<compile_context>
chip_gen: v6e
topology: v6e:2x2x1
jax: 0.10.0
libtpu: 0.0.40
codegen_flags: <defaults>
</compile_context>

<pallas_src>
import math
import functools

import jax
import jax.numpy as jnp
from jax import lax
from jax.experimental import pallas as pl
from jax.experimental.pallas import tpu as pltpu


# -----------------------------------------------------------------------------
# Shared numeric helpers (used by kernels and by the pure-JAX reference).
# -----------------------------------------------------------------------------

def _mm(a, b):
    """Matmul with bf16 operands and f32 accumulation (MXU-friendly)."""
    return jnp.dot(a.astype(jnp.bfloat16), b.astype(jnp.bfloat16),
                   preferred_element_type=jnp.float32)


def _gelu(x):
    # TODO(synk): PyTorch nn.GELU() default is the exact erf form; tanh
    # approximation used here (guaranteed EUP lowering, |delta| < 1e-3).
    c = math.sqrt(2.0 / math.pi)
    return 0.5 * x * (1.0 + jnp.tanh(c * (x + 0.044715 * x * x * x)))


def _layer_norm(x, g, b, eps=1e-5):
    mean = jnp.mean(x, axis=-1, keepdims=True)
    var = jnp.mean(jnp.square(x - mean), axis=-1, keepdims=True)
    return ((x - mean) * lax.rsqrt(var + eps) * g.astype(jnp.float32)
            + b.astype(jnp.float32))


# -----------------------------------------------------------------------------
# Fused embedding kernel:
#   state path : Linear -> LN -> GELU -> Linear (+ time emb)
#   action path: (embedding lookup outside) -> LN -> GELU -> Linear (+ time emb)
#   then embed_ln on both, written interleaved as out[:, 0, :] / out[:, 1, :].
# -----------------------------------------------------------------------------

def _embed_kernel(st_ref, atok_ref, t_ref,
                  esw1_ref, esb1_ref, esg_ref, esbe_ref, esw2_ref, esb2_ref,
                  eag_ref, eabe_ref, eaw2_ref, eab2_ref,
                  elng_ref, elnb_ref, o_ref):
    t = t_ref[...]                                              # (rb, C) f32

    # state path (no redundant f32 cast before _mm; it casts to bf16 itself)
    s1 = _mm(st_ref[...], esw1_ref[...]) + esb1_ref[...]
    s1 = _gelu(_layer_norm(s1, esg_ref[...], esbe_ref[...]))
    s_emb = _mm(s1, esw2_ref[...]) + esb2_ref[...] + t

    # action path
    a1 = _gelu(_layer_norm(atok_ref[...], eag_ref[...], eabe_ref[...]))
    a_emb = _mm(a1, eaw2_ref[...]) + eab2_ref[...] + t

    s_ln = _layer_norm(s_emb, elng_ref[...], elnb_ref[...])
    a_ln = _layer_norm(a_emb, elng_ref[...], elnb_ref[...])

    o_ref[:, 0:1, :] = s_ln[:, None, :].astype(o_ref.dtype)
    o_ref[:, 1:2, :] = a_ln[:, None, :].astype(o_ref.dtype)


# -----------------------------------------------------------------------------
# Fused multi-layer transformer kernel.
#   grid = (B // b_blk, n_layers); activations kept in VMEM scratch across the
#   layer axis; per-layer weights streamed via index_map (DMA hidden).
# -----------------------------------------------------------------------------

def _blocks_kernel(x_ref, ln1g_ref, ln1b_ref, wqkv_ref, bqkv_ref, wp_ref, bp_ref,
                   ln2g_ref, ln2b_ref, wm1_ref, bm1_ref, wm2_ref, bm2_ref,
                   o_ref, h_scr, *, n_heads):
    l = pl.program_id(1)
    n_layers = pl.num_programs(1)

    b_blk, S, C = x_ref.shape
    H = n_heads
    D = C // H
    M = b_blk * S
    scale = 1.0 / math.sqrt(D)

    # Load the (post embed_ln) activations for this batch block once.
    @pl.when(l == 0)
    def _():
        h_scr[...] = x_ref[...]

    h0 = h_scr[...].reshape(M, C)                               # f32 (M, C)

    # ---- ln1 + fused QKV projection (one wide MXU matmul) -------------------
    xln = _layer_norm(h0, ln1g_ref[0], ln1b_ref[0])
    qkv = _mm(xln, wqkv_ref[0]) + bqkv_ref[0]                   # (M, 3C) f32

    # Causal mask as a finite additive bias, built once per grid step.
    row = lax.broadcasted_iota(jnp.int32, (S, S), 0)
    col = lax.broadcasted_iota(jnp.int32, (S, S), 1)
    mask_bias = jnp.where(col <= row, 0.0, -1e30).astype(jnp.float32)

    def to_heads(mat):
        # (M, C) -> (H, M, D) via O(H) lane slices -> (H*b_blk, S, D)
        # (leading-dim reshape; no per-batch Python loop, no per-(b,h) concat).
        hs = jnp.stack([mat[:, hh * D:(hh + 1) * D] for hh in range(H)], axis=0)
        return hs.reshape(H * b_blk, S, D)

    qh = to_heads(qkv[:, 0 * C:1 * C])
    kh = to_heads(qkv[:, 1 * C:2 * C])
    vh = to_heads(qkv[:, 2 * C:3 * C])

    # Batched over (H * b_blk) in a single dot_general each.
    s = jnp.einsum("bqd,bkd->bqk",
                   qh.astype(jnp.bfloat16), kh.astype(jnp.bfloat16),
                   preferred_element_type=jnp.float32) * scale
    s = s + mask_bias[None, :, :]

    m = jnp.max(s, axis=-1, keepdims=True)
    e = jnp.exp(s - m)
    p = e * pl.reciprocal(jnp.sum(e, axis=-1, keepdims=True), approx=True)

    o = jnp.einsum("bqk,bkd->bqd",
                   p.astype(jnp.bfloat16), vh.astype(jnp.bfloat16),
                   preferred_element_type=jnp.float32)           # (H*b, S, D)
    o = o.reshape(H, M, D)
    attn = jnp.concatenate([o[hh] for hh in range(H)], axis=-1)  # (M, C)

    # ---- output projection + residual ---------------------------------------
    y = h0 + _mm(attn, wp_ref[0]) + bp_ref[0]

    # ---- MLP (Linear -> GELU -> Linear) + residual ---------------------------
    yln = _layer_norm(y, ln2g_ref[0], ln2b_ref[0])
    h1 = _gelu(_mm(yln, wm1_ref[0]) + bm1_ref[0])
    out = y + _mm(h1, wm2_ref[0]) + bm2_ref[0]

    h_scr[...] = out.reshape(b_blk, S, C)

    @pl.when(l == n_layers - 1)
    def _():
        o_ref[...] = h_scr[...].astype(o_ref.dtype)


# -----------------------------------------------------------------------------
# Prediction head: Linear -> GELU -> Linear on the last state token.
# The input BlockSpec fetches only the 8-row sequence block containing it.
# -----------------------------------------------------------------------------

def _head_kernel(x_ref, w1_ref, b1_ref, w2_ref, b2_ref, o_ref, *, row):
    Bq = x_ref.shape[0]
    C = x_ref.shape[2]
    x = x_ref[:, row:row + 1, :].reshape(Bq, C)
    h1 = _gelu(_mm(x, w1_ref[...]) + b1_ref[...])
    o_ref[...] = (_mm(h1, w2_ref[...]) + b2_ref[...]).astype(o_ref.dtype)


# -----------------------------------------------------------------------------
# Wrappers
# -----------------------------------------------------------------------------

def transformer_policy_forward(params, timesteps, states, actions, *,
                               n_heads, b_blk=2, row_blk=32):
    B, T, state_dim = states.shape
    C = params["embed_ln_g"].shape[-1]
    S = 2 * T
    BT = B * T
    act_dim = params["ph_b2"].shape[-1]
    L = params["wqkv"].shape[0]

    assert C % n_heads == 0
    assert B % b_blk == 0
    assert S >= 8

    if BT % row_blk != 0 or row_blk % 8 != 0:
        row_blk = BT

    def _rep1(shape):
        nd = len(shape)
        return pl.BlockSpec(shape, lambda i, _nd=nd: (0,) * _nd)

    # TODO(synk): embedding-table lookups are plain-JAX (XLA) gathers.
    t_emb = jnp.take(params["time_table"], timesteps.reshape(-1), axis=0)  # (BT, C)
    a_tok = jnp.take(params["act_table"], actions.reshape(-1), axis=0)     # (BT, C)

    # ---- fused embedding path (state MLP + action MLP + embed_ln, interleaved)
    emb = pl.pallas_call(
        _embed_kernel,
        out_shape=jax.ShapeDtypeStruct((BT, 2, C), jnp.float32),
        grid=(BT // row_blk,),
        in_specs=[
            pl.BlockSpec((row_blk, state_dim), lambda i: (i, 0)),
            pl.BlockSpec((row_blk, C), lambda i: (i, 0)),
            pl.BlockSpec((row_blk, C), lambda i: (i, 0)),
            _rep1(params["es_w1"].shape), _rep1(params["es_b1"].shape),
            _rep1(params["es_g"].shape), _rep1(params["es_be"].shape),
            _rep1(params["es_w2"].shape), _rep1(params["es_b2"].shape),
            _rep1(params["ea_g"].shape), _rep1(params["ea_be"].shape),
            _rep1(params["ea_w2"].shape), _rep1(params["ea_b2"].shape),
            _rep1(params["embed_ln_g"].shape), _rep1(params["embed_ln_b"].shape),
        ],
        out_specs=pl.BlockSpec((row_blk, 2, C), lambda i: (i, 0, 0)),
        compiler_params=pltpu.CompilerParams(dimension_semantics=("parallel",)),
    )(states.reshape(BT, state_dim), a_tok, t_emb,
      params["es_w1"], params["es_b1"], params["es_g"], params["es_be"],
      params["es_w2"], params["es_b2"],
      params["ea_g"], params["ea_be"], params["ea_w2"], params["ea_b2"],
      params["embed_ln_g"], params["embed_ln_b"])
    h = emb.reshape(B, S, C)            # contiguous reshape (free interleave)

    # ---- all transformer blocks in one pallas_call ---------------------------
    def _wmap(b, l):
        return (l, 0, 0)

    h = pl.pallas_call(
        functools.partial(_blocks_kernel, n_heads=n_heads),
        out_shape=jax.ShapeDtypeStruct((B, S, C), jnp.float32),
        grid=(B // b_blk, L),
        in_specs=[
            pl.BlockSpec((b_blk, S, C), lambda b, l: (b, 0, 0)),     # activations
            pl.BlockSpec((1, 1, C), _wmap),        # ln1 gamma
            pl.BlockSpec((1, 1, C), _wmap),        # ln1 beta
            pl.BlockSpec((1, C, 3 * C), _wmap),    # fused Wqkv
            pl.BlockSpec((1, 1, 3 * C), _wmap),    # bqkv
            pl.BlockSpec((1, C, C), _wmap),        # Wproj
            pl.BlockSpec((1, 1, C), _wmap),        # bproj
            pl.BlockSpec((1, 1, C), _wmap),        # ln2 gamma
            pl.BlockSpec((1, 1, C), _wmap),        # ln2 beta
            pl.BlockSpec((1, C, 4 * C), _wmap),    # Wmlp1
            pl.BlockSpec((1, 1, 4 * C), _wmap),    # bmlp1
            pl.BlockSpec((1, 4 * C, C), _wmap),    # Wmlp2
            pl.BlockSpec((1, 1, C), _wmap),        # bmlp2
        ],
        out_specs=pl.BlockSpec((b_blk, S, C), lambda b, l: (b, 0, 0)),
        scratch_shapes=[pltpu.VMEM((b_blk, S, C), jnp.float32)],
        compiler_params=pltpu.CompilerParams(
            dimension_semantics=("parallel", "arbitrary"),
            # Small at demo shapes; raise toward ~100 MiB on v5e/v6e and tile
            # wm1/wm2 along 4C on v7x for production C.
            vmem_limit_bytes=64 * 1024 * 1024,
        ),
    )(h, params["ln1_g"], params["ln1_b"], params["wqkv"], params["bqkv"],
      params["wp"], params["bp"], params["ln2_g"], params["ln2_b"],
      params["wm1"], params["bm1"], params["wm2"], params["bm2"])

    # ---- prediction head on the last state token (position S - 2) -----------
    blk_row = (S - 2) // 8
    row_in = (S - 2) % 8
    preds = pl.pallas_call(
        functools.partial(_head_kernel, row=row_in),
        out_shape=jax.ShapeDtypeStruct((B, act_dim), jnp.float32),
        grid=(1,),
        in_specs=[
            pl.BlockSpec((B, 8, C), lambda i, _br=blk_row: (0, _br, 0)),
            _rep1(params["ph_w1"].shape), _rep1(params["ph_b1"].shape),
            _rep1(params["ph_w2"].shape), _rep1(params["ph_b2"].shape),
        ],
        out_specs=pl.BlockSpec((B, act_dim), lambda i: (0, 0)),
    )(h, params["ph_w1"], params["ph_b1"], params["ph_w2"], params["ph_b2"])
    return preds


# -----------------------------------------------------------------------------
# Pure-JAX reference (mirrors PyTorch eval semantics + identical bf16 casts).
# -----------------------------------------------------------------------------

def _reference_forward(params, timesteps, states, actions, *, n_heads):
    B, T, _ = states.shape
    C = params["embed_ln_g"].shape[-1]
    S = 2 * T
    D = C // n_heads

    t_emb = jnp.take(params["time_table"], timesteps, axis=0)
    a_tok = jnp.take(params["act_table"], actions, axis=0)

    s_emb = _mm(states, params["es_w1"]) + params["es_b1"]
    s_emb = _gelu(_layer_norm(s_emb, params["es_g"], params["es_be"]))
    s_emb = _mm(s_emb, params["es_w2"]) + params["es_b2"] + t_emb

    a_emb = _gelu(_layer_norm(a_tok, params["ea_g"], params["ea_be"]))
    a_emb = _mm(a_emb, params["ea_w2"]) + params["ea_b2"] + t_emb

    h = jnp.stack([s_emb, a_emb], axis=2).reshape(B, S, C)
    h = _layer_norm(h, params["embed_ln_g"], params["embed_ln_b"])

    row = jnp.arange(S)[:, None]
    col = jnp.arange(S)[None, :]
    mask_bias = jnp.where(col <= row, 0.0, -1e30).astype(jnp.float32)

    L = params["wqkv"].shape[0]
    for l in range(L):
        xln = _layer_norm(h, params["ln1_g"][l], params["ln1_b"][l])
        qkv = _mm(xln, params["wqkv"][l]) + params["bqkv"][l]
        q, k, v = qkv[..., :C], qkv[..., C:2 * C], qkv[..., 2 * C:]
        q = q.reshape(B, S, n_heads, D).transpose(0, 2, 1, 3)
        k = k.reshape(B, S, n_heads, D).transpose(0, 2, 1, 3)
        v = v.reshape(B, S, n_heads, D).transpose(0, 2, 1, 3)
        s = jnp.einsum("bhqd,bhkd->bhqk",
                       q.astype(jnp.bfloat16), k.astype(jnp.bfloat16),
                       preferred_element_type=jnp.float32) / math.sqrt(D)
        s = s + mask_bias
        pw = jax.nn.softmax(s, axis=-1)
        o = jnp.einsum("bhqk,bhkd->bhqd",
                       pw.astype(jnp.bfloat16), v.astype(jnp.bfloat16),
                       preferred_element_type=jnp.float32)
        attn = o.transpose(0, 2, 1, 3).reshape(B, S, C)
        h = h + _mm(attn, params["wp"][l]) + params["bp"][l]
        yln = _layer_norm(h, params["ln2_g"][l], params["ln2_b"][l])
        m1 = _gelu(_mm(yln, params["wm1"][l]) + params["bm1"][l])
        h = h + _mm(m1, params["wm2"][l]) + params["bm2"][l]

    x_last = h[:, S - 2, :]
    hh = _gelu(_mm(x_last, params["ph_w1"]) + params["ph_b1"])
    return _mm(hh, params["ph_w2"]) + params["ph_b2"]


# -----------------------------------------------------------------------------
# Deterministic parameter init (nn.Linear-style; matmul weights stored as
# (in, out) = W.T in bf16; biases / LayerNorm params in f32; per-layer params
# stacked on a leading layer axis for streaming).
# -----------------------------------------------------------------------------

def _init_params(key, state_dim, act_dim, n_blocks, h_dim, max_timestep):
    keys = iter(jax.random.split(key, 16 + 4 * n_blocks))

    def lin(k, fan_in, fan_out):
        bound = 1.0 / math.sqrt(fan_in)
        kw, kb = jax.random.split(k)
        w = jax.random.uniform(kw, (fan_in, fan_out), jnp.float32,
                               -bound, bound).astype(jnp.bfloat16)
        b = jax.random.uniform(kb, (1, fan_out), jnp.float32, -bound, bound)
        return w, b

    def ln():
        return (jnp.ones((1, h_dim), jnp.float32),
                jnp.zeros((1, h_dim), jnp.float32))

    p = {}
    p["time_table"] = 0.02 * jax.random.normal(next(keys), (max_timestep, h_dim),
                                               jnp.float32)
    p["act_table"] = 0.02 * jax.random.normal(next(keys), (act_dim, h_dim),
                                              jnp.float32)
    p["es_w1"], p["es_b1"] = lin(next(keys), state_dim, h_dim)
    p["es_g"], p["es_be"] = ln()
    p["es_w2"], p["es_b2"] = lin(next(keys), h_dim, h_dim)
    p["ea_g"], p["ea_be"] = ln()
    p["ea_w2"], p["ea_b2"] = lin(next(keys), h_dim, h_dim)
    p["embed_ln_g"], p["embed_ln_b"] = ln()

    wqkv, bqkv, wp, bp, wm1, bm1, wm2, bm2 = [], [], [], [], [], [], [], []
    for _ in range(n_blocks):
        w, b = lin(next(keys), h_dim, 3 * h_dim); wqkv.append(w); bqkv.append(b)
        w, b = lin(next(keys), h_dim, h_dim);     wp.append(w);   bp.append(b)
        w, b = lin(next(keys), h_dim, 4 * h_dim); wm1.append(w);  bm1.append(b)
        w, b = lin(next(keys), 4 * h_dim, h_dim); wm2.append(w);  bm2.append(b)
    p["wqkv"] = jnp.stack(wqkv); p["bqkv"] = jnp.stack(bqkv)
    p["wp"] = jnp.stack(wp);     p["bp"] = jnp.stack(bp)
    p["wm1"] = jnp.stack(wm1);   p["bm1"] = jnp.stack(bm1)
    p["wm2"] = jnp.stack(wm2);   p["bm2"] = jnp.stack(bm2)
    p["ln1_g"] = jnp.ones((n_blocks, 1, h_dim), jnp.float32)
    p["ln1_b"] = jnp.zeros((n_blocks, 1, h_dim), jnp.float32)
    p["ln2_g"] = jnp.ones((n_blocks, 1, h_dim), jnp.float32)
    p["ln2_b"] = jnp.zeros((n_blocks, 1, h_dim), jnp.float32)

    p["ph_w1"], p["ph_b1"] = lin(next(keys), h_dim, h_dim)
    p["ph_w2"], p["ph_b2"] = lin(next(keys), h_dim, act_dim)
    return p


if __name__ == "__main__":
    # Small deterministic config with lane-dense C: B=8, context_len=8
    # (seq len 16), h_dim=128, 4 heads, 2 blocks, state_dim=5, act_dim=6.
    B, context_len = 8, 8
    state_dim, act_dim = 5, 6
    h_dim, n_heads, n_blocks = 128, 4, 2
    max_timestep = 64
    T = context_len

    key = jax.random.PRNGKey(0)
    k_p, k_s, k_t, k_a = jax.random.split(key, 4)
    params = _init_params(k_p, state_dim, act_dim, n_blocks, h_dim, max_timestep)
    states = jax.random.normal(k_s, (B, T, state_dim), jnp.float32)
    timesteps = jax.random.randint(k_t, (B, T), 0, max_timestep)
    actions = jax.random.randint(k_a, (B, T), 0, act_dim)

    fwd = jax.jit(functools.partial(transformer_policy_forward,
                                    n_heads=n_heads, b_blk=4, row_blk=32))
    out = jax.block_until_ready(fwd(params, timesteps, states, actions))

    ref = _reference_forward(params, timesteps, states, actions, n_heads=n_heads)
    assert out.shape == (B, act_dim)
    assert bool(jnp.all(jnp.isfinite(out)))
    assert jnp.allclose(out, ref, atol=1e-2, rtol=1e-2), (out, ref)

    print("KERNEL_OK")
</pallas_src>

<mosaic_0001>
module attributes {stable_mosaic.version = 11 : i64} {
  func.func @_embed_kernel(%arg0: i32, %arg1: memref<32x5xf32, #tpu.memory_space<vmem>>, %arg2: memref<32x128xf32, #tpu.memory_space<vmem>>, %arg3: memref<32x128xf32, #tpu.memory_space<vmem>>, %arg4: memref<5x128xbf16, #tpu.memory_space<vmem>>, %arg5: memref<1x128xf32, #tpu.memory_space<vmem>>, %arg6: memref<1x128xf32, #tpu.memory_space<vmem>>, %arg7: memref<1x128xf32, #tpu.memory_space<vmem>>, %arg8: memref<128x128xbf16, #tpu.memory_space<vmem>>, %arg9: memref<1x128xf32, #tpu.memory_space<vmem>>, %arg10: memref<1x128xf32, #tpu.memory_space<vmem>>, %arg11: memref<1x128xf32, #tpu.memory_space<vmem>>, %arg12: memref<128x128xbf16, #tpu.memory_space<vmem>>, %arg13: memref<1x128xf32, #tpu.memory_space<vmem>>, %arg14: memref<1x128xf32, #tpu.memory_space<vmem>>, %arg15: memref<1x128xf32, #tpu.memory_space<vmem>>, %arg16: memref<32x2x128xf32, #tpu.memory_space<vmem>>) attributes {dimension_semantics = [#tpu.dimension_semantics<parallel>], iteration_bounds = array<i64: 2>, scalar_prefetch = 0 : i64, scratch_operands = 0 : i64, tpu.core_type = #tpu.core_type<tc>, window_params = [{transform_indices = @transform_0, window_bounds = array<i64: 32, 5>}, {transform_indices = @transform_1, window_bounds = array<i64: 32, 128>}, {transform_indices = @transform_2, window_bounds = array<i64: 32, 128>}, {pipeline_mode = #tpu.pipeline_mode<synchronous>, transform_indices = @transform_3, window_bounds = array<i64: 5, 128>}, {pipeline_mode = #tpu.pipeline_mode<synchronous>, transform_indices = @transform_4, window_bounds = array<i64: 1, 128>}, {pipeline_mode = #tpu.pipeline_mode<synchronous>, transform_indices = @transform_5, window_bounds = array<i64: 1, 128>}, {pipeline_mode = #tpu.pipeline_mode<synchronous>, transform_indices = @transform_6, window_bounds = array<i64: 1, 128>}, {pipeline_mode = #tpu.pipeline_mode<synchronous>, transform_indices = @transform_7, window_bounds = array<i64: 128, 128>}, {pipeline_mode = #tpu.pipeline_mode<synchronous>, transform_indices = @transform_8, window_bounds = array<i64: 1, 128>}, {pipeline_mode = #tpu.pipeline_mode<synchronous>, transform_indices = @transform_9, window_bounds = array<i64: 1, 128>}, {pipeline_mode = #tpu.pipeline_mode<synchronous>, transform_indices = @transform_10, window_bounds = array<i64: 1, 128>}, {pipeline_mode = #tpu.pipeline_mode<synchronous>, transform_indices = @transform_11, window_bounds = array<i64: 128, 128>}, {pipeline_mode = #tpu.pipeline_mode<synchronous>, transform_indices = @transform_12, window_bounds = array<i64: 1, 128>}, {pipeline_mode = #tpu.pipeline_mode<synchronous>, transform_indices = @transform_13, window_bounds = array<i64: 1, 128>}, {pipeline_mode = #tpu.pipeline_mode<synchronous>, transform_indices = @transform_14, window_bounds = array<i64: 1, 128>}, {transform_indices = @transform_15, window_bounds = array<i64: 32, 2, 128>}]} {
    %c0 = arith.constant 0 : index
    %c0_0 = arith.constant 0 : index
    %0 = vector.load %arg3[%c0, %c0_0] : memref<32x128xf32, #tpu.memory_space<vmem>>, vector<32x128xf32>
    %c0_1 = arith.constant 0 : index
    %c0_2 = arith.constant 0 : index
    %1 = vector.load %arg1[%c0_1, %c0_2] : memref<32x5xf32, #tpu.memory_space<vmem>>, vector<32x5xf32>
    %c0_3 = arith.constant 0 : index
    %c0_4 = arith.constant 0 : index
    %2 = vector.load %arg4[%c0_3, %c0_4] : memref<5x128xbf16, #tpu.memory_space<vmem>>, vector<5x128xbf16>
    %3 = arith.truncf %1 : vector<32x5xf32> to vector<32x5xbf16>
    %cst = arith.constant dense<0.000000e+00> : vector<32x128xf32>
    %4 = tpu.matmul %3, %2, %cst {dimension_numbers = #tpu.dot_dimension_numbers<[1], [0], [0], [1], [0, 0, 1, 1], [], []>} : vector<32x5xbf16>, vector<5x128xbf16>, vector<32x128xf32> -> vector<32x128xf32>
    %c0_5 = arith.constant 0 : index
    %c0_6 = arith.constant 0 : index
    %5 = vector.load %arg5[%c0_5, %c0_6] : memref<1x128xf32, #tpu.memory_space<vmem>>, vector<1x128xf32>
    %6 = vector.broadcast %5 : vector<1x128xf32> to vector<32x128xf32>
    %7 = arith.addf %4, %6 : vector<32x128xf32>
    %c0_7 = arith.constant 0 : index
    %c0_8 = arith.constant 0 : index
    %8 = vector.load %arg6[%c0_7, %c0_8] : memref<1x128xf32, #tpu.memory_space<vmem>>, vector<1x128xf32>
    %c0_9 = arith.constant 0 : index
    %c0_10 = arith.constant 0 : index
    %9 = vector.load %arg7[%c0_9, %c0_10] : memref<1x128xf32, #tpu.memory_space<vmem>>, vector<1x128xf32>
    %cst_11 = arith.constant dense<0.000000e+00> : vector<32xf32>
    %10 = vector.multi_reduction <add>, %7, %cst_11 [1] : vector<32x128xf32> to vector<32xf32>
    %11 = vector.shape_cast %10 : vector<32xf32> to vector<32x1xf32>
    %cst_12 = arith.constant 1.280000e+02 : f32
    %12 = vector.broadcast %cst_12 : f32 to vector<32x1xf32>
    %13 = arith.divf %11, %12 : vector<32x1xf32>
    %14 = vector.broadcast %13 : vector<32x1xf32> to vector<32x128xf32>
    %15 = arith.subf %7, %14 : vector<32x128xf32>
    %16 = arith.mulf %15, %15 : vector<32x128xf32>
    %cst_13 = arith.constant dense<0.000000e+00> : vector<32xf32>
    %17 = vector.multi_reduction <add>, %16, %cst_13 [1] : vector<32x128xf32> to vector<32xf32>
    %18 = vector.shape_cast %17 : vector<32xf32> to vector<32x1xf32>
    %cst_14 = arith.constant 1.280000e+02 : f32
    %19 = vector.broadcast %cst_14 : f32 to vector<32x1xf32>
    %20 = arith.divf %18, %19 : vector<32x1xf32>
    %21 = vector.broadcast %13 : vector<32x1xf32> to vector<32x128xf32>
    %22 = arith.subf %7, %21 : vector<32x128xf32>
    %cst_15 = arith.constant 9.99999974E-6 : f32
    %23 = vector.broadcast %cst_15 : f32 to vector<32x1xf32>
    %24 = arith.addf %20, %23 : vector<32x1xf32>
    %25 = math.rsqrt %24 : vector<32x1xf32>
    %26 = vector.broadcast %25 : vector<32x1xf32> to vector<32x128xf32>
    %27 = arith.mulf %22, %26 : vector<32x128xf32>
    %28 = vector.broadcast %8 : vector<1x128xf32> to vector<32x128xf32>
    %29 = arith.mulf %27, %28 : vector<32x128xf32>
    %30 = vector.broadcast %9 : vector<1x128xf32> to vector<32x128xf32>
    %31 = arith.addf %29, %30 : vector<32x128xf32>
    %cst_16 = arith.constant 5.000000e-01 : f32
    %32 = vector.broadcast %cst_16 : f32 to vector<32x128xf32>
    %33 = arith.mulf %32, %31 : vector<32x128xf32>
    %cst_17 = arith.constant 4.471500e-02 : f32
    %34 = vector.broadcast %cst_17 : f32 to vector<32x128xf32>
    %35 = arith.mulf %34, %31 : vector<32x128xf32>
    %36 = arith.mulf %35, %31 : vector<32x128xf32>
    %37 = arith.mulf %36, %31 : vector<32x128xf32>
    %38 = arith.addf %31, %37 : vector<32x128xf32>
    %cst_18 = arith.constant 0.797884583 : f32
    %39 = vector.broadcast %cst_18 : f32 to vector<32x128xf32>
    %40 = arith.mulf %39, %38 : vector<32x128xf32>
    %41 = math.tanh %40 : vector<32x128xf32>
    %cst_19 = arith.constant 1.000000e+00 : f32
    %42 = vector.broadcast %cst_19 : f32 to vector<32x128xf32>
    %43 = arith.addf %42, %41 : vector<32x128xf32>
    %44 = arith.mulf %33, %43 : vector<32x128xf32>
    %c0_20 = arith.constant 0 : index
    %c0_21 = arith.constant 0 : index
    %45 = vector.load %arg8[%c0_20, %c0_21] : memref<128x128xbf16, #tpu.memory_space<vmem>>, vector<128x128xbf16>
    %46 = arith.truncf %44 : vector<32x128xf32> to vector<32x128xbf16>
    %cst_22 = arith.constant dense<0.000000e+00> : vector<32x128xf32>
    %47 = tpu.matmul %46, %45, %cst_22 {dimension_numbers = #tpu.dot_dimension_numbers<[1], [0], [0], [1], [0, 0, 1, 1], [], []>} : vector<32x128xbf16>, vector<128x128xbf16>, vector<32x128xf32> -> vector<32x128xf32>
    %c0_23 = arith.constant 0 : index
    %c0_24 = arith.constant 0 : index
    %48 = vector.load %arg9[%c0_23, %c0_24] : memref<1x128xf32, #tpu.memory_space<vmem>>, vector<1x128xf32>
    %49 = vector.broadcast %48 : vector<1x128xf32> to vector<32x128xf32>
    %50 = arith.addf %47, %49 : vector<32x128xf32>
    %51 = arith.addf %50, %0 : vector<32x128xf32>
    %c0_25 = arith.constant 0 : index
    %c0_26 = arith.constant 0 : index
    %52 = vector.load %arg2[%c0_25, %c0_26] : memref<32x128xf32, #tpu.memory_space<vmem>>, vector<32x128xf32>
    %c0_27 = arith.constant 0 : index
    %c0_28 = arith.constant 0 : index
    %53 = vector.load %arg10[%c0_27, %c0_28] : memref<1x128xf32, #tpu.memory_space<vmem>>, vector<1x128xf32>
    %c0_29 = arith.constant 0 : index
    %c0_30 = arith.constant 0 : index
    %54 = vector.load %arg11[%c0_29, %c0_30] : memref<1x128xf32, #tpu.memory_space<vmem>>, vector<1x128xf32>
    %cst_31 = arith.constant dense<0.000000e+00> : vector<32xf32>
    %55 = vector.multi_reduction <add>, %52, %cst_31 [1] : vector<32x128xf32> to vector<32xf32>
    %56 = vector.shape_cast %55 : vector<32xf32> to vector<32x1xf32>
    %cst_32 = arith.constant 1.280000e+02 : f32
    %57 = vector.broadcast %cst_32 : f32 to vector<32x1xf32>
    %58 = arith.divf %56, %57 : vector<32x1xf32>
    %59 = vector.broadcast %58 : vector<32x1xf32> to vector<32x128xf32>
    %60 = arith.subf %52, %59 : vector<32x128xf32>
    %61 = arith.mulf %60, %60 : vector<32x128xf32>
    %cst_33 = arith.constant dense<0.000000e+00> : vector<32xf32>
    %62 = vector.multi_reduction <add>, %61, %cst_33 [1] : vector<32x128xf32> to vector<32xf32>
    %63 = vector.shape_cast %62 : vector<32xf32> to vector<32x1xf32>
    %cst_34 = arith.constant 1.280000e+02 : f32
    %64 = vector.broadcast %cst_34 : f32 to vector<32x1xf32>
    %65 = arith.divf %63, %64 : vector<32x1xf32>
    %66 = vector.broadcast %58 : vector<32x1xf32> to vector<32x128xf32>
    %67 = arith.subf %52, %66 : vector<32x128xf32>
    %cst_35 = arith.constant 9.99999974E-6 : f32
    %68 = vector.broadcast %cst_35 : f32 to vector<32x1xf32>
    %69 = arith.addf %65, %68 : vector<32x1xf32>
    %70 = math.rsqrt %69 : vector<32x1xf32>
    %71 = vector.broadcast %70 : vector<32x1xf32> to vector<32x128xf32>
    %72 = arith.mulf %67, %71 : vector<32x128xf32>
    %73 = vector.broadcast %53 : vector<1x128xf32> to vector<32x128xf32>
    %74 = arith.mulf %72, %73 : vector<32x128xf32>
    %75 = vector.broadcast %54 : vector<1x128xf32> to vector<32x128xf32>
    %76 = arith.addf %74, %75 : vector<32x128xf32>
    %cst_36 = arith.constant 5.000000e-01 : f32
    %77 = vector.broadcast %cst_36 : f32 to vector<32x128xf32>
    %78 = arith.mulf %77, %76 : vector<32x128xf32>
    %cst_37 = arith.constant 4.471500e-02 : f32
    %79 = vector.broadcast %cst_37 : f32 to vector<32x128xf32>
    %80 = arith.mulf %79, %76 : vector<32x128xf32>
    %81 = arith.mulf %80, %76 : vector<32x128xf32>
    %82 = arith.mulf %81, %76 : vector<32x128xf32>
    %83 = arith.addf %76, %82 : vector<32x128xf32>
    %cst_38 = arith.constant 0.797884583 : f32
    %84 = vector.broadcast %cst_38 : f32 to vector<32x128xf32>
    %85 = arith.mulf %84, %83 : vector<32x128xf32>
    %86 = math.tanh %85 : vector<32x128xf32>
    %cst_39 = arith.constant 1.000000e+00 : f32
    %87 = vector.broadcast %cst_39 : f32 to vector<32x128xf32>
    %88 = arith.addf %87, %86 : vector<32x128xf32>
    %89 = arith.mulf %78, %88 : vector<32x128xf32>
    %c0_40 = arith.constant 0 : index
    %c0_41 = arith.constant 0 : index
    %90 = vector.load %arg12[%c0_40, %c0_41] : memref<128x128xbf16, #tpu.memory_space<vmem>>, vector<128x128xbf16>
    %91 = arith.truncf %89 : vector<32x128xf32> to vector<32x128xbf16>
    %cst_42 = arith.constant dense<0.000000e+00> : vector<32x128xf32>
    %92 = tpu.matmul %91, %90, %cst_42 {dimension_numbers = #tpu.dot_dimension_numbers<[1], [0], [0], [1], [0, 0, 1, 1], [], []>} : vector<32x128xbf16>, vector<128x128xbf16>, vector<32x128xf32> -> vector<32x128xf32>
    %c0_43 = arith.constant 0 : index
    %c0_44 = arith.constant 0 : index
    %93 = vector.load %arg13[%c0_43, %c0_44] : memref<1x128xf32, #tpu.memory_space<vmem>>, vector<1x128xf32>
    %94 = vector.broadcast %93 : vector<1x128xf32> to vector<32x128xf32>
    %95 = arith.addf %92, %94 : vector<32x128xf32>
    %96 = arith.addf %95, %0 : vector<32x128xf32>
    %c0_45 = arith.constant 0 : index
    %c0_46 = arith.constant 0 : index
    %97 = vector.load %arg14[%c0_45, %c0_46] : memref<1x128xf32, #tpu.memory_space<vmem>>, vector<1x128xf32>
    %c0_47 = arith.constant 0 : index
    %c0_48 = arith.constant 0 : index
    %98 = vector.load %arg15[%c0_47, %c0_48] : memref<1x128xf32, #tpu.memory_space<vmem>>, vector<1x128xf32>
    %cst_49 = arith.constant dense<0.000000e+00> : vector<32xf32>
    %99 = vector.multi_reduction <add>, %51, %cst_49 [1] : vector<32x128xf32> to vector<32xf32>
    %100 = vector.shape_cast %99 : vector<32xf32> to vector<32x1xf32>
    %cst_50 = arith.constant 1.280000e+02 : f32
    %101 = vector.broadcast %cst_50 : f32 to vector<32x1xf32>
    %102 = arith.divf %100, %101 : vector<32x1xf32>
    %103 = vector.broadcast %102 : vector<32x1xf32> to vector<32x128xf32>
    %104 = arith.subf %51, %103 : vector<32x128xf32>
    %105 = arith.mulf %104, %104 : vector<32x128xf32>
    %cst_51 = arith.constant dense<0.000000e+00> : vector<32xf32>
    %106 = vector.multi_reduction <add>, %105, %cst_51 [1] : vector<32x128xf32> to vector<32xf32>
    %107 = vector.shape_cast %106 : vector<32xf32> to vector<32x1xf32>
    %cst_52 = arith.constant 1.280000e+02 : f32
    %108 = vector.broadcast %cst_52 : f32 to vector<32x1xf32>
    %109 = arith.divf %107, %108 : vector<32x1xf32>
    %110 = vector.broadcast %102 : vector<32x1xf32> to vector<32x128xf32>
    %111 = arith.subf %51, %110 : vector<32x128xf32>
    %cst_53 = arith.constant 9.99999974E-6 : f32
    %112 = vector.broadcast %cst_53 : f32 to vector<32x1xf32>
    %113 = arith.addf %109, %112 : vector<32x1xf32>
    %114 = math.rsqrt %113 : vector<32x1xf32>
    %115 = vector.broadcast %114 : vector<32x1xf32> to vector<32x128xf32>
    %116 = arith.mulf %111, %115 : vector<32x128xf32>
    %117 = vector.broadcast %97 : vector<1x128xf32> to vector<32x128xf32>
    %118 = arith.mulf %116, %117 : vector<32x128xf32>
    %119 = vector.broadcast %98 : vector<1x128xf32> to vector<32x128xf32>
    %120 = arith.addf %118, %119 : vector<32x128xf32>
    %c0_54 = arith.constant 0 : index
    %c0_55 = arith.constant 0 : index
    %121 = vector.load %arg14[%c0_54, %c0_55] : memref<1x128xf32, #tpu.memory_space<vmem>>, vector<1x128xf32>
    %c0_56 = arith.constant 0 : index
    %c0_57 = arith.constant 0 : index
    %122 = vector.load %arg15[%c0_56, %c0_57] : memref<1x128xf32, #tpu.memory_space<vmem>>, vector<1x128xf32>
    %cst_58 = arith.constant dense<0.000000e+00> : vector<32xf32>
    %123 = vector.multi_reduction <add>, %96, %cst_58 [1] : vector<32x128xf32> to vector<32xf32>
    %124 = vector.shape_cast %123 : vector<32xf32> to vector<32x1xf32>
    %cst_59 = arith.constant 1.280000e+02 : f32
    %125 = vector.broadcast %cst_59 : f32 to vector<32x1xf32>
    %126 = arith.divf %124, %125 : vector<32x1xf32>
    %127 = vector.broadcast %126 : vector<32x1xf32> to vector<32x128xf32>
    %128 = arith.subf %96, %127 : vector<32x128xf32>
    %129 = arith.mulf %128, %128 : vector<32x128xf32>
    %cst_60 = arith.constant dense<0.000000e+00> : vector<32xf32>
    %130 = vector.multi_reduction <add>, %129, %cst_60 [1] : vector<32x128xf32> to vector<32xf32>
    %131 = vector.shape_cast %130 : vector<32xf32> to vector<32x1xf32>
    %cst_61 = arith.constant 1.280000e+02 : f32
    %132 = vector.broadcast %cst_61 : f32 to vector<32x1xf32>
    %133 = arith.divf %131, %132 : vector<32x1xf32>
    %134 = vector.broadcast %126 : vector<32x1xf32> to vector<32x128xf32>
    %135 = arith.subf %96, %134 : vector<32x128xf32>
    %cst_62 = arith.constant 9.99999974E-6 : f32
    %136 = vector.broadcast %cst_62 : f32 to vector<32x1xf32>
    %137 = arith.addf %133, %136 : vector<32x1xf32>
    %138 = math.rsqrt %137 : vector<32x1xf32>
    %139 = vector.broadcast %138 : vector<32x1xf32> to vector<32x128xf32>
    %140 = arith.mulf %135, %139 : vector<32x128xf32>
    %141 = vector.broadcast %121 : vector<1x128xf32> to vector<32x128xf32>
    %142 = arith.mulf %140, %141 : vector<32x128xf32>
    %143 = vector.broadcast %122 : vector<1x128xf32> to vector<32x128xf32>
    %144 = arith.addf %142, %143 : vector<32x128xf32>
    %145 = vector.shape_cast %120 : vector<32x128xf32> to vector<32x1x128xf32>
    %c0_63 = arith.constant 0 : index
    %c0_64 = arith.constant 0 : index
    %c0_65 = arith.constant 0 : index
    %146 = vector.load %arg16[%c0_63, %c0_64, %c0_65] : memref<32x2x128xf32, #tpu.memory_space<vmem>>, vector<32x1x128xf32>
    tpu.vector_store %arg16[%c0_63, %c0_64, %c0_65], %145 {strides = array<i32>} : memref<32x2x128xf32, #tpu.memory_space<vmem>>, vector<32x1x128xf32>,
    %147 = vector.shape_cast %144 : vector<32x128xf32> to vector<32x1x128xf32>
    %c0_66 = arith.constant 0 : index
    %c1 = arith.constant 1 : index
    %c0_67 = arith.constant 0 : index
    %148 = vector.load %arg16[%c0_66, %c1, %c0_67] : memref<32x2x128xf32, #tpu.memory_space<vmem>>, vector<32x1x128xf32>
    tpu.vector_store %arg16[%c0_66, %c1, %c0_67], %147 {strides = array<i32>} : memref<32x2x128xf32, #tpu.memory_space<vmem>>, vector<32x1x128xf32>,
    return
  }
  func.func @transform_0(%arg0: i32) -> (i32, i32) {
    %c0_i32 = arith.constant 0 : i32
    %c0_i32_0 = arith.constant 0 : i32
    return %arg0, %c0_i32 : i32, i32
  }
  func.func @transform_1(%arg0: i32) -> (i32, i32) {
    %c0_i32 = arith.constant 0 : i32
    %c0_i32_0 = arith.constant 0 : i32
    return %arg0, %c0_i32 : i32, i32
  }
  func.func @transform_2(%arg0: i32) -> (i32, i32) {
    %c0_i32 = arith.constant 0 : i32
    %c0_i32_0 = arith.constant 0 : i32
    return %arg0, %c0_i32 : i32, i32
  }
  func.func @transform_3(%arg0: i32) -> (i32, i32) {
    %c0_i32 = arith.constant 0 : i32
    %c0_i32_0 = arith.constant 0 : i32
    %c0_i32_1 = arith.constant 0 : i32
    return %c0_i32, %c0_i32_0 : i32, i32
  }
  func.func @transform_4(%arg0: i32) -> (i32, i32) {
    %c0_i32 = arith.constant 0 : i32
    %c0_i32_0 = arith.constant 0 : i32
    %c0_i32_1 = arith.constant 0 : i32
    return %c0_i32, %c0_i32_0 : i32, i32
  }
  func.func @transform_5(%arg0: i32) -> (i32, i32) {
    %c0_i32 = arith.constant 0 : i32
    %c0_i32_0 = arith.constant 0 : i32
    %c0_i32_1 = arith.constant 0 : i32
    return %c0_i32, %c0_i32_0 : i32, i32
  }
  func.func @transform_6(%arg0: i32) -> (i32, i32) {
    %c0_i32 = arith.constant 0 : i32
    %c0_i32_0 = arith.constant 0 : i32
    %c0_i32_1 = arith.constant 0 : i32
    return %c0_i32, %c0_i32_0 : i32, i32
  }
  func.func @transform_7(%arg0: i32) -> (i32, i32) {
    %c0_i32 = arith.constant 0 : i32
    %c0_i32_0 = arith.constant 0 : i32
    %c0_i32_1 = arith.constant 0 : i32
    return %c0_i32, %c0_i32_0 : i32, i32
  }
  func.func @transform_8(%arg0: i32) -> (i32, i32) {
    %c0_i32 = arith.constant 0 : i32
    %c0_i32_0 = arith.constant 0 : i32
    %c0_i32_1 = arith.constant 0 : i32
    return %c0_i32, %c0_i32_0 : i32, i32
  }
  func.func @transform_9(%arg0: i32) -> (i32, i32) {
    %c0_i32 = arith.constant 0 : i32
    %c0_i32_0 = arith.constant 0 : i32
    %c0_i32_1 = arith.constant 0 : i32
    return %c0_i32, %c0_i32_0 : i32, i32
  }
  func.func @transform_10(%arg0: i32) -> (i32, i32) {
    %c0_i32 = arith.constant 0 : i32
    %c0_i32_0 = arith.constant 0 : i32
    %c0_i32_1 = arith.constant 0 : i32
    return %c0_i32, %c0_i32_0 : i32, i32
  }
  func.func @transform_11(%arg0: i32) -> (i32, i32) {
    %c0_i32 = arith.constant 0 : i32
    %c0_i32_0 = arith.constant 0 : i32
    %c0_i32_1 = arith.constant 0 : i32
    return %c0_i32, %c0_i32_0 : i32, i32
  }
  func.func @transform_12(%arg0: i32) -> (i32, i32) {
    %c0_i32 = arith.constant 0 : i32
    %c0_i32_0 = arith.constant 0 : i32
    %c0_i32_1 = arith.constant 0 : i32
    return %c0_i32, %c0_i32_0 : i32, i32
  }
  func.func @transform_13(%arg0: i32) -> (i32, i32) {
    %c0_i32 = arith.constant 0 : i32
    %c0_i32_0 = arith.constant 0 : i32
    %c0_i32_1 = arith.constant 0 : i32
    return %c0_i32, %c0_i32_0 : i32, i32
  }
  func.func @transform_14(%arg0: i32) -> (i32, i32) {
    %c0_i32 = arith.constant 0 : i32
    %c0_i32_0 = arith.constant 0 : i32
    %c0_i32_1 = arith.constant 0 : i32
    return %c0_i32, %c0_i32_0 : i32, i32
  }
  func.func @transform_15(%arg0: i32) -> (i32, i32, i32) {
    %c0_i32 = arith.constant 0 : i32
    %c0_i32_0 = arith.constant 0 : i32
    %c0_i32_1 = arith.constant 0 : i32
    return %arg0, %c0_i32, %c0_i32_0 : i32, i32, i32
  }
}

module attributes {stable_mosaic.version = 11 : i64} {
  func.func @_head_kernel(%arg0: i32, %arg1: memref<8x8x128xf32, #tpu.memory_space<vmem>>, %arg2: memref<128x128xbf16, #tpu.memory_space<vmem>>, %arg3: memref<1x128xf32, #tpu.memory_space<vmem>>, %arg4: memref<128x6xbf16, #tpu.memory_space<vmem>>, %arg5: memref<1x6xf32, #tpu.memory_space<vmem>>, %arg6: memref<8x6xf32, #tpu.memory_space<vmem>>) attributes {dimension_semantics = [#tpu.dimension_semantics<arbitrary>], iteration_bounds = array<i64: 1>, scalar_prefetch = 0 : i64, scratch_operands = 0 : i64, tpu.core_type = #tpu.core_type<tc>, window_params = [{transform_indices = @transform_0, window_bounds = array<i64: 8, 8, 128>}, {pipeline_mode = #tpu.pipeline_mode<synchronous>, transform_indices = @transform_1, window_bounds = array<i64: 128, 128>}, {pipeline_mode = #tpu.pipeline_mode<synchronous>, transform_indices = @transform_2, window_bounds = array<i64: 1, 128>}, {pipeline_mode = #tpu.pipeline_mode<synchronous>, transform_indices = @transform_3, window_bounds = array<i64: 128, 6>}, {pipeline_mode = #tpu.pipeline_mode<synchronous>, transform_indices = @transform_4, window_bounds = array<i64: 1, 6>}, {pipeline_mode = #tpu.pipeline_mode<synchronous>, transform_indices = @transform_5, window_bounds = array<i64: 8, 6>}]} {
    %c0 = arith.constant 0 : index
    %c6 = arith.constant 6 : index
    %c0_0 = arith.constant 0 : index
    %0 = vector.load %arg1[%c0, %c6, %c0_0] : memref<8x8x128xf32, #tpu.memory_space<vmem>>, vector<8x1x128xf32>
    %1 = vector.shape_cast %0 : vector<8x1x128xf32> to vector<8x128xf32>
    %c0_1 = arith.constant 0 : index
    %c0_2 = arith.constant 0 : index
    %2 = vector.load %arg2[%c0_1, %c0_2] : memref<128x128xbf16, #tpu.memory_space<vmem>>, vector<128x128xbf16>
    %3 = arith.truncf %1 : vector<8x128xf32> to vector<8x128xbf16>
    %cst = arith.constant dense<0.000000e+00> : vector<8x128xf32>
    %4 = tpu.matmul %3, %2, %cst {dimension_numbers = #tpu.dot_dimension_numbers<[1], [0], [0], [1], [0, 0, 1, 1], [], []>} : vector<8x128xbf16>, vector<128x128xbf16>, vector<8x128xf32> -> vector<8x128xf32>
    %c0_3 = arith.constant 0 : index
    %c0_4 = arith.constant 0 : index
    %5 = vector.load %arg3[%c0_3, %c0_4] : memref<1x128xf32, #tpu.memory_space<vmem>>, vector<1x128xf32>
    %6 = vector.broadcast %5 : vector<1x128xf32> to vector<8x128xf32>
    %7 = arith.addf %4, %6 : vector<8x128xf32>
    %cst_5 = arith.constant 5.000000e-01 : f32
    %8 = vector.broadcast %cst_5 : f32 to vector<8x128xf32>
    %9 = arith.mulf %8, %7 : vector<8x128xf32>
    %cst_6 = arith.constant 4.471500e-02 : f32
    %10 = vector.broadcast %cst_6 : f32 to vector<8x128xf32>
    %11 = arith.mulf %10, %7 : vector<8x128xf32>
    %12 = arith.mulf %11, %7 : vector<8x128xf32>
    %13 = arith.mulf %12, %7 : vector<8x128xf32>
    %14 = arith.addf %7, %13 : vector<8x128xf32>
    %cst_7 = arith.constant 0.797884583 : f32
    %15 = vector.broadcast %cst_7 : f32 to vector<8x128xf32>
    %16 = arith.mulf %15, %14 : vector<8x128xf32>
    %17 = math.tanh %16 : vector<8x128xf32>
    %cst_8 = arith.constant 1.000000e+00 : f32
    %18 = vector.broadcast %cst_8 : f32 to vector<8x128xf32>
    %19 = arith.addf %18, %17 : vector<8x128xf32>
    %20 = arith.mulf %9, %19 : vector<8x128xf32>
    %c0_9 = arith.constant 0 : index
    %c0_10 = arith.constant 0 : index
    %21 = vector.load %arg4[%c0_9, %c0_10] : memref<128x6xbf16, #tpu.memory_space<vmem>>, vector<128x6xbf16>
    %22 = arith.truncf %20 : vector<8x128xf32> to vector<8x128xbf16>
    %cst_11 = arith.constant dense<0.000000e+00> : vector<8x6xf32>
    %23 = tpu.matmul %22, %21, %cst_11 {dimension_numbers = #tpu.dot_dimension_numbers<[1], [0], [0], [1], [0, 0, 1, 1], [], []>} : vector<8x128xbf16>, vector<128x6xbf16>, vector<8x6xf32> -> vector<8x6xf32>
    %c0_12 = arith.constant 0 : index
    %c0_13 = arith.constant 0 : index
    %24 = vector.load %arg5[%c0_12, %c0_13] : memref<1x6xf32, #tpu.memory_space<vmem>>, vector<1x6xf32>
    %25 = vector.broadcast %24 : vector<1x6xf32> to vector<8x6xf32>
    %26 = arith.addf %23, %25 : vector<8x6xf32>
    %c0_14 = arith.constant 0 : index
    %c0_15 = arith.constant 0 : index
    %27 = vector.load %arg6[%c0_14, %c0_15] : memref<8x6xf32, #tpu.memory_space<vmem>>, vector<8x6xf32>
    tpu.vector_store %arg6[%c0_14, %c0_15], %26 {strides = array<i32>} : memref<8x6xf32, #tpu.memory_space<vmem>>, vector<8x6xf32>,
    return
  }
  func.func @transform_0(%arg0: i32) -> (i32, i32, i32) {
    %c0_i32 = arith.constant 0 : i32
    %c1_i32 = arith.constant 1 : i32
    %c0_i32_0 = arith.constant 0 : i32
    %c0_i32_1 = arith.constant 0 : i32
    return %c0_i32, %c1_i32, %c0_i32_0 : i32, i32, i32
  }
  func.func @transform_1(%arg0: i32) -> (i32, i32) {
    %c0_i32 = arith.constant 0 : i32
    %c0_i32_0 = arith.constant 0 : i32
    %c0_i32_1 = arith.constant 0 : i32
    return %c0_i32, %c0_i32_0 : i32, i32
  }
  func.func @transform_2(%arg0: i32) -> (i32, i32) {
    %c0_i32 = arith.constant 0 : i32
    %c0_i32_0 = arith.constant 0 : i32
    %c0_i32_1 = arith.constant 0 : i32
    return %c0_i32, %c0_i32_0 : i32, i32
  }
  func.func @transform_3(%arg0: i32) -> (i32, i32) {
    %c0_i32 = arith.constant 0 : i32
    %c0_i32_0 = arith.constant 0 : i32
    %c0_i32_1 = arith.constant 0 : i32
    return %c0_i32, %c0_i32_0 : i32, i32
  }
  func.func @transform_4(%arg0: i32) -> (i32, i32) {
    %c0_i32 = arith.constant 0 : i32
    %c0_i32_0 = arith.constant 0 : i32
    %c0_i32_1 = arith.constant 0 : i32
    return %c0_i32, %c0_i32_0 : i32, i32
  }
  func.func @transform_5(%arg0: i32) -> (i32, i32) {
    %c0_i32 = arith.constant 0 : i32
    %c0_i32_0 = arith.constant 0 : i32
    %c0_i32_1 = arith.constant 0 : i32
    return %c0_i32, %c0_i32_0 : i32, i32
  }
}

module attributes {stable_mosaic.version = 11 : i64} {
  func.func @_blocks_kernel(%arg0: i32, %arg1: i32, %arg2: memref<4x16x128xf32, #tpu.memory_space<vmem>>, %arg3: memref<1x1x128xf32, #tpu.memory_space<vmem>>, %arg4: memref<1x1x128xf32, #tpu.memory_space<vmem>>, %arg5: memref<1x128x384xbf16, #tpu.memory_space<vmem>>, %arg6: memref<1x1x384xf32, #tpu.memory_space<vmem>>, %arg7: memref<1x128x128xbf16, #tpu.memory_space<vmem>>, %arg8: memref<1x1x128xf32, #tpu.memory_space<vmem>>, %arg9: memref<1x1x128xf32, #tpu.memory_space<vmem>>, %arg10: memref<1x1x128xf32, #tpu.memory_space<vmem>>, %arg11: memref<1x128x512xbf16, #tpu.memory_space<vmem>>, %arg12: memref<1x1x512xf32, #tpu.memory_space<vmem>>, %arg13: memref<1x512x128xbf16, #tpu.memory_space<vmem>>, %arg14: memref<1x1x128xf32, #tpu.memory_space<vmem>>, %arg15: memref<4x16x128xf32, #tpu.memory_space<vmem>>, %arg16: memref<4x16x128xf32, #tpu.memory_space<vmem>>) attributes {dimension_semantics = [#tpu.dimension_semantics<parallel>, #tpu.dimension_semantics<arbitrary>], iteration_bounds = array<i64: 2, 2>, scalar_prefetch = 0 : i64, scratch_operands = 1 : i64, tpu.core_type = #tpu.core_type<tc>, window_params = [{transform_indices = @transform_0, window_bounds = array<i64: 4, 16, 128>}, {transform_indices = @transform_1, window_bounds = array<i64: 1, 1, 128>}, {transform_indices = @transform_2, window_bounds = array<i64: 1, 1, 128>}, {transform_indices = @transform_3, window_bounds = array<i64: 1, 128, 384>}, {transform_indices = @transform_4, window_bounds = array<i64: 1, 1, 384>}, {transform_indices = @transform_5, window_bounds = array<i64: 1, 128, 128>}, {transform_indices = @transform_6, window_bounds = array<i64: 1, 1, 128>}, {transform_indices = @transform_7, window_bounds = array<i64: 1, 1, 128>}, {transform_indices = @transform_8, window_bounds = array<i64: 1, 1, 128>}, {transform_indices = @transform_9, window_bounds = array<i64: 1, 128, 512>}, {transform_indices = @transform_10, window_bounds = array<i64: 1, 1, 512>}, {transform_indices = @transform_11, window_bounds = array<i64: 1, 512, 128>}, {transform_indices = @transform_12, window_bounds = array<i64: 1, 1, 128>}, {transform_indices = @transform_13, window_bounds = array<i64: 4, 16, 128>}]} {
    %c0_i32 = arith.constant 0 : i32
    %0 = arith.cmpi eq, %arg1, %c0_i32 : i32
    %1 = arith.extui %0 : i1 to i32
    %c0_i32_0 = arith.constant 0 : i32
    %2 = arith.cmpi ne, %1, %c0_i32_0 : i32
    scf.if %2 {
      %c0_67 = arith.constant 0 : index
      %c0_68 = arith.constant 0 : index
      %c0_69 = arith.constant 0 : index
      %179 = vector.load %arg2[%c0_67, %c0_68, %c0_69] : memref<4x16x128xf32, #tpu.memory_space<vmem>>, vector<4x16x128xf32>
      %c0_70 = arith.constant 0 : index
      %c0_71 = arith.constant 0 : index
      %c0_72 = arith.constant 0 : index
      %180 = vector.load %arg16[%c0_70, %c0_71, %c0_72] : memref<4x16x128xf32, #tpu.memory_space<vmem>>, vector<4x16x128xf32>
      tpu.vector_store %arg16[%c0_70, %c0_71, %c0_72], %179 {strides = array<i32>} : memref<4x16x128xf32, #tpu.memory_space<vmem>>, vector<4x16x128xf32>,
    } else {
    }
    %c0 = arith.constant 0 : index
    %c0_1 = arith.constant 0 : index
    %c0_2 = arith.constant 0 : index
    %3 = vector.load %arg16[%c0, %c0_1, %c0_2] : memref<4x16x128xf32, #tpu.memory_space<vmem>>, vector<4x16x128xf32>
    %4 = vector.shape_cast %3 : vector<4x16x128xf32> to vector<64x128xf32>
    %c0_3 = arith.constant 0 : index
    %c0_4 = arith.constant 0 : index
    %c0_5 = arith.constant 0 : index
    %5 = vector.load %arg3[%c0_3, %c0_4, %c0_5] : memref<1x1x128xf32, #tpu.memory_space<vmem>>, vector<1x1x128xf32>
    %6 = vector.shape_cast %5 : vector<1x1x128xf32> to vector<1x128xf32>
    %c0_6 = arith.constant 0 : index
    %c0_7 = arith.constant 0 : index
    %c0_8 = arith.constant 0 : index
    %7 = vector.load %arg4[%c0_6, %c0_7, %c0_8] : memref<1x1x128xf32, #tpu.memory_space<vmem>>, vector<1x1x128xf32>
    %8 = vector.shape_cast %7 : vector<1x1x128xf32> to vector<1x128xf32>
    %cst = arith.constant dense<0.000000e+00> : vector<64xf32>
    %9 = vector.multi_reduction <add>, %4, %cst [1] : vector<64x128xf32> to vector<64xf32>
    %10 = vector.shape_cast %9 : vector<64xf32> to vector<64x1xf32>
    %cst_9 = arith.constant 1.280000e+02 : f32
    %11 = vector.broadcast %cst_9 : f32 to vector<64x1xf32>
    %12 = arith.divf %10, %11 : vector<64x1xf32>
    %13 = vector.broadcast %12 : vector<64x1xf32> to vector<64x128xf32>
    %14 = arith.subf %4, %13 : vector<64x128xf32>
    %15 = arith.mulf %14, %14 : vector<64x128xf32>
    %cst_10 = arith.constant dense<0.000000e+00> : vector<64xf32>
    %16 = vector.multi_reduction <add>, %15, %cst_10 [1] : vector<64x128xf32> to vector<64xf32>
    %17 = vector.shape_cast %16 : vector<64xf32> to vector<64x1xf32>
    %cst_11 = arith.constant 1.280000e+02 : f32
    %18 = vector.broadcast %cst_11 : f32 to vector<64x1xf32>
    %19 = arith.divf %17, %18 : vector<64x1xf32>
    %20 = vector.broadcast %12 : vector<64x1xf32> to vector<64x128xf32>
    %21 = arith.subf %4, %20 : vector<64x128xf32>
    %cst_12 = arith.constant 9.99999974E-6 : f32
    %22 = vector.broadcast %cst_12 : f32 to vector<64x1xf32>
    %23 = arith.addf %19, %22 : vector<64x1xf32>
    %24 = math.rsqrt %23 : vector<64x1xf32>
    %25 = vector.broadcast %24 : vector<64x1xf32> to vector<64x128xf32>
    %26 = arith.mulf %21, %25 : vector<64x128xf32>
    %27 = vector.broadcast %6 : vector<1x128xf32> to vector<64x128xf32>
    %28 = arith.mulf %26, %27 : vector<64x128xf32>
    %29 = vector.broadcast %8 : vector<1x128xf32> to vector<64x128xf32>
    %30 = arith.addf %28, %29 : vector<64x128xf32>
    %c0_13 = arith.constant 0 : index
    %c0_14 = arith.constant 0 : index
    %c0_15 = arith.constant 0 : index
    %31 = vector.load %arg5[%c0_13, %c0_14, %c0_15] : memref<1x128x384xbf16, #tpu.memory_space<vmem>>, vector<1x128x384xbf16>
    %32 = vector.shape_cast %31 : vector<1x128x384xbf16> to vector<128x384xbf16>
    %33 = arith.truncf %30 : vector<64x128xf32> to vector<64x128xbf16>
    %cst_16 = arith.constant dense<0.000000e+00> : vector<64x384xf32>
    %34 = tpu.matmul %33, %32, %cst_16 {dimension_numbers = #tpu.dot_dimension_numbers<[1], [0], [0], [1], [0, 0, 1, 1], [], []>} : vector<64x128xbf16>, vector<128x384xbf16>, vector<64x384xf32> -> vector<64x384xf32>
    %c0_17 = arith.constant 0 : index
    %c0_18 = arith.constant 0 : index
    %c0_19 = arith.constant 0 : index
    %35 = vector.load %arg6[%c0_17, %c0_18, %c0_19] : memref<1x1x384xf32, #tpu.memory_space<vmem>>, vector<1x1x384xf32>
    %36 = vector.shape_cast %35 : vector<1x1x384xf32> to vector<1x384xf32>
    %37 = vector.broadcast %36 : vector<1x384xf32> to vector<64x384xf32>
    %38 = arith.addf %34, %37 : vector<64x384xf32>
    %39 = tpu.iota {dimensions = array<i32: 0>} : vector<16x16xi32>
    %40 = tpu.iota {dimensions = array<i32: 1>} : vector<16x16xi32>
    %41 = arith.cmpi sle, %40, %39 : vector<16x16xi32>
    %cst_20 = arith.constant 0.000000e+00 : f32
    %cst_21 = arith.constant -1.000000e+30 : f32
    %42 = vector.broadcast %cst_20 : f32 to vector<16x16xf32>
    %43 = vector.broadcast %cst_21 : f32 to vector<16x16xf32>
    %44 = arith.select %41, %42, %43 : vector<16x16xi1>, vector<16x16xf32>
    %45 = vector.extract_strided_slice %38 {offsets = [0, 0], sizes = [64, 128], strides = [1, 1]} : vector<64x384xf32> to vector<64x128xf32>
    %46 = vector.extract_strided_slice %45 {offsets = [0, 0], sizes = [64, 32], strides = [1, 1]} : vector<64x128xf32> to vector<64x32xf32>
    %47 = vector.extract_strided_slice %45 {offsets = [0, 32], sizes = [64, 32], strides = [1, 1]} : vector<64x128xf32> to vector<64x32xf32>
    %48 = vector.extract_strided_slice %45 {offsets = [0, 64], sizes = [64, 32], strides = [1, 1]} : vector<64x128xf32> to vector<64x32xf32>
    %49 = vector.extract_strided_slice %45 {offsets = [0, 96], sizes = [64, 32], strides = [1, 1]} : vector<64x128xf32> to vector<64x32xf32>
    %50 = vector.shape_cast %46 : vector<64x32xf32> to vector<1x64x32xf32>
    %51 = vector.shape_cast %47 : vector<64x32xf32> to vector<1x64x32xf32>
    %52 = vector.shape_cast %48 : vector<64x32xf32> to vector<1x64x32xf32>
    %53 = vector.shape_cast %49 : vector<64x32xf32> to vector<1x64x32xf32>
    %54 = tpu.concatenate %50, %51, %52, %53 in 0 : vector<1x64x32xf32>, vector<1x64x32xf32>, vector<1x64x32xf32>, vector<1x64x32xf32> -> vector<4x64x32xf32>
    %55 = vector.shape_cast %54 : vector<4x64x32xf32> to vector<16x16x32xf32>
    %56 = vector.extract_strided_slice %38 {offsets = [0, 128], sizes = [64, 128], strides = [1, 1]} : vector<64x384xf32> to vector<64x128xf32>
    %57 = vector.extract_strided_slice %56 {offsets = [0, 0], sizes = [64, 32], strides = [1, 1]} : vector<64x128xf32> to vector<64x32xf32>
    %58 = vector.extract_strided_slice %56 {offsets = [0, 32], sizes = [64, 32], strides = [1, 1]} : vector<64x128xf32> to vector<64x32xf32>
    %59 = vector.extract_strided_slice %56 {offsets = [0, 64], sizes = [64, 32], strides = [1, 1]} : vector<64x128xf32> to vector<64x32xf32>
    %60 = vector.extract_strided_slice %56 {offsets = [0, 96], sizes = [64, 32], strides = [1, 1]} : vector<64x128xf32> to vector<64x32xf32>
    %61 = vector.shape_cast %57 : vector<64x32xf32> to vector<1x64x32xf32>
    %62 = vector.shape_cast %58 : vector<64x32xf32> to vector<1x64x32xf32>
    %63 = vector.shape_cast %59 : vector<64x32xf32> to vector<1x64x32xf32>
    %64 = vector.shape_cast %60 : vector<64x32xf32> to vector<1x64x32xf32>
    %65 = tpu.concatenate %61, %62, %63, %64 in 0 : vector<1x64x32xf32>, vector<1x64x32xf32>, vector<1x64x32xf32>, vector<1x64x32xf32> -> vector<4x64x32xf32>
    %66 = vector.shape_cast %65 : vector<4x64x32xf32> to vector<16x16x32xf32>
    %67 = vector.extract_strided_slice %38 {offsets = [0, 256], sizes = [64, 128], strides = [1, 1]} : vector<64x384xf32> to vector<64x128xf32>
    %68 = vector.extract_strided_slice %67 {offsets = [0, 0], sizes = [64, 32], strides = [1, 1]} : vector<64x128xf32> to vector<64x32xf32>
    %69 = vector.extract_strided_slice %67 {offsets = [0, 32], sizes = [64, 32], strides = [1, 1]} : vector<64x128xf32> to vector<64x32xf32>
    %70 = vector.extract_strided_slice %67 {offsets = [0, 64], sizes = [64, 32], strides = [1, 1]} : vector<64x128xf32> to vector<64x32xf32>
    %71 = vector.extract_strided_slice %67 {offsets = [0, 96], sizes = [64, 32], strides = [1, 1]} : vector<64x128xf32> to vector<64x32xf32>
    %72 = vector.shape_cast %68 : vector<64x32xf32> to vector<1x64x32xf32>
    %73 = vector.shape_cast %69 : vector<64x32xf32> to vector<1x64x32xf32>
    %74 = vector.shape_cast %70 : vector<64x32xf32> to vector<1x64x32xf32>
    %75 = vector.shape_cast %71 : vector<64x32xf32> to vector<1x64x32xf32>
    %76 = tpu.concatenate %72, %73, %74, %75 in 0 : vector<1x64x32xf32>, vector<1x64x32xf32>, vector<1x64x32xf32>, vector<1x64x32xf32> -> vector<4x64x32xf32>
    %77 = vector.shape_cast %76 : vector<4x64x32xf32> to vector<16x16x32xf32>
    %78 = arith.truncf %55 : vector<16x16x32xf32> to vector<16x16x32xbf16>
    %79 = arith.truncf %66 : vector<16x16x32xf32> to vector<16x16x32xbf16>
    "tpu.trace_start"() <{level = 10 : i32, message = "bqd,bkd->bqk"}> : () -> ()
    %cst_22 = arith.constant dense<0.000000e+00> : vector<16x16x16xf32>
    %80 = tpu.matmul %78, %79, %cst_22 {dimension_numbers = #tpu.dot_dimension_numbers<[2], [2], [1], [1], [0, 0, 0, 1, 1, 1], [0], [0]>} : vector<16x16x32xbf16>, vector<16x16x32xbf16>, vector<16x16x16xf32> -> vector<16x16x16xf32>
    "tpu.trace_stop"() : () -> ()
    %cst_23 = arith.constant 0.176776692 : f32
    %81 = vector.broadcast %cst_23 : f32 to vector<16x16x16xf32>
    %82 = arith.mulf %80, %81 : vector<16x16x16xf32>
    %83 = vector.shape_cast %44 : vector<16x16xf32> to vector<1x16x16xf32>
    %84 = vector.broadcast %83 : vector<1x16x16xf32> to vector<16x16x16xf32>
    %85 = arith.addf %82, %84 : vector<16x16x16xf32>
    %cst_24 = arith.constant dense<0xFF800000> : vector<16x16xf32>
    %86 = vector.multi_reduction <maximumf>, %85, %cst_24 [2] : vector<16x16x16xf32> to vector<16x16xf32>
    %87 = vector.shape_cast %86 : vector<16x16xf32> to vector<16x16x1xf32>
    %88 = vector.broadcast %87 : vector<16x16x1xf32> to vector<16x16x16xf32>
    %89 = arith.subf %85, %88 : vector<16x16x16xf32>
    %90 = math.exp %89 : vector<16x16x16xf32>
    %cst_25 = arith.constant dense<0.000000e+00> : vector<16x16xf32>
    %91 = vector.multi_reduction <add>, %90, %cst_25 [2] : vector<16x16x16xf32> to vector<16x16xf32>
    %92 = vector.shape_cast %91 : vector<16x16xf32> to vector<16x16x1xf32>
    %93 = tpu.reciprocal %92 {approx = true} : vector<16x16x1xf32> -> vector<16x16x1xf32>
    %94 = vector.broadcast %93 : vector<16x16x1xf32> to vector<16x16x16xf32>
    %95 = arith.mulf %90, %94 : vector<16x16x16xf32>
    %96 = arith.truncf %95 : vector<16x16x16xf32> to vector<16x16x16xbf16>
    %97 = arith.truncf %77 : vector<16x16x32xf32> to vector<16x16x32xbf16>
    "tpu.trace_start"() <{level = 10 : i32, message = "bqk,bkd->bqd"}> : () -> ()
    %cst_26 = arith.constant dense<0.000000e+00> : vector<16x16x32xf32>
    %98 = tpu.matmul %96, %97, %cst_26 {dimension_numbers = #tpu.dot_dimension_numbers<[2], [1], [1], [2], [0, 0, 0, 1, 1, 2], [0], [0]>} : vector<16x16x16xbf16>, vector<16x16x32xbf16>, vector<16x16x32xf32> -> vector<16x16x32xf32>
    "tpu.trace_stop"() : () -> ()
    %99 = vector.shape_cast %98 : vector<16x16x32xf32> to vector<4x64x32xf32>
    %100 = vector.extract_strided_slice %99 {offsets = [0, 0, 0], sizes = [1, 64, 32], strides = [1, 1, 1]} : vector<4x64x32xf32> to vector<1x64x32xf32>
    %101 = vector.shape_cast %100 : vector<1x64x32xf32> to vector<64x32xf32>
    %102 = vector.extract_strided_slice %99 {offsets = [1, 0, 0], sizes = [1, 64, 32], strides = [1, 1, 1]} : vector<4x64x32xf32> to vector<1x64x32xf32>
    %103 = vector.shape_cast %102 : vector<1x64x32xf32> to vector<64x32xf32>
    %104 = vector.extract_strided_slice %99 {offsets = [2, 0, 0], sizes = [1, 64, 32], strides = [1, 1, 1]} : vector<4x64x32xf32> to vector<1x64x32xf32>
    %105 = vector.shape_cast %104 : vector<1x64x32xf32> to vector<64x32xf32>
    %106 = vector.extract_strided_slice %99 {offsets = [3, 0, 0], sizes = [1, 64, 32], strides = [1, 1, 1]} : vector<4x64x32xf32> to vector<1x64x32xf32>
    %107 = vector.shape_cast %106 : vector<1x64x32xf32> to vector<64x32xf32>
    %108 = tpu.concatenate %101, %103, %105, %107 in 1 : vector<64x32xf32>, vector<64x32xf32>, vector<64x32xf32>, vector<64x32xf32> -> vector<64x128xf32>
    %c0_27 = arith.constant 0 : index
    %c0_28 = arith.constant 0 : index
    %c0_29 = arith.constant 0 : index
    %109 = vector.load %arg7[%c0_27, %c0_28, %c0_29] : memref<1x128x128xbf16, #tpu.memory_space<vmem>>, vector<1x128x128xbf16>
    %110 = vector.shape_cast %109 : vector<1x128x128xbf16> to vector<128x128xbf16>
    %111 = arith.truncf %108 : vector<64x128xf32> to vector<64x128xbf16>
    %cst_30 = arith.constant dense<0.000000e+00> : vector<64x128xf32>
    %112 = tpu.matmul %111, %110, %cst_30 {dimension_numbers = #tpu.dot_dimension_numbers<[1], [0], [0], [1], [0, 0, 1, 1], [], []>} : vector<64x128xbf16>, vector<128x128xbf16>, vector<64x128xf32> -> vector<64x128xf32>
    %113 = arith.addf %4, %112 : vector<64x128xf32>
    %c0_31 = arith.constant 0 : index
    %c0_32 = arith.constant 0 : index
    %c0_33 = arith.constant 0 : index
    %114 = vector.load %arg8[%c0_31, %c0_32, %c0_33] : memref<1x1x128xf32, #tpu.memory_space<vmem>>, vector<1x1x128xf32>
    %115 = vector.shape_cast %114 : vector<1x1x128xf32> to vector<1x128xf32>
    %116 = vector.broadcast %115 : vector<1x128xf32> to vector<64x128xf32>
    %117 = arith.addf %113, %116 : vector<64x128xf32>
    %c0_34 = arith.constant 0 : index
    %c0_35 = arith.constant 0 : index
    %c0_36 = arith.constant 0 : index
    %118 = vector.load %arg9[%c0_34, %c0_35, %c0_36] : memref<1x1x128xf32, #tpu.memory_space<vmem>>, vector<1x1x128xf32>
    %119 = vector.shape_cast %118 : vector<1x1x128xf32> to vector<1x128xf32>
    %c0_37 = arith.constant 0 : index
    %c0_38 = arith.constant 0 : index
    %c0_39 = arith.constant 0 : index
    %120 = vector.load %arg10[%c0_37, %c0_38, %c0_39] : memref<1x1x128xf32, #tpu.memory_space<vmem>>, vector<1x1x128xf32>
    %121 = vector.shape_cast %120 : vector<1x1x128xf32> to vector<1x128xf32>
    %cst_40 = arith.constant dense<0.000000e+00> : vector<64xf32>
    %122 = vector.multi_reduction <add>, %117, %cst_40 [1] : vector<64x128xf32> to vector<64xf32>
    %123 = vector.shape_cast %122 : vector<64xf32> to vector<64x1xf32>
    %cst_41 = arith.constant 1.280000e+02 : f32
    %124 = vector.broadcast %cst_41 : f32 to vector<64x1xf32>
    %125 = arith.divf %123, %124 : vector<64x1xf32>
    %126 = vector.broadcast %125 : vector<64x1xf32> to vector<64x128xf32>
    %127 = arith.subf %117, %126 : vector<64x128xf32>
    %128 = arith.mulf %127, %127 : vector<64x128xf32>
    %cst_42 = arith.constant dense<0.000000e+00> : vector<64xf32>
    %129 = vector.multi_reduction <add>, %128, %cst_42 [1] : vector<64x128xf32> to vector<64xf32>
    %130 = vector.shape_cast %129 : vector<64xf32> to vector<64x1xf32>
    %cst_43 = arith.constant 1.280000e+02 : f32
    %131 = vector.broadcast %cst_43 : f32 to vector<64x1xf32>
    %132 = arith.divf %130, %131 : vector<64x1xf32>
    %133 = vector.broadcast %125 : vector<64x1xf32> to vector<64x128xf32>
    %134 = arith.subf %117, %133 : vector<64x128xf32>
    %cst_44 = arith.constant 9.99999974E-6 : f32
    %135 = vector.broadcast %cst_44 : f32 to vector<64x1xf32>
    %136 = arith.addf %132, %135 : vector<64x1xf32>
    %137 = math.rsqrt %136 : vector<64x1xf32>
    %138 = vector.broadcast %137 : vector<64x1xf32> to vector<64x128xf32>
    %139 = arith.mulf %134, %138 : vector<64x128xf32>
    %140 = vector.broadcast %119 : vector<1x128xf32> to vector<64x128xf32>
    %141 = arith.mulf %139, %140 : vector<64x128xf32>
    %142 = vector.broadcast %121 : vector<1x128xf32> to vector<64x128xf32>
    %143 = arith.addf %141, %142 : vector<64x128xf32>
    %c0_45 = arith.constant 0 : index
    %c0_46 = arith.constant 0 : index
    %c0_47 = arith.constant 0 : index
    %144 = vector.load %arg11[%c0_45, %c0_46, %c0_47] : memref<1x128x512xbf16, #tpu.memory_space<vmem>>, vector<1x128x512xbf16>
    %145 = vector.shape_cast %144 : vector<1x128x512xbf16> to vector<128x512xbf16>
    %146 = arith.truncf %143 : vector<64x128xf32> to vector<64x128xbf16>
    %cst_48 = arith.constant dense<0.000000e+00> : vector<64x512xf32>
    %147 = tpu.matmul %146, %145, %cst_48 {dimension_numbers = #tpu.dot_dimension_numbers<[1], [0], [0], [1], [0, 0, 1, 1], [], []>} : vector<64x128xbf16>, vector<128x512xbf16>, vector<64x512xf32> -> vector<64x512xf32>
    %c0_49 = arith.constant 0 : index
    %c0_50 = arith.constant 0 : index
    %c0_51 = arith.constant 0 : index
    %148 = vector.load %arg12[%c0_49, %c0_50, %c0_51] : memref<1x1x512xf32, #tpu.memory_space<vmem>>, vector<1x1x512xf32>
    %149 = vector.shape_cast %148 : vector<1x1x512xf32> to vector<1x512xf32>
    %150 = vector.broadcast %149 : vector<1x512xf32> to vector<64x512xf32>
    %151 = arith.addf %147, %150 : vector<64x512xf32>
    %cst_52 = arith.constant 5.000000e-01 : f32
    %152 = vector.broadcast %cst_52 : f32 to vector<64x512xf32>
    %153 = arith.mulf %152, %151 : vector<64x512xf32>
    %cst_53 = arith.constant 4.471500e-02 : f32
    %154 = vector.broadcast %cst_53 : f32 to vector<64x512xf32>
    %155 = arith.mulf %154, %151 : vector<64x512xf32>
    %156 = arith.mulf %155, %151 : vector<64x512xf32>
    %157 = arith.mulf %156, %151 : vector<64x512xf32>
    %158 = arith.addf %151, %157 : vector<64x512xf32>
    %cst_54 = arith.constant 0.797884583 : f32
    %159 = vector.broadcast %cst_54 : f32 to vector<64x512xf32>
    %160 = arith.mulf %159, %158 : vector<64x512xf32>
    %161 = math.tanh %160 : vector<64x512xf32>
    %cst_55 = arith.constant 1.000000e+00 : f32
    %162 = vector.broadcast %cst_55 : f32 to vector<64x512xf32>
    %163 = arith.addf %162, %161 : vector<64x512xf32>
    %164 = arith.mulf %153, %163 : vector<64x512xf32>
    %c0_56 = arith.constant 0 : index
    %c0_57 = arith.constant 0 : index
    %c0_58 = arith.constant 0 : index
    %165 = vector.load %arg13[%c0_56, %c0_57, %c0_58] : memref<1x512x128xbf16, #tpu.memory_space<vmem>>, vector<1x512x128xbf16>
    %166 = vector.shape_cast %165 : vector<1x512x128xbf16> to vector<512x128xbf16>
    %167 = arith.truncf %164 : vector<64x512xf32> to vector<64x512xbf16>
    %cst_59 = arith.constant dense<0.000000e+00> : vector<64x128xf32>
    %168 = tpu.matmul %167, %166, %cst_59 {dimension_numbers = #tpu.dot_dimension_numbers<[1], [0], [0], [1], [0, 0, 1, 1], [], []>} : vector<64x512xbf16>, vector<512x128xbf16>, vector<64x128xf32> -> vector<64x128xf32>
    %169 = arith.addf %117, %168 : vector<64x128xf32>
    %c0_60 = arith.constant 0 : index
    %c0_61 = arith.constant 0 : index
    %c0_62 = arith.constant 0 : index
    %170 = vector.load %arg14[%c0_60, %c0_61, %c0_62] : memref<1x1x128xf32, #tpu.memory_space<vmem>>, vector<1x1x128xf32>
    %171 = vector.shape_cast %170 : vector<1x1x128xf32> to vector<1x128xf32>
    %172 = vector.broadcast %171 : vector<1x128xf32> to vector<64x128xf32>
    %173 = arith.addf %169, %172 : vector<64x128xf32>
    %174 = vector.shape_cast %173 : vector<64x128xf32> to vector<4x16x128xf32>
    %c0_63 = arith.constant 0 : index
    %c0_64 = arith.constant 0 : index
    %c0_65 = arith.constant 0 : index
    %175 = vector.load %arg16[%c0_63, %c0_64, %c0_65] : memref<4x16x128xf32, #tpu.memory_space<vmem>>, vector<4x16x128xf32>
    tpu.vector_store %arg16[%c0_63, %c0_64, %c0_65], %174 {strides = array<i32>} : memref<4x16x128xf32, #tpu.memory_space<vmem>>, vector<4x16x128xf32>,
    %c1_i32 = arith.constant 1 : i32
    %176 = arith.cmpi eq, %arg1, %c1_i32 : i32
    %177 = arith.extui %176 : i1 to i32
    %c0_i32_66 = arith.constant 0 : i32
    %178 = arith.cmpi ne, %177, %c0_i32_66 : i32
    scf.if %178 {
      %c0_67 = arith.constant 0 : index
      %c0_68 = arith.constant 0 : index
      %c0_69 = arith.constant 0 : index
      %179 = vector.load %arg16[%c0_67, %c0_68, %c0_69] : memref<4x16x128xf32, #tpu.memory_space<vmem>>, vector<4x16x128xf32>
      %c0_70 = arith.constant 0 : index
      %c0_71 = arith.constant 0 : index
      %c0_72 = arith.constant 0 : index
      %180 = vector.load %arg15[%c0_70, %c0_71, %c0_72] : memref<4x16x128xf32, #tpu.memory_space<vmem>>, vector<4x16x128xf32>
      tpu.vector_store %arg15[%c0_70, %c0_71, %c0_72], %179 {strides = array<i32>} : memref<4x16x128xf32, #tpu.memory_space<vmem>>, vector<4x16x128xf32>,
    } else {
    }
    return
  }
  func.func @transform_0(%arg0: i32, %arg1: i32) -> (i32, i32, i32) {
    %c0_i32 = arith.constant 0 : i32
    %c0_i32_0 = arith.constant 0 : i32
    %c0_i32_1 = arith.constant 0 : i32
    return %arg0, %c0_i32, %c0_i32_0 : i32, i32, i32
  }
  func.func @transform_1(%arg0: i32, %arg1: i32) -> (i32, i32, i32) {
    %c0_i32 = arith.constant 0 : i32
    %c0_i32_0 = arith.constant 0 : i32
    %c0_i32_1 = arith.constant 0 : i32
    return %arg1, %c0_i32, %c0_i32_0 : i32, i32, i32
  }
  func.func @transform_2(%arg0: i32, %arg1: i32) -> (i32, i32, i32) {
    %c0_i32 = arith.constant 0 : i32
    %c0_i32_0 = arith.constant 0 : i32
    %c0_i32_1 = arith.constant 0 : i32
    return %arg1, %c0_i32, %c0_i32_0 : i32, i32, i32
  }
  func.func @transform_3(%arg0: i32, %arg1: i32) -> (i32, i32, i32) {
    %c0_i32 = arith.constant 0 : i32
    %c0_i32_0 = arith.constant 0 : i32
    %c0_i32_1 = arith.constant 0 : i32
    return %arg1, %c0_i32, %c0_i32_0 : i32, i32, i32
  }
  func.func @transform_4(%arg0: i32, %arg1: i32) -> (i32, i32, i32) {
    %c0_i32 = arith.constant 0 : i32
    %c0_i32_0 = arith.constant 0 : i32
    %c0_i32_1 = arith.constant 0 : i32
    return %arg1, %c0_i32, %c0_i32_0 : i32, i32, i32
  }
  func.func @transform_5(%arg0: i32, %arg1: i32) -> (i32, i32, i32) {
    %c0_i32 = arith.constant 0 : i32
    %c0_i32_0 = arith.constant 0 : i32
    %c0_i32_1 = arith.constant 0 : i32
    return %arg1, %c0_i32, %c0_i32_0 : i32, i32, i32
  }
  func.func @transform_6(%arg0: i32, %arg1: i32) -> (i32, i32, i32) {
    %c0_i32 = arith.constant 0 : i32
    %c0_i32_0 = arith.constant 0 : i32
    %c0_i32_1 = arith.constant 0 : i32
    return %arg1, %c0_i32, %c0_i32_0 : i32, i32, i32
  }
  func.func @transform_7(%arg0: i32, %arg1: i32) -> (i32, i32, i32) {
    %c0_i32 = arith.constant 0 : i32
    %c0_i32_0 = arith.constant 0 : i32
    %c0_i32_1 = arith.constant 0 : i32
    return %arg1, %c0_i32, %c0_i32_0 : i32, i32, i32
  }
  func.func @transform_8(%arg0: i32, %arg1: i32) -> (i32, i32, i32) {
    %c0_i32 = arith.constant 0 : i32
    %c0_i32_0 = arith.constant 0 : i32
    %c0_i32_1 = arith.constant 0 : i32
    return %arg1, %c0_i32, %c0_i32_0 : i32, i32, i32
  }
  func.func @transform_9(%arg0: i32, %arg1: i32) -> (i32, i32, i32) {
    %c0_i32 = arith.constant 0 : i32
    %c0_i32_0 = arith.constant 0 : i32
    %c0_i32_1 = arith.constant 0 : i32
    return %arg1, %c0_i32, %c0_i32_0 : i32, i32, i32
  }
  func.func @transform_10(%arg0: i32, %arg1: i32) -> (i32, i32, i32) {
    %c0_i32 = arith.constant 0 : i32
    %c0_i32_0 = arith.constant 0 : i32
    %c0_i32_1 = arith.constant 0 : i32
    return %arg1, %c0_i32, %c0_i32_0 : i32, i32, i32
  }
  func.func @transform_11(%arg0: i32, %arg1: i32) -> (i32, i32, i32) {
    %c0_i32 = arith.constant 0 : i32
    %c0_i32_0 = arith.constant 0 : i32
    %c0_i32_1 = arith.constant 0 : i32
    return %arg1, %c0_i32, %c0_i32_0 : i32, i32, i32
  }
  func.func @transform_12(%arg0: i32, %arg1: i32) -> (i32, i32, i32) {
    %c0_i32 = arith.constant 0 : i32
    %c0_i32_0 = arith.constant 0 : i32
    %c0_i32_1 = arith.constant 0 : i32
    return %arg1, %c0_i32, %c0_i32_0 : i32, i32, i32
  }
  func.func @transform_13(%arg0: i32, %arg1: i32) -> (i32, i32, i32) {
    %c0_i32 = arith.constant 0 : i32
    %c0_i32_0 = arith.constant 0 : i32
    %c0_i32_1 = arith.constant 0 : i32
    return %arg0, %c0_i32, %c0_i32_0 : i32, i32, i32
  }
}

</mosaic_0001>

<llo_original>
// kernel: transformer_policy_forward.5
$region0: #{transformer_policy_forward.5}
  #allocation0 [shape = 'u32[]', space=smem, size = 0x4, offset = 0x4, fixed_abs, tag = 'smem constant byte address 0x4 - core index']
  #allocation1 [shape = 'u32[144,128]{1,0:T(1,128)}', space=vmem, size = 0x12000, scoped, tag = 'internal scratch']
  %s0 = inlined_call_operand.vmem [shape: f32[8,16,128], index: 0, kind: input, shape index: {}]
  %s1 = inlined_call_operand.vmem [shape: bf16[128,128], index: 1, kind: input, shape index: {}]
  %s2 = inlined_call_operand.vmem [shape: f32[1,128], index: 2, kind: input, shape index: {}]
  %s3 = inlined_call_operand.vmem [shape: bf16[128,6], index: 3, kind: input, shape index: {}]
  %s4 = inlined_call_operand.vmem [shape: f32[1,6], index: 4, kind: input, shape index: {}]
  %s5 = inlined_call_operand.hbm [shape: f32[8,6], index: 5, kind: output, shape index: {}]
  %s6 = sld [smem:[#allocation0]]
  $region68: #{transformer_policy_forward.5} parent=0
    _
  %s8 = ssub.s32 1, %s6
  %s9 = scalar_select 0, %s8, %s6
  $region1: #{transformer_policy_forward.5} parent=0
    #allocation2 [shape = 'u8[32768]{0}', space=vmem, size = 0x8000, scoped, tag = 'input window, operand 0, single buffered']
    #allocation3 [shape = 'u8[4096]{0}', space=vmem, size = 0x1000, scoped, tag = 'output window, operand 0, single buffered']
    #allocation4 [shape = 's32[1]{0}', space=sflag, size = 0x4, scoped, tag = 'scoped memory for transformer_policy_forward.5']
    %10 = vsyncpa [#allocation4], 0
    // Predicated region
    $region2: #{transformer_policy_forward.5} parent=1 // pred_check
      _
    $region3: #{transformer_policy_forward.5} parent=1 // pred_check_branch
      %12 = sbr.rel (0) target = $region5
    $region4: #{transformer_policy_forward.5} parent=1 // pred_region
      %s13 = scalar_lea.vmem %s0, 8
      // Predicated region
      $region6: #{transformer_policy_forward.5} parent=4 // pred_check
        _
      $region7: #{transformer_policy_forward.5} parent=4 // pred_check_branch
        %15 = sbr.rel (0) target = $region9
      $region8: #{transformer_policy_forward.5} parent=4 // pred_region
        // Predicated region
        $region10: #{transformer_policy_forward.5} parent=8 // pred_check
          _
        $region11: #{transformer_policy_forward.5} parent=8 // pred_check_branch
          %17 = sbr.rel (0) target = $region13
        $region12: #{transformer_policy_forward.5} parent=8 // pred_region
          // Predicated region
          $region25: #{transformer_policy_forward.5} parent=12 // pred_check
            _
          $region26: #{transformer_policy_forward.5} parent=12 // pred_check_branch
            %47 = sbr.rel (0) target = $region28
          $region27: #{transformer_policy_forward.5} parent=12 // pred_region
            loop: start=0, step=1, limit=1
            $region29: #{transformer_policy_forward.5} parent=27 // loop_pre_header
              _
            $region30: #{transformer_policy_forward.5} parent=27 // loop_header
              %s49 = sphi 0, %s53
              %p50 = scmp.ge.s32.totalorder %s49, 1
              %s54 = sphi %s13, %s13
              %s55 = sphi [#allocation2], [#allocation2]
            $region31: #{transformer_policy_forward.5} parent=27 // loop_header_branch
              %52 = sbr.rel (%p50) target = $region35
            $region32: #{transformer_policy_forward.5} parent=27 // loop_body
              %v56 = vld [vmem:[%s54] sm:$0xff]
              %57 = vst [vmem:[%s55] sm:$0xff] %v56
              %v58 = vld [vmem:[%s54 + $0x10] sm:$0xff]
              %59 = vst [vmem:[%s55 + $0x8] sm:$0xff] %v58
              %v60 = vld [vmem:[%s54 + $0x20] sm:$0xff]
              %61 = vst [vmem:[%s55 + $0x10] sm:$0xff] %v60
              %v62 = vld [vmem:[%s54 + $0x30] sm:$0xff]
              %63 = vst [vmem:[%s55 + $0x18] sm:$0xff] %v62
              %v64 = vld [vmem:[%s54 + $0x40] sm:$0xff]
              %65 = vst [vmem:[%s55 + $0x20] sm:$0xff] %v64
              %v66 = vld [vmem:[%s54 + $0x50] sm:$0xff]
              %67 = vst [vmem:[%s55 + $0x28] sm:$0xff] %v66
              %v68 = vld [vmem:[%s54 + $0x60] sm:$0xff]
              %69 = vst [vmem:[%s55 + $0x30] sm:$0xff] %v68
              %v70 = vld [vmem:[%s54 + $0x70] sm:$0xff]
              %71 = vst [vmem:[%s55 + $0x38] sm:$0xff] %v70
            $region33: #{transformer_policy_forward.5} parent=27 // loop_footer
              %s53 = sadd.s32 1, %s49
            $region34: #{transformer_policy_forward.5} parent=27 // loop_footer_branch
              %48 = sbr.rel target = $region30
            $region35: #{transformer_policy_forward.5} parent=27 // loop_exit
              _
          $region28: #{transformer_policy_forward.5} parent=12 // pred_fallthru
            _
          // Predicated region
          $region36: #{transformer_policy_forward.5} parent=12 // pred_check
            _
          $region37: #{transformer_policy_forward.5} parent=12 // pred_check_branch
            %73 = sbr.rel target = $region39
          $region38: #{transformer_policy_forward.5} parent=12 // pred_region
            _
          $region39: #{transformer_policy_forward.5} parent=12 // pred_fallthru
            _
        $region13: #{transformer_policy_forward.5} parent=8 // pred_fallthru
          _
        // Predicated region
        $region14: #{transformer_policy_forward.5} parent=8 // pred_check
          _
        $region15: #{transformer_policy_forward.5} parent=8 // pred_check_branch
          %19 = sbr.rel target = $region17
        $region16: #{transformer_policy_forward.5} parent=8 // pred_region
          %s21 = ssub.s32 256, 1
          loop: start=0, step=1, limit=1
          $region18: #{transformer_policy_forward.5} parent=16 // loop_pre_header
            _
          $region19: #{transformer_policy_forward.5} parent=16 // loop_header
            %s23 = sphi 0, %s27
            %p24 = scmp.ge.s32.totalorder %s23, 1
            %s28 = sphi %s13, %s13
            %s29 = sphi [#allocation2], [#allocation2]
          $region20: #{transformer_policy_forward.5} parent=16 // loop_header_branch
            %26 = sbr.rel (%p24) target = $region24
          $region21: #{transformer_policy_forward.5} parent=16 // loop_body
            %v30 = vld [vmem:[%s28] sm:%s21]
            %31 = vst [vmem:[%s29] sm:%s21] %v30
            %v32 = vld [vmem:[%s28 + $0x10] sm:%s21]
            %33 = vst [vmem:[%s29 + $0x8] sm:%s21] %v32
            %v34 = vld [vmem:[%s28 + $0x20] sm:%s21]
            %35 = vst [vmem:[%s29 + $0x10] sm:%s21] %v34
            %v36 = vld [vmem:[%s28 + $0x30] sm:%s21]
            %37 = vst [vmem:[%s29 + $0x18] sm:%s21] %v36
            %v38 = vld [vmem:[%s28 + $0x40] sm:%s21]
            %39 = vst [vmem:[%s29 + $0x20] sm:%s21] %v38
            %v40 = vld [vmem:[%s28 + $0x50] sm:%s21]
            %41 = vst [vmem:[%s29 + $0x28] sm:%s21] %v40
            %v42 = vld [vmem:[%s28 + $0x60] sm:%s21]
            %43 = vst [vmem:[%s29 + $0x30] sm:%s21] %v42
            %v44 = vld [vmem:[%s28 + $0x70] sm:%s21]
            %45 = vst [vmem:[%s29 + $0x38] sm:%s21] %v44
          $region22: #{transformer_policy_forward.5} parent=16 // loop_footer
            %s27 = sadd.s32 1, %s23
          $region23: #{transformer_policy_forward.5} parent=16 // loop_footer_branch
            %22 = sbr.rel target = $region19
          $region24: #{transformer_policy_forward.5} parent=16 // loop_exit
            _
        $region17: #{transformer_policy_forward.5} parent=8 // pred_fallthru
          _
      $region9: #{transformer_policy_forward.5} parent=4 // pred_fallthru
        _
      %74 = vnop
    $region5: #{transformer_policy_forward.5} parent=1 // pred_fallthru
      _
    // Predicated region
    $region40: #{transformer_policy_forward.5} parent=1 // pred_check
      _
    $region41: #{transformer_policy_forward.5} parent=1 // pred_check_branch
      %76 = sbr.rel (0) target = $region43
    $region42: #{transformer_policy_forward.5} parent=1 // pred_region
      _
    $region43: #{transformer_policy_forward.5} parent=1 // pred_fallthru
      _
    // Predicated region
    $region44: #{transformer_policy_forward.5} parent=1 // pred_check
      _
    $region45: #{transformer_policy_forward.5} parent=1 // pred_check_branch
      %78 = sbr.rel (0) target = $region47
    $region46: #{transformer_policy_forward.5} parent=1 // pred_region
      _
    $region47: #{transformer_policy_forward.5} parent=1 // pred_fallthru
      _
    // Predicated region
    $region48: #{transformer_policy_forward.5} parent=1 // pred_check
      _
    $region49: #{transformer_policy_forward.5} parent=1 // pred_check_branch
      %80 = sbr.rel (0) target = $region51
    $region50: #{transformer_policy_forward.5} parent=1 // pred_region
      _
    $region51: #{transformer_policy_forward.5} parent=1 // pred_fallthru
      _
    // Predicated region
    $region52: #{transformer_policy_forward.5} parent=1 // pred_check
      _
    $region53: #{transformer_policy_forward.5} parent=1 // pred_check_branch
      %82 = sbr.rel (0) target = $region55
    $region54: #{transformer_policy_forward.5} parent=1 // pred_region
      _
    $region55: #{transformer_policy_forward.5} parent=1 // pred_fallthru
      _
    // Predicated region
    $region56: #{transformer_policy_forward.5} parent=1 // pred_check
      _
    $region57: #{transformer_policy_forward.5} parent=1 // pred_check_branch
      %84 = sbr.rel (0) target = $region59
    $region58: #{transformer_policy_forward.5} parent=1 // pred_region
      _
    $region59: #{transformer_policy_forward.5} parent=1 // pred_fallthru
      _
    %v86 = vld [vmem:[#allocation2 + $0x6] sm:$0x1]
    %v87 = vld [vmem:[#allocation2 + $0xe] sm:$0x1]
    %v88 = vld [vmem:[#allocation2 + $0x16] sm:$0x1]
    %v89 = vld [vmem:[#allocation2 + $0x1e] sm:$0x1]
    %v90 = vld [vmem:[#allocation2 + $0x26] sm:$0x1]
    %v91 = vld [vmem:[#allocation2 + $0x2e] sm:$0x1]
    %v92 = vld [vmem:[#allocation2 + $0x36] sm:$0x1]
    %v93 = vld [vmem:[#allocation2 + $0x3e] sm:$0x1]
    %v94 = vld [vmem:[%s1] sm:$0xf]
    %v95 = vld [vmem:[%s1 + $0x4] sm:$0xf]
    %v96 = vld [vmem:[%s1 + $0x8] sm:$0xf]
    %v97 = vld [vmem:[%s1 + $0xc] sm:$0xf]
    %v98 = vld [vmem:[%s1 + $0x10] sm:$0xf]
    %v99 = vld [vmem:[%s1 + $0x14] sm:$0xf]
    %v100 = vld [vmem:[%s1 + $0x18] sm:$0xf]
    %v101 = vld [vmem:[%s1 + $0x1c] sm:$0xf]
    %v102 = vld [vmem:[%s1 + $0x20] sm:$0xf]
    %v103 = vld [vmem:[%s1 + $0x24] sm:$0xf]
    %v104 = vld [vmem:[%s1 + $0x28] sm:$0xf]
    %v105 = vld [vmem:[%s1 + $0x2c] sm:$0xf]
    %v106 = vld [vmem:[%s1 + $0x30] sm:$0xf]
    %v107 = vld [vmem:[%s1 + $0x34] sm:$0xf]
    %v108 = vld [vmem:[%s1 + $0x38] sm:$0xf]
    %v109 = vld [vmem:[%s1 + $0x3c] sm:$0xf]
    %v110 = vpack.c.bf16 %v86, %v86
    %v111 = vpack.c.bf16 %v87, %v87
    %v112 = vpack.c.bf16 %v88, %v88
    %v113 = vpack.c.bf16 %v89, %v89
    %v114 = vpack.c.bf16 %v90, %v90
    %v115 = vpack.c.bf16 %v91, %v91
    %v116 = vpack.c.bf16 %v92, %v92
    %v117 = vpack.c.bf16 %v93, %v93
    %v118 = vld [vmem:[%s2] sm:$0x1]
    %v120 = vlaneseq
    %v121 = vshrl.u32 %v120, 7
    %v122 = vsub.s32 0, %v121
    %v123 = vrot.slane %v118, %v122
    %v133 = vunpack.c.l.b16 %v110
    %v134 = vunpack.c.l.b16 %v111
    %v135 = vunpack.c.l.b16 %v112
    %v136 = vunpack.c.l.b16 %v113
    %v137 = vunpack.c.l.b16 %v114
    %v138 = vunpack.c.l.b16 %v115
    %v139 = vunpack.c.l.b16 %v116
    %v140 = vunpack.c.l.b16 %v117
    %v141 = vrot.slane %v134, 7
    %vm142 = vcmask 1041409
    %v143 = vsel %vm142, %v141, %v133
    %v144 = vrot.slane %v135, 6
    %vm145 = vcmask 1042434
    %v146 = vsel %vm145, %v144, %v143
    %v147 = vrot.slane %v136, 5
    %vm148 = vcmask 1043459
    %v149 = vsel %vm148, %v147, %v146
    %v150 = vrot.slane %v137, 4
    %vm151 = vcmask 1044484
    %v152 = vsel %vm151, %v150, %v149
    %v153 = vrot.slane %v138, 3
    %vm154 = vcmask 1045509
    %v155 = vsel %vm154, %v153, %v152
    %v156 = vrot.slane %v139, 2
    %vm157 = vcmask 1046534
    %v158 = vsel %vm157, %v156, %v155
    %v159 = vrot.slane %v140, 1
    %vm160 = vcmask 1047559
    %v161 = vsel %vm160, %v159, %v158
    %v162 = vpack.c.b16 %v161, %v161
    %v180 = vunpack.c.l.b16 %v94
    %v181 = vunpack.c.l.b16 %v95
    %v182 = vunpack.c.l.b16 %v96
    %v183 = vunpack.c.l.b16 %v97
    %v184 = vunpack.c.l.b16 %v98
    %v185 = vunpack.c.l.b16 %v99
    %v186 = vunpack.c.l.b16 %v100
    %v187 = vunpack.c.l.b16 %v101
    %v188 = vunpack.c.l.b16 %v102
    %v189 = vunpack.c.l.b16 %v103
    %v190 = vunpack.c.l.b16 %v104
    %v191 = vunpack.c.l.b16 %v105
    %v192 = vunpack.c.l.b16 %v106
    %v193 = vunpack.c.l.b16 %v107
    %v194 = vunpack.c.l.b16 %v108
    %v195 = vunpack.c.l.b16 %v109
    %v196 = vpack.c.b16 %v181, %v180
    %v197 = vpack.c.b16 %v183, %v182
    %v198 = vpack.c.b16 %v185, %v184
    %v199 = vpack.c.b16 %v187, %v186
    %v200 = vpack.c.b16 %v189, %v188
    %v201 = vpack.c.b16 %v191, %v190
    %v202 = vpack.c.b16 %v193, %v192
    %v203 = vpack.c.b16 %v195, %v194
    %212 = vmatprep.subr.bf16.mxu0 0
    %213 = vmatpush1.bf16.msra.mxu0 %v203
    %214 = vmatprep.subr.bf16.mxu0 0
    %215 = vmatpush1.bf16.msra.mxu0 %v202
    %216 = vmatprep.subr.bf16.mxu0 0
    %217 = vmatpush1.bf16.msra.mxu0 %v201
    %218 = vmatprep.subr.bf16.mxu0 0
    %219 = vmatpush1.bf16.msra.mxu0 %v200
    %220 = vmatprep.subr.bf16.mxu0 0
    %221 = vmatpush1.bf16.msra.mxu0 %v199
    %222 = vmatprep.subr.bf16.mxu0 0
    %223 = vmatpush1.bf16.msra.mxu0 %v198
    %224 = vmatprep.subr.bf16.mxu0 0
    %225 = vmatpush1.bf16.msra.mxu0 %v197
    %226 = vmatprep.subr.bf16.mxu0 0
    %227 = vmatpush1.bf16.msra.mxu0 %v196
    %228 = vmatprep.subr.bf16.mxu0 0
    %229 = vmatpush2.bf16.msra.mxu0 0
    %230 = vmatprep.subr.bf16.mxu0 0
    %231 = vmatpush2.bf16.msra.mxu0 0
    %232 = vmatprep.subr.bf16.mxu0 0
    %233 = vmatpush2.bf16.msra.mxu0 0
    %234 = vmatprep.subr.bf16.mxu0 0
    %235 = vmatpush2.bf16.msra.mxu0 0
    %236 = vmatprep.subr.bf16.mxu0 0
    %237 = vmatpush2.bf16.msra.mxu0 0
    %238 = vmatprep.subr.bf16.mxu0 0
    %239 = vmatpush2.bf16.msra.mxu0 0
    %240 = vmatprep.subr.bf16.mxu0 0
    %241 = vmatpush2.bf16.msra.mxu0 0
    %242 = vmatprep.subr.bf16.mxu0 0
    %243 = vmatpush2.bf16.msra.mxu0 0
    %244 = vmatprep.mubr.bf16.mxu0 0
    %245 = vmatmul.mubr.bf16.gmra.mxu0 %v162
    %v246 = vpop.f32.mrf.mxu0
    %v247 = vadd.f32 %v123, %v246
    %v248 = vpop.f32.mrf.mxu0
    %v249 = vpop.f32.mrf.mxu0
    %v250 = vpop.f32.mrf.mxu0
    %251 = vdwg.mxu0
    %v252 = vmul.f32 %v247, 0.5
    %v253 = vmul.f32 %v247, 0.044715
    %v254 = vmul.f32 %v253, %v247
    %v255 = vmul.f32 %v254, %v247
    %v256 = vadd.f32 %v247, %v255
    %v257 = vmul.f32 %v256, 0.7978846
    %v258 = vtanh.pop %v257
    %v259 = vadd.f32 %v258, 1.0
    %v260 = vmul.f32 %v252, %v259
    %v261 = vld [vmem:[%s3] sm:$0xf]
    %v262 = vld [vmem:[%s3 + $0x4] sm:$0xf]
    %v263 = vld [vmem:[%s3 + $0x8] sm:$0xf]
    %v264 = vld [vmem:[%s3 + $0xc] sm:$0xf]
    %v265 = vld [vmem:[%s3 + $0x10] sm:$0xf]
    %v266 = vld [vmem:[%s3 + $0x14] sm:$0xf]
    %v267 = vld [vmem:[%s3 + $0x18] sm:$0xf]
    %v268 = vld [vmem:[%s3 + $0x1c] sm:$0xf]
    %v269 = vld [vmem:[%s3 + $0x20] sm:$0xf]
    %v270 = vld [vmem:[%s3 + $0x24] sm:$0xf]
    %v271 = vld [vmem:[%s3 + $0x28] sm:$0xf]
    %v272 = vld [vmem:[%s3 + $0x2c] sm:$0xf]
    %v273 = vld [vmem:[%s3 + $0x30] sm:$0xf]
    %v274 = vld [vmem:[%s3 + $0x34] sm:$0xf]
    %v275 = vld [vmem:[%s3 + $0x38] sm:$0xf]
    %v276 = vld [vmem:[%s3 + $0x3c] sm:$0xf]
    %v277 = vpack.c.bf16 %v260, %v260
    %v278 = vld [vmem:[%s4] sm:$0x1]
    %v280 = vlaneseq
    %v281 = vshrl.u32 %v280, 7
    %v282 = vsub.s32 0, %v281
    %v283 = vrot.slane %v278, %v282
    %v301 = vunpack.c.l.b16 %v261
    %v302 = vunpack.c.l.b16 %v262
    %v303 = vunpack.c.l.b16 %v263
    %v304 = vunpack.c.l.b16 %v264
    %v305 = vunpack.c.l.b16 %v265
    %v306 = vunpack.c.l.b16 %v266
    %v307 = vunpack.c.l.b16 %v267
    %v308 = vunpack.c.l.b16 %v268
    %v309 = vunpack.c.l.b16 %v269
    %v310 = vunpack.c.l.b16 %v270
    %v311 = vunpack.c.l.b16 %v271
    %v312 = vunpack.c.l.b16 %v272
    %v313 = vunpack.c.l.b16 %v273
    %v314 = vunpack.c.l.b16 %v274
    %v315 = vunpack.c.l.b16 %v275
    %v316 = vunpack.c.l.b16 %v276
    %v317 = vpack.c.b16 %v302, %v301
    %v318 = vpack.c.b16 %v304, %v303
    %v319 = vpack.c.b16 %v306, %v305
    %v320 = vpack.c.b16 %v308, %v307
    %v321 = vpack.c.b16 %v310, %v309
    %v322 = vpack.c.b16 %v312, %v311
    %v323 = vpack.c.b16 %v314, %v313
    %v324 = vpack.c.b16 %v316, %v315
    %333 = vmatprep.subr.bf16.mxu0 0
    %334 = vmatpush1.bf16.msra.mxu0 %v324
    %335 = vmatprep.subr.bf16.mxu0 0
    %336 = vmatpush1.bf16.msra.mxu0 %v323
    %337 = vmatprep.subr.bf16.mxu0 0
    %338 = vmatpush1.bf16.msra.mxu0 %v322
    %339 = vmatprep.subr.bf16.mxu0 0
    %340 = vmatpush1.bf16.msra.mxu0 %v321
    %341 = vmatprep.subr.bf16.mxu0 0
    %342 = vmatpush1.bf16.msra.mxu0 %v320
    %343 = vmatprep.subr.bf16.mxu0 0
    %344 = vmatpush1.bf16.msra.mxu0 %v319
    %345 = vmatprep.subr.bf16.mxu0 0
    %346 = vmatpush1.bf16.msra.mxu0 %v318
    %347 = vmatprep.subr.bf16.mxu0 0
    %348 = vmatpush1.bf16.msra.mxu0 %v317
    %349 = vmatprep.subr.bf16.mxu0 0
    %350 = vmatpush2.bf16.msra.mxu0 0
    %351 = vmatprep.subr.bf16.mxu0 0
    %352 = vmatpush2.bf16.msra.mxu0 0
    %353 = vmatprep.subr.bf16.mxu0 0
    %354 = vmatpush2.bf16.msra.mxu0 0
    %355 = vmatprep.subr.bf16.mxu0 0
    %356 = vmatpush2.bf16.msra.mxu0 0
    %357 = vmatprep.subr.bf16.mxu0 0
    %358 = vmatpush2.bf16.msra.mxu0 0
    %359 = vmatprep.subr.bf16.mxu0 0
    %360 = vmatpush2.bf16.msra.mxu0 0
    %361 = vmatprep.subr.bf16.mxu0 0
    %362 = vmatpush2.bf16.msra.mxu0 0
    %363 = vmatprep.subr.bf16.mxu0 0
    %364 = vmatpush2.bf16.msra.mxu0 0
    %365 = vmatprep.mubr.bf16.mxu0 0
    %366 = vmatmul.mubr.bf16.gmra.mxu0 %v277
    %v367 = vpop.f32.mrf.mxu0
    %v368 = vadd.f32 %v283, %v367
    %v369 = vpop.f32.mrf.mxu0
    %v370 = vpop.f32.mrf.mxu0
    %v371 = vpop.f32.mrf.mxu0
    %372 = vdwg.mxu0
    %vm373 = vcmask 48128
    %374 = vst.msk [vmem:[#allocation3] sm:$0xff] %vm373, %v368
    // Predicated region
    $region60: #{transformer_policy_forward.5} parent=1 // pred_check
      _
    $region61: #{transformer_policy_forward.5} parent=1 // pred_check_branch
      %376 = sbr.rel (0) target = $region63
    $region62: #{transformer_policy_forward.5} parent=1 // pred_region
      %s378 = ssub.s32 128, 128
      %379 = vsyncadd [#allocation4], %s378
      %s381 = sshll.u32 [#allocation3], 4
      %s382 = int_to_ptr.vmem [resolvable:$true] %s381
      %384 = dma.vmem_to_hbm [thread:$0]  %s382, 128, %s5, [#allocation4]
    $region63: #{transformer_policy_forward.5} parent=1 // pred_fallthru
      _
    // Predicated region
    $region64: #{transformer_policy_forward.5} parent=1 // pred_check
      _
    $region65: #{transformer_policy_forward.5} parent=1 // pred_check_branch
      %386 = sbr.rel (0) target = $region67
    $region66: #{transformer_policy_forward.5} parent=1 // pred_region
      %387 = dma.done [#allocation4], 128
    $region67: #{transformer_policy_forward.5} parent=1 // pred_fallthru
      _
    %388 = vsyncpa [#allocation4], 1

// kernel: transformer_policy_forward.3
$region0: #{transformer_policy_forward.3}
  #allocation0 [shape = 'u32[]', space=smem, size = 0x4, offset = 0x4, fixed_abs, tag = 'smem constant byte address 0x4 - core index']
  #allocation1 [shape = 'u32[144,128]{1,0:T(1,128)}', space=vmem, size = 0x12000, scoped, tag = 'internal scratch']
  %s0 = inlined_call_operand.vmem [shape: f32[64,5], index: 0, kind: input, shape index: {}]
  %s1 = inlined_call_operand.vmem [shape: f32[64,128], index: 1, kind: input, shape index: {}]
  %s2 = inlined_call_operand.vmem [shape: f32[64,128], index: 2, kind: input, shape index: {}]
  %s3 = inlined_call_operand.vmem [shape: bf16[5,128], index: 3, kind: input, shape index: {}]
  %s4 = inlined_call_operand.vmem [shape: f32[1,128], index: 4, kind: input, shape index: {}]
  %s5 = inlined_call_operand.vmem [shape: f32[1,128], index: 5, kind: input, shape index: {}]
  %s6 = inlined_call_operand.vmem [shape: f32[1,128], index: 6, kind: input, shape index: {}]
  %s7 = inlined_call_operand.vmem [shape: bf16[128,128], index: 7, kind: input, shape index: {}]
  %s8 = inlined_call_operand.vmem [shape: f32[1,128], index: 8, kind: input, shape index: {}]
  %s9 = inlined_call_operand.vmem [shape: f32[1,128], index: 9, kind: input, shape index: {}]
  %s10 = inlined_call_operand.vmem [shape: f32[1,128], index: 10, kind: input, shape index: {}]
  %s11 = inlined_call_operand.vmem [shape: bf16[128,128], index: 11, kind: input, shape index: {}]
  %s12 = inlined_call_operand.vmem [shape: f32[1,128], index: 12, kind: input, shape index: {}]
  %s13 = inlined_call_operand.vmem [shape: f32[1,128], index: 13, kind: input, shape index: {}]
  %s14 = inlined_call_operand.vmem [shape: f32[1,128], index: 14, kind: input, shape index: {}]
  %s15 = inlined_call_operand.vmem [shape: f32[64,2,128], index: 15, kind: output, shape index: {}]
  %s16 = sld [smem:[#allocation0]]
  $region93: #{transformer_policy_forward.3} parent=0
    _
  %s18 = ssub.s32 1, %s16
  %s19 = scalar_select 0, %s18, %s16
  loop: start=0, step=1, limit=4
  $region2: #{transformer_policy_forward.3} parent=0 // loop_pre_header
    _
  $region3: #{transformer_policy_forward.3} parent=0 // loop_header
    %s21 = sphi 0, %s25
    %p22 = scmp.ge.s32.totalorder %s21, 4
    %s31 = sphi 0, %s33
    %s34 = sphi 0, %s31
    %s35 = sphi 0, %s34
    %s51 = sphi 0, %s35
    %s57 = sphi 0, %s59
    %s60 = sphi 0, %s57
    %s61 = sphi 0, %s60
    %s77 = sphi 0, %s61
    %s83 = sphi 0, %s85
    %s86 = sphi 0, %s83
    %s87 = sphi 0, %s86
    %s103 = sphi 0, %s87
    %s107 = sphi 0, %s107
    %s109 = sphi 0, %s107
    %s110 = sphi 0, %s109
    %s124 = sphi 0, %s110
    %s128 = sphi 0, %s128
    %s130 = sphi 0, %s128
    %s131 = sphi 0, %s130
    %s145 = sphi 0, %s131
    %s149 = sphi 0, %s149
    %s151 = sphi 0, %s149
    %s152 = sphi 0, %s151
    %s166 = sphi 0, %s152
    %s170 = sphi 0, %s170
    %s172 = sphi 0, %s170
    %s173 = sphi 0, %s172
    %s187 = sphi 0, %s173
    %s191 = sphi 0, %s191
    %s193 = sphi 0, %s191
    %s194 = sphi 0, %s193
    %s208 = sphi 0, %s194
    %s212 = sphi 0, %s212
    %s214 = sphi 0, %s212
    %s215 = sphi 0, %s214
    %s229 = sphi 0, %s215
    %s233 = sphi 0, %s233
    %s235 = sphi 0, %s233
    %s236 = sphi 0, %s235
    %s250 = sphi 0, %s236
    %s254 = sphi 0, %s254
    %s256 = sphi 0, %s254
    %s257 = sphi 0, %s256
    %s271 = sphi 0, %s257
    %s275 = sphi 0, %s275
    %s277 = sphi 0, %s275
    %s278 = sphi 0, %s277
    %s292 = sphi 0, %s278
    %s296 = sphi 0, %s296
    %s298 = sphi 0, %s296
    %s299 = sphi 0, %s298
    %s313 = sphi 0, %s299
    %s317 = sphi 0, %s317
    %s319 = sphi 0, %s317
    %s320 = sphi 0, %s319
    %s334 = sphi 0, %s320
    %s338 = sphi 0, %s338
    %s340 = sphi 0, %s338
    %s341 = sphi 0, %s340
    %s355 = sphi 0, %s341
    %s361 = sphi 0, %s363
    %s364 = sphi 0, %s361
    %s365 = sphi 0, %s364
    %s381 = sphi 0, %s365
  $region4: #{transformer_policy_forward.3} parent=0 // loop_header_branch
    %24 = sbr.rel (%p22) target = $region8
  $region5: #{transformer_policy_forward.3} parent=0 // loop_body
    %s26 = ssub.s32 %s21, 1
    %s27 = ssub.s32 %s21, 2
    %s28 = sadd.s32 %s21, 1
    %s29 = ssub.s32 %s21, %s28
    %p30 = scmp.eq.s32.totalorder %s29, 0
    %s32 = sadd.s32 %s31, 1
    %s33 = scalar_select %p30, %s31, %s32
    %p36 = pneg %p30
    %p37 = scmp.eq.s32.totalorder %s21, 1
    %p38 = por %p36, %p37
    %p39 = scmp.ne.s32.totalorder %s31, %s34
    %p40 = scmp.eq.s32.totalorder %s21, 0
    %p41 = por %p39, %p40
    %p42 = scmp.ne.s32.totalorder %s31, %s34
    %p43 = scmp.eq.s32.totalorder %s26, 1
    %p44 = por %p42, %p43
    %p45 = scmp.ne.s32.totalorder %s34, %s35
    %p46 = scmp.eq.s32.totalorder %s26, 0
    %p47 = por %p45, %p46
    %p48 = scmp.ne.s32.totalorder %s34, %s35
    %p49 = scmp.eq.s32.totalorder %s27, 1
    %p50 = por %p48, %p49
    %p52 = scmp.ne.s32.totalorder %s35, %s51
    %p53 = scmp.eq.s32.totalorder %s27, 0
    %p54 = por %p52, %p53
    %s55 = ssub.s32 %s21, %s28
    %p56 = scmp.eq.s32.totalorder %s55, 0
    %s58 = sadd.s32 %s57, 1
    %s59 = scalar_select %p56, %s57, %s58
    %p62 = pneg %p56
    %p63 = scmp.eq.s32.totalorder %s21, 1
    %p64 = por %p62, %p63
    %p65 = scmp.ne.s32.totalorder %s57, %s60
    %p66 = scmp.eq.s32.totalorder %s21, 0
    %p67 = por %p65, %p66
    %p68 = scmp.ne.s32.totalorder %s57, %s60
    %p69 = scmp.eq.s32.totalorder %s26, 1
    %p70 = por %p68, %p69
    %p71 = scmp.ne.s32.totalorder %s60, %s61
    %p72 = scmp.eq.s32.totalorder %s26, 0
    %p73 = por %p71, %p72
    %p74 = scmp.ne.s32.totalorder %s60, %s61
    %p75 = scmp.eq.s32.totalorder %s27, 1
    %p76 = por %p74, %p75
    %p78 = scmp.ne.s32.totalorder %s61, %s77
    %p79 = scmp.eq.s32.totalorder %s27, 0
    %p80 = por %p78, %p79
    %s81 = ssub.s32 %s21, %s28
    %p82 = scmp.eq.s32.totalorder %s81, 0
    %s84 = sadd.s32 %s83, 1
    %s85 = scalar_select %p82, %s83, %s84
    %p88 = pneg %p82
    %p89 = scmp.eq.s32.totalorder %s21, 1
    %p90 = por %p88, %p89
    %p91 = scmp.ne.s32.totalorder %s83, %s86
    %p92 = scmp.eq.s32.totalorder %s21, 0
    %p93 = por %p91, %p92
    %p94 = scmp.ne.s32.totalorder %s83, %s86
    %p95 = scmp.eq.s32.totalorder %s26, 1
    %p96 = por %p94, %p95
    %p97 = scmp.ne.s32.totalorder %s86, %s87
    %p98 = scmp.eq.s32.totalorder %s26, 0
    %p99 = por %p97, %p98
    %p100 = scmp.ne.s32.totalorder %s86, %s87
    %p101 = scmp.eq.s32.totalorder %s27, 1
    %p102 = por %p100, %p101
    %p104 = scmp.ne.s32.totalorder %s87, %s103
    %p105 = scmp.eq.s32.totalorder %s27, 0
    %p106 = por %p104, %p105
    %s108 = sadd.s32 %s107, 1
    %p111 = scmp.eq.s32.totalorder %s21, 1
    %p112 = scmp.ne.s32.totalorder %s107, %s109
    %p113 = scmp.eq.s32.totalorder %s21, 0
    %p114 = por %p112, %p113
    %p115 = scmp.ne.s32.totalorder %s107, %s109
    %p116 = scmp.eq.s32.totalorder %s26, 1
    %p117 = por %p115, %p116
    %p118 = scmp.ne.s32.totalorder %s109, %s110
    %p119 = scmp.eq.s32.totalorder %s26, 0
    %p120 = por %p118, %p119
    %p121 = scmp.ne.s32.totalorder %s109, %s110
    %p122 = scmp.eq.s32.totalorder %s27, 1
    %p123 = por %p121, %p122
    %p125 = scmp.ne.s32.totalorder %s110, %s124
    %p126 = scmp.eq.s32.totalorder %s27, 0
    %p127 = por %p125, %p126
    %s129 = sadd.s32 %s128, 1
    %p132 = scmp.eq.s32.totalorder %s21, 1
    %p133 = scmp.ne.s32.totalorder %s128, %s130
    %p134 = scmp.eq.s32.totalorder %s21, 0
    %p135 = por %p133, %p134
    %p136 = scmp.ne.s32.totalorder %s128, %s130
    %p137 = scmp.eq.s32.totalorder %s26, 1
    %p138 = por %p136, %p137
    %p139 = scmp.ne.s32.totalorder %s130, %s131
    %p140 = scmp.eq.s32.totalorder %s26, 0
    %p141 = por %p139, %p140
    %p142 = scmp.ne.s32.totalorder %s130, %s131
    %p143 = scmp.eq.s32.totalorder %s27, 1
    %p144 = por %p142, %p143
    %p146 = scmp.ne.s32.totalorder %s131, %s145
    %p147 = scmp.eq.s32.totalorder %s27, 0
    %p148 = por %p146, %p147
    %s150 = sadd.s32 %s149, 1
    %p153 = scmp.eq.s32.totalorder %s21, 1
    %p154 = scmp.ne.s32.totalorder %s149, %s151
    %p155 = scmp.eq.s32.totalorder %s21, 0
    %p156 = por %p154, %p155
    %p157 = scmp.ne.s32.totalorder %s149, %s151
    %p158 = scmp.eq.s32.totalorder %s26, 1
    %p159 = por %p157, %p158
    %p160 = scmp.ne.s32.totalorder %s151, %s152
    %p161 = scmp.eq.s32.totalorder %s26, 0
    %p162 = por %p160, %p161
    %p163 = scmp.ne.s32.totalorder %s151, %s152
    %p164 = scmp.eq.s32.totalorder %s27, 1
    %p165 = por %p163, %p164
    %p167 = scmp.ne.s32.totalorder %s152, %s166
    %p168 = scmp.eq.s32.totalorder %s27, 0
    %p169 = por %p167, %p168
    %s171 = sadd.s32 %s170, 1
    %p174 = scmp.eq.s32.totalorder %s21, 1
    %p175 = scmp.ne.s32.totalorder %s170, %s172
    %p176 = scmp.eq.s32.totalorder %s21, 0
    %p177 = por %p175, %p176
    %p178 = scmp.ne.s32.totalorder %s170, %s172
    %p179 = scmp.eq.s32.totalorder %s26, 1
    %p180 = por %p178, %p179
    %p181 = scmp.ne.s32.totalorder %s172, %s173
    %p182 = scmp.eq.s32.totalorder %s26, 0
    %p183 = por %p181, %p182
    %p184 = scmp.ne.s32.totalorder %s172, %s173
    %p185 = scmp.eq.s32.totalorder %s27, 1
    %p186 = por %p184, %p185
    %p188 = scmp.ne.s32.totalorder %s173, %s187
    %p189 = scmp.eq.s32.totalorder %s27, 0
    %p190 = por %p188, %p189
    %s192 = sadd.s32 %s191, 1
    %p195 = scmp.eq.s32.totalorder %s21, 1
    %p196 = scmp.ne.s32.totalorder %s191, %s193
    %p197 = scmp.eq.s32.totalorder %s21, 0
    %p198 = por %p196, %p197
    %p199 = scmp.ne.s32.totalorder %s191, %s193
    %p200 = scmp.eq.s32.totalorder %s26, 1
    %p201 = por %p199, %p200
    %p202 = scmp.ne.s32.totalorder %s193, %s194
    %p203 = scmp.eq.s32.totalorder %s26, 0
    %p204 = por %p202, %p203
    %p205 = scmp.ne.s32.totalorder %s193, %s194
    %p206 = scmp.eq.s32.totalorder %s27, 1
    %p207 = por %p205, %p206
    %p209 = scmp.ne.s32.totalorder %s194, %s208
    %p210 = scmp.eq.s32.totalorder %s27, 0
    %p211 = por %p209, %p210
    %s213 = sadd.s32 %s212, 1
    %p216 = scmp.eq.s32.totalorder %s21, 1
    %p217 = scmp.ne.s32.totalorder %s212, %s214
    %p218 = scmp.eq.s32.totalorder %s21, 0
    %p219 = por %p217, %p218
    %p220 = scmp.ne.s32.totalorder %s212, %s214
    %p221 = scmp.eq.s32.totalorder %s26, 1
    %p222 = por %p220, %p221
    %p223 = scmp.ne.s32.totalorder %s214, %s215
    %p224 = scmp.eq.s32.totalorder %s26, 0
    %p225 = por %p223, %p224
    %p226 = scmp.ne.s32.totalorder %s214, %s215
    %p227 = scmp.eq.s32.totalorder %s27, 1
    %p228 = por %p226, %p227
    %p230 = scmp.ne.s32.totalorder %s215, %s229
    %p231 = scmp.eq.s32.totalorder %s27, 0
    %p232 = por %p230, %p231
    %s234 = sadd.s32 %s233, 1
    %p237 = scmp.eq.s32.totalorder %s21, 1
    %p238 = scmp.ne.s32.totalorder %s233, %s235
    %p239 = scmp.eq.s32.totalorder %s21, 0
    %p240 = por %p238, %p239
    %p241 = scmp.ne.s32.totalorder %s233, %s235
    %p242 = scmp.eq.s32.totalorder %s26, 1
    %p243 = por %p241, %p242
    %p244 = scmp.ne.s32.totalorder %s235, %s236
    %p245 = scmp.eq.s32.totalorder %s26, 0
    %p246 = por %p244, %p245
    %p247 = scmp.ne.s32.totalorder %s235, %s236
    %p248 = scmp.eq.s32.totalorder %s27, 1
    %p249 = por %p247, %p248
    %p251 = scmp.ne.s32.totalorder %s236, %s250
    %p252 = scmp.eq.s32.totalorder %s27, 0
    %p253 = por %p251, %p252
    %s255 = sadd.s32 %s254, 1
    %p258 = scmp.eq.s32.totalorder %s21, 1
    %p259 = scmp.ne.s32.totalorder %s254, %s256
    %p260 = scmp.eq.s32.totalorder %s21, 0
    %p261 = por %p259, %p260
    %p262 = scmp.ne.s32.totalorder %s254, %s256
    %p263 = scmp.eq.s32.totalorder %s26, 1
    %p264 = por %p262, %p263
    %p265 = scmp.ne.s32.totalorder %s256, %s257
    %p266 = scmp.eq.s32.totalorder %s26, 0
    %p267 = por %p265, %p266
    %p268 = scmp.ne.s32.totalorder %s256, %s257
    %p269 = scmp.eq.s32.totalorder %s27, 1
    %p270 = por %p268, %p269
    %p272 = scmp.ne.s32.totalorder %s257, %s271
    %p273 = scmp.eq.s32.totalorder %s27, 0
    %p274 = por %p272, %p273
    %s276 = sadd.s32 %s275, 1
    %p279 = scmp.eq.s32.totalorder %s21, 1
    %p280 = scmp.ne.s32.totalorder %s275, %s277
    %p281 = scmp.eq.s32.totalorder %s21, 0
    %p282 = por %p280, %p281
    %p283 = scmp.ne.s32.totalorder %s275, %s277
    %p284 = scmp.eq.s32.totalorder %s26, 1
    %p285 = por %p283, %p284
    %p286 = scmp.ne.s32.totalorder %s277, %s278
    %p287 = scmp.eq.s32.totalorder %s26, 0
    %p288 = por %p286, %p287
    %p289 = scmp.ne.s32.totalorder %s277, %s278
    %p290 = scmp.eq.s32.totalorder %s27, 1
    %p291 = por %p289, %p290
    %p293 = scmp.ne.s32.totalorder %s278, %s292
    %p294 = scmp.eq.s32.totalorder %s27, 0
    %p295 = por %p293, %p294
    %s297 = sadd.s32 %s296, 1
    %p300 = scmp.eq.s32.totalorder %s21, 1
    %p301 = scmp.ne.s32.totalorder %s296, %s298
    %p302 = scmp.eq.s32.totalorder %s21, 0
    %p303 = por %p301, %p302
    %p304 = scmp.ne.s32.totalorder %s296, %s298
    %p305 = scmp.eq.s32.totalorder %s26, 1
    %p306 = por %p304, %p305
    %p307 = scmp.ne.s32.totalorder %s298, %s299
    %p308 = scmp.eq.s32.totalorder %s26, 0
    %p309 = por %p307, %p308
    %p310 = scmp.ne.s32.totalorder %s298, %s299
    %p311 = scmp.eq.s32.totalorder %s27, 1
    %p312 = por %p310, %p311
    %p314 = scmp.ne.s32.totalorder %s299, %s313
    %p315 = scmp.eq.s32.totalorder %s27, 0
    %p316 = por %p314, %p315
    %s318 = sadd.s32 %s317, 1
    %p321 = scmp.eq.s32.totalorder %s21, 1
    %p322 = scmp.ne.s32.totalorder %s317, %s319
    %p323 = scmp.eq.s32.totalorder %s21, 0
    %p324 = por %p322, %p323
    %p325 = scmp.ne.s32.totalorder %s317, %s319
    %p326 = scmp.eq.s32.totalorder %s26, 1
    %p327 = por %p325, %p326
    %p328 = scmp.ne.s32.totalorder %s319, %s320
    %p329 = scmp.eq.s32.totalorder %s26, 0
    %p330 = por %p328, %p329
    %p331 = scmp.ne.s32.totalorder %s319, %s320
    %p332 = scmp.eq.s32.totalorder %s27, 1
    %p333 = por %p331, %p332
    %p335 = scmp.ne.s32.totalorder %s320, %s334
    %p336 = scmp.eq.s32.totalorder %s27, 0
    %p337 = por %p335, %p336
    %s339 = sadd.s32 %s338, 1
    %p342 = scmp.eq.s32.totalorder %s21, 1
    %p343 = scmp.ne.s32.totalorder %s338, %s340
    %p344 = scmp.eq.s32.totalorder %s21, 0
    %p345 = por %p343, %p344
    %p346 = scmp.ne.s32.totalorder %s338, %s340
    %p347 = scmp.eq.s32.totalorder %s26, 1
    %p348 = por %p346, %p347
    %p349 = scmp.ne.s32.totalorder %s340, %s341
    %p350 = scmp.eq.s32.totalorder %s26, 0
    %p351 = por %p349, %p350
    %p352 = scmp.ne.s32.totalorder %s340, %s341
    %p353 = scmp.eq.s32.totalorder %s27, 1
    %p354 = por %p352, %p353
    %p356 = scmp.ne.s32.totalorder %s341, %s355
    %p357 = scmp.eq.s32.totalorder %s27, 0
    %p358 = por %p356, %p357
    %s359 = ssub.s32 %s21, %s28
    %p360 = scmp.eq.s32.totalorder %s359, 0
    %s362 = sadd.s32 %s361, 1
    %s363 = scalar_select %p360, %s361, %s362
    %p366 = pneg %p360
    %p367 = scmp.eq.s32.totalorder %s21, 1
    %p368 = por %p366, %p367
    %p369 = scmp.ne.s32.totalorder %s361, %s364
    %p370 = scmp.eq.s32.totalorder %s21, 0
    %p371 = por %p369, %p370
    %p372 = scmp.ne.s32.totalorder %s361, %s364
    %p373 = scmp.eq.s32.totalorder %s26, 1
    %p374 = por %p372, %p373
    %p375 = scmp.ne.s32.totalorder %s364, %s365
    %p376 = scmp.eq.s32.totalorder %s26, 0
    %p377 = por %p375, %p376
    %p378 = scmp.ne.s32.totalorder %s364, %s365
    %p379 = scmp.eq.s32.totalorder %s27, 1
    %p380 = por %p378, %p379
    %p382 = scmp.ne.s32.totalorder %s365, %s381
    %p383 = scmp.eq.s32.totalorder %s27, 0
    %p384 = por %p382, %p383
    %p385 = scmp.le.s32.totalorder 1, %s21
    %p386 = scmp.lt.s32.totalorder %s21, 3
    %p387 = pnand %p385, %p386
    %p388 = pneg %p387
    // Predicated region
    $region9: #{transformer_policy_forward.3} parent=5 // pred_check
      _
    $region10: #{transformer_policy_forward.3} parent=5 // pred_check_branch
      %390 = sbr.rel (%p387) target = $region12
    $region11: #{transformer_policy_forward.3} parent=5 // pred_region
      %s391 = ssub.s32 %s21, 1
      // Predicated region
      $region13: #{transformer_policy_forward.3} parent=11 // pred_check
        %p392 = pneg %p120
      $region14: #{transformer_policy_forward.3} parent=11 // pred_check_branch
        %394 = sbr.rel (%p392) target = $region16
      $region15: #{transformer_policy_forward.3} parent=11 // pred_region
        _
      $region16: #{transformer_policy_forward.3} parent=11 // pred_fallthru
        _
      // Predicated region
      $region17: #{transformer_policy_forward.3} parent=11 // pred_check
        %p395 = pneg %p141
      $region18: #{transformer_policy_forward.3} parent=11 // pred_check_branch
        %397 = sbr.rel (%p395) target = $region20
      $region19: #{transformer_policy_forward.3} parent=11 // pred_region
        _
      $region20: #{transformer_policy_forward.3} parent=11 // pred_fallthru
        _
      // Predicated region
      $region21: #{transformer_policy_forward.3} parent=11 // pred_check
        %p398 = pneg %p162
      $region22: #{transformer_policy_forward.3} parent=11 // pred_check_branch
        %400 = sbr.rel (%p398) target = $region24
      $region23: #{transformer_policy_forward.3} parent=11 // pred_region
        _
      $region24: #{transformer_policy_forward.3} parent=11 // pred_fallthru
        _
      // Predicated region
      $region25: #{transformer_policy_forward.3} parent=11 // pred_check
        %p401 = pneg %p183
      $region26: #{transformer_policy_forward.3} parent=11 // pred_check_branch
        %403 = sbr.rel (%p401) target = $region28
      $region27: #{transformer_policy_forward.3} parent=11 // pred_region
        _
      $region28: #{transformer_policy_forward.3} parent=11 // pred_fallthru
        _
      // Predicated region
      $region29: #{transformer_policy_forward.3} parent=11 // pred_check
        %p404 = pneg %p204
      $region30: #{transformer_policy_forward.3} parent=11 // pred_check_branch
        %406 = sbr.rel (%p404) target = $region32
      $region31: #{transformer_policy_forward.3} parent=11 // pred_region
        _
      $region32: #{transformer_policy_forward.3} parent=11 // pred_fallthru
        _
      // Predicated region
      $region33: #{transformer_policy_forward.3} parent=11 // pred_check
        %p407 = pneg %p225
      $region34: #{transformer_policy_forward.3} parent=11 // pred_check_branch
        %409 = sbr.rel (%p407) target = $region36
      $region35: #{transformer_policy_forward.3} parent=11 // pred_region
        _
      $region36: #{transformer_policy_forward.3} parent=11 // pred_fallthru
        _
      // Predicated region
      $region37: #{transformer_policy_forward.3} parent=11 // pred_check
        %p410 = pneg %p246
      $region38: #{transformer_policy_forward.3} parent=11 // pred_check_branch
        %412 = sbr.rel (%p410) target = $region40
      $region39: #{transformer_policy_forward.3} parent=11 // pred_region
        _
      $region40: #{transformer_policy_forward.3} parent=11 // pred_fallthru
        _
      // Predicated region
      $region41: #{transformer_policy_forward.3} parent=11 // pred_check
        %p413 = pneg %p267
      $region42: #{transformer_policy_forward.3} parent=11 // pred_check_branch
        %415 = sbr.rel (%p413) target = $region44
      $region43: #{transformer_policy_forward.3} parent=11 // pred_region
        _
      $region44: #{transformer_policy_forward.3} parent=11 // pred_fallthru
        _
      // Predicated region
      $region45: #{transformer_policy_forward.3} parent=11 // pred_check
        %p416 = pneg %p288
      $region46: #{transformer_policy_forward.3} parent=11 // pred_check_branch
        %418 = sbr.rel (%p416) target = $region48
      $region47: #{transformer_policy_forward.3} parent=11 // pred_region
        _
      $region48: #{transformer_policy_forward.3} parent=11 // pred_fallthru
        _
      // Predicated region
      $region49: #{transformer_policy_forward.3} parent=11 // pred_check
        %p419 = pneg %p309
      $region50: #{transformer_policy_forward.3} parent=11 // pred_check_branch
        %421 = sbr.rel (%p419) target = $region52
      $region51: #{transformer_policy_forward.3} parent=11 // pred_region
        _
      $region52: #{transformer_policy_forward.3} parent=11 // pred_fallthru
        _
      // Predicated region
      $region53: #{transformer_policy_forward.3} parent=11 // pred_check
        %p422 = pneg %p330
      $region54: #{transformer_policy_forward.3} parent=11 // pred_check_branch
        %424 = sbr.rel (%p422) target = $region56
      $region55: #{transformer_policy_forward.3} parent=11 // pred_region
        _
      $region56: #{transformer_policy_forward.3} parent=11 // pred_fallthru
        _
      // Predicated region
      $region57: #{transformer_policy_forward.3} parent=11 // pred_check
        %p425 = pneg %p351
      $region58: #{transformer_policy_forward.3} parent=11 // pred_check_branch
        %427 = sbr.rel (%p425) target = $region60
      $region59: #{transformer_policy_forward.3} parent=11 // pred_region
        _
      $region60: #{transformer_policy_forward.3} parent=11 // pred_fallthru
        _
    $region12: #{transformer_policy_forward.3} parent=5 // pred_fallthru
      _
    %p428 = scmp.lt.s32.totalorder %s21, 2
    // Predicated region
    $region61: #{transformer_policy_forward.3} parent=5 // pred_check
      %p429 = pneg %p428
    $region62: #{transformer_policy_forward.3} parent=5 // pred_check_branch
      %431 = sbr.rel (%p429) target = $region64
    $region63: #{transformer_policy_forward.3} parent=5 // pred_region
      // Predicated region
      $region65: #{transformer_policy_forward.3} parent=63 // pred_check
        %p432 = pneg %p41
      $region66: #{transformer_policy_forward.3} parent=63 // pred_check_branch
        %434 = sbr.rel (%p432) target = $region68
      $region67: #{transformer_policy_forward.3} parent=63 // pred_region
        %s435 = smul.u32 4, %s21
        %p436 = scmp.lt.s32.totalorder %s435, 7
        %s437 = scalar_select %p436, %s435, 7
        %s438 = smul.addr %s437, 8
        %s439 = scalar_lea.vmem %s0, %s438
        %s440 = smul.u32 4, %s21
      $region68: #{transformer_policy_forward.3} parent=63 // pred_fallthru
        _
      // Predicated region
      $region69: #{transformer_policy_forward.3} parent=63 // pred_check
        %p441 = pneg %p67
      $region70: #{transformer_policy_forward.3} parent=63 // pred_check_branch
        %443 = sbr.rel (%p441) target = $region72
      $region71: #{transformer_policy_forward.3} parent=63 // pred_region
        %s444 = smul.u32 4, %s21
        %p445 = scmp.lt.s32.totalorder %s444, 7
        %s446 = scalar_select %p445, %s444, 7
        %s447 = smul.addr %s446, 8
        %s448 = scalar_lea.vmem %s1, %s447
        %s449 = smul.u32 4, %s21
      $region72: #{transformer_policy_forward.3} parent=63 // pred_fallthru
        _
      // Predicated region
      $region73: #{transformer_policy_forward.3} parent=63 // pred_check
        %p450 = pneg %p93
      $region74: #{transformer_policy_forward.3} parent=63 // pred_check_branch
        %452 = sbr.rel (%p450) target = $region76
      $region75: #{transformer_policy_forward.3} parent=63 // pred_region
        %s453 = smul.u32 4, %s21
        %p454 = scmp.lt.s32.totalorder %s453, 7
        %s455 = scalar_select %p454, %s453, 7
        %s456 = smul.addr %s455, 8
        %s457 = scalar_lea.vmem %s2, %s456
        %s458 = smul.u32 4, %s21
      $region76: #{transformer_policy_forward.3} parent=63 // pred_fallthru
        _
    $region64: #{transformer_policy_forward.3} parent=5 // pred_fallthru
      _
    %p459 = scmp.le.s32.totalorder 1, %s21
    %p460 = scmp.lt.s32.totalorder %s21, 3
    %p461 = pnand %p459, %p460
    %p462 = pneg %p461
    // Predicated region
    $region77: #{transformer_policy_forward.3} parent=5 // pred_check
      _
    $region78: #{transformer_policy_forward.3} parent=5 // pred_check_branch
      %464 = sbr.rel (%p461) target = $region80
    $region79: #{transformer_policy_forward.3} parent=5 // pred_region
      %s465 = ssub.s32 %s21, 1
      %s466 = smul.u32 4, %s26
      %p467 = scmp.lt.s32.totalorder %s466, 7
      %s468 = scalar_select %p467, %s466, 7
      %s469 = smul.addr %s468, 8
      %s470 = scalar_lea.vmem %s0, %s469
      %p471 = pneg %p47
      %p472 = pneg %p44
      %s473 = smul.u32 4, %s26
      %p474 = scmp.lt.s32.totalorder %s473, 7
      %s475 = scalar_select %p474, %s473, 7
      %s476 = smul.addr %s475, 8
      %s477 = scalar_lea.vmem %s1, %s476
      %p478 = pneg %p73
      %p479 = pneg %p70
      %s480 = smul.u32 4, %s26
      %p481 = scmp.lt.s32.totalorder %s480, 7
      %s482 = scalar_select %p481, %s480, 7
      %s483 = smul.addr %s482, 8
      %s484 = scalar_lea.vmem %s2, %s483
      %p485 = pneg %p99
      %p486 = pneg %p96
      %p487 = pneg %p120
      %p488 = pneg %p117
      %p489 = pneg %p141
      %p490 = pneg %p138
      %p491 = pneg %p162
      %p492 = pneg %p159
      %p493 = pneg %p183
      %p494 = pneg %p180
      %p495 = pneg %p204
      %p496 = pneg %p201
      %p497 = pneg %p225
      %p498 = pneg %p222
      %p499 = pneg %p246
      %p500 = pneg %p243
      %p501 = pneg %p267
      %p502 = pneg %p264
      %p503 = pneg %p288
      %p504 = pneg %p285
      %p505 = pneg %p309
      %p506 = pneg %p306
      %p507 = pneg %p330
      %p508 = pneg %p327
      %p509 = pneg %p351
      %p510 = pneg %p348
      %p511 = pneg %p377
      %p512 = pneg %p374
      %s513 = smul.u32 32, %s26
      %p514 = scmp.lt.s32.totalorder %s513, 63
      %s515 = scalar_select %p514, %s513, 63
      %s516 = smul.addr %s515, 2
      %s517 = scalar_lea.vmem %s15, %s516
      %s518 = smul.u32 4, %s26
      %p519 = scmp.lt.s32.totalorder %s518, 7
      %s520 = scalar_select %p519, %s518, 7
      %s521 = smul.addr %s520, 8
      %s522 = scalar_lea.vmem %s0, %s521
      %s523 = smul.u32 4, %s26
      %s524 = smul.u32 4, %s26
      %p525 = scmp.lt.s32.totalorder %s524, 7
      %s526 = scalar_select %p525, %s524, 7
      %s527 = smul.addr %s526, 8
      %s528 = scalar_lea.vmem %s1, %s527
      %s529 = smul.u32 4, %s26
      %s530 = smul.u32 4, %s26
      %p531 = scmp.lt.s32.totalorder %s530, 7
      %s532 = scalar_select %p531, %s530, 7
      %s533 = smul.addr %s532, 8
      %s534 = scalar_lea.vmem %s2, %s533
      %s535 = smul.u32 4, %s26
      %s536 = smul.u32 32, %s26
      %p537 = scmp.lt.s32.totalorder %s536, 63
      %s538 = scalar_select %p537, %s536, 63
      %s539 = smul.addr %s538, 2
      %s540 = scalar_lea.vmem %s15, %s539
      %s541 = smul.u32 32, %s26
      %v543 = vld [vmem:[%s534] sm:$0xff]
      %v544 = vld [vmem:[%s534 + $0x8] sm:$0xff]
      %v545 = vld [vmem:[%s534 + $0x10] sm:$0xff]
      %v546 = vld [vmem:[%s534 + $0x18] sm:$0xff]
      %v547 = vld [vmem:[%s522] sm:$0xff]
      %v548 = vld [vmem:[%s522 + $0x8] sm:$0xff]
      %v549 = vld [vmem:[%s522 + $0x10] sm:$0xff]
      %v550 = vld [vmem:[%s522 + $0x18] sm:$0xff]
      %v551 = vld [vmem:[%s3] sm:$0x7]
      %v552 = vpack.c.bf16 %v548, %v547
      %v553 = vpack.c.bf16 %v550, %v549
      %v554 = vld [vmem:[%s4] sm:$0x1]
      %v556 = vlaneseq
      %v557 = vshrl.u32 %v556, 7
      %v558 = vsub.s32 0, %v557
      %v559 = vrot.slane %v554, %v558
      %vm561 = vcmask 39936
      %v563 = vsel %vm561, %v552, 0
      %v566 = vsel %vm561, %v553, 0
      %vm568 = vcmask 1041408
      %vm569 = vcmask 1042432
      %v570 = vsel %vm568, 4294967295, 65535
      %v571 = vsel %vm569, %v570, 0
      %v573 = vand.u32 %v551, %v571
      %575 = vmatprep.subr.bf16.mxu0 0
      %576 = vmatpush1.bf16.msra.mxu0 0
      %577 = vmatprep.subr.bf16.mxu0 0
      %578 = vmatpush1.bf16.msra.mxu0 0
      %579 = vmatprep.subr.bf16.mxu0 0
      %580 = vmatpush1.bf16.msra.mxu0 0
      %581 = vmatprep.subr.bf16.mxu0 0
      %582 = vmatpush1.bf16.msra.mxu0 0
      %583 = vmatprep.subr.bf16.mxu0 0
      %584 = vmatpush1.bf16.msra.mxu0 0
      %585 = vmatprep.subr.bf16.mxu0 0
      %586 = vmatpush1.bf16.msra.mxu0 0
      %587 = vmatprep.subr.bf16.mxu0 0
      %588 = vmatpush1.bf16.msra.mxu0 0
      %589 = vmatprep.subr.bf16.mxu0 0
      %590 = vmatpush1.bf16.msra.mxu0 %v573
      %591 = vmatprep.subr.bf16.mxu0 0
      %592 = vmatpush2.bf16.msra.mxu0 0
      %593 = vmatprep.subr.bf16.mxu0 0
      %594 = vmatpush2.bf16.msra.mxu0 0
      %595 = vmatprep.subr.bf16.mxu0 0
      %596 = vmatpush2.bf16.msra.mxu0 0
      %597 = vmatprep.subr.bf16.mxu0 0
      %598 = vmatpush2.bf16.msra.mxu0 0
      %599 = vmatprep.subr.bf16.mxu0 0
      %600 = vmatpush2.bf16.msra.mxu0 0
      %601 = vmatprep.subr.bf16.mxu0 0
      %602 = vmatpush2.bf16.msra.mxu0 0
      %603 = vmatprep.subr.bf16.mxu0 0
      %604 = vmatpush2.bf16.msra.mxu0 0
      %605 = vmatprep.subr.bf16.mxu0 0
      %606 = vmatpush2.bf16.msra.mxu0 0
      %607 = vmatprep.mubr.bf16.mxu0 0
      %608 = vmatmul.mubr.bf16.gmra.mxu0 %v563
      %v609 = vpop.f32.mrf.mxu0
      %v610 = vadd.f32 %v559, %v609
      %v611 = vpop.f32.mrf.mxu0
      %v612 = vpop.f32.mrf.mxu0
      %v613 = vadd.f32 %v559, %v612
      %v614 = vpop.f32.mrf.mxu0
      %615 = vmatprep.mubr.bf16.mxu0 0
      %616 = vmatmul.mubr.bf16.gmra.mxu0 %v566
      %v617 = vpop.f32.mrf.mxu0
      %v618 = vadd.f32 %v559, %v617
      %v619 = vpop.f32.mrf.mxu0
      %v620 = vpop.f32.mrf.mxu0
      %v621 = vadd.f32 %v559, %v620
      %v622 = vpop.f32.mrf.mxu0
      %623 = vdwg.mxu0
      %v624 = vld [vmem:[%s5] sm:$0x1]
      %v625 = vld [vmem:[%s6] sm:$0x1]
      %626 = vadd.xlane.f32.xlu0 %v610
      %v627 = vpop.xlane.xlu0 %626
      %628 = vadd.xlane.f32.xlu0 %v613
      %v629 = vpop.xlane.xlu0 %628
      %630 = vadd.xlane.f32.xlu0 %v618
      %v631 = vpop.xlane.xlu0 %630
      %632 = vadd.xlane.f32.xlu0 %v621
      %v633 = vpop.xlane.xlu0 %632
      %v634 = vrcp.pop 128.0
      %v635 = vmul.f32 %v627, %v634
      %v636 = vmul.f32 %v629, %v634
      %v637 = vmul.f32 %v631, %v634
      %v638 = vmul.f32 %v633, %v634
      %v639 = vsub.f32 %v610, %v635
      %v640 = vsub.f32 %v613, %v636
      %v641 = vsub.f32 %v618, %v637
      %v642 = vsub.f32 %v621, %v638
      %v643 = vmul.f32 %v639, %v639
      %v644 = vmul.f32 %v640, %v640
      %v645 = vmul.f32 %v641, %v641
      %v646 = vmul.f32 %v642, %v642
      %647 = vadd.xlane.f32.xlu0 %v643
      %v648 = vpop.xlane.xlu0 %647
      %649 = vadd.xlane.f32.xlu0 %v644
      %v650 = vpop.xlane.xlu0 %649
      %651 = vadd.xlane.f32.xlu0 %v645
      %v652 = vpop.xlane.xlu0 %651
      %653 = vadd.xlane.f32.xlu0 %v646
      %v654 = vpop.xlane.xlu0 %653
      %v655 = vmul.f32 %v648, %v634
      %v656 = vmul.f32 %v650, %v634
      %v657 = vmul.f32 %v652, %v634
      %v658 = vmul.f32 %v654, %v634
      %v659 = vadd.f32 %v655, 1e-05
      %v660 = vadd.f32 %v656, 1e-05
      %v661 = vadd.f32 %v657, 1e-05
      %v662 = vadd.f32 %v658, 1e-05
      %v663 = vrsqrt.pop %v659
      %v664 = vrsqrt.pop %v660
      %v665 = vrsqrt.pop %v661
      %v666 = vrsqrt.pop %v662
      %v667 = vmul.f32 %v639, %v663
      %v668 = vmul.f32 %v640, %v664
      %v669 = vmul.f32 %v641, %v665
      %v670 = vmul.f32 %v642, %v666
      %v672 = vlaneseq
      %v673 = vshrl.u32 %v672, 7
      %v674 = vsub.s32 0, %v673
      %v675 = vrot.slane %v624, %v674
      %v677 = vmul.f32 %v667, %v675
      %v678 = vmul.f32 %v668, %v675
      %v679 = vmul.f32 %v669, %v675
      %v680 = vmul.f32 %v670, %v675
      %v682 = vlaneseq
      %v683 = vshrl.u32 %v682, 7
      %v684 = vsub.s32 0, %v683
      %v685 = vrot.slane %v625, %v684
      %v687 = vadd.f32 %v677, %v685
      %v688 = vadd.f32 %v678, %v685
      %v689 = vadd.f32 %v679, %v685
      %v690 = vadd.f32 %v680, %v685
      %v691 = vmul.f32 %v687, 0.5
      %v692 = vmul.f32 %v688, 0.5
      %v693 = vmul.f32 %v689, 0.5
      %v694 = vmul.f32 %v690, 0.5
      %v695 = vmul.f32 %v687, 0.044715
      %v696 = vmul.f32 %v688, 0.044715
      %v697 = vmul.f32 %v689, 0.044715
      %v698 = vmul.f32 %v690, 0.044715
      %v699 = vmul.f32 %v695, %v687
      %v700 = vmul.f32 %v696, %v688
      %v701 = vmul.f32 %v697, %v689
      %v702 = vmul.f32 %v698, %v690
      %v703 = vmul.f32 %v699, %v687
      %v704 = vmul.f32 %v700, %v688
      %v705 = vmul.f32 %v701, %v689
      %v706 = vmul.f32 %v702, %v690
      %v707 = vadd.f32 %v687, %v703
      %v708 = vadd.f32 %v688, %v704
      %v709 = vadd.f32 %v689, %v705
      %v710 = vadd.f32 %v690, %v706
      %v711 = vmul.f32 %v707, 0.7978846
      %v712 = vmul.f32 %v708, 0.7978846
      %v713 = vmul.f32 %v709, 0.7978846
      %v714 = vmul.f32 %v710, 0.7978846
      %v715 = vtanh.pop %v711
      %v716 = vtanh.pop %v712
      %v717 = vtanh.pop %v713
      %v718 = vtanh.pop %v714
      %v719 = vadd.f32 %v715, 1.0
      %v720 = vadd.f32 %v716, 1.0
      %v721 = vadd.f32 %v717, 1.0
      %v722 = vadd.f32 %v718, 1.0
      %v723 = vmul.f32 %v691, %v719
      %v724 = vmul.f32 %v692, %v720
      %v725 = vmul.f32 %v693, %v721
      %v726 = vmul.f32 %v694, %v722
      %v727 = vld [vmem:[%s7] sm:$0xf]
      %v728 = vld [vmem:[%s7 + $0x4] sm:$0xf]
      %v729 = vld [vmem:[%s7 + $0x8] sm:$0xf]
      %v730 = vld [vmem:[%s7 + $0xc] sm:$0xf]
      %v731 = vld [vmem:[%s7 + $0x10] sm:$0xf]
      %v732 = vld [vmem:[%s7 + $0x14] sm:$0xf]
      %v733 = vld [vmem:[%s7 + $0x18] sm:$0xf]
      %v734 = vld [vmem:[%s7 + $0x1c] sm:$0xf]
      %v735 = vld [vmem:[%s7 + $0x20] sm:$0xf]
      %v736 = vld [vmem:[%s7 + $0x24] sm:$0xf]
      %v737 = vld [vmem:[%s7 + $0x28] sm:$0xf]
      %v738 = vld [vmem:[%s7 + $0x2c] sm:$0xf]
      %v739 = vld [vmem:[%s7 + $0x30] sm:$0xf]
      %v740 = vld [vmem:[%s7 + $0x34] sm:$0xf]
      %v741 = vld [vmem:[%s7 + $0x38] sm:$0xf]
      %v742 = vld [vmem:[%s7 + $0x3c] sm:$0xf]
      %v743 = vpack.c.bf16 %v724, %v723
      %v744 = vpack.c.bf16 %v726, %v725
      %v745 = vld [vmem:[%s8] sm:$0x1]
      %v747 = vlaneseq
      %v748 = vshrl.u32 %v747, 7
      %v749 = vsub.s32 0, %v748
      %v750 = vrot.slane %v745, %v749
      %v768 = vunpack.c.l.b16 %v727
      %v769 = vunpack.c.l.b16 %v728
      %v770 = vunpack.c.l.b16 %v729
      %v771 = vunpack.c.l.b16 %v730
      %v772 = vunpack.c.l.b16 %v731
      %v773 = vunpack.c.l.b16 %v732
      %v774 = vunpack.c.l.b16 %v733
      %v775 = vunpack.c.l.b16 %v734
      %v776 = vunpack.c.l.b16 %v735
      %v777 = vunpack.c.l.b16 %v736
      %v778 = vunpack.c.l.b16 %v737
      %v779 = vunpack.c.l.b16 %v738
      %v780 = vunpack.c.l.b16 %v739
      %v781 = vunpack.c.l.b16 %v740
      %v782 = vunpack.c.l.b16 %v741
      %v783 = vunpack.c.l.b16 %v742
      %v784 = vpack.c.b16 %v769, %v768
      %v785 = vpack.c.b16 %v771, %v770
      %v786 = vpack.c.b16 %v773, %v772
      %v787 = vpack.c.b16 %v775, %v774
      %v788 = vpack.c.b16 %v777, %v776
      %v789 = vpack.c.b16 %v779, %v778
      %v790 = vpack.c.b16 %v781, %v780
      %v791 = vpack.c.b16 %v783, %v782
      %800 = vmatprep.subr.bf16.mxu0 0
      %801 = vmatpush1.bf16.msra.mxu0 %v791
      %802 = vmatprep.subr.bf16.mxu0 0
      %803 = vmatpush1.bf16.msra.mxu0 %v790
      %804 = vmatprep.subr.bf16.mxu0 0
      %805 = vmatpush1.bf16.msra.mxu0 %v789
      %806 = vmatprep.subr.bf16.mxu0 0
      %807 = vmatpush1.bf16.msra.mxu0 %v788
      %808 = vmatprep.subr.bf16.mxu0 0
      %809 = vmatpush1.bf16.msra.mxu0 %v787
      %810 = vmatprep.subr.bf16.mxu0 0
      %811 = vmatpush1.bf16.msra.mxu0 %v786
      %812 = vmatprep.subr.bf16.mxu0 0
      %813 = vmatpush1.bf16.msra.mxu0 %v785
      %814 = vmatprep.subr.bf16.mxu0 0
      %815 = vmatpush1.bf16.msra.mxu0 %v784
      %816 = vmatprep.subr.bf16.mxu0 0
      %817 = vmatpush2.bf16.msra.mxu0 0
      %818 = vmatprep.subr.bf16.mxu0 0
      %819 = vmatpush2.bf16.msra.mxu0 0
      %820 = vmatprep.subr.bf16.mxu0 0
      %821 = vmatpush2.bf16.msra.mxu0 0
      %822 = vmatprep.subr.bf16.mxu0 0
      %823 = vmatpush2.bf16.msra.mxu0 0
      %824 = vmatprep.subr.bf16.mxu0 0
      %825 = vmatpush2.bf16.msra.mxu0 0
      %826 = vmatprep.subr.bf16.mxu0 0
      %827 = vmatpush2.bf16.msra.mxu0 0
      %828 = vmatprep.subr.bf16.mxu0 0
      %829 = vmatpush2.bf16.msra.mxu0 0
      %830 = vmatprep.subr.bf16.mxu0 0
      %831 = vmatpush2.bf16.msra.mxu0 0
      %832 = vmatprep.mubr.bf16.mxu0 0
      %833 = vmatmul.mubr.bf16.gmra.mxu0 %v743
      %v834 = vpop.f32.mrf.mxu0
      %v835 = vadd.f32 %v750, %v834
      %v836 = vpop.f32.mrf.mxu0
      %v837 = vpop.f32.mrf.mxu0
      %v838 = vadd.f32 %v750, %v837
      %v839 = vpop.f32.mrf.mxu0
      %840 = vmatprep.mubr.bf16.mxu0 0
      %841 = vmatmul.mubr.bf16.gmra.mxu0 %v744
      %v842 = vpop.f32.mrf.mxu0
      %v843 = vadd.f32 %v750, %v842
      %v844 = vpop.f32.mrf.mxu0
      %v845 = vpop.f32.mrf.mxu0
      %v846 = vadd.f32 %v750, %v845
      %v847 = vpop.f32.mrf.mxu0
      %848 = vdwg.mxu0
      %v849 = vadd.f32 %v835, %v543
      %v850 = vadd.f32 %v838, %v544
      %v851 = vadd.f32 %v843, %v545
      %v852 = vadd.f32 %v846, %v546
      %v853 = vld [vmem:[%s528] sm:$0xff]
      %v854 = vld [vmem:[%s528 + $0x8] sm:$0xff]
      %v855 = vld [vmem:[%s528 + $0x10] sm:$0xff]
      %v856 = vld [vmem:[%s528 + $0x18] sm:$0xff]
      %v857 = vld [vmem:[%s9] sm:$0x1]
      %v858 = vld [vmem:[%s10] sm:$0x1]
      %859 = vadd.xlane.f32.xlu0 %v853
      %v860 = vpop.xlane.xlu0 %859
      %861 = vadd.xlane.f32.xlu0 %v854
      %v862 = vpop.xlane.xlu0 %861
      %863 = vadd.xlane.f32.xlu0 %v855
      %v864 = vpop.xlane.xlu0 %863
      %865 = vadd.xlane.f32.xlu0 %v856
      %v866 = vpop.xlane.xlu0 %865
      %v867 = vmul.f32 %v860, %v634
      %v868 = vmul.f32 %v862, %v634
      %v869 = vmul.f32 %v864, %v634
      %v870 = vmul.f32 %v866, %v634
      %v871 = vsub.f32 %v853, %v867
      %v872 = vsub.f32 %v854, %v868
      %v873 = vsub.f32 %v855, %v869
      %v874 = vsub.f32 %v856, %v870
      %v875 = vmul.f32 %v871, %v871
      %v876 = vmul.f32 %v872, %v872
      %v877 = vmul.f32 %v873, %v873
      %v878 = vmul.f32 %v874, %v874
      %879 = vadd.xlane.f32.xlu0 %v875
      %v880 = vpop.xlane.xlu0 %879
      %881 = vadd.xlane.f32.xlu0 %v876
      %v882 = vpop.xlane.xlu0 %881
      %883 = vadd.xlane.f32.xlu0 %v877
      %v884 = vpop.xlane.xlu0 %883
      %885 = vadd.xlane.f32.xlu0 %v878
      %v886 = vpop.xlane.xlu0 %885
      %v887 = vmul.f32 %v880, %v634
      %v888 = vmul.f32 %v882, %v634
      %v889 = vmul.f32 %v884, %v634
      %v890 = vmul.f32 %v886, %v634
      %v891 = vadd.f32 %v887, 1e-05
      %v892 = vadd.f32 %v888, 1e-05
      %v893 = vadd.f32 %v889, 1e-05
      %v894 = vadd.f32 %v890, 1e-05
      %v895 = vrsqrt.pop %v891
      %v896 = vrsqrt.pop %v892
      %v897 = vrsqrt.pop %v893
      %v898 = vrsqrt.pop %v894
      %v899 = vmul.f32 %v871, %v895
      %v900 = vmul.f32 %v872, %v896
      %v901 = vmul.f32 %v873, %v897
      %v902 = vmul.f32 %v874, %v898
      %v904 = vlaneseq
      %v905 = vshrl.u32 %v904, 7
      %v906 = vsub.s32 0, %v905
      %v907 = vrot.slane %v857, %v906
      %v909 = vmul.f32 %v899, %v907
      %v910 = vmul.f32 %v900, %v907
      %v911 = vmul.f32 %v901, %v907
      %v912 = vmul.f32 %v902, %v907
      %v914 = vlaneseq
      %v915 = vshrl.u32 %v914, 7
      %v916 = vsub.s32 0, %v915
      %v917 = vrot.slane %v858, %v916
      %v919 = vadd.f32 %v909, %v917
      %v920 = vadd.f32 %v910, %v917
      %v921 = vadd.f32 %v911, %v917
      %v922 = vadd.f32 %v912, %v917
      %v923 = vmul.f32 %v919, 0.5
      %v924 = vmul.f32 %v920, 0.5
      %v925 = vmul.f32 %v921, 0.5
      %v926 = vmul.f32 %v922, 0.5
      %v927 = vmul.f32 %v919, 0.044715
      %v928 = vmul.f32 %v920, 0.044715
      %v929 = vmul.f32 %v921, 0.044715
      %v930 = vmul.f32 %v922, 0.044715
      %v931 = vmul.f32 %v927, %v919
      %v932 = vmul.f32 %v928, %v920
      %v933 = vmul.f32 %v929, %v921
      %v934 = vmul.f32 %v930, %v922
      %v935 = vmul.f32 %v931, %v919
      %v936 = vmul.f32 %v932, %v920
      %v937 = vmul.f32 %v933, %v921
      %v938 = vmul.f32 %v934, %v922
      %v939 = vadd.f32 %v919, %v935
      %v940 = vadd.f32 %v920, %v936
      %v941 = vadd.f32 %v921, %v937
      %v942 = vadd.f32 %v922, %v938
      %v943 = vmul.f32 %v939, 0.7978846
      %v944 = vmul.f32 %v940, 0.7978846
      %v945 = vmul.f32 %v941, 0.7978846
      %v946 = vmul.f32 %v942, 0.7978846
      %v947 = vtanh.pop %v943
      %v948 = vtanh.pop %v944
      %v949 = vtanh.pop %v945
      %v950 = vtanh.pop %v946
      %v951 = vadd.f32 %v947, 1.0
      %v952 = vadd.f32 %v948, 1.0
      %v953 = vadd.f32 %v949, 1.0
      %v954 = vadd.f32 %v950, 1.0
      %v955 = vmul.f32 %v923, %v951
      %v956 = vmul.f32 %v924, %v952
      %v957 = vmul.f32 %v925, %v953
      %v958 = vmul.f32 %v926, %v954
      %v959 = vld [vmem:[%s11] sm:$0xf]
      %v960 = vld [vmem:[%s11 + $0x4] sm:$0xf]
      %v961 = vld [vmem:[%s11 + $0x8] sm:$0xf]
      %v962 = vld [vmem:[%s11 + $0xc] sm:$0xf]
      %v963 = vld [vmem:[%s11 + $0x10] sm:$0xf]
      %v964 = vld [vmem:[%s11 + $0x14] sm:$0xf]
      %v965 = vld [vmem:[%s11 + $0x18] sm:$0xf]
      %v966 = vld [vmem:[%s11 + $0x1c] sm:$0xf]
      %v967 = vld [vmem:[%s11 + $0x20] sm:$0xf]
      %v968 = vld [vmem:[%s11 + $0x24] sm:$0xf]
      %v969 = vld [vmem:[%s11 + $0x28] sm:$0xf]
      %v970 = vld [vmem:[%s11 + $0x2c] sm:$0xf]
      %v971 = vld [vmem:[%s11 + $0x30] sm:$0xf]
      %v972 = vld [vmem:[%s11 + $0x34] sm:$0xf]
      %v973 = vld [vmem:[%s11 + $0x38] sm:$0xf]
      %v974 = vld [vmem:[%s11 + $0x3c] sm:$0xf]
      %v975 = vpack.c.bf16 %v956, %v955
      %v976 = vpack.c.bf16 %v958, %v957
      %v977 = vld [vmem:[%s12] sm:$0x1]
      %v979 = vlaneseq
      %v980 = vshrl.u32 %v979, 7
      %v981 = vsub.s32 0, %v980
      %v982 = vrot.slane %v977, %v981
      %v1000 = vunpack.c.l.b16 %v959
      %v1001 = vunpack.c.l.b16 %v960
      %v1002 = vunpack.c.l.b16 %v961
      %v1003 = vunpack.c.l.b16 %v962
      %v1004 = vunpack.c.l.b16 %v963
      %v1005 = vunpack.c.l.b16 %v964
      %v1006 = vunpack.c.l.b16 %v965
      %v1007 = vunpack.c.l.b16 %v966
      %v1008 = vunpack.c.l.b16 %v967
      %v1009 = vunpack.c.l.b16 %v968
      %v1010 = vunpack.c.l.b16 %v969
      %v1011 = vunpack.c.l.b16 %v970
      %v1012 = vunpack.c.l.b16 %v971
      %v1013 = vunpack.c.l.b16 %v972
      %v1014 = vunpack.c.l.b16 %v973
      %v1015 = vunpack.c.l.b16 %v974
      %v1016 = vpack.c.b16 %v1001, %v1000
      %v1017 = vpack.c.b16 %v1003, %v1002
      %v1018 = vpack.c.b16 %v1005, %v1004
      %v1019 = vpack.c.b16 %v1007, %v1006
      %v1020 = vpack.c.b16 %v1009, %v1008
      %v1021 = vpack.c.b16 %v1011, %v1010
      %v1022 = vpack.c.b16 %v1013, %v1012
      %v1023 = vpack.c.b16 %v1015, %v1014
      %1032 = vmatprep.subr.bf16.mxu0 0
      %1033 = vmatpush1.bf16.msra.mxu0 %v1023
      %1034 = vmatprep.subr.bf16.mxu0 0
      %1035 = vmatpush1.bf16.msra.mxu0 %v1022
      %1036 = vmatprep.subr.bf16.mxu0 0
      %1037 = vmatpush1.bf16.msra.mxu0 %v1021
      %1038 = vmatprep.subr.bf16.mxu0 0
      %1039 = vmatpush1.bf16.msra.mxu0 %v1020
      %1040 = vmatprep.subr.bf16.mxu0 0
      %1041 = vmatpush1.bf16.msra.mxu0 %v1019
      %1042 = vmatprep.subr.bf16.mxu0 0
      %1043 = vmatpush1.bf16.msra.mxu0 %v1018
      %1044 = vmatprep.subr.bf16.mxu0 0
      %1045 = vmatpush1.bf16.msra.mxu0 %v1017
      %1046 = vmatprep.subr.bf16.mxu0 0
      %1047 = vmatpush1.bf16.msra.mxu0 %v1016
      %1048 = vmatprep.subr.bf16.mxu0 0
      %1049 = vmatpush2.bf16.msra.mxu0 0
      %1050 = vmatprep.subr.bf16.mxu0 0
      %1051 = vmatpush2.bf16.msra.mxu0 0
      %1052 = vmatprep.subr.bf16.mxu0 0
      %1053 = vmatpush2.bf16.msra.mxu0 0
      %1054 = vmatprep.subr.bf16.mxu0 0
      %1055 = vmatpush2.bf16.msra.mxu0 0
      %1056 = vmatprep.subr.bf16.mxu0 0
      %1057 = vmatpush2.bf16.msra.mxu0 0
      %1058 = vmatprep.subr.bf16.mxu0 0
      %1059 = vmatpush2.bf16.msra.mxu0 0
      %1060 = vmatprep.subr.bf16.mxu0 0
      %1061 = vmatpush2.bf16.msra.mxu0 0
      %1062 = vmatprep.subr.bf16.mxu0 0
      %1063 = vmatpush2.bf16.msra.mxu0 0
      %1064 = vmatprep.mubr.bf16.mxu0 0
      %1065 = vmatmul.mubr.bf16.gmra.mxu0 %v975
      %v1066 = vpop.f32.mrf.mxu0
      %v1067 = vadd.f32 %v982, %v1066
      %v1068 = vpop.f32.mrf.mxu0
      %v1069 = vpop.f32.mrf.mxu0
      %v1070 = vadd.f32 %v982, %v1069
      %v1071 = vpop.f32.mrf.mxu0
      %1072 = vmatprep.mubr.bf16.mxu0 0
      %1073 = vmatmul.mubr.bf16.gmra.mxu0 %v976
      %v1074 = vpop.f32.mrf.mxu0
      %v1075 = vadd.f32 %v982, %v1074
      %v1076 = vpop.f32.mrf.mxu0
      %v1077 = vpop.f32.mrf.mxu0
      %v1078 = vadd.f32 %v982, %v1077
      %v1079 = vpop.f32.mrf.mxu0
      %1080 = vdwg.mxu0
      %v1081 = vadd.f32 %v1067, %v543
      %v1082 = vadd.f32 %v1070, %v544
      %v1083 = vadd.f32 %v1075, %v545
      %v1084 = vadd.f32 %v1078, %v546
      %v1085 = vld [vmem:[%s13] sm:$0x1]
      %v1086 = vld [vmem:[%s14] sm:$0x1]
      %1087 = vadd.xlane.f32.xlu0 %v849
      %v1088 = vpop.xlane.xlu0 %1087
      %1089 = vadd.xlane.f32.xlu0 %v850
      %v1090 = vpop.xlane.xlu0 %1089
      %1091 = vadd.xlane.f32.xlu0 %v851
      %v1092 = vpop.xlane.xlu0 %1091
      %1093 = vadd.xlane.f32.xlu0 %v852
      %v1094 = vpop.xlane.xlu0 %1093
      %v1095 = vmul.f32 %v1088, %v634
      %v1096 = vmul.f32 %v1090, %v634
      %v1097 = vmul.f32 %v1092, %v634
      %v1098 = vmul.f32 %v1094, %v634
      %v1099 = vsub.f32 %v849, %v1095
      %v1100 = vsub.f32 %v850, %v1096
      %v1101 = vsub.f32 %v851, %v1097
      %v1102 = vsub.f32 %v852, %v1098
      %v1103 = vmul.f32 %v1099, %v1099
      %v1104 = vmul.f32 %v1100, %v1100
      %v1105 = vmul.f32 %v1101, %v1101
      %v1106 = vmul.f32 %v1102, %v1102
      %1107 = vadd.xlane.f32.xlu0 %v1103
      %v1108 = vpop.xlane.xlu0 %1107
      %1109 = vadd.xlane.f32.xlu0 %v1104
      %v1110 = vpop.xlane.xlu0 %1109
      %1111 = vadd.xlane.f32.xlu0 %v1105
      %v1112 = vpop.xlane.xlu0 %1111
      %1113 = vadd.xlane.f32.xlu0 %v1106
      %v1114 = vpop.xlane.xlu0 %1113
      %v1115 = vmul.f32 %v1108, %v634
      %v1116 = vmul.f32 %v1110, %v634
      %v1117 = vmul.f32 %v1112, %v634
      %v1118 = vmul.f32 %v1114, %v634
      %v1119 = vadd.f32 %v1115, 1e-05
      %v1120 = vadd.f32 %v1116, 1e-05
      %v1121 = vadd.f32 %v1117, 1e-05
      %v1122 = vadd.f32 %v1118, 1e-05
      %v1123 = vrsqrt.pop %v1119
      %v1124 = vrsqrt.pop %v1120
      %v1125 = vrsqrt.pop %v1121
      %v1126 = vrsqrt.pop %v1122
      %v1127 = vmul.f32 %v1099, %v1123
      %v1128 = vmul.f32 %v1100, %v1124
      %v1129 = vmul.f32 %v1101, %v1125
      %v1130 = vmul.f32 %v1102, %v1126
      %v1132 = vlaneseq
      %v1133 = vshrl.u32 %v1132, 7
      %v1134 = vsub.s32 0, %v1133
      %v1135 = vrot.slane %v1085, %v1134
      %v1137 = vmul.f32 %v1127, %v1135
      %v1138 = vmul.f32 %v1128, %v1135
      %v1139 = vmul.f32 %v1129, %v1135
      %v1140 = vmul.f32 %v1130, %v1135
      %v1142 = vlaneseq
      %v1143 = vshrl.u32 %v1142, 7
      %v1144 = vsub.s32 0, %v1143
      %v1145 = vrot.slane %v1086, %v1144
      %v1147 = vadd.f32 %v1137, %v1145
      %v1148 = vadd.f32 %v1138, %v1145
      %v1149 = vadd.f32 %v1139, %v1145
      %v1150 = vadd.f32 %v1140, %v1145
      %1151 = vadd.xlane.f32.xlu0 %v1081
      %v1152 = vpop.xlane.xlu0 %1151
      %1153 = vadd.xlane.f32.xlu0 %v1082
      %v1154 = vpop.xlane.xlu0 %1153
      %1155 = vadd.xlane.f32.xlu0 %v1083
      %v1156 = vpop.xlane.xlu0 %1155
      %1157 = vadd.xlane.f32.xlu0 %v1084
      %v1158 = vpop.xlane.xlu0 %1157
      %v1159 = vmul.f32 %v1152, %v634
      %v1160 = vmul.f32 %v1154, %v634
      %v1161 = vmul.f32 %v1156, %v634
      %v1162 = vmul.f32 %v1158, %v634
      %v1163 = vsub.f32 %v1081, %v1159
      %v1164 = vsub.f32 %v1082, %v1160
      %v1165 = vsub.f32 %v1083, %v1161
      %v1166 = vsub.f32 %v1084, %v1162
      %v1167 = vmul.f32 %v1163, %v1163
      %v1168 = vmul.f32 %v1164, %v1164
      %v1169 = vmul.f32 %v1165, %v1165
      %v1170 = vmul.f32 %v1166, %v1166
      %1171 = vadd.xlane.f32.xlu0 %v1167
      %v1172 = vpop.xlane.xlu0 %1171
      %1173 = vadd.xlane.f32.xlu0 %v1168
      %v1174 = vpop.xlane.xlu0 %1173
      %1175 = vadd.xlane.f32.xlu0 %v1169
      %v1176 = vpop.xlane.xlu0 %1175
      %1177 = vadd.xlane.f32.xlu0 %v1170
      %v1178 = vpop.xlane.xlu0 %1177
      %v1179 = vmul.f32 %v1172, %v634
      %v1180 = vmul.f32 %v1174, %v634
      %v1181 = vmul.f32 %v1176, %v634
      %v1182 = vmul.f32 %v1178, %v634
      %v1183 = vadd.f32 %v1179, 1e-05
      %v1184 = vadd.f32 %v1180, 1e-05
      %v1185 = vadd.f32 %v1181, 1e-05
      %v1186 = vadd.f32 %v1182, 1e-05
      %v1187 = vrsqrt.pop %v1183
      %v1188 = vrsqrt.pop %v1184
      %v1189 = vrsqrt.pop %v1185
      %v1190 = vrsqrt.pop %v1186
      %v1191 = vmul.f32 %v1163, %v1187
      %v1192 = vmul.f32 %v1164, %v1188
      %v1193 = vmul.f32 %v1165, %v1189
      %v1194 = vmul.f32 %v1166, %v1190
      %v1195 = vmul.f32 %v1191, %v1135
      %v1196 = vmul.f32 %v1192, %v1135
      %v1197 = vmul.f32 %v1193, %v1135
      %v1198 = vmul.f32 %v1194, %v1135
      %v1199 = vadd.f32 %v1195, %v1145
      %v1200 = vadd.f32 %v1196, %v1145
      %v1201 = vadd.f32 %v1197, %v1145
      %v1202 = vadd.f32 %v1198, %v1145
      %v1207 = vcombine.high %v1147, %v1147
      %v1209 = vunpack.c.l.s4 1966171168
      %v1210 = vunpack.c.0.s8 %v1209
      %v1211 = vlaneseq
      %v1212 = vshrl.u32 %v1211, 7
      %v1213 = vsub.s32 %v1210, %v1212
      %v1214 = vrot.slane %v1147, %v1213
      %v1216 = vunpack.c.l.s4 1966171168
      %v1217 = vunpack.c.0.s8 %v1216
      %v1218 = vlaneseq
      %v1219 = vshrl.u32 %v1218, 7
      %v1220 = vsub.s32 %v1217, %v1219
      %v1221 = vrot.slane %v1207, %v1220
      %v1222 = vcombine.high %v1214, %v1214
      %v1223 = vcombine.high %v1221, %v1221
      %v1225 = vunpack.c.l.s4 1966171168
      %v1226 = vunpack.c.0.s8 %v1225
      %v1227 = vlaneseq
      %v1228 = vshrl.u32 %v1227, 7
      %v1229 = vsub.s32 %v1226, %v1228
      %v1230 = vrot.slane %v1214, %v1229
      %v1232 = vunpack.c.l.s4 1966171168
      %v1233 = vunpack.c.0.s8 %v1232
      %v1234 = vlaneseq
      %v1235 = vshrl.u32 %v1234, 7
      %v1236 = vsub.s32 %v1233, %v1235
      %v1237 = vrot.slane %v1221, %v1236
      %v1239 = vunpack.c.l.s4 1966171168
      %v1240 = vunpack.c.0.s8 %v1239
      %v1241 = vlaneseq
      %v1242 = vshrl.u32 %v1241, 7
      %v1243 = vsub.s32 %v1240, %v1242
      %v1244 = vrot.slane %v1222, %v1243
      %v1246 = vunpack.c.l.s4 1966171168
      %v1247 = vunpack.c.0.s8 %v1246
      %v1248 = vlaneseq
      %v1249 = vshrl.u32 %v1248, 7
      %v1250 = vsub.s32 %v1247, %v1249
      %v1251 = vrot.slane %v1223, %v1250
      %v1252 = vcombine.high %v1230, %v1230
      %v1253 = vcombine.high %v1237, %v1237
      %v1254 = vcombine.high %v1244, %v1244
      %v1255 = vcombine.high %v1251, %v1251
      %v1256 = vcombine.high %v1148, %v1148
      %v1258 = vunpack.c.l.s4 1966171168
      %v1259 = vunpack.c.0.s8 %v1258
      %v1260 = vlaneseq
      %v1261 = vshrl.u32 %v1260, 7
      %v1262 = vsub.s32 %v1259, %v1261
      %v1263 = vrot.slane %v1148, %v1262
      %v1265 = vunpack.c.l.s4 1966171168
      %v1266 = vunpack.c.0.s8 %v1265
      %v1267 = vlaneseq
      %v1268 = vshrl.u32 %v1267, 7
      %v1269 = vsub.s32 %v1266, %v1268
      %v1270 = vrot.slane %v1256, %v1269
      %v1271 = vcombine.high %v1263, %v1263
      %v1272 = vcombine.high %v1270, %v1270
      %v1274 = vunpack.c.l.s4 1966171168
      %v1275 = vunpack.c.0.s8 %v1274
      %v1276 = vlaneseq
      %v1277 = vshrl.u32 %v1276, 7
      %v1278 = vsub.s32 %v1275, %v1277
      %v1279 = vrot.slane %v1263, %v1278
      %v1281 = vunpack.c.l.s4 1966171168
      %v1282 = vunpack.c.0.s8 %v1281
      %v1283 = vlaneseq
      %v1284 = vshrl.u32 %v1283, 7
      %v1285 = vsub.s32 %v1282, %v1284
      %v1286 = vrot.slane %v1270, %v1285
      %v1288 = vunpack.c.l.s4 1966171168
      %v1289 = vunpack.c.0.s8 %v1288
      %v1290 = vlaneseq
      %v1291 = vshrl.u32 %v1290, 7
      %v1292 = vsub.s32 %v1289, %v1291
      %v1293 = vrot.slane %v1271, %v1292
      %v1295 = vunpack.c.l.s4 1966171168
      %v1296 = vunpack.c.0.s8 %v1295
      %v1297 = vlaneseq
      %v1298 = vshrl.u32 %v1297, 7
      %v1299 = vsub.s32 %v1296, %v1298
      %v1300 = vrot.slane %v1272, %v1299
      %v1301 = vcombine.high %v1279, %v1279
      %v1302 = vcombine.high %v1286, %v1286
      %v1303 = vcombine.high %v1293, %v1293
      %v1304 = vcombine.high %v1300, %v1300
      %v1305 = vcombine.high %v1149, %v1149
      %v1307 = vunpack.c.l.s4 1966171168
      %v1308 = vunpack.c.0.s8 %v1307
      %v1309 = vlaneseq
      %v1310 = vshrl.u32 %v1309, 7
      %v1311 = vsub.s32 %v1308, %v1310
      %v1312 = vrot.slane %v1149, %v1311
      %v1314 = vunpack.c.l.s4 1966171168
      %v1315 = vunpack.c.0.s8 %v1314
      %v1316 = vlaneseq
      %v1317 = vshrl.u32 %v1316, 7
      %v1318 = vsub.s32 %v1315, %v1317
      %v1319 = vrot.slane %v1305, %v1318
      %v1320 = vcombine.high %v1312, %v1312
      %v1321 = vcombine.high %v1319, %v1319
      %v1323 = vunpack.c.l.s4 1966171168
      %v1324 = vunpack.c.0.s8 %v1323
      %v1325 = vlaneseq
      %v1326 = vshrl.u32 %v1325, 7
      %v1327 = vsub.s32 %v1324, %v1326
      %v1328 = vrot.slane %v1312, %v1327
      %v1330 = vunpack.c.l.s4 1966171168
      %v1331 = vunpack.c.0.s8 %v1330
      %v1332 = vlaneseq
      %v1333 = vshrl.u32 %v1332, 7
      %v1334 = vsub.s32 %v1331, %v1333
      %v1335 = vrot.slane %v1319, %v1334
      %v1337 = vunpack.c.l.s4 1966171168
      %v1338 = vunpack.c.0.s8 %v1337
      %v1339 = vlaneseq
      %v1340 = vshrl.u32 %v1339, 7
      %v1341 = vsub.s32 %v1338, %v1340
      %v1342 = vrot.slane %v1320, %v1341
      %v1344 = vunpack.c.l.s4 1966171168
      %v1345 = vunpack.c.0.s8 %v1344
      %v1346 = vlaneseq
      %v1347 = vshrl.u32 %v1346, 7
      %v1348 = vsub.s32 %v1345, %v1347
      %v1349 = vrot.slane %v1321, %v1348
      %v1350 = vcombine.high %v1328, %v1328
      %v1351 = vcombine.high %v1335, %v1335
      %v1352 = vcombine.high %v1342, %v1342
      %v1353 = vcombine.high %v1349, %v1349
      %v1354 = vcombine.high %v1150, %v1150
      %v1356 = vunpack.c.l.s4 1966171168
      %v1357 = vunpack.c.0.s8 %v1356
      %v1358 = vlaneseq
      %v1359 = vshrl.u32 %v1358, 7
      %v1360 = vsub.s32 %v1357, %v1359
      %v1361 = vrot.slane %v1150, %v1360
      %v1363 = vunpack.c.l.s4 1966171168
      %v1364 = vunpack.c.0.s8 %v1363
      %v1365 = vlaneseq
      %v1366 = vshrl.u32 %v1365, 7
      %v1367 = vsub.s32 %v1364, %v1366
      %v1368 = vrot.slane %v1354, %v1367
      %v1369 = vcombine.high %v1361, %v1361
      %v1370 = vcombine.high %v1368, %v1368
      %v1372 = vunpack.c.l.s4 1966171168
      %v1373 = vunpack.c.0.s8 %v1372
      %v1374 = vlaneseq
      %v1375 = vshrl.u32 %v1374, 7
      %v1376 = vsub.s32 %v1373, %v1375
      %v1377 = vrot.slane %v1361, %v1376
      %v1379 = vunpack.c.l.s4 1966171168
      %v1380 = vunpack.c.0.s8 %v1379
      %v1381 = vlaneseq
      %v1382 = vshrl.u32 %v1381, 7
      %v1383 = vsub.s32 %v1380, %v1382
      %v1384 = vrot.slane %v1368, %v1383
      %v1386 = vunpack.c.l.s4 1966171168
      %v1387 = vunpack.c.0.s8 %v1386
      %v1388 = vlaneseq
      %v1389 = vshrl.u32 %v1388, 7
      %v1390 = vsub.s32 %v1387, %v1389
      %v1391 = vrot.slane %v1369, %v1390
      %v1393 = vunpack.c.l.s4 1966171168
      %v1394 = vunpack.c.0.s8 %v1393
      %v1395 = vlaneseq
      %v1396 = vshrl.u32 %v1395, 7
      %v1397 = vsub.s32 %v1394, %v1396
      %v1398 = vrot.slane %v1370, %v1397
      %v1399 = vcombine.high %v1377, %v1377
      %v1400 = vcombine.high %v1384, %v1384
      %v1401 = vcombine.high %v1391, %v1391
      %v1402 = vcombine.high %v1398, %v1398
      %1435 = vst [vmem:[%s540] sm:$0x1] %v1230
      %1436 = vst [vmem:[%s540 + $0x2] sm:$0x1] %v1244
      %1437 = vst [vmem:[%s540 + $0x4] sm:$0x1] %v1252
      %1438 = vst [vmem:[%s540 + $0x6] sm:$0x1] %v1254
      %1439 = vst [vmem:[%s540 + $0x8] sm:$0x1] %v1237
      %1440 = vst [vmem:[%s540 + $0xa] sm:$0x1] %v1251
      %1441 = vst [vmem:[%s540 + $0xc] sm:$0x1] %v1253
      %1442 = vst [vmem:[%s540 + $0xe] sm:$0x1] %v1255
      %1443 = vst [vmem:[%s540 + $0x10] sm:$0x1] %v1279
      %1444 = vst [vmem:[%s540 + $0x12] sm:$0x1] %v1293
      %1445 = vst [vmem:[%s540 + $0x14] sm:$0x1] %v1301
      %1446 = vst [vmem:[%s540 + $0x16] sm:$0x1] %v1303
      %1447 = vst [vmem:[%s540 + $0x18] sm:$0x1] %v1286
      %1448 = vst [vmem:[%s540 + $0x1a] sm:$0x1] %v1300
      %1449 = vst [vmem:[%s540 + $0x1c] sm:$0x1] %v1302
      %1450 = vst [vmem:[%s540 + $0x1e] sm:$0x1] %v1304
      %1451 = vst [vmem:[%s540 + $0x20] sm:$0x1] %v1328
      %1452 = vst [vmem:[%s540 + $0x22] sm:$0x1] %v1342
      %1453 = vst [vmem:[%s540 + $0x24] sm:$0x1] %v1350
      %1454 = vst [vmem:[%s540 + $0x26] sm:$0x1] %v1352
      %1455 = vst [vmem:[%s540 + $0x28] sm:$0x1] %v1335
      %1456 = vst [vmem:[%s540 + $0x2a] sm:$0x1] %v1349
      %1457 = vst [vmem:[%s540 + $0x2c] sm:$0x1] %v1351
      %1458 = vst [vmem:[%s540 + $0x2e] sm:$0x1] %v1353
      %1459 = vst [vmem:[%s540 + $0x30] sm:$0x1] %v1377
      %1460 = vst [vmem:[%s540 + $0x32] sm:$0x1] %v1391
      %1461 = vst [vmem:[%s540 + $0x34] sm:$0x1] %v1399
      %1462 = vst [vmem:[%s540 + $0x36] sm:$0x1] %v1401
      %1463 = vst [vmem:[%s540 + $0x38] sm:$0x1] %v1384
      %1464 = vst [vmem:[%s540 + $0x3a] sm:$0x1] %v1398
      %1465 = vst [vmem:[%s540 + $0x3c] sm:$0x1] %v1400
      %1466 = vst [vmem:[%s540 + $0x3e] sm:$0x1] %v1402
      %v1471 = vcombine.high %v1199, %v1199
      %v1473 = vunpack.c.l.s4 1966171168
      %v1474 = vunpack.c.0.s8 %v1473
      %v1475 = vlaneseq
      %v1476 = vshrl.u32 %v1475, 7
      %v1477 = vsub.s32 %v1474, %v1476
      %v1478 = vrot.slane %v1199, %v1477
      %v1480 = vunpack.c.l.s4 1966171168
      %v1481 = vunpack.c.0.s8 %v1480
      %v1482 = vlaneseq
      %v1483 = vshrl.u32 %v1482, 7
      %v1484 = vsub.s32 %v1481, %v1483
      %v1485 = vrot.slane %v1471, %v1484
      %v1486 = vcombine.high %v1478, %v1478
      %v1487 = vcombine.high %v1485, %v1485
      %v1489 = vunpack.c.l.s4 1966171168
      %v1490 = vunpack.c.0.s8 %v1489
      %v1491 = vlaneseq
      %v1492 = vshrl.u32 %v1491, 7
      %v1493 = vsub.s32 %v1490, %v1492
      %v1494 = vrot.slane %v1478, %v1493
      %v1496 = vunpack.c.l.s4 1966171168
      %v1497 = vunpack.c.0.s8 %v1496
      %v1498 = vlaneseq
      %v1499 = vshrl.u32 %v1498, 7
      %v1500 = vsub.s32 %v1497, %v1499
      %v1501 = vrot.slane %v1485, %v1500
      %v1503 = vunpack.c.l.s4 1966171168
      %v1504 = vunpack.c.0.s8 %v1503
      %v1505 = vlaneseq
      %v1506 = vshrl.u32 %v1505, 7
      %v1507 = vsub.s32 %v1504, %v1506
      %v1508 = vrot.slane %v1486, %v1507
      %v1510 = vunpack.c.l.s4 1966171168
      %v1511 = vunpack.c.0.s8 %v1510
      %v1512 = vlaneseq
      %v1513 = vshrl.u32 %v1512, 7
      %v1514 = vsub.s32 %v1511, %v1513
      %v1515 = vrot.slane %v1487, %v1514
      %v1516 = vcombine.high %v1494, %v1494
      %v1517 = vcombine.high %v1501, %v1501
      %v1518 = vcombine.high %v1508, %v1508
      %v1519 = vcombine.high %v1515, %v1515
      %v1520 = vcombine.high %v1200, %v1200
      %v1522 = vunpack.c.l.s4 1966171168
      %v1523 = vunpack.c.0.s8 %v1522
      %v1524 = vlaneseq
      %v1525 = vshrl.u32 %v1524, 7
      %v1526 = vsub.s32 %v1523, %v1525
      %v1527 = vrot.slane %v1200, %v1526
      %v1529 = vunpack.c.l.s4 1966171168
      %v1530 = vunpack.c.0.s8 %v1529
      %v1531 = vlaneseq
      %v1532 = vshrl.u32 %v1531, 7
      %v1533 = vsub.s32 %v1530, %v1532
      %v1534 = vrot.slane %v1520, %v1533
      %v1535 = vcombine.high %v1527, %v1527
      %v1536 = vcombine.high %v1534, %v1534
      %v1538 = vunpack.c.l.s4 1966171168
      %v1539 = vunpack.c.0.s8 %v1538
      %v1540 = vlaneseq
      %v1541 = vshrl.u32 %v1540, 7
      %v1542 = vsub.s32 %v1539, %v1541
      %v1543 = vrot.slane %v1527, %v1542
      %v1545 = vunpack.c.l.s4 1966171168
      %v1546 = vunpack.c.0.s8 %v1545
      %v1547 = vlaneseq
      %v1548 = vshrl.u32 %v1547, 7
      %v1549 = vsub.s32 %v1546, %v1548
      %v1550 = vrot.slane %v1534, %v1549
      %v1552 = vunpack.c.l.s4 1966171168
      %v1553 = vunpack.c.0.s8 %v1552
      %v1554 = vlaneseq
      %v1555 = vshrl.u32 %v1554, 7
      %v1556 = vsub.s32 %v1553, %v1555
      %v1557 = vrot.slane %v1535, %v1556
      %v1559 = vunpack.c.l.s4 1966171168
      %v1560 = vunpack.c.0.s8 %v1559
      %v1561 = vlaneseq
      %v1562 = vshrl.u32 %v1561, 7
      %v1563 = vsub.s32 %v1560, %v1562
      %v1564 = vrot.slane %v1536, %v1563
      %v1565 = vcombine.high %v1543, %v1543
      %v1566 = vcombine.high %v1550, %v1550
      %v1567 = vcombine.high %v1557, %v1557
      %v1568 = vcombine.high %v1564, %v1564
      %v1569 = vcombine.high %v1201, %v1201
      %v1571 = vunpack.c.l.s4 1966171168
      %v1572 = vunpack.c.0.s8 %v1571
      %v1573 = vlaneseq
      %v1574 = vshrl.u32 %v1573, 7
      %v1575 = vsub.s32 %v1572, %v1574
      %v1576 = vrot.slane %v1201, %v1575
      %v1578 = vunpack.c.l.s4 1966171168
      %v1579 = vunpack.c.0.s8 %v1578
      %v1580 = vlaneseq
      %v1581 = vshrl.u32 %v1580, 7
      %v1582 = vsub.s32 %v1579, %v1581
      %v1583 = vrot.slane %v1569, %v1582
      %v1584 = vcombine.high %v1576, %v1576
      %v1585 = vcombine.high %v1583, %v1583
      %v1587 = vunpack.c.l.s4 1966171168
      %v1588 = vunpack.c.0.s8 %v1587
      %v1589 = vlaneseq
      %v1590 = vshrl.u32 %v1589, 7
      %v1591 = vsub.s32 %v1588, %v1590
      %v1592 = vrot.slane %v1576, %v1591
      %v1594 = vunpack.c.l.s4 1966171168
      %v1595 = vunpack.c.0.s8 %v1594
      %v1596 = vlaneseq
      %v1597 = vshrl.u32 %v1596, 7
      %v1598 = vsub.s32 %v1595, %v1597
      %v1599 = vrot.slane %v1583, %v1598
      %v1601 = vunpack.c.l.s4 1966171168
      %v1602 = vunpack.c.0.s8 %v1601
      %v1603 = vlaneseq
      %v1604 = vshrl.u32 %v1603, 7
      %v1605 = vsub.s32 %v1602, %v1604
      %v1606 = vrot.slane %v1584, %v1605
      %v1608 = vunpack.c.l.s4 1966171168
      %v1609 = vunpack.c.0.s8 %v1608
      %v1610 = vlaneseq
      %v1611 = vshrl.u32 %v1610, 7
      %v1612 = vsub.s32 %v1609, %v1611
      %v1613 = vrot.slane %v1585, %v1612
      %v1614 = vcombine.high %v1592, %v1592
      %v1615 = vcombine.high %v1599, %v1599
      %v1616 = vcombine.high %v1606, %v1606
      %v1617 = vcombine.high %v1613, %v1613
      %v1618 = vcombine.high %v1202, %v1202
      %v1620 = vunpack.c.l.s4 1966171168
      %v1621 = vunpack.c.0.s8 %v1620
      %v1622 = vlaneseq
      %v1623 = vshrl.u32 %v1622, 7
      %v1624 = vsub.s32 %v1621, %v1623
      %v1625 = vrot.slane %v1202, %v1624
      %v1627 = vunpack.c.l.s4 1966171168
      %v1628 = vunpack.c.0.s8 %v1627
      %v1629 = vlaneseq
      %v1630 = vshrl.u32 %v1629, 7
      %v1631 = vsub.s32 %v1628, %v1630
      %v1632 = vrot.slane %v1618, %v1631
      %v1633 = vcombine.high %v1625, %v1625
      %v1634 = vcombine.high %v1632, %v1632
      %v1636 = vunpack.c.l.s4 1966171168
      %v1637 = vunpack.c.0.s8 %v1636
      %v1638 = vlaneseq
      %v1639 = vshrl.u32 %v1638, 7
      %v1640 = vsub.s32 %v1637, %v1639
      %v1641 = vrot.slane %v1625, %v1640
      %v1643 = vunpack.c.l.s4 1966171168
      %v1644 = vunpack.c.0.s8 %v1643
      %v1645 = vlaneseq
      %v1646 = vshrl.u32 %v1645, 7
      %v1647 = vsub.s32 %v1644, %v1646
      %v1648 = vrot.slane %v1632, %v1647
      %v1650 = vunpack.c.l.s4 1966171168
      %v1651 = vunpack.c.0.s8 %v1650
      %v1652 = vlaneseq
      %v1653 = vshrl.u32 %v1652, 7
      %v1654 = vsub.s32 %v1651, %v1653
      %v1655 = vrot.slane %v1633, %v1654
      %v1657 = vunpack.c.l.s4 1966171168
      %v1658 = vunpack.c.0.s8 %v1657
      %v1659 = vlaneseq
      %v1660 = vshrl.u32 %v1659, 7
      %v1661 = vsub.s32 %v1658, %v1660
      %v1662 = vrot.slane %v1634, %v1661
      %v1663 = vcombine.high %v1641, %v1641
      %v1664 = vcombine.high %v1648, %v1648
      %v1665 = vcombine.high %v1655, %v1655
      %v1666 = vcombine.high %v1662, %v1662
      %1699 = vst [vmem:[%s540 + $0x1] sm:$0x1] %v1494
      %1700 = vst [vmem:[%s540 + $0x3] sm:$0x1] %v1508
      %1701 = vst [vmem:[%s540 + $0x5] sm:$0x1] %v1516
      %1702 = vst [vmem:[%s540 + $0x7] sm:$0x1] %v1518
      %1703 = vst [vmem:[%s540 + $0x9] sm:$0x1] %v1501
      %1704 = vst [vmem:[%s540 + $0xb] sm:$0x1] %v1515
      %1705 = vst [vmem:[%s540 + $0xd] sm:$0x1] %v1517
      %1706 = vst [vmem:[%s540 + $0xf] sm:$0x1] %v1519
      %1707 = vst [vmem:[%s540 + $0x11] sm:$0x1] %v1543
      %1708 = vst [vmem:[%s540 + $0x13] sm:$0x1] %v1557
      %1709 = vst [vmem:[%s540 + $0x15] sm:$0x1] %v1565
      %1710 = vst [vmem:[%s540 + $0x17] sm:$0x1] %v1567
      %1711 = vst [vmem:[%s540 + $0x19] sm:$0x1] %v1550
      %1712 = vst [vmem:[%s540 + $0x1b] sm:$0x1] %v1564
      %1713 = vst [vmem:[%s540 + $0x1d] sm:$0x1] %v1566
      %1714 = vst [vmem:[%s540 + $0x1f] sm:$0x1] %v1568
      %1715 = vst [vmem:[%s540 + $0x21] sm:$0x1] %v1592
      %1716 = vst [vmem:[%s540 + $0x23] sm:$0x1] %v1606
      %1717 = vst [vmem:[%s540 + $0x25] sm:$0x1] %v1614
      %1718 = vst [vmem:[%s540 + $0x27] sm:$0x1] %v1616
      %1719 = vst [vmem:[%s540 + $0x29] sm:$0x1] %v1599
      %1720 = vst [vmem:[%s540 + $0x2b] sm:$0x1] %v1613
      %1721 = vst [vmem:[%s540 + $0x2d] sm:$0x1] %v1615
      %1722 = vst [vmem:[%s540 + $0x2f] sm:$0x1] %v1617
      %1723 = vst [vmem:[%s540 + $0x31] sm:$0x1] %v1641
      %1724 = vst [vmem:[%s540 + $0x33] sm:$0x1] %v1655
      %1725 = vst [vmem:[%s540 + $0x35] sm:$0x1] %v1663
      %1726 = vst [vmem:[%s540 + $0x37] sm:$0x1] %v1665
      %1727 = vst [vmem:[%s540 + $0x39] sm:$0x1] %v1648
      %1728 = vst [vmem:[%s540 + $0x3b] sm:$0x1] %v1662
      %1729 = vst [vmem:[%s540 + $0x3d] sm:$0x1] %v1664
      %1730 = vst [vmem:[%s540 + $0x3f] sm:$0x1] %v1666
      %s1731 = smul.u32 32, %s26
      %p1732 = scmp.lt.s32.totalorder %s1731, 63
      %s1733 = scalar_select %p1732, %s1731, 63
      %s1734 = smul.addr %s1733, 2
      %s1735 = scalar_lea.vmem %s15, %s1734
      // Predicated region
      $region81: #{transformer_policy_forward.3} parent=79 // pred_check
        %p1736 = pneg %p374
      $region82: #{transformer_policy_forward.3} parent=79 // pred_check_branch
        %1738 = sbr.rel (%p1736) target = $region84
      $region83: #{transformer_policy_forward.3} parent=79 // pred_region
        %s1739 = smul.u32 32, %s26
      $region84: #{transformer_policy_forward.3} parent=79 // pred_fallthru
        _
    $region80: #{transformer_policy_forward.3} parent=5 // pred_fallthru
      _
    %p1740 = scmp.le.s32.totalorder 2, %s21
    // Predicated region
    $region85: #{transformer_policy_forward.3} parent=5 // pred_check
      %p1741 = pneg %p1740
    $region86: #{transformer_policy_forward.3} parent=5 // pred_check_branch
      %1743 = sbr.rel (%p1741) target = $region88
    $region87: #{transformer_policy_forward.3} parent=5 // pred_region
      %s1744 = ssub.s32 %s21, 2
      // Predicated region
      $region89: #{transformer_policy_forward.3} parent=87 // pred_check
        %p1745 = pneg %p380
      $region90: #{transformer_policy_forward.3} parent=87 // pred_check_branch
        %1747 = sbr.rel (%p1745) target = $region92
      $region91: #{transformer_policy_forward.3} parent=87 // pred_region
        %s1748 = smul.u32 32, %s27
        %p1749 = scmp.lt.s32.totalorder %s1748, 63
        %s1750 = scalar_select %p1749, %s1748, 63
        %s1751 = smul.addr %s1750, 2
        %s1752 = scalar_lea.vmem %s15, %s1751
      $region92: #{transformer_policy_forward.3} parent=87 // pred_fallthru
        _
    $region88: #{transformer_policy_forward.3} parent=5 // pred_fallthru
      _
  $region6: #{transformer_policy_forward.3} parent=0 // loop_footer
    %s25 = sadd.s32 1, %s21
  $region7: #{transformer_policy_forward.3} parent=0 // loop_footer_branch
    %20 = sbr.rel target = $region3
  $region8: #{transformer_policy_forward.3} parent=0 // loop_exit
    _

// kernel: transformer_policy_forward.4
$region0: #{transformer_policy_forward.4}
  #allocation0 [shape = 'u32[]', space=smem, size = 0x4, offset = 0x4, fixed_abs, tag = 'smem constant byte address 0x4 - core index']
  #allocation1 [shape = 'u32[144,128]{1,0:T(1,128)}', space=vmem, size = 0x12000, scoped, tag = 'internal scratch']
  #allocation2 [shape = 'f32[4,16,128]{2,1,0:T(8,128)}', space=vmem, size = 0x8000, scoped, tag = 'scratch operand']
  %s0 = inlined_call_operand.vmem [shape: f32[8,16,128], index: 0, kind: input, shape index: {}]
  %s1 = inlined_call_operand.vmem [shape: f32[2,1,128], index: 1, kind: input, shape index: {}]
  %s2 = inlined_call_operand.vmem [shape: f32[2,1,128], index: 2, kind: input, shape index: {}]
  %s3 = inlined_call_operand.vmem [shape: bf16[2,128,384], index: 3, kind: input, shape index: {}]
  %s4 = inlined_call_operand.vmem [shape: f32[2,1,384], index: 4, kind: input, shape index: {}]
  %s5 = inlined_call_operand.vmem [shape: bf16[2,128,128], index: 5, kind: input, shape index: {}]
  %s6 = inlined_call_operand.vmem [shape: f32[2,1,128], index: 6, kind: input, shape index: {}]
  %s7 = inlined_call_operand.vmem [shape: f32[2,1,128], index: 7, kind: input, shape index: {}]
  %s8 = inlined_call_operand.vmem [shape: f32[2,1,128], index: 8, kind: input, shape index: {}]
  %s9 = inlined_call_operand.vmem [shape: bf16[2,128,512], index: 9, kind: input, shape index: {}]
  %s10 = inlined_call_operand.vmem [shape: f32[2,1,512], index: 10, kind: input, shape index: {}]
  %s11 = inlined_call_operand.vmem [shape: bf16[2,512,128], index: 11, kind: input, shape index: {}]
  %s12 = inlined_call_operand.vmem [shape: f32[2,1,128], index: 12, kind: input, shape index: {}]
  %s13 = inlined_call_operand.vmem [shape: f32[8,16,128], index: 13, kind: output, shape index: {}]
  %s14 = sld [smem:[#allocation0]]
  $region93: #{transformer_policy_forward.4} parent=0
    _
  %s16 = ssub.s32 1, %s14
  %s17 = scalar_select 0, %s16, %s14
  loop: start=0, step=1, limit=6
  $region2: #{transformer_policy_forward.4} parent=0 // loop_pre_header
    _
  $region3: #{transformer_policy_forward.4} parent=0 // loop_header
    %s19 = sphi 0, %s23
    %p20 = scmp.ge.s32.totalorder %s19, 6
    %s26 = sphi 0, %s38
    %s27 = sphi 0, %s34
    %s28 = sphi 0, %s26
    %s29 = sphi 0, %s27
    %s30 = sphi 0, %s28
    %s31 = sphi 0, %s29
    %s41 = sphi 0, %s43
    %s44 = sphi 0, %s41
    %s45 = sphi 0, %s44
    %s61 = sphi 0, %s45
    %s67 = sphi 0, %s69
    %s70 = sphi 0, %s67
    %s71 = sphi 0, %s70
    %s87 = sphi 0, %s71
    %s93 = sphi 0, %s95
    %s96 = sphi 0, %s93
    %s97 = sphi 0, %s96
    %s113 = sphi 0, %s97
    %s119 = sphi 0, %s121
    %s122 = sphi 0, %s119
    %s123 = sphi 0, %s122
    %s139 = sphi 0, %s123
    %s145 = sphi 0, %s147
    %s148 = sphi 0, %s145
    %s149 = sphi 0, %s148
    %s165 = sphi 0, %s149
    %s171 = sphi 0, %s173
    %s174 = sphi 0, %s171
    %s175 = sphi 0, %s174
    %s191 = sphi 0, %s175
    %s197 = sphi 0, %s199
    %s200 = sphi 0, %s197
    %s201 = sphi 0, %s200
    %s217 = sphi 0, %s201
    %s223 = sphi 0, %s225
    %s226 = sphi 0, %s223
    %s227 = sphi 0, %s226
    %s243 = sphi 0, %s227
    %s249 = sphi 0, %s251
    %s252 = sphi 0, %s249
    %s253 = sphi 0, %s252
    %s269 = sphi 0, %s253
    %s275 = sphi 0, %s277
    %s278 = sphi 0, %s275
    %s279 = sphi 0, %s278
    %s295 = sphi 0, %s279
    %s301 = sphi 0, %s303
    %s304 = sphi 0, %s301
    %s305 = sphi 0, %s304
    %s321 = sphi 0, %s305
    %s327 = sphi 0, %s329
    %s330 = sphi 0, %s327
    %s331 = sphi 0, %s330
    %s347 = sphi 0, %s331
    %s353 = sphi 0, %s355
    %s356 = sphi 0, %s353
    %s357 = sphi 0, %s356
    %s373 = sphi 0, %s357
    %s379 = sphi 0, %s381
    %s382 = sphi 0, %s379
    %s383 = sphi 0, %s382
    %s399 = sphi 0, %s383
  $region4: #{transformer_policy_forward.4} parent=0 // loop_header_branch
    %22 = sbr.rel (%p20) target = $region8
  $region5: #{transformer_policy_forward.4} parent=0 // loop_body
    %s24 = ssub.s32 %s19, 1
    %s25 = ssub.s32 %s19, 2
    %s32 = sadd.s32 1, %s27
    %p33 = scmp.ge.s32.totalorder %s32, 2
    %s34 = scalar_select %p33, 0, %s32
    %s35 = sadd.s32 1, %s26
    %s36 = scalar_select %p33, %s35, %s26
    %p37 = scmp.ge.s32.totalorder %s36, 2
    %s38 = scalar_select %p37, 0, %s36
    %s39 = ssub.s32 %s26, %s38
    %p40 = scmp.eq.s32.totalorder %s39, 0
    %s42 = sadd.s32 %s41, 1
    %s43 = scalar_select %p40, %s41, %s42
    %p46 = pneg %p40
    %p47 = scmp.eq.s32.totalorder %s19, 3
    %p48 = por %p46, %p47
    %p49 = scmp.ne.s32.totalorder %s41, %s44
    %p50 = scmp.eq.s32.totalorder %s19, 0
    %p51 = por %p49, %p50
    %p52 = scmp.ne.s32.totalorder %s41, %s44
    %p53 = scmp.eq.s32.totalorder %s24, 3
    %p54 = por %p52, %p53
    %p55 = scmp.ne.s32.totalorder %s44, %s45
    %p56 = scmp.eq.s32.totalorder %s24, 0
    %p57 = por %p55, %p56
    %p58 = scmp.ne.s32.totalorder %s44, %s45
    %p59 = scmp.eq.s32.totalorder %s25, 3
    %p60 = por %p58, %p59
    %p62 = scmp.ne.s32.totalorder %s45, %s61
    %p63 = scmp.eq.s32.totalorder %s25, 0
    %p64 = por %p62, %p63
    %s65 = ssub.s32 %s27, %s34
    %p66 = scmp.eq.s32.totalorder %s65, 0
    %s68 = sadd.s32 %s67, 1
    %s69 = scalar_select %p66, %s67, %s68
    %p72 = pneg %p66
    %p73 = scmp.eq.s32.totalorder %s19, 3
    %p74 = por %p72, %p73
    %p75 = scmp.ne.s32.totalorder %s67, %s70
    %p76 = scmp.eq.s32.totalorder %s19, 0
    %p77 = por %p75, %p76
    %p78 = scmp.ne.s32.totalorder %s67, %s70
    %p79 = scmp.eq.s32.totalorder %s24, 3
    %p80 = por %p78, %p79
    %p81 = scmp.ne.s32.totalorder %s70, %s71
    %p82 = scmp.eq.s32.totalorder %s24, 0
    %p83 = por %p81, %p82
    %p84 = scmp.ne.s32.totalorder %s70, %s71
    %p85 = scmp.eq.s32.totalorder %s25, 3
    %p86 = por %p84, %p85
    %p88 = scmp.ne.s32.totalorder %s71, %s87
    %p89 = scmp.eq.s32.totalorder %s25, 0
    %p90 = por %p88, %p89
    %s91 = ssub.s32 %s27, %s34
    %p92 = scmp.eq.s32.totalorder %s91, 0
    %s94 = sadd.s32 %s93, 1
    %s95 = scalar_select %p92, %s93, %s94
    %p98 = pneg %p92
    %p99 = scmp.eq.s32.totalorder %s19, 3
    %p100 = por %p98, %p99
    %p101 = scmp.ne.s32.totalorder %s93, %s96
    %p102 = scmp.eq.s32.totalorder %s19, 0
    %p103 = por %p101, %p102
    %p104 = scmp.ne.s32.totalorder %s93, %s96
    %p105 = scmp.eq.s32.totalorder %s24, 3
    %p106 = por %p104, %p105
    %p107 = scmp.ne.s32.totalorder %s96, %s97
    %p108 = scmp.eq.s32.totalorder %s24, 0
    %p109 = por %p107, %p108
    %p110 = scmp.ne.s32.totalorder %s96, %s97
    %p111 = scmp.eq.s32.totalorder %s25, 3
    %p112 = por %p110, %p111
    %p114 = scmp.ne.s32.totalorder %s97, %s113
    %p115 = scmp.eq.s32.totalorder %s25, 0
    %p116 = por %p114, %p115
    %s117 = ssub.s32 %s27, %s34
    %p118 = scmp.eq.s32.totalorder %s117, 0
    %s120 = sadd.s32 %s119, 1
    %s121 = scalar_select %p118, %s119, %s120
    %p124 = pneg %p118
    %p125 = scmp.eq.s32.totalorder %s19, 3
    %p126 = por %p124, %p125
    %p127 = scmp.ne.s32.totalorder %s119, %s122
    %p128 = scmp.eq.s32.totalorder %s19, 0
    %p129 = por %p127, %p128
    %p130 = scmp.ne.s32.totalorder %s119, %s122
    %p131 = scmp.eq.s32.totalorder %s24, 3
    %p132 = por %p130, %p131
    %p133 = scmp.ne.s32.totalorder %s122, %s123
    %p134 = scmp.eq.s32.totalorder %s24, 0
    %p135 = por %p133, %p134
    %p136 = scmp.ne.s32.totalorder %s122, %s123
    %p137 = scmp.eq.s32.totalorder %s25, 3
    %p138 = por %p136, %p137
    %p140 = scmp.ne.s32.totalorder %s123, %s139
    %p141 = scmp.eq.s32.totalorder %s25, 0
    %p142 = por %p140, %p141
    %s143 = ssub.s32 %s27, %s34
    %p144 = scmp.eq.s32.totalorder %s143, 0
    %s146 = sadd.s32 %s145, 1
    %s147 = scalar_select %p144, %s145, %s146
    %p150 = pneg %p144
    %p151 = scmp.eq.s32.totalorder %s19, 3
    %p152 = por %p150, %p151
    %p153 = scmp.ne.s32.totalorder %s145, %s148
    %p154 = scmp.eq.s32.totalorder %s19, 0
    %p155 = por %p153, %p154
    %p156 = scmp.ne.s32.totalorder %s145, %s148
    %p157 = scmp.eq.s32.totalorder %s24, 3
    %p158 = por %p156, %p157
    %p159 = scmp.ne.s32.totalorder %s148, %s149
    %p160 = scmp.eq.s32.totalorder %s24, 0
    %p161 = por %p159, %p160
    %p162 = scmp.ne.s32.totalorder %s148, %s149
    %p163 = scmp.eq.s32.totalorder %s25, 3
    %p164 = por %p162, %p163
    %p166 = scmp.ne.s32.totalorder %s149, %s165
    %p167 = scmp.eq.s32.totalorder %s25, 0
    %p168 = por %p166, %p167
    %s169 = ssub.s32 %s27, %s34
    %p170 = scmp.eq.s32.totalorder %s169, 0
    %s172 = sadd.s32 %s171, 1
    %s173 = scalar_select %p170, %s171, %s172
    %p176 = pneg %p170
    %p177 = scmp.eq.s32.totalorder %s19, 3
    %p178 = por %p176, %p177
    %p179 = scmp.ne.s32.totalorder %s171, %s174
    %p180 = scmp.eq.s32.totalorder %s19, 0
    %p181 = por %p179, %p180
    %p182 = scmp.ne.s32.totalorder %s171, %s174
    %p183 = scmp.eq.s32.totalorder %s24, 3
    %p184 = por %p182, %p183
    %p185 = scmp.ne.s32.totalorder %s174, %s175
    %p186 = scmp.eq.s32.totalorder %s24, 0
    %p187 = por %p185, %p186
    %p188 = scmp.ne.s32.totalorder %s174, %s175
    %p189 = scmp.eq.s32.totalorder %s25, 3
    %p190 = por %p188, %p189
    %p192 = scmp.ne.s32.totalorder %s175, %s191
    %p193 = scmp.eq.s32.totalorder %s25, 0
    %p194 = por %p192, %p193
    %s195 = ssub.s32 %s27, %s34
    %p196 = scmp.eq.s32.totalorder %s195, 0
    %s198 = sadd.s32 %s197, 1
    %s199 = scalar_select %p196, %s197, %s198
    %p202 = pneg %p196
    %p203 = scmp.eq.s32.totalorder %s19, 3
    %p204 = por %p202, %p203
    %p205 = scmp.ne.s32.totalorder %s197, %s200
    %p206 = scmp.eq.s32.totalorder %s19, 0
    %p207 = por %p205, %p206
    %p208 = scmp.ne.s32.totalorder %s197, %s200
    %p209 = scmp.eq.s32.totalorder %s24, 3
    %p210 = por %p208, %p209
    %p211 = scmp.ne.s32.totalorder %s200, %s201
    %p212 = scmp.eq.s32.totalorder %s24, 0
    %p213 = por %p211, %p212
    %p214 = scmp.ne.s32.totalorder %s200, %s201
    %p215 = scmp.eq.s32.totalorder %s25, 3
    %p216 = por %p214, %p215
    %p218 = scmp.ne.s32.totalorder %s201, %s217
    %p219 = scmp.eq.s32.totalorder %s25, 0
    %p220 = por %p218, %p219
    %s221 = ssub.s32 %s27, %s34
    %p222 = scmp.eq.s32.totalorder %s221, 0
    %s224 = sadd.s32 %s223, 1
    %s225 = scalar_select %p222, %s223, %s224
    %p228 = pneg %p222
    %p229 = scmp.eq.s32.totalorder %s19, 3
    %p230 = por %p228, %p229
    %p231 = scmp.ne.s32.totalorder %s223, %s226
    %p232 = scmp.eq.s32.totalorder %s19, 0
    %p233 = por %p231, %p232
    %p234 = scmp.ne.s32.totalorder %s223, %s226
    %p235 = scmp.eq.s32.totalorder %s24, 3
    %p236 = por %p234, %p235
    %p237 = scmp.ne.s32.totalorder %s226, %s227
    %p238 = scmp.eq.s32.totalorder %s24, 0
    %p239 = por %p237, %p238
    %p240 = scmp.ne.s32.totalorder %s226, %s227
    %p241 = scmp.eq.s32.totalorder %s25, 3
    %p242 = por %p240, %p241
    %p244 = scmp.ne.s32.totalorder %s227, %s243
    %p245 = scmp.eq.s32.totalorder %s25, 0
    %p246 = por %p244, %p245
    %s247 = ssub.s32 %s27, %s34
    %p248 = scmp.eq.s32.totalorder %s247, 0
    %s250 = sadd.s32 %s249, 1
    %s251 = scalar_select %p248, %s249, %s250
    %p254 = pneg %p248
    %p255 = scmp.eq.s32.totalorder %s19, 3
    %p256 = por %p254, %p255
    %p257 = scmp.ne.s32.totalorder %s249, %s252
    %p258 = scmp.eq.s32.totalorder %s19, 0
    %p259 = por %p257, %p258
    %p260 = scmp.ne.s32.totalorder %s249, %s252
    %p261 = scmp.eq.s32.totalorder %s24, 3
    %p262 = por %p260, %p261
    %p263 = scmp.ne.s32.totalorder %s252, %s253
    %p264 = scmp.eq.s32.totalorder %s24, 0
    %p265 = por %p263, %p264
    %p266 = scmp.ne.s32.totalorder %s252, %s253
    %p267 = scmp.eq.s32.totalorder %s25, 3
    %p268 = por %p266, %p267
    %p270 = scmp.ne.s32.totalorder %s253, %s269
    %p271 = scmp.eq.s32.totalorder %s25, 0
    %p272 = por %p270, %p271
    %s273 = ssub.s32 %s27, %s34
    %p274 = scmp.eq.s32.totalorder %s273, 0
    %s276 = sadd.s32 %s275, 1
    %s277 = scalar_select %p274, %s275, %s276
    %p280 = pneg %p274
    %p281 = scmp.eq.s32.totalorder %s19, 3
    %p282 = por %p280, %p281
    %p283 = scmp.ne.s32.totalorder %s275, %s278
    %p284 = scmp.eq.s32.totalorder %s19, 0
    %p285 = por %p283, %p284
    %p286 = scmp.ne.s32.totalorder %s275, %s278
    %p287 = scmp.eq.s32.totalorder %s24, 3
    %p288 = por %p286, %p287
    %p289 = scmp.ne.s32.totalorder %s278, %s279
    %p290 = scmp.eq.s32.totalorder %s24, 0
    %p291 = por %p289, %p290
    %p292 = scmp.ne.s32.totalorder %s278, %s279
    %p293 = scmp.eq.s32.totalorder %s25, 3
    %p294 = por %p292, %p293
    %p296 = scmp.ne.s32.totalorder %s279, %s295
    %p297 = scmp.eq.s32.totalorder %s25, 0
    %p298 = por %p296, %p297
    %s299 = ssub.s32 %s27, %s34
    %p300 = scmp.eq.s32.totalorder %s299, 0
    %s302 = sadd.s32 %s301, 1
    %s303 = scalar_select %p300, %s301, %s302
    %p306 = pneg %p300
    %p307 = scmp.eq.s32.totalorder %s19, 3
    %p308 = por %p306, %p307
    %p309 = scmp.ne.s32.totalorder %s301, %s304
    %p310 = scmp.eq.s32.totalorder %s19, 0
    %p311 = por %p309, %p310
    %p312 = scmp.ne.s32.totalorder %s301, %s304
    %p313 = scmp.eq.s32.totalorder %s24, 3
    %p314 = por %p312, %p313
    %p315 = scmp.ne.s32.totalorder %s304, %s305
    %p316 = scmp.eq.s32.totalorder %s24, 0
    %p317 = por %p315, %p316
    %p318 = scmp.ne.s32.totalorder %s304, %s305
    %p319 = scmp.eq.s32.totalorder %s25, 3
    %p320 = por %p318, %p319
    %p322 = scmp.ne.s32.totalorder %s305, %s321
    %p323 = scmp.eq.s32.totalorder %s25, 0
    %p324 = por %p322, %p323
    %s325 = ssub.s32 %s27, %s34
    %p326 = scmp.eq.s32.totalorder %s325, 0
    %s328 = sadd.s32 %s327, 1
    %s329 = scalar_select %p326, %s327, %s328
    %p332 = pneg %p326
    %p333 = scmp.eq.s32.totalorder %s19, 3
    %p334 = por %p332, %p333
    %p335 = scmp.ne.s32.totalorder %s327, %s330
    %p336 = scmp.eq.s32.totalorder %s19, 0
    %p337 = por %p335, %p336
    %p338 = scmp.ne.s32.totalorder %s327, %s330
    %p339 = scmp.eq.s32.totalorder %s24, 3
    %p340 = por %p338, %p339
    %p341 = scmp.ne.s32.totalorder %s330, %s331
    %p342 = scmp.eq.s32.totalorder %s24, 0
    %p343 = por %p341, %p342
    %p344 = scmp.ne.s32.totalorder %s330, %s331
    %p345 = scmp.eq.s32.totalorder %s25, 3
    %p346 = por %p344, %p345
    %p348 = scmp.ne.s32.totalorder %s331, %s347
    %p349 = scmp.eq.s32.totalorder %s25, 0
    %p350 = por %p348, %p349
    %s351 = ssub.s32 %s27, %s34
    %p352 = scmp.eq.s32.totalorder %s351, 0
    %s354 = sadd.s32 %s353, 1
    %s355 = scalar_select %p352, %s353, %s354
    %p358 = pneg %p352
    %p359 = scmp.eq.s32.totalorder %s19, 3
    %p360 = por %p358, %p359
    %p361 = scmp.ne.s32.totalorder %s353, %s356
    %p362 = scmp.eq.s32.totalorder %s19, 0
    %p363 = por %p361, %p362
    %p364 = scmp.ne.s32.totalorder %s353, %s356
    %p365 = scmp.eq.s32.totalorder %s24, 3
    %p366 = por %p364, %p365
    %p367 = scmp.ne.s32.totalorder %s356, %s357
    %p368 = scmp.eq.s32.totalorder %s24, 0
    %p369 = por %p367, %p368
    %p370 = scmp.ne.s32.totalorder %s356, %s357
    %p371 = scmp.eq.s32.totalorder %s25, 3
    %p372 = por %p370, %p371
    %p374 = scmp.ne.s32.totalorder %s357, %s373
    %p375 = scmp.eq.s32.totalorder %s25, 0
    %p376 = por %p374, %p375
    %s377 = ssub.s32 %s26, %s38
    %p378 = scmp.eq.s32.totalorder %s377, 0
    %s380 = sadd.s32 %s379, 1
    %s381 = scalar_select %p378, %s379, %s380
    %p384 = pneg %p378
    %p385 = scmp.eq.s32.totalorder %s19, 3
    %p386 = por %p384, %p385
    %p387 = scmp.ne.s32.totalorder %s379, %s382
    %p388 = scmp.eq.s32.totalorder %s19, 0
    %p389 = por %p387, %p388
    %p390 = scmp.ne.s32.totalorder %s379, %s382
    %p391 = scmp.eq.s32.totalorder %s24, 3
    %p392 = por %p390, %p391
    %p393 = scmp.ne.s32.totalorder %s382, %s383
    %p394 = scmp.eq.s32.totalorder %s24, 0
    %p395 = por %p393, %p394
    %p396 = scmp.ne.s32.totalorder %s382, %s383
    %p397 = scmp.eq.s32.totalorder %s25, 3
    %p398 = por %p396, %p397
    %p400 = scmp.ne.s32.totalorder %s383, %s399
    %p401 = scmp.eq.s32.totalorder %s25, 0
    %p402 = por %p400, %p401
    %p403 = scmp.le.s32.totalorder 1, %s19
    %p404 = scmp.lt.s32.totalorder %s19, 5
    %p405 = pnand %p403, %p404
    %p406 = pneg %p405
    // Predicated region
    $region9: #{transformer_policy_forward.4} parent=5 // pred_check
      _
    $region10: #{transformer_policy_forward.4} parent=5 // pred_check_branch
      %408 = sbr.rel (%p405) target = $region12
    $region11: #{transformer_policy_forward.4} parent=5 // pred_region
      %s409 = ssub.s32 %s19, 1
    $region12: #{transformer_policy_forward.4} parent=5 // pred_fallthru
      _
    %p410 = scmp.lt.s32.totalorder %s19, 4
    // Predicated region
    $region13: #{transformer_policy_forward.4} parent=5 // pred_check
      %p411 = pneg %p410
    $region14: #{transformer_policy_forward.4} parent=5 // pred_check_branch
      %413 = sbr.rel (%p411) target = $region16
    $region15: #{transformer_policy_forward.4} parent=5 // pred_region
      // Predicated region
      $region17: #{transformer_policy_forward.4} parent=15 // pred_check
        %p414 = pneg %p51
      $region18: #{transformer_policy_forward.4} parent=15 // pred_check_branch
        %416 = sbr.rel (%p414) target = $region20
      $region19: #{transformer_policy_forward.4} parent=15 // pred_region
        %s417 = smul.u32 4, %s26
        %p418 = scmp.lt.s32.totalorder %s417, 7
        %s419 = scalar_select %p418, %s417, 7
        %s420 = smul.addr %s419, 2
        %s421 = smul.addr %s420, 8
        %s422 = scalar_lea.vmem %s0, %s421
        %s423 = smul.u32 4, %s26
      $region20: #{transformer_policy_forward.4} parent=15 // pred_fallthru
        _
      // Predicated region
      $region21: #{transformer_policy_forward.4} parent=15 // pred_check
        %p424 = pneg %p77
      $region22: #{transformer_policy_forward.4} parent=15 // pred_check_branch
        %426 = sbr.rel (%p424) target = $region24
      $region23: #{transformer_policy_forward.4} parent=15 // pred_region
        %p427 = scmp.lt.s32.totalorder %s27, 1
        %s428 = scalar_select %p427, %s27, 1
        %s429 = scalar_lea.vmem %s1, %s428
      $region24: #{transformer_policy_forward.4} parent=15 // pred_fallthru
        _
      // Predicated region
      $region25: #{transformer_policy_forward.4} parent=15 // pred_check
        %p430 = pneg %p103
      $region26: #{transformer_policy_forward.4} parent=15 // pred_check_branch
        %432 = sbr.rel (%p430) target = $region28
      $region27: #{transformer_policy_forward.4} parent=15 // pred_region
        %p433 = scmp.lt.s32.totalorder %s27, 1
        %s434 = scalar_select %p433, %s27, 1
        %s435 = scalar_lea.vmem %s2, %s434
      $region28: #{transformer_policy_forward.4} parent=15 // pred_fallthru
        _
      // Predicated region
      $region29: #{transformer_policy_forward.4} parent=15 // pred_check
        %p436 = pneg %p129
      $region30: #{transformer_policy_forward.4} parent=15 // pred_check_branch
        %438 = sbr.rel (%p436) target = $region32
      $region31: #{transformer_policy_forward.4} parent=15 // pred_region
        %p439 = scmp.lt.s32.totalorder %s27, 1
        %s440 = scalar_select %p439, %s27, 1
        %s441 = smul.addr %s440, 48
        %s442 = smul.addr %s441, 4
        %s443 = scalar_lea.vmem %s3, %s442
      $region32: #{transformer_policy_forward.4} parent=15 // pred_fallthru
        _
      // Predicated region
      $region33: #{transformer_policy_forward.4} parent=15 // pred_check
        %p444 = pneg %p155
      $region34: #{transformer_policy_forward.4} parent=15 // pred_check_branch
        %446 = sbr.rel (%p444) target = $region36
      $region35: #{transformer_policy_forward.4} parent=15 // pred_region
        %p447 = scmp.lt.s32.totalorder %s27, 1
        %s448 = scalar_select %p447, %s27, 1
        %s449 = smul.addr %s448, 3
        %s450 = scalar_lea.vmem %s4, %s449
      $region36: #{transformer_policy_forward.4} parent=15 // pred_fallthru
        _
      // Predicated region
      $region37: #{transformer_policy_forward.4} parent=15 // pred_check
        %p451 = pneg %p181
      $region38: #{transformer_policy_forward.4} parent=15 // pred_check_branch
        %453 = sbr.rel (%p451) target = $region40
      $region39: #{transformer_policy_forward.4} parent=15 // pred_region
        %p454 = scmp.lt.s32.totalorder %s27, 1
        %s455 = scalar_select %p454, %s27, 1
        %s456 = smul.addr %s455, 16
        %s457 = smul.addr %s456, 4
        %s458 = scalar_lea.vmem %s5, %s457
      $region40: #{transformer_policy_forward.4} parent=15 // pred_fallthru
        _
      // Predicated region
      $region41: #{transformer_policy_forward.4} parent=15 // pred_check
        %p459 = pneg %p207
      $region42: #{transformer_policy_forward.4} parent=15 // pred_check_branch
        %461 = sbr.rel (%p459) target = $region44
      $region43: #{transformer_policy_forward.4} parent=15 // pred_region
        %p462 = scmp.lt.s32.totalorder %s27, 1
        %s463 = scalar_select %p462, %s27, 1
        %s464 = scalar_lea.vmem %s6, %s463
      $region44: #{transformer_policy_forward.4} parent=15 // pred_fallthru
        _
      // Predicated region
      $region45: #{transformer_policy_forward.4} parent=15 // pred_check
        %p465 = pneg %p233
      $region46: #{transformer_policy_forward.4} parent=15 // pred_check_branch
        %467 = sbr.rel (%p465) target = $region48
      $region47: #{transformer_policy_forward.4} parent=15 // pred_region
        %p468 = scmp.lt.s32.totalorder %s27, 1
        %s469 = scalar_select %p468, %s27, 1
        %s470 = scalar_lea.vmem %s7, %s469
      $region48: #{transformer_policy_forward.4} parent=15 // pred_fallthru
        _
      // Predicated region
      $region49: #{transformer_policy_forward.4} parent=15 // pred_check
        %p471 = pneg %p259
      $region50: #{transformer_policy_forward.4} parent=15 // pred_check_branch
        %473 = sbr.rel (%p471) target = $region52
      $region51: #{transformer_policy_forward.4} parent=15 // pred_region
        %p474 = scmp.lt.s32.totalorder %s27, 1
        %s475 = scalar_select %p474, %s27, 1
        %s476 = scalar_lea.vmem %s8, %s475
      $region52: #{transformer_policy_forward.4} parent=15 // pred_fallthru
        _
      // Predicated region
      $region53: #{transformer_policy_forward.4} parent=15 // pred_check
        %p477 = pneg %p285
      $region54: #{transformer_policy_forward.4} parent=15 // pred_check_branch
        %479 = sbr.rel (%p477) target = $region56
      $region55: #{transformer_policy_forward.4} parent=15 // pred_region
        %p480 = scmp.lt.s32.totalorder %s27, 1
        %s481 = scalar_select %p480, %s27, 1
        %s482 = smul.addr %s481, 64
        %s483 = smul.addr %s482, 4
        %s484 = scalar_lea.vmem %s9, %s483
      $region56: #{transformer_policy_forward.4} parent=15 // pred_fallthru
        _
      // Predicated region
      $region57: #{transformer_policy_forward.4} parent=15 // pred_check
        %p485 = pneg %p311
      $region58: #{transformer_policy_forward.4} parent=15 // pred_check_branch
        %487 = sbr.rel (%p485) target = $region60
      $region59: #{transformer_policy_forward.4} parent=15 // pred_region
        %p488 = scmp.lt.s32.totalorder %s27, 1
        %s489 = scalar_select %p488, %s27, 1
        %s490 = smul.addr %s489, 4
        %s491 = scalar_lea.vmem %s10, %s490
      $region60: #{transformer_policy_forward.4} parent=15 // pred_fallthru
        _
      // Predicated region
      $region61: #{transformer_policy_forward.4} parent=15 // pred_check
        %p492 = pneg %p337
      $region62: #{transformer_policy_forward.4} parent=15 // pred_check_branch
        %494 = sbr.rel (%p492) target = $region64
      $region63: #{transformer_policy_forward.4} parent=15 // pred_region
        %p495 = scmp.lt.s32.totalorder %s27, 1
        %s496 = scalar_select %p495, %s27, 1
        %s497 = smul.addr %s496, 64
        %s498 = smul.addr %s497, 4
        %s499 = scalar_lea.vmem %s11, %s498
      $region64: #{transformer_policy_forward.4} parent=15 // pred_fallthru
        _
      // Predicated region
      $region65: #{transformer_policy_forward.4} parent=15 // pred_check
        %p500 = pneg %p363
      $region66: #{transformer_policy_forward.4} parent=15 // pred_check_branch
        %502 = sbr.rel (%p500) target = $region68
      $region67: #{transformer_policy_forward.4} parent=15 // pred_region
        %p503 = scmp.lt.s32.totalorder %s27, 1
        %s504 = scalar_select %p503, %s27, 1
        %s505 = scalar_lea.vmem %s12, %s504
      $region68: #{transformer_policy_forward.4} parent=15 // pred_fallthru
        _
    $region16: #{transformer_policy_forward.4} parent=5 // pred_fallthru
      _
    %p506 = scmp.le.s32.totalorder 1, %s19
    %p507 = scmp.lt.s32.totalorder %s19, 5
    %p508 = pnand %p506, %p507
    %p509 = pneg %p508
    // Predicated region
    $region69: #{transformer_policy_forward.4} parent=5 // pred_check
      _
    $region70: #{transformer_policy_forward.4} parent=5 // pred_check_branch
      %511 = sbr.rel (%p508) target = $region72
    $region71: #{transformer_policy_forward.4} parent=5 // pred_region
      %s512 = ssub.s32 %s19, 1
      %s513 = smul.u32 4, %s28
      %p514 = scmp.lt.s32.totalorder %s513, 7
      %s515 = scalar_select %p514, %s513, 7
      %s516 = smul.addr %s515, 2
      %s517 = smul.addr %s516, 8
      %s518 = scalar_lea.vmem %s0, %s517
      %p519 = pneg %p57
      %p520 = pneg %p54
      %p521 = scmp.lt.s32.totalorder %s29, 1
      %s522 = scalar_select %p521, %s29, 1
      %s523 = scalar_lea.vmem %s1, %s522
      %p524 = pneg %p83
      %p525 = pneg %p80
      %p526 = scmp.lt.s32.totalorder %s29, 1
      %s527 = scalar_select %p526, %s29, 1
      %s528 = scalar_lea.vmem %s2, %s527
      %p529 = pneg %p109
      %p530 = pneg %p106
      %p531 = scmp.lt.s32.totalorder %s29, 1
      %s532 = scalar_select %p531, %s29, 1
      %s533 = smul.addr %s532, 48
      %s534 = smul.addr %s533, 4
      %s535 = scalar_lea.vmem %s3, %s534
      %p536 = pneg %p135
      %p537 = pneg %p132
      %p538 = scmp.lt.s32.totalorder %s29, 1
      %s539 = scalar_select %p538, %s29, 1
      %s540 = smul.addr %s539, 3
      %s541 = scalar_lea.vmem %s4, %s540
      %p542 = pneg %p161
      %p543 = pneg %p158
      %p544 = scmp.lt.s32.totalorder %s29, 1
      %s545 = scalar_select %p544, %s29, 1
      %s546 = smul.addr %s545, 16
      %s547 = smul.addr %s546, 4
      %s548 = scalar_lea.vmem %s5, %s547
      %p549 = pneg %p187
      %p550 = pneg %p184
      %p551 = scmp.lt.s32.totalorder %s29, 1
      %s552 = scalar_select %p551, %s29, 1
      %s553 = scalar_lea.vmem %s6, %s552
      %p554 = pneg %p213
      %p555 = pneg %p210
      %p556 = scmp.lt.s32.totalorder %s29, 1
      %s557 = scalar_select %p556, %s29, 1
      %s558 = scalar_lea.vmem %s7, %s557
      %p559 = pneg %p239
      %p560 = pneg %p236
      %p561 = scmp.lt.s32.totalorder %s29, 1
      %s562 = scalar_select %p561, %s29, 1
      %s563 = scalar_lea.vmem %s8, %s562
      %p564 = pneg %p265
      %p565 = pneg %p262
      %p566 = scmp.lt.s32.totalorder %s29, 1
      %s567 = scalar_select %p566, %s29, 1
      %s568 = smul.addr %s567, 64
      %s569 = smul.addr %s568, 4
      %s570 = scalar_lea.vmem %s9, %s569
      %p571 = pneg %p291
      %p572 = pneg %p288
      %p573 = scmp.lt.s32.totalorder %s29, 1
      %s574 = scalar_select %p573, %s29, 1
      %s575 = smul.addr %s574, 4
      %s576 = scalar_lea.vmem %s10, %s575
      %p577 = pneg %p317
      %p578 = pneg %p314
      %p579 = scmp.lt.s32.totalorder %s29, 1
      %s580 = scalar_select %p579, %s29, 1
      %s581 = smul.addr %s580, 64
      %s582 = smul.addr %s581, 4
      %s583 = scalar_lea.vmem %s11, %s582
      %p584 = pneg %p343
      %p585 = pneg %p340
      %p586 = scmp.lt.s32.totalorder %s29, 1
      %s587 = scalar_select %p586, %s29, 1
      %s588 = scalar_lea.vmem %s12, %s587
      %p589 = pneg %p369
      %p590 = pneg %p366
      %p591 = pneg %p395
      %p592 = pneg %p392
      %s593 = smul.u32 4, %s28
      %p594 = scmp.lt.s32.totalorder %s593, 7
      %s595 = scalar_select %p594, %s593, 7
      %s596 = smul.addr %s595, 2
      %s597 = smul.addr %s596, 8
      %s598 = scalar_lea.vmem %s13, %s597
      %s599 = smul.u32 4, %s28
      %p600 = scmp.lt.s32.totalorder %s599, 7
      %s601 = scalar_select %p600, %s599, 7
      %s602 = smul.addr %s601, 2
      %s603 = smul.addr %s602, 8
      %s604 = scalar_lea.vmem %s0, %s603
      %s605 = smul.u32 4, %s28
      %p606 = scmp.lt.s32.totalorder %s29, 1
      %s607 = scalar_select %p606, %s29, 1
      %s608 = scalar_lea.vmem %s1, %s607
      %p609 = scmp.lt.s32.totalorder %s29, 1
      %s610 = scalar_select %p609, %s29, 1
      %s611 = scalar_lea.vmem %s2, %s610
      %p612 = scmp.lt.s32.totalorder %s29, 1
      %s613 = scalar_select %p612, %s29, 1
      %s614 = smul.addr %s613, 48
      %s615 = smul.addr %s614, 4
      %s616 = scalar_lea.vmem %s3, %s615
      %p617 = scmp.lt.s32.totalorder %s29, 1
      %s618 = scalar_select %p617, %s29, 1
      %s619 = smul.addr %s618, 3
      %s620 = scalar_lea.vmem %s4, %s619
      %p621 = scmp.lt.s32.totalorder %s29, 1
      %s622 = scalar_select %p621, %s29, 1
      %s623 = smul.addr %s622, 16
      %s624 = smul.addr %s623, 4
      %s625 = scalar_lea.vmem %s5, %s624
      %p626 = scmp.lt.s32.totalorder %s29, 1
      %s627 = scalar_select %p626, %s29, 1
      %s628 = scalar_lea.vmem %s6, %s627
      %p629 = scmp.lt.s32.totalorder %s29, 1
      %s630 = scalar_select %p629, %s29, 1
      %s631 = scalar_lea.vmem %s7, %s630
      %p632 = scmp.lt.s32.totalorder %s29, 1
      %s633 = scalar_select %p632, %s29, 1
      %s634 = scalar_lea.vmem %s8, %s633
      %p635 = scmp.lt.s32.totalorder %s29, 1
      %s636 = scalar_select %p635, %s29, 1
      %s637 = smul.addr %s636, 64
      %s638 = smul.addr %s637, 4
      %s639 = scalar_lea.vmem %s9, %s638
      %p640 = scmp.lt.s32.totalorder %s29, 1
      %s641 = scalar_select %p640, %s29, 1
      %s642 = smul.addr %s641, 4
      %s643 = scalar_lea.vmem %s10, %s642
      %p644 = scmp.lt.s32.totalorder %s29, 1
      %s645 = scalar_select %p644, %s29, 1
      %s646 = smul.addr %s645, 64
      %s647 = smul.addr %s646, 4
      %s648 = scalar_lea.vmem %s11, %s647
      %p649 = scmp.lt.s32.totalorder %s29, 1
      %s650 = scalar_select %p649, %s29, 1
      %s651 = scalar_lea.vmem %s12, %s650
      %s652 = smul.u32 4, %s28
      %p653 = scmp.lt.s32.totalorder %s652, 7
      %s654 = scalar_select %p653, %s652, 7
      %s655 = smul.addr %s654, 2
      %s656 = smul.addr %s655, 8
      %s657 = scalar_lea.vmem %s13, %s656
      %s658 = smul.u32 4, %s28
      %p660 = scmp.eq.s32.totalorder %s29, 0
      // Predicated region
      $region73: #{transformer_policy_forward.4} parent=71 // pred_check
        %p661 = pneg %p660
      $region74: #{transformer_policy_forward.4} parent=71 // pred_check_branch
        %663 = sbr.rel (%p661) target = $region76
      $region75: #{transformer_policy_forward.4} parent=71 // pred_region
        %v664 = vld [vmem:[%s604] sm:$0xff]
        %v665 = vld [vmem:[%s604 + $0x8] sm:$0xff]
        %v666 = vld [vmem:[%s604 + $0x10] sm:$0xff]
        %v667 = vld [vmem:[%s604 + $0x18] sm:$0xff]
        %v668 = vld [vmem:[%s604 + $0x20] sm:$0xff]
        %v669 = vld [vmem:[%s604 + $0x28] sm:$0xff]
        %v670 = vld [vmem:[%s604 + $0x30] sm:$0xff]
        %v671 = vld [vmem:[%s604 + $0x38] sm:$0xff]
        %672 = vst [vmem:[#allocation2] sm:$0xff] %v664
        %673 = vst [vmem:[#allocation2 + $0x8] sm:$0xff] %v665
        %674 = vst [vmem:[#allocation2 + $0x10] sm:$0xff] %v666
        %675 = vst [vmem:[#allocation2 + $0x18] sm:$0xff] %v667
        %676 = vst [vmem:[#allocation2 + $0x20] sm:$0xff] %v668
        %677 = vst [vmem:[#allocation2 + $0x28] sm:$0xff] %v669
        %678 = vst [vmem:[#allocation2 + $0x30] sm:$0xff] %v670
        %679 = vst [vmem:[#allocation2 + $0x38] sm:$0xff] %v671
      $region76: #{transformer_policy_forward.4} parent=71 // pred_fallthru
        _
      %v680 = vld [vmem:[#allocation2] sm:$0xff]
      %v681 = vld [vmem:[#allocation2 + $0x8] sm:$0xff]
      %v682 = vld [vmem:[#allocation2 + $0x10] sm:$0xff]
      %v683 = vld [vmem:[#allocation2 + $0x18] sm:$0xff]
      %v684 = vld [vmem:[#allocation2 + $0x20] sm:$0xff]
      %v685 = vld [vmem:[#allocation2 + $0x28] sm:$0xff]
      %v686 = vld [vmem:[#allocation2 + $0x30] sm:$0xff]
      %v687 = vld [vmem:[#allocation2 + $0x38] sm:$0xff]
      %v688 = vld [vmem:[%s608] sm:$0x1]
      %v689 = vld [vmem:[%s611] sm:$0x1]
      %690 = vadd.xlane.f32.xlu0 %v680
      %v691 = vpop.xlane.xlu0 %690
      %692 = vadd.xlane.f32.xlu0 %v681
      %v693 = vpop.xlane.xlu0 %692
      %694 = vadd.xlane.f32.xlu0 %v682
      %v695 = vpop.xlane.xlu0 %694
      %696 = vadd.xlane.f32.xlu0 %v683
      %v697 = vpop.xlane.xlu0 %696
      %698 = vadd.xlane.f32.xlu0 %v684
      %v699 = vpop.xlane.xlu0 %698
      %700 = vadd.xlane.f32.xlu0 %v685
      %v701 = vpop.xlane.xlu0 %700
      %702 = vadd.xlane.f32.xlu0 %v686
      %v703 = vpop.xlane.xlu0 %702
      %704 = vadd.xlane.f32.xlu0 %v687
      %v705 = vpop.xlane.xlu0 %704
      %v706 = vrcp.pop 128.0
      %v707 = vmul.f32 %v691, %v706
      %v708 = vmul.f32 %v693, %v706
      %v709 = vmul.f32 %v695, %v706
      %v710 = vmul.f32 %v697, %v706
      %v711 = vmul.f32 %v699, %v706
      %v712 = vmul.f32 %v701, %v706
      %v713 = vmul.f32 %v703, %v706
      %v714 = vmul.f32 %v705, %v706
      %v715 = vsub.f32 %v680, %v707
      %v716 = vsub.f32 %v681, %v708
      %v717 = vsub.f32 %v682, %v709
      %v718 = vsub.f32 %v683, %v710
      %v719 = vsub.f32 %v684, %v711
      %v720 = vsub.f32 %v685, %v712
      %v721 = vsub.f32 %v686, %v713
      %v722 = vsub.f32 %v687, %v714
      %v723 = vmul.f32 %v715, %v715
      %v724 = vmul.f32 %v716, %v716
      %v725 = vmul.f32 %v717, %v717
      %v726 = vmul.f32 %v718, %v718
      %v727 = vmul.f32 %v719, %v719
      %v728 = vmul.f32 %v720, %v720
      %v729 = vmul.f32 %v721, %v721
      %v730 = vmul.f32 %v722, %v722
      %731 = vadd.xlane.f32.xlu0 %v723
      %v732 = vpop.xlane.xlu0 %731
      %733 = vadd.xlane.f32.xlu0 %v724
      %v734 = vpop.xlane.xlu0 %733
      %735 = vadd.xlane.f32.xlu0 %v725
      %v736 = vpop.xlane.xlu0 %735
      %737 = vadd.xlane.f32.xlu0 %v726
      %v738 = vpop.xlane.xlu0 %737
      %739 = vadd.xlane.f32.xlu0 %v727
      %v740 = vpop.xlane.xlu0 %739
      %741 = vadd.xlane.f32.xlu0 %v728
      %v742 = vpop.xlane.xlu0 %741
      %743 = vadd.xlane.f32.xlu0 %v729
      %v744 = vpop.xlane.xlu0 %743
      %745 = vadd.xlane.f32.xlu0 %v730
      %v746 = vpop.xlane.xlu0 %745
      %v747 = vmul.f32 %v732, %v706
      %v748 = vmul.f32 %v734, %v706
      %v749 = vmul.f32 %v736, %v706
      %v750 = vmul.f32 %v738, %v706
      %v751 = vmul.f32 %v740, %v706
      %v752 = vmul.f32 %v742, %v706
      %v753 = vmul.f32 %v744, %v706
      %v754 = vmul.f32 %v746, %v706
      %v755 = vadd.f32 %v747, 1e-05
      %v756 = vadd.f32 %v748, 1e-05
      %v757 = vadd.f32 %v749, 1e-05
      %v758 = vadd.f32 %v750, 1e-05
      %v759 = vadd.f32 %v751, 1e-05
      %v760 = vadd.f32 %v752, 1e-05
      %v761 = vadd.f32 %v753, 1e-05
      %v762 = vadd.f32 %v754, 1e-05
      %v763 = vrsqrt.pop %v755
      %v764 = vrsqrt.pop %v756
      %v765 = vrsqrt.pop %v757
      %v766 = vrsqrt.pop %v758
      %v767 = vrsqrt.pop %v759
      %v768 = vrsqrt.pop %v760
      %v769 = vrsqrt.pop %v761
      %v770 = vrsqrt.pop %v762
      %v771 = vmul.f32 %v715, %v763
      %v772 = vmul.f32 %v716, %v764
      %v773 = vmul.f32 %v717, %v765
      %v774 = vmul.f32 %v718, %v766
      %v775 = vmul.f32 %v719, %v767
      %v776 = vmul.f32 %v720, %v768
      %v777 = vmul.f32 %v721, %v769
      %v778 = vmul.f32 %v722, %v770
      %v780 = vlaneseq
      %v781 = vshrl.u32 %v780, 7
      %v782 = vsub.s32 0, %v781
      %v783 = vrot.slane %v688, %v782
      %v785 = vmul.f32 %v771, %v783
      %v786 = vmul.f32 %v772, %v783
      %v787 = vmul.f32 %v773, %v783
      %v788 = vmul.f32 %v774, %v783
      %v789 = vmul.f32 %v775, %v783
      %v790 = vmul.f32 %v776, %v783
      %v791 = vmul.f32 %v777, %v783
      %v792 = vmul.f32 %v778, %v783
      %v794 = vlaneseq
      %v795 = vshrl.u32 %v794, 7
      %v796 = vsub.s32 0, %v795
      %v797 = vrot.slane %v689, %v796
      %v799 = vadd.f32 %v785, %v797
      %v800 = vadd.f32 %v786, %v797
      %v801 = vadd.f32 %v787, %v797
      %v802 = vadd.f32 %v788, %v797
      %v803 = vadd.f32 %v789, %v797
      %v804 = vadd.f32 %v790, %v797
      %v805 = vadd.f32 %v791, %v797
      %v806 = vadd.f32 %v792, %v797
      %v807 = vld [vmem:[%s616] sm:$0xff]
      %v808 = vld [vmem:[%s616 + $0x8] sm:$0xf]
      %v809 = vld [vmem:[%s616 + $0xc] sm:$0xff]
      %v810 = vld [vmem:[%s616 + $0x14] sm:$0xf]
      %v811 = vld [vmem:[%s616 + $0x18] sm:$0xff]
      %v812 = vld [vmem:[%s616 + $0x20] sm:$0xf]
      %v813 = vld [vmem:[%s616 + $0x24] sm:$0xff]
      %v814 = vld [vmem:[%s616 + $0x2c] sm:$0xf]
      %v815 = vld [vmem:[%s616 + $0x30] sm:$0xff]
      %v816 = vld [vmem:[%s616 + $0x38] sm:$0xf]
      %v817 = vld [vmem:[%s616 + $0x3c] sm:$0xff]
      %v818 = vld [vmem:[%s616 + $0x44] sm:$0xf]
      %v819 = vld [vmem:[%s616 + $0x48] sm:$0xff]
      %v820 = vld [vmem:[%s616 + $0x50] sm:$0xf]
      %v821 = vld [vmem:[%s616 + $0x54] sm:$0xff]
      %v822 = vld [vmem:[%s616 + $0x5c] sm:$0xf]
      %v823 = vld [vmem:[%s616 + $0x60] sm:$0xff]
      %v824 = vld [vmem:[%s616 + $0x68] sm:$0xf]
      %v825 = vld [vmem:[%s616 + $0x6c] sm:$0xff]
      %v826 = vld [vmem:[%s616 + $0x74] sm:$0xf]
      %v827 = vld [vmem:[%s616 + $0x78] sm:$0xff]
      %v828 = vld [vmem:[%s616 + $0x80] sm:$0xf]
      %v829 = vld [vmem:[%s616 + $0x84] sm:$0xff]
      %v830 = vld [vmem:[%s616 + $0x8c] sm:$0xf]
      %v831 = vld [vmem:[%s616 + $0x90] sm:$0xff]
      %v832 = vld [vmem:[%s616 + $0x98] sm:$0xf]
      %v833 = vld [vmem:[%s616 + $0x9c] sm:$0xff]
      %v834 = vld [vmem:[%s616 + $0xa4] sm:$0xf]
      %v835 = vld [vmem:[%s616 + $0xa8] sm:$0xff]
      %v836 = vld [vmem:[%s616 + $0xb0] sm:$0xf]
      %v837 = vld [vmem:[%s616 + $0xb4] sm:$0xff]
      %v838 = vld [vmem:[%s616 + $0xbc] sm:$0xf]
      %v839 = vpack.c.bf16 %v800, %v799
      %v840 = vpack.c.bf16 %v802, %v801
      %v841 = vpack.c.bf16 %v804, %v803
      %v842 = vpack.c.bf16 %v806, %v805
      %v843 = vld [vmem:[%s620] sm:$0x7]
      %v845 = vlaneseq
      %v846 = vshrl.u32 %v845, 7
      %v847 = vsub.s32 0, %v846
      %v848 = vrot.slane %v843, %v847
      %v849 = vlaneseq
      %v850 = vshrl.u32 %v849, 7
      %v851 = vsub.s32 1, %v850
      %v852 = vrot.slane %v843, %v851
      %v853 = vlaneseq
      %v854 = vshrl.u32 %v853, 7
      %v855 = vsub.s32 2, %v854
      %v856 = vrot.slane %v843, %v855
      %v892 = vunpack.c.l.b16 %v807
      %v893 = vunpack.c.h.b16 %v807
      %v894 = vunpack.c.l.b16 %v808
      %v895 = vunpack.c.l.b16 %v809
      %v896 = vunpack.c.h.b16 %v809
      %v897 = vunpack.c.l.b16 %v810
      %v898 = vunpack.c.l.b16 %v811
      %v899 = vunpack.c.h.b16 %v811
      %v900 = vunpack.c.l.b16 %v812
      %v901 = vunpack.c.l.b16 %v813
      %v902 = vunpack.c.h.b16 %v813
      %v903 = vunpack.c.l.b16 %v814
      %v904 = vunpack.c.l.b16 %v815
      %v905 = vunpack.c.h.b16 %v815
      %v906 = vunpack.c.l.b16 %v816
      %v907 = vunpack.c.l.b16 %v817
      %v908 = vunpack.c.h.b16 %v817
      %v909 = vunpack.c.l.b16 %v818
      %v910 = vunpack.c.l.b16 %v819
      %v911 = vunpack.c.h.b16 %v819
      %v912 = vunpack.c.l.b16 %v820
      %v913 = vunpack.c.l.b16 %v821
      %v914 = vunpack.c.h.b16 %v821
      %v915 = vunpack.c.l.b16 %v822
      %v916 = vunpack.c.l.b16 %v823
      %v917 = vunpack.c.h.b16 %v823
      %v918 = vunpack.c.l.b16 %v824
      %v919 = vunpack.c.l.b16 %v825
      %v920 = vunpack.c.h.b16 %v825
      %v921 = vunpack.c.l.b16 %v826
      %v922 = vunpack.c.l.b16 %v827
      %v923 = vunpack.c.h.b16 %v827
      %v924 = vunpack.c.l.b16 %v828
      %v925 = vunpack.c.l.b16 %v829
      %v926 = vunpack.c.h.b16 %v829
      %v927 = vunpack.c.l.b16 %v830
      %v928 = vunpack.c.l.b16 %v831
      %v929 = vunpack.c.h.b16 %v831
      %v930 = vunpack.c.l.b16 %v832
      %v931 = vunpack.c.l.b16 %v833
      %v932 = vunpack.c.h.b16 %v833
      %v933 = vunpack.c.l.b16 %v834
      %v934 = vunpack.c.l.b16 %v835
      %v935 = vunpack.c.h.b16 %v835
      %v936 = vunpack.c.l.b16 %v836
      %v937 = vunpack.c.l.b16 %v837
      %v938 = vunpack.c.h.b16 %v837
      %v939 = vunpack.c.l.b16 %v838
      %v940 = vpack.c.b16 %v895, %v892
      %v941 = vpack.c.b16 %v896, %v893
      %v942 = vpack.c.b16 %v897, %v894
      %v943 = vpack.c.b16 %v901, %v898
      %v944 = vpack.c.b16 %v902, %v899
      %v945 = vpack.c.b16 %v903, %v900
      %v946 = vpack.c.b16 %v907, %v904
      %v947 = vpack.c.b16 %v908, %v905
      %v948 = vpack.c.b16 %v909, %v906
      %v949 = vpack.c.b16 %v913, %v910
      %v950 = vpack.c.b16 %v914, %v911
      %v951 = vpack.c.b16 %v915, %v912
      %v952 = vpack.c.b16 %v919, %v916
      %v953 = vpack.c.b16 %v920, %v917
      %v954 = vpack.c.b16 %v921, %v918
      %v955 = vpack.c.b16 %v925, %v922
      %v956 = vpack.c.b16 %v926, %v923
      %v957 = vpack.c.b16 %v927, %v924
      %v958 = vpack.c.b16 %v931, %v928
      %v959 = vpack.c.b16 %v932, %v929
      %v960 = vpack.c.b16 %v933, %v930
      %v961 = vpack.c.b16 %v937, %v934
      %v962 = vpack.c.b16 %v938, %v935
      %v963 = vpack.c.b16 %v939, %v936
      %988 = vmatprep.subr.bf16.mxu0 %v962
      %989 = vmatpush1.bf16.msra.mxu0 %v961
      %990 = vmatprep.subr.bf16.mxu0 %v959
      %991 = vmatpush1.bf16.msra.mxu0 %v958
      %992 = vmatprep.subr.bf16.mxu0 %v956
      %993 = vmatpush1.bf16.msra.mxu0 %v955
      %994 = vmatprep.subr.bf16.mxu0 %v953
      %995 = vmatpush1.bf16.msra.mxu0 %v952
      %996 = vmatprep.subr.bf16.mxu0 %v950
      %997 = vmatpush1.bf16.msra.mxu0 %v949
      %998 = vmatprep.subr.bf16.mxu0 %v947
      %999 = vmatpush1.bf16.msra.mxu0 %v946
      %1000 = vmatprep.subr.bf16.mxu0 %v944
      %1001 = vmatpush1.bf16.msra.mxu0 %v943
      %1002 = vmatprep.subr.bf16.mxu0 %v941
      %1003 = vmatpush1.bf16.msra.mxu0 %v940
      %1004 = vmatprep.subr.bf16.mxu0 0
      %1005 = vmatpush2.bf16.msra.mxu0 0
      %1006 = vmatprep.subr.bf16.mxu0 0
      %1007 = vmatpush2.bf16.msra.mxu0 0
      %1008 = vmatprep.subr.bf16.mxu0 0
      %1009 = vmatpush2.bf16.msra.mxu0 0
      %1010 = vmatprep.subr.bf16.mxu0 0
      %1011 = vmatpush2.bf16.msra.mxu0 0
      %1012 = vmatprep.subr.bf16.mxu0 0
      %1013 = vmatpush2.bf16.msra.mxu0 0
      %1014 = vmatprep.subr.bf16.mxu0 0
      %1015 = vmatpush2.bf16.msra.mxu0 0
      %1016 = vmatprep.subr.bf16.mxu0 0
      %1017 = vmatpush2.bf16.msra.mxu0 0
      %1018 = vmatprep.subr.bf16.mxu0 0
      %1019 = vmatpush2.bf16.msra.mxu0 0
      %1020 = vmatprep.mubr.bf16.mxu0 0
      %1021 = vmatmul.mubr.bf16.gmra.mxu0 %v839
      %v1022 = vpop.f32.mrf.mxu0
      %v1023 = vadd.f32 %v848, %v1022
      %v1024 = vpop.f32.mrf.mxu0
      %v1025 = vadd.f32 %v852, %v1024
      %v1026 = vpop.f32.mrf.mxu0
      %v1027 = vadd.f32 %v848, %v1026
      %v1028 = vpop.f32.mrf.mxu0
      %v1029 = vadd.f32 %v852, %v1028
      %1030 = vmatprep.mubr.bf16.mxu0 0
      %1031 = vmatmul.mubr.bf16.gmra.mxu0 %v840
      %v1032 = vpop.f32.mrf.mxu0
      %v1033 = vadd.f32 %v848, %v1032
      %v1034 = vpop.f32.mrf.mxu0
      %v1035 = vadd.f32 %v852, %v1034
      %v1036 = vpop.f32.mrf.mxu0
      %v1037 = vadd.f32 %v848, %v1036
      %v1038 = vpop.f32.mrf.mxu0
      %v1039 = vadd.f32 %v852, %v1038
      %1040 = vmatprep.mubr.bf16.mxu0 0
      %1041 = vmatmul.mubr.bf16.gmra.mxu0 %v841
      %v1042 = vpop.f32.mrf.mxu0
      %v1043 = vadd.f32 %v848, %v1042
      %v1044 = vpop.f32.mrf.mxu0
      %v1045 = vadd.f32 %v852, %v1044
      %v1046 = vpop.f32.mrf.mxu0
      %v1047 = vadd.f32 %v848, %v1046
      %v1048 = vpop.f32.mrf.mxu0
      %v1049 = vadd.f32 %v852, %v1048
      %1050 = vmatprep.mubr.bf16.mxu0 0
      %1051 = vmatmul.mubr.bf16.gmra.mxu0 %v842
      %v1052 = vpop.f32.mrf.mxu0
      %v1053 = vadd.f32 %v848, %v1052
      %v1054 = vpop.f32.mrf.mxu0
      %v1055 = vadd.f32 %v852, %v1054
      %v1056 = vpop.f32.mrf.mxu0
      %v1057 = vadd.f32 %v848, %v1056
      %v1058 = vpop.f32.mrf.mxu0
      %v1059 = vadd.f32 %v852, %v1058
      %1060 = vdwg.mxu0
      %1061 = vmatprep.subr.bf16.mxu0 0
      %1062 = vmatpush1.bf16.msra.mxu0 %v963
      %1063 = vmatprep.subr.bf16.mxu0 0
      %1064 = vmatpush1.bf16.msra.mxu0 %v960
      %1065 = vmatprep.subr.bf16.mxu0 0
      %1066 = vmatpush1.bf16.msra.mxu0 %v957
      %1067 = vmatprep.subr.bf16.mxu0 0
      %1068 = vmatpush1.bf16.msra.mxu0 %v954
      %1069 = vmatprep.subr.bf16.mxu0 0
      %1070 = vmatpush1.bf16.msra.mxu0 %v951
      %1071 = vmatprep.subr.bf16.mxu0 0
      %1072 = vmatpush1.bf16.msra.mxu0 %v948
      %1073 = vmatprep.subr.bf16.mxu0 0
      %1074 = vmatpush1.bf16.msra.mxu0 %v945
      %1075 = vmatprep.subr.bf16.mxu0 0
      %1076 = vmatpush1.bf16.msra.mxu0 %v942
      %1077 = vmatprep.subr.bf16.mxu0 0
      %1078 = vmatpush2.bf16.msra.mxu0 0
      %1079 = vmatprep.subr.bf16.mxu0 0
      %1080 = vmatpush2.bf16.msra.mxu0 0
      %1081 = vmatprep.subr.bf16.mxu0 0
      %1082 = vmatpush2.bf16.msra.mxu0 0
      %1083 = vmatprep.subr.bf16.mxu0 0
      %1084 = vmatpush2.bf16.msra.mxu0 0
      %1085 = vmatprep.subr.bf16.mxu0 0
      %1086 = vmatpush2.bf16.msra.mxu0 0
      %1087 = vmatprep.subr.bf16.mxu0 0
      %1088 = vmatpush2.bf16.msra.mxu0 0
      %1089 = vmatprep.subr.bf16.mxu0 0
      %1090 = vmatpush2.bf16.msra.mxu0 0
      %1091 = vmatprep.subr.bf16.mxu0 0
      %1092 = vmatpush2.bf16.msra.mxu0 0
      %1093 = vmatprep.mubr.bf16.mxu0 0
      %1094 = vmatmul.mubr.bf16.gmra.mxu0 %v839
      %v1095 = vpop.f32.mrf.mxu0
      %v1096 = vadd.f32 %v856, %v1095
      %v1097 = vpop.f32.mrf.mxu0
      %v1098 = vpop.f32.mrf.mxu0
      %v1099 = vadd.f32 %v856, %v1098
      %v1100 = vpop.f32.mrf.mxu0
      %1101 = vmatprep.mubr.bf16.mxu0 0
      %1102 = vmatmul.mubr.bf16.gmra.mxu0 %v840
      %v1103 = vpop.f32.mrf.mxu0
      %v1104 = vadd.f32 %v856, %v1103
      %v1105 = vpop.f32.mrf.mxu0
      %v1106 = vpop.f32.mrf.mxu0
      %v1107 = vadd.f32 %v856, %v1106
      %v1108 = vpop.f32.mrf.mxu0
      %1109 = vmatprep.mubr.bf16.mxu0 0
      %1110 = vmatmul.mubr.bf16.gmra.mxu0 %v841
      %v1111 = vpop.f32.mrf.mxu0
      %v1112 = vadd.f32 %v856, %v1111
      %v1113 = vpop.f32.mrf.mxu0
      %v1114 = vpop.f32.mrf.mxu0
      %v1115 = vadd.f32 %v856, %v1114
      %v1116 = vpop.f32.mrf.mxu0
      %1117 = vmatprep.mubr.bf16.mxu0 0
      %1118 = vmatmul.mubr.bf16.gmra.mxu0 %v842
      %v1119 = vpop.f32.mrf.mxu0
      %v1120 = vadd.f32 %v856, %v1119
      %v1121 = vpop.f32.mrf.mxu0
      %v1122 = vpop.f32.mrf.mxu0
      %v1123 = vadd.f32 %v856, %v1122
      %v1124 = vpop.f32.mrf.mxu0
      %1125 = vdwg.mxu0
      %v1126 = vlaneseq
      %v1127 = vshrl.u32 %v1126, 7
      %v1128 = vadd.s32 %v1127, 8
      %v1129 = vlaneseq
      %v1130 = vand.u32 %v1129, 127
      %vm1131 = vcmp.le.s32.totalorder %v1130, %v1127
      %vm1132 = vcmp.le.s32.totalorder %v1130, %v1128
      %v1133 = vsel %vm1131, 0.0, -1e+30
      %v1134 = vsel %vm1132, 0.0, -1e+30
      %1143 = vrot.lane.b32.xlu0 %v1023, 96
      %v1144 = vpop.permute.xlu0 %1143
      %1145 = vrot.lane.b32.xlu0 %v1027, 96
      %v1146 = vpop.permute.xlu0 %1145
      %1147 = vrot.lane.b32.xlu0 %v1033, 96
      %v1148 = vpop.permute.xlu0 %1147
      %1149 = vrot.lane.b32.xlu0 %v1037, 96
      %v1150 = vpop.permute.xlu0 %1149
      %1151 = vrot.lane.b32.xlu0 %v1043, 96
      %v1152 = vpop.permute.xlu0 %1151
      %1153 = vrot.lane.b32.xlu0 %v1047, 96
      %v1154 = vpop.permute.xlu0 %1153
      %1155 = vrot.lane.b32.xlu0 %v1053, 96
      %v1156 = vpop.permute.xlu0 %1155
      %1157 = vrot.lane.b32.xlu0 %v1057, 96
      %v1158 = vpop.permute.xlu0 %1157
      %1167 = vrot.lane.b32.xlu0 %v1023, 64
      %v1168 = vpop.permute.xlu0 %1167
      %1169 = vrot.lane.b32.xlu0 %v1027, 64
      %v1170 = vpop.permute.xlu0 %1169
      %1171 = vrot.lane.b32.xlu0 %v1033, 64
      %v1172 = vpop.permute.xlu0 %1171
      %1173 = vrot.lane.b32.xlu0 %v1037, 64
      %v1174 = vpop.permute.xlu0 %1173
      %1175 = vrot.lane.b32.xlu0 %v1043, 64
      %v1176 = vpop.permute.xlu0 %1175
      %1177 = vrot.lane.b32.xlu0 %v1047, 64
      %v1178 = vpop.permute.xlu0 %1177
      %1179 = vrot.lane.b32.xlu0 %v1053, 64
      %v1180 = vpop.permute.xlu0 %1179
      %1181 = vrot.lane.b32.xlu0 %v1057, 64
      %v1182 = vpop.permute.xlu0 %1181
      %1191 = vrot.lane.b32.xlu0 %v1023, 32
      %v1192 = vpop.permute.xlu0 %1191
      %1193 = vrot.lane.b32.xlu0 %v1027, 32
      %v1194 = vpop.permute.xlu0 %1193
      %1195 = vrot.lane.b32.xlu0 %v1033, 32
      %v1196 = vpop.permute.xlu0 %1195
      %1197 = vrot.lane.b32.xlu0 %v1037, 32
      %v1198 = vpop.permute.xlu0 %1197
      %1199 = vrot.lane.b32.xlu0 %v1043, 32
      %v1200 = vpop.permute.xlu0 %1199
      %1201 = vrot.lane.b32.xlu0 %v1047, 32
      %v1202 = vpop.permute.xlu0 %1201
      %1203 = vrot.lane.b32.xlu0 %v1053, 32
      %v1204 = vpop.permute.xlu0 %1203
      %1205 = vrot.lane.b32.xlu0 %v1057, 32
      %v1206 = vpop.permute.xlu0 %1205
      %1223 = vrot.lane.b32.xlu0 %v1025, 96
      %v1224 = vpop.permute.xlu0 %1223
      %1225 = vrot.lane.b32.xlu0 %v1029, 96
      %v1226 = vpop.permute.xlu0 %1225
      %1227 = vrot.lane.b32.xlu0 %v1035, 96
      %v1228 = vpop.permute.xlu0 %1227
      %1229 = vrot.lane.b32.xlu0 %v1039, 96
      %v1230 = vpop.permute.xlu0 %1229
      %1231 = vrot.lane.b32.xlu0 %v1045, 96
      %v1232 = vpop.permute.xlu0 %1231
      %1233 = vrot.lane.b32.xlu0 %v1049, 96
      %v1234 = vpop.permute.xlu0 %1233
      %1235 = vrot.lane.b32.xlu0 %v1055, 96
      %v1236 = vpop.permute.xlu0 %1235
      %1237 = vrot.lane.b32.xlu0 %v1059, 96
      %v1238 = vpop.permute.xlu0 %1237
      %1247 = vrot.lane.b32.xlu0 %v1025, 64
      %v1248 = vpop.permute.xlu0 %1247
      %1249 = vrot.lane.b32.xlu0 %v1029, 64
      %v1250 = vpop.permute.xlu0 %1249
      %1251 = vrot.lane.b32.xlu0 %v1035, 64
      %v1252 = vpop.permute.xlu0 %1251
      %1253 = vrot.lane.b32.xlu0 %v1039, 64
      %v1254 = vpop.permute.xlu0 %1253
      %1255 = vrot.lane.b32.xlu0 %v1045, 64
      %v1256 = vpop.permute.xlu0 %1255
      %1257 = vrot.lane.b32.xlu0 %v1049, 64
      %v1258 = vpop.permute.xlu0 %1257
      %1259 = vrot.lane.b32.xlu0 %v1055, 64
      %v1260 = vpop.permute.xlu0 %1259
      %1261 = vrot.lane.b32.xlu0 %v1059, 64
      %v1262 = vpop.permute.xlu0 %1261
      %1271 = vrot.lane.b32.xlu0 %v1025, 32
      %v1272 = vpop.permute.xlu0 %1271
      %1273 = vrot.lane.b32.xlu0 %v1029, 32
      %v1274 = vpop.permute.xlu0 %1273
      %1275 = vrot.lane.b32.xlu0 %v1035, 32
      %v1276 = vpop.permute.xlu0 %1275
      %1277 = vrot.lane.b32.xlu0 %v1039, 32
      %v1278 = vpop.permute.xlu0 %1277
      %1279 = vrot.lane.b32.xlu0 %v1045, 32
      %v1280 = vpop.permute.xlu0 %1279
      %1281 = vrot.lane.b32.xlu0 %v1049, 32
      %v1282 = vpop.permute.xlu0 %1281
      %1283 = vrot.lane.b32.xlu0 %v1055, 32
      %v1284 = vpop.permute.xlu0 %1283
      %1285 = vrot.lane.b32.xlu0 %v1059, 32
      %v1286 = vpop.permute.xlu0 %1285
      %1303 = vrot.lane.b32.xlu0 %v1096, 96
      %v1304 = vpop.permute.xlu0 %1303
      %1305 = vrot.lane.b32.xlu0 %v1099, 96
      %v1306 = vpop.permute.xlu0 %1305
      %1307 = vrot.lane.b32.xlu0 %v1104, 96
      %v1308 = vpop.permute.xlu0 %1307
      %1309 = vrot.lane.b32.xlu0 %v1107, 96
      %v1310 = vpop.permute.xlu0 %1309
      %1311 = vrot.lane.b32.xlu0 %v1112, 96
      %v1312 = vpop.permute.xlu0 %1311
      %1313 = vrot.lane.b32.xlu0 %v1115, 96
      %v1314 = vpop.permute.xlu0 %1313
      %1315 = vrot.lane.b32.xlu0 %v1120, 96
      %v1316 = vpop.permute.xlu0 %1315
      %1317 = vrot.lane.b32.xlu0 %v1123, 96
      %v1318 = vpop.permute.xlu0 %1317
      %1327 = vrot.lane.b32.xlu0 %v1096, 64
      %v1328 = vpop.permute.xlu0 %1327
      %1329 = vrot.lane.b32.xlu0 %v1099, 64
      %v1330 = vpop.permute.xlu0 %1329
      %1331 = vrot.lane.b32.xlu0 %v1104, 64
      %v1332 = vpop.permute.xlu0 %1331
      %1333 = vrot.lane.b32.xlu0 %v1107, 64
      %v1334 = vpop.permute.xlu0 %1333
      %1335 = vrot.lane.b32.xlu0 %v1112, 64
      %v1336 = vpop.permute.xlu0 %1335
      %1337 = vrot.lane.b32.xlu0 %v1115, 64
      %v1338 = vpop.permute.xlu0 %1337
      %1339 = vrot.lane.b32.xlu0 %v1120, 64
      %v1340 = vpop.permute.xlu0 %1339
      %1341 = vrot.lane.b32.xlu0 %v1123, 64
      %v1342 = vpop.permute.xlu0 %1341
      %1351 = vrot.lane.b32.xlu0 %v1096, 32
      %v1352 = vpop.permute.xlu0 %1351
      %1353 = vrot.lane.b32.xlu0 %v1099, 32
      %v1354 = vpop.permute.xlu0 %1353
      %1355 = vrot.lane.b32.xlu0 %v1104, 32
      %v1356 = vpop.permute.xlu0 %1355
      %1357 = vrot.lane.b32.xlu0 %v1107, 32
      %v1358 = vpop.permute.xlu0 %1357
      %1359 = vrot.lane.b32.xlu0 %v1112, 32
      %v1360 = vpop.permute.xlu0 %1359
      %1361 = vrot.lane.b32.xlu0 %v1115, 32
      %v1362 = vpop.permute.xlu0 %1361
      %1363 = vrot.lane.b32.xlu0 %v1120, 32
      %v1364 = vpop.permute.xlu0 %1363
      %1365 = vrot.lane.b32.xlu0 %v1123, 32
      %v1366 = vpop.permute.xlu0 %1365
      %v1375 = vpack.c.bf16 %v1027, %v1023
      %v1376 = vpack.c.bf16 %v1037, %v1033
      %v1377 = vpack.c.bf16 %v1047, %v1043
      %v1378 = vpack.c.bf16 %v1057, %v1053
      %v1379 = vpack.c.bf16 %v1146, %v1144
      %v1380 = vpack.c.bf16 %v1150, %v1148
      %v1381 = vpack.c.bf16 %v1154, %v1152
      %v1382 = vpack.c.bf16 %v1158, %v1156
      %v1383 = vpack.c.bf16 %v1170, %v1168
      %v1384 = vpack.c.bf16 %v1174, %v1172
      %v1385 = vpack.c.bf16 %v1178, %v1176
      %v1386 = vpack.c.bf16 %v1182, %v1180
      %v1387 = vpack.c.bf16 %v1194, %v1192
      %v1388 = vpack.c.bf16 %v1198, %v1196
      %v1389 = vpack.c.bf16 %v1202, %v1200
      %v1390 = vpack.c.bf16 %v1206, %v1204
      %v1391 = vpack.c.bf16 %v1029, %v1025
      %v1392 = vpack.c.bf16 %v1039, %v1035
      %v1393 = vpack.c.bf16 %v1049, %v1045
      %v1394 = vpack.c.bf16 %v1059, %v1055
      %v1395 = vpack.c.bf16 %v1226, %v1224
      %v1396 = vpack.c.bf16 %v1230, %v1228
      %v1397 = vpack.c.bf16 %v1234, %v1232
      %v1398 = vpack.c.bf16 %v1238, %v1236
      %v1399 = vpack.c.bf16 %v1250, %v1248
      %v1400 = vpack.c.bf16 %v1254, %v1252
      %v1401 = vpack.c.bf16 %v1258, %v1256
      %v1402 = vpack.c.bf16 %v1262, %v1260
      %v1403 = vpack.c.bf16 %v1274, %v1272
      %v1404 = vpack.c.bf16 %v1278, %v1276
      %v1405 = vpack.c.bf16 %v1282, %v1280
      %v1406 = vpack.c.bf16 %v1286, %v1284
      %vm1407 = vcmask 261120
      %v1409 = vsel %vm1407, %v1375, 0
      %v1412 = vsel %vm1407, %v1391, 0
      %1414 = vmatprep.subr.bf16.mxu0 0
      %1415 = vmatpush1.bf16.xpose.msra.mxu0 0
      %1416 = vmatprep.subr.bf16.mxu0 0
      %1417 = vmatpush1.bf16.xpose.msra.mxu0 0
      %1418 = vmatprep.subr.bf16.mxu0 0
      %1419 = vmatpush1.bf16.xpose.msra.mxu0 0
      %1420 = vmatprep.subr.bf16.mxu0 0
      %1421 = vmatpush1.bf16.xpose.msra.mxu0 0
      %1422 = vmatprep.subr.bf16.mxu0 0
      %1423 = vmatpush1.bf16.xpose.msra.mxu0 0
      %1424 = vmatprep.subr.bf16.mxu0 0
      %1425 = vmatpush1.bf16.xpose.msra.mxu0 0
      %1426 = vmatprep.subr.bf16.mxu0 0
      %1427 = vmatpush1.bf16.xpose.msra.mxu0 0
      %1428 = vmatprep.subr.bf16.mxu0 0
      %1429 = vmatpush1.bf16.xpose.msra.mxu0 %v1412
      %1430 = vmatprep.subr.bf16.mxu0 0
      %1431 = vmatpush2.bf16.xpose.msra.mxu0 0
      %1432 = vmatprep.subr.bf16.mxu0 0
      %1433 = vmatpush2.bf16.xpose.msra.mxu0 0
      %1434 = vmatprep.subr.bf16.mxu0 0
      %1435 = vmatpush2.bf16.xpose.msra.mxu0 0
      %1436 = vmatprep.subr.bf16.mxu0 0
      %1437 = vmatpush2.bf16.xpose.msra.mxu0 0
      %1438 = vmatprep.subr.bf16.mxu0 0
      %1439 = vmatpush2.bf16.xpose.msra.mxu0 0
      %1440 = vmatprep.subr.bf16.mxu0 0
      %1441 = vmatpush2.bf16.xpose.msra.mxu0 0
      %1442 = vmatprep.subr.bf16.mxu0 0
      %1443 = vmatpush2.bf16.xpose.msra.mxu0 0
      %1444 = vmatprep.subr.bf16.mxu0 0
      %1445 = vmatpush2.bf16.xpose.msra.mxu0 0
      %1446 = vmatprep.mubr.bf16.mxu0 0
      %1447 = vmatmul.mubr.bf16.gmra.mxu0 %v1409
      %v1448 = vpop.f32.mrf.mxu0
      %v1449 = vadd.f32 0.0, %v1448
      %v1450 = vpop.f32.mrf.mxu0
      %v1451 = vpop.f32.mrf.mxu0
      %v1452 = vadd.f32 0.0, %v1451
      %v1453 = vpop.f32.mrf.mxu0
      %1454 = vdwg.mxu0
      %v1456 = vsel %vm1407, %v1376, 0
      %v1459 = vsel %vm1407, %v1392, 0
      %1461 = vmatprep.subr.bf16.mxu0 0
      %1462 = vmatpush1.bf16.xpose.msra.mxu0 0
      %1463 = vmatprep.subr.bf16.mxu0 0
      %1464 = vmatpush1.bf16.xpose.msra.mxu0 0
      %1465 = vmatprep.subr.bf16.mxu0 0
      %1466 = vmatpush1.bf16.xpose.msra.mxu0 0
      %1467 = vmatprep.subr.bf16.mxu0 0
      %1468 = vmatpush1.bf16.xpose.msra.mxu0 0
      %1469 = vmatprep.subr.bf16.mxu0 0
      %1470 = vmatpush1.bf16.xpose.msra.mxu0 0
      %1471 = vmatprep.subr.bf16.mxu0 0
      %1472 = vmatpush1.bf16.xpose.msra.mxu0 0
      %1473 = vmatprep.subr.bf16.mxu0 0
      %1474 = vmatpush1.bf16.xpose.msra.mxu0 0
      %1475 = vmatprep.subr.bf16.mxu0 0
      %1476 = vmatpush1.bf16.xpose.msra.mxu0 %v1459
      %1477 = vmatprep.subr.bf16.mxu0 0
      %1478 = vmatpush2.bf16.xpose.msra.mxu0 0
      %1479 = vmatprep.subr.bf16.mxu0 0
      %1480 = vmatpush2.bf16.xpose.msra.mxu0 0
      %1481 = vmatprep.subr.bf16.mxu0 0
      %1482 = vmatpush2.bf16.xpose.msra.mxu0 0
      %1483 = vmatprep.subr.bf16.mxu0 0
      %1484 = vmatpush2.bf16.xpose.msra.mxu0 0
      %1485 = vmatprep.subr.bf16.mxu0 0
      %1486 = vmatpush2.bf16.xpose.msra.mxu0 0
      %1487 = vmatprep.subr.bf16.mxu0 0
      %1488 = vmatpush2.bf16.xpose.msra.mxu0 0
      %1489 = vmatprep.subr.bf16.mxu0 0
      %1490 = vmatpush2.bf16.xpose.msra.mxu0 0
      %1491 = vmatprep.subr.bf16.mxu0 0
      %1492 = vmatpush2.bf16.xpose.msra.mxu0 0
      %1493 = vmatprep.mubr.bf16.mxu0 0
      %1494 = vmatmul.mubr.bf16.gmra.mxu0 %v1456
      %v1495 = vpop.f32.mrf.mxu0
      %v1496 = vadd.f32 0.0, %v1495
      %v1497 = vpop.f32.mrf.mxu0
      %v1498 = vpop.f32.mrf.mxu0
      %v1499 = vadd.f32 0.0, %v1498
      %v1500 = vpop.f32.mrf.mxu0
      %1501 = vdwg.mxu0
      %v1503 = vsel %vm1407, %v1377, 0
      %v1506 = vsel %vm1407, %v1393, 0
      %1508 = vmatprep.subr.bf16.mxu0 0
      %1509 = vmatpush1.bf16.xpose.msra.mxu0 0
      %1510 = vmatprep.subr.bf16.mxu0 0
      %1511 = vmatpush1.bf16.xpose.msra.mxu0 0
      %1512 = vmatprep.subr.bf16.mxu0 0
      %1513 = vmatpush1.bf16.xpose.msra.mxu0 0
      %1514 = vmatprep.subr.bf16.mxu0 0
      %1515 = vmatpush1.bf16.xpose.msra.mxu0 0
      %1516 = vmatprep.subr.bf16.mxu0 0
      %1517 = vmatpush1.bf16.xpose.msra.mxu0 0
      %1518 = vmatprep.subr.bf16.mxu0 0
      %1519 = vmatpush1.bf16.xpose.msra.mxu0 0
      %1520 = vmatprep.subr.bf16.mxu0 0
      %1521 = vmatpush1.bf16.xpose.msra.mxu0 0
      %1522 = vmatprep.subr.bf16.mxu0 0
      %1523 = vmatpush1.bf16.xpose.msra.mxu0 %v1506
      %1524 = vmatprep.subr.bf16.mxu0 0
      %1525 = vmatpush2.bf16.xpose.msra.mxu0 0
      %1526 = vmatprep.subr.bf16.mxu0 0
      %1527 = vmatpush2.bf16.xpose.msra.mxu0 0
      %1528 = vmatprep.subr.bf16.mxu0 0
      %1529 = vmatpush2.bf16.xpose.msra.mxu0 0
      %1530 = vmatprep.subr.bf16.mxu0 0
      %1531 = vmatpush2.bf16.xpose.msra.mxu0 0
      %1532 = vmatprep.subr.bf16.mxu0 0
      %1533 = vmatpush2.bf16.xpose.msra.mxu0 0
      %1534 = vmatprep.subr.bf16.mxu0 0
      %1535 = vmatpush2.bf16.xpose.msra.mxu0 0
      %1536 = vmatprep.subr.bf16.mxu0 0
      %1537 = vmatpush2.bf16.xpose.msra.mxu0 0
      %1538 = vmatprep.subr.bf16.mxu0 0
      %1539 = vmatpush2.bf16.xpose.msra.mxu0 0
      %1540 = vmatprep.mubr.bf16.mxu0 0
      %1541 = vmatmul.mubr.bf16.gmra.mxu0 %v1503
      %v1542 = vpop.f32.mrf.mxu0
      %v1543 = vadd.f32 0.0, %v1542
      %v1544 = vpop.f32.mrf.mxu0
      %v1545 = vpop.f32.mrf.mxu0
      %v1546 = vadd.f32 0.0, %v1545
      %v1547 = vpop.f32.mrf.mxu0
      %1548 = vdwg.mxu0
      %v1550 = vsel %vm1407, %v1378, 0
      %v1553 = vsel %vm1407, %v1394, 0
      %1555 = vmatprep.subr.bf16.mxu0 0
      %1556 = vmatpush1.bf16.xpose.msra.mxu0 0
      %1557 = vmatprep.subr.bf16.mxu0 0
      %1558 = vmatpush1.bf16.xpose.msra.mxu0 0
      %1559 = vmatprep.subr.bf16.mxu0 0
      %1560 = vmatpush1.bf16.xpose.msra.mxu0 0
      %1561 = vmatprep.subr.bf16.mxu0 0
      %1562 = vmatpush1.bf16.xpose.msra.mxu0 0
      %1563 = vmatprep.subr.bf16.mxu0 0
      %1564 = vmatpush1.bf16.xpose.msra.mxu0 0
      %1565 = vmatprep.subr.bf16.mxu0 0
      %1566 = vmatpush1.bf16.xpose.msra.mxu0 0
      %1567 = vmatprep.subr.bf16.mxu0 0
      %1568 = vmatpush1.bf16.xpose.msra.mxu0 0
      %1569 = vmatprep.subr.bf16.mxu0 0
      %1570 = vmatpush1.bf16.xpose.msra.mxu0 %v1553
      %1571 = vmatprep.subr.bf16.mxu0 0
      %1572 = vmatpush2.bf16.xpose.msra.mxu0 0
      %1573 = vmatprep.subr.bf16.mxu0 0
      %1574 = vmatpush2.bf16.xpose.msra.mxu0 0
      %1575 = vmatprep.subr.bf16.mxu0 0
      %1576 = vmatpush2.bf16.xpose.msra.mxu0 0
      %1577 = vmatprep.subr.bf16.mxu0 0
      %1578 = vmatpush2.bf16.xpose.msra.mxu0 0
      %1579 = vmatprep.subr.bf16.mxu0 0
      %1580 = vmatpush2.bf16.xpose.msra.mxu0 0
      %1581 = vmatprep.subr.bf16.mxu0 0
      %1582 = vmatpush2.bf16.xpose.msra.mxu0 0
      %1583 = vmatprep.subr.bf16.mxu0 0
      %1584 = vmatpush2.bf16.xpose.msra.mxu0 0
      %1585 = vmatprep.subr.bf16.mxu0 0
      %1586 = vmatpush2.bf16.xpose.msra.mxu0 0
      %1587 = vmatprep.mubr.bf16.mxu0 0
      %1588 = vmatmul.mubr.bf16.gmra.mxu0 %v1550
      %v1589 = vpop.f32.mrf.mxu0
      %v1590 = vadd.f32 0.0, %v1589
      %v1591 = vpop.f32.mrf.mxu0
      %v1592 = vpop.f32.mrf.mxu0
      %v1593 = vadd.f32 0.0, %v1592
      %v1594 = vpop.f32.mrf.mxu0
      %1595 = vdwg.mxu0
      %v1597 = vsel %vm1407, %v1379, 0
      %v1600 = vsel %vm1407, %v1395, 0
      %1602 = vmatprep.subr.bf16.mxu0 0
      %1603 = vmatpush1.bf16.xpose.msra.mxu0 0
      %1604 = vmatprep.subr.bf16.mxu0 0
      %1605 = vmatpush1.bf16.xpose.msra.mxu0 0
      %1606 = vmatprep.subr.bf16.mxu0 0
      %1607 = vmatpush1.bf16.xpose.msra.mxu0 0
      %1608 = vmatprep.subr.bf16.mxu0 0
      %1609 = vmatpush1.bf16.xpose.msra.mxu0 0
      %1610 = vmatprep.subr.bf16.mxu0 0
      %1611 = vmatpush1.bf16.xpose.msra.mxu0 0
      %1612 = vmatprep.subr.bf16.mxu0 0
      %1613 = vmatpush1.bf16.xpose.msra.mxu0 0
      %1614 = vmatprep.subr.bf16.mxu0 0
      %1615 = vmatpush1.bf16.xpose.msra.mxu0 0
      %1616 = vmatprep.subr.bf16.mxu0 0
      %1617 = vmatpush1.bf16.xpose.msra.mxu0 %v1600
      %1618 = vmatprep.subr.bf16.mxu0 0
      %1619 = vmatpush2.bf16.xpose.msra.mxu0 0
      %1620 = vmatprep.subr.bf16.mxu0 0
      %1621 = vmatpush2.bf16.xpose.msra.mxu0 0
      %1622 = vmatprep.subr.bf16.mxu0 0
      %1623 = vmatpush2.bf16.xpose.msra.mxu0 0
      %1624 = vmatprep.subr.bf16.mxu0 0
      %1625 = vmatpush2.bf16.xpose.msra.mxu0 0
      %1626 = vmatprep.subr.bf16.mxu0 0
      %1627 = vmatpush2.bf16.xpose.msra.mxu0 0
      %1628 = vmatprep.subr.bf16.mxu0 0
      %1629 = vmatpush2.bf16.xpose.msra.mxu0 0
      %1630 = vmatprep.subr.bf16.mxu0 0
      %1631 = vmatpush2.bf16.xpose.msra.mxu0 0
      %1632 = vmatprep.subr.bf16.mxu0 0
      %1633 = vmatpush2.bf16.xpose.msra.mxu0 0
      %1634 = vmatprep.mubr.bf16.mxu0 0
      %1635 = vmatmul.mubr.bf16.gmra.mxu0 %v1597
      %v1636 = vpop.f32.mrf.mxu0
      %v1637 = vadd.f32 0.0, %v1636
      %v1638 = vpop.f32.mrf.mxu0
      %v1639 = vpop.f32.mrf.mxu0
      %v1640 = vadd.f32 0.0, %v1639
      %v1641 = vpop.f32.mrf.mxu0
      %1642 = vdwg.mxu0
      %v1644 = vsel %vm1407, %v1380, 0
      %v1647 = vsel %vm1407, %v1396, 0
      %1649 = vmatprep.subr.bf16.mxu0 0
      %1650 = vmatpush1.bf16.xpose.msra.mxu0 0
      %1651 = vmatprep.subr.bf16.mxu0 0
      %1652 = vmatpush1.bf16.xpose.msra.mxu0 0
      %1653 = vmatprep.subr.bf16.mxu0 0
      %1654 = vmatpush1.bf16.xpose.msra.mxu0 0
      %1655 = vmatprep.subr.bf16.mxu0 0
      %1656 = vmatpush1.bf16.xpose.msra.mxu0 0
      %1657 = vmatprep.subr.bf16.mxu0 0
      %1658 = vmatpush1.bf16.xpose.msra.mxu0 0
      %1659 = vmatprep.subr.bf16.mxu0 0
      %1660 = vmatpush1.bf16.xpose.msra.mxu0 0
      %1661 = vmatprep.subr.bf16.mxu0 0
      %1662 = vmatpush1.bf16.xpose.msra.mxu0 0
      %1663 = vmatprep.subr.bf16.mxu0 0
      %1664 = vmatpush1.bf16.xpose.msra.mxu0 %v1647
      %1665 = vmatprep.subr.bf16.mxu0 0
      %1666 = vmatpush2.bf16.xpose.msra.mxu0 0
      %1667 = vmatprep.subr.bf16.mxu0 0
      %1668 = vmatpush2.bf16.xpose.msra.mxu0 0
      %1669 = vmatprep.subr.bf16.mxu0 0
      %1670 = vmatpush2.bf16.xpose.msra.mxu0 0
      %1671 = vmatprep.subr.bf16.mxu0 0
      %1672 = vmatpush2.bf16.xpose.msra.mxu0 0
      %1673 = vmatprep.subr.bf16.mxu0 0
      %1674 = vmatpush2.bf16.xpose.msra.mxu0 0
      %1675 = vmatprep.subr.bf16.mxu0 0
      %1676 = vmatpush2.bf16.xpose.msra.mxu0 0
      %1677 = vmatprep.subr.bf16.mxu0 0
      %1678 = vmatpush2.bf16.xpose.msra.mxu0 0
      %1679 = vmatprep.subr.bf16.mxu0 0
      %1680 = vmatpush2.bf16.xpose.msra.mxu0 0
      %1681 = vmatprep.mubr.bf16.mxu0 0
      %1682 = vmatmul.mubr.bf16.gmra.mxu0 %v1644
      %v1683 = vpop.f32.mrf.mxu0
      %v1684 = vadd.f32 0.0, %v1683
      %v1685 = vpop.f32.mrf.mxu0
      %v1686 = vpop.f32.mrf.mxu0
      %v1687 = vadd.f32 0.0, %v1686
      %v1688 = vpop.f32.mrf.mxu0
      %1689 = vdwg.mxu0
      %v1691 = vsel %vm1407, %v1381, 0
      %v1694 = vsel %vm1407, %v1397, 0
      %1696 = vmatprep.subr.bf16.mxu0 0
      %1697 = vmatpush1.bf16.xpose.msra.mxu0 0
      %1698 = vmatprep.subr.bf16.mxu0 0
      %1699 = vmatpush1.bf16.xpose.msra.mxu0 0
      %1700 = vmatprep.subr.bf16.mxu0 0
      %1701 = vmatpush1.bf16.xpose.msra.mxu0 0
      %1702 = vmatprep.subr.bf16.mxu0 0
      %1703 = vmatpush1.bf16.xpose.msra.mxu0 0
      %1704 = vmatprep.subr.bf16.mxu0 0
      %1705 = vmatpush1.bf16.xpose.msra.mxu0 0
      %1706 = vmatprep.subr.bf16.mxu0 0
      %1707 = vmatpush1.bf16.xpose.msra.mxu0 0
      %1708 = vmatprep.subr.bf16.mxu0 0
      %1709 = vmatpush1.bf16.xpose.msra.mxu0 0
      %1710 = vmatprep.subr.bf16.mxu0 0
      %1711 = vmatpush1.bf16.xpose.msra.mxu0 %v1694
      %1712 = vmatprep.subr.bf16.mxu0 0
      %1713 = vmatpush2.bf16.xpose.msra.mxu0 0
      %1714 = vmatprep.subr.bf16.mxu0 0
      %1715 = vmatpush2.bf16.xpose.msra.mxu0 0
      %1716 = vmatprep.subr.bf16.mxu0 0
      %1717 = vmatpush2.bf16.xpose.msra.mxu0 0
      %1718 = vmatprep.subr.bf16.mxu0 0
      %1719 = vmatpush2.bf16.xpose.msra.mxu0 0
      %1720 = vmatprep.subr.bf16.mxu0 0
      %1721 = vmatpush2.bf16.xpose.msra.mxu0 0
      %1722 = vmatprep.subr.bf16.mxu0 0
      %1723 = vmatpush2.bf16.xpose.msra.mxu0 0
      %1724 = vmatprep.subr.bf16.mxu0 0
      %1725 = vmatpush2.bf16.xpose.msra.mxu0 0
      %1726 = vmatprep.subr.bf16.mxu0 0
      %1727 = vmatpush2.bf16.xpose.msra.mxu0 0
      %1728 = vmatprep.mubr.bf16.mxu0 0
      %1729 = vmatmul.mubr.bf16.gmra.mxu0 %v1691
      %v1730 = vpop.f32.mrf.mxu0
      %v1731 = vadd.f32 0.0, %v1730
      %v1732 = vpop.f32.mrf.mxu0
      %v1733 = vpop.f32.mrf.mxu0
      %v1734 = vadd.f32 0.0, %v1733
      %v1735 = vpop.f32.mrf.mxu0
      %1736 = vdwg.mxu0
      %v1738 = vsel %vm1407, %v1382, 0
      %v1741 = vsel %vm1407, %v1398, 0
      %1743 = vmatprep.subr.bf16.mxu0 0
      %1744 = vmatpush1.bf16.xpose.msra.mxu0 0
      %1745 = vmatprep.subr.bf16.mxu0 0
      %1746 = vmatpush1.bf16.xpose.msra.mxu0 0
      %1747 = vmatprep.subr.bf16.mxu0 0
      %1748 = vmatpush1.bf16.xpose.msra.mxu0 0
      %1749 = vmatprep.subr.bf16.mxu0 0
      %1750 = vmatpush1.bf16.xpose.msra.mxu0 0
      %1751 = vmatprep.subr.bf16.mxu0 0
      %1752 = vmatpush1.bf16.xpose.msra.mxu0 0
      %1753 = vmatprep.subr.bf16.mxu0 0
      %1754 = vmatpush1.bf16.xpose.msra.mxu0 0
      %1755 = vmatprep.subr.bf16.mxu0 0
      %1756 = vmatpush1.bf16.xpose.msra.mxu0 0
      %1757 = vmatprep.subr.bf16.mxu0 0
      %1758 = vmatpush1.bf16.xpose.msra.mxu0 %v1741
      %1759 = vmatprep.subr.bf16.mxu0 0
      %1760 = vmatpush2.bf16.xpose.msra.mxu0 0
      %1761 = vmatprep.subr.bf16.mxu0 0
      %1762 = vmatpush2.bf16.xpose.msra.mxu0 0
      %1763 = vmatprep.subr.bf16.mxu0 0
      %1764 = vmatpush2.bf16.xpose.msra.mxu0 0
      %1765 = vmatprep.subr.bf16.mxu0 0
      %1766 = vmatpush2.bf16.xpose.msra.mxu0 0
      %1767 = vmatprep.subr.bf16.mxu0 0
      %1768 = vmatpush2.bf16.xpose.msra.mxu0 0
      %1769 = vmatprep.subr.bf16.mxu0 0
      %1770 = vmatpush2.bf16.xpose.msra.mxu0 0
      %1771 = vmatprep.subr.bf16.mxu0 0
      %1772 = vmatpush2.bf16.xpose.msra.mxu0 0
      %1773 = vmatprep.subr.bf16.mxu0 0
      %1774 = vmatpush2.bf16.xpose.msra.mxu0 0
      %1775 = vmatprep.mubr.bf16.mxu0 0
      %1776 = vmatmul.mubr.bf16.gmra.mxu0 %v1738
      %v1777 = vpop.f32.mrf.mxu0
      %v1778 = vadd.f32 0.0, %v1777
      %v1779 = vpop.f32.mrf.mxu0
      %v1780 = vpop.f32.mrf.mxu0
      %v1781 = vadd.f32 0.0, %v1780
      %v1782 = vpop.f32.mrf.mxu0
      %1783 = vdwg.mxu0
      %v1785 = vsel %vm1407, %v1383, 0
      %v1788 = vsel %vm1407, %v1399, 0
      %1790 = vmatprep.subr.bf16.mxu0 0
      %1791 = vmatpush1.bf16.xpose.msra.mxu0 0
      %1792 = vmatprep.subr.bf16.mxu0 0
      %1793 = vmatpush1.bf16.xpose.msra.mxu0 0
      %1794 = vmatprep.subr.bf16.mxu0 0
      %1795 = vmatpush1.bf16.xpose.msra.mxu0 0
      %1796 = vmatprep.subr.bf16.mxu0 0
      %1797 = vmatpush1.bf16.xpose.msra.mxu0 0
      %1798 = vmatprep.subr.bf16.mxu0 0
      %1799 = vmatpush1.bf16.xpose.msra.mxu0 0
      %1800 = vmatprep.subr.bf16.mxu0 0
      %1801 = vmatpush1.bf16.xpose.msra.mxu0 0
      %1802 = vmatprep.subr.bf16.mxu0 0
      %1803 = vmatpush1.bf16.xpose.msra.mxu0 0
      %1804 = vmatprep.subr.bf16.mxu0 0
      %1805 = vmatpush1.bf16.xpose.msra.mxu0 %v1788
      %1806 = vmatprep.subr.bf16.mxu0 0
      %1807 = vmatpush2.bf16.xpose.msra.mxu0 0
      %1808 = vmatprep.subr.bf16.mxu0 0
      %1809 = vmatpush2.bf16.xpose.msra.mxu0 0
      %1810 = vmatprep.subr.bf16.mxu0 0
      %1811 = vmatpush2.bf16.xpose.msra.mxu0 0
      %1812 = vmatprep.subr.bf16.mxu0 0
      %1813 = vmatpush2.bf16.xpose.msra.mxu0 0
      %1814 = vmatprep.subr.bf16.mxu0 0
      %1815 = vmatpush2.bf16.xpose.msra.mxu0 0
      %1816 = vmatprep.subr.bf16.mxu0 0
      %1817 = vmatpush2.bf16.xpose.msra.mxu0 0
      %1818 = vmatprep.subr.bf16.mxu0 0
      %1819 = vmatpush2.bf16.xpose.msra.mxu0 0
      %1820 = vmatprep.subr.bf16.mxu0 0
      %1821 = vmatpush2.bf16.xpose.msra.mxu0 0
      %1822 = vmatprep.mubr.bf16.mxu0 0
      %1823 = vmatmul.mubr.bf16.gmra.mxu0 %v1785
      %v1824 = vpop.f32.mrf.mxu0
      %v1825 = vadd.f32 0.0, %v1824
      %v1826 = vpop.f32.mrf.mxu0
      %v1827 = vpop.f32.mrf.mxu0
      %v1828 = vadd.f32 0.0, %v1827
      %v1829 = vpop.f32.mrf.mxu0
      %1830 = vdwg.mxu0
      %v1832 = vsel %vm1407, %v1384, 0
      %v1835 = vsel %vm1407, %v1400, 0
      %1837 = vmatprep.subr.bf16.mxu0 0
      %1838 = vmatpush1.bf16.xpose.msra.mxu0 0
      %1839 = vmatprep.subr.bf16.mxu0 0
      %1840 = vmatpush1.bf16.xpose.msra.mxu0 0
      %1841 = vmatprep.subr.bf16.mxu0 0
      %1842 = vmatpush1.bf16.xpose.msra.mxu0 0
      %1843 = vmatprep.subr.bf16.mxu0 0
      %1844 = vmatpush1.bf16.xpose.msra.mxu0 0
      %1845 = vmatprep.subr.bf16.mxu0 0
      %1846 = vmatpush1.bf16.xpose.msra.mxu0 0
      %1847 = vmatprep.subr.bf16.mxu0 0
      %1848 = vmatpush1.bf16.xpose.msra.mxu0 0
      %1849 = vmatprep.subr.bf16.mxu0 0
      %1850 = vmatpush1.bf16.xpose.msra.mxu0 0
      %1851 = vmatprep.subr.bf16.mxu0 0
      %1852 = vmatpush1.bf16.xpose.msra.mxu0 %v1835
      %1853 = vmatprep.subr.bf16.mxu0 0
      %1854 = vmatpush2.bf16.xpose.msra.mxu0 0
      %1855 = vmatprep.subr.bf16.mxu0 0
      %1856 = vmatpush2.bf16.xpose.msra.mxu0 0
      %1857 = vmatprep.subr.bf16.mxu0 0
      %1858 = vmatpush2.bf16.xpose.msra.mxu0 0
      %1859 = vmatprep.subr.bf16.mxu0 0
      %1860 = vmatpush2.bf16.xpose.msra.mxu0 0
      %1861 = vmatprep.subr.bf16.mxu0 0
      %1862 = vmatpush2.bf16.xpose.msra.mxu0 0
      %1863 = vmatprep.subr.bf16.mxu0 0
      %1864 = vmatpush2.bf16.xpose.msra.mxu0 0
      %1865 = vmatprep.subr.bf16.mxu0 0
      %1866 = vmatpush2.bf16.xpose.msra.mxu0 0
      %1867 = vmatprep.subr.bf16.mxu0 0
      %1868 = vmatpush2.bf16.xpose.msra.mxu0 0
      %1869 = vmatprep.mubr.bf16.mxu0 0
      %1870 = vmatmul.mubr.bf16.gmra.mxu0 %v1832
      %v1871 = vpop.f32.mrf.mxu0
      %v1872 = vadd.f32 0.0, %v1871
      %v1873 = vpop.f32.mrf.mxu0
      %v1874 = vpop.f32.mrf.mxu0
      %v1875 = vadd.f32 0.0, %v1874
      %v1876 = vpop.f32.mrf.mxu0
      %1877 = vdwg.mxu0
      %v1879 = vsel %vm1407, %v1385, 0
      %v1882 = vsel %vm1407, %v1401, 0
      %1884 = vmatprep.subr.bf16.mxu0 0
      %1885 = vmatpush1.bf16.xpose.msra.mxu0 0
      %1886 = vmatprep.subr.bf16.mxu0 0
      %1887 = vmatpush1.bf16.xpose.msra.mxu0 0
      %1888 = vmatprep.subr.bf16.mxu0 0
      %1889 = vmatpush1.bf16.xpose.msra.mxu0 0
      %1890 = vmatprep.subr.bf16.mxu0 0
      %1891 = vmatpush1.bf16.xpose.msra.mxu0 0
      %1892 = vmatprep.subr.bf16.mxu0 0
      %1893 = vmatpush1.bf16.xpose.msra.mxu0 0
      %1894 = vmatprep.subr.bf16.mxu0 0
      %1895 = vmatpush1.bf16.xpose.msra.mxu0 0
      %1896 = vmatprep.subr.bf16.mxu0 0
      %1897 = vmatpush1.bf16.xpose.msra.mxu0 0
      %1898 = vmatprep.subr.bf16.mxu0 0
      %1899 = vmatpush1.bf16.xpose.msra.mxu0 %v1882
      %1900 = vmatprep.subr.bf16.mxu0 0
      %1901 = vmatpush2.bf16.xpose.msra.mxu0 0
      %1902 = vmatprep.subr.bf16.mxu0 0
      %1903 = vmatpush2.bf16.xpose.msra.mxu0 0
      %1904 = vmatprep.subr.bf16.mxu0 0
      %1905 = vmatpush2.bf16.xpose.msra.mxu0 0
      %1906 = vmatprep.subr.bf16.mxu0 0
      %1907 = vmatpush2.bf16.xpose.msra.mxu0 0
      %1908 = vmatprep.subr.bf16.mxu0 0
      %1909 = vmatpush2.bf16.xpose.msra.mxu0 0
      %1910 = vmatprep.subr.bf16.mxu0 0
      %1911 = vmatpush2.bf16.xpose.msra.mxu0 0
      %1912 = vmatprep.subr.bf16.mxu0 0
      %1913 = vmatpush2.bf16.xpose.msra.mxu0 0
      %1914 = vmatprep.subr.bf16.mxu0 0
      %1915 = vmatpush2.bf16.xpose.msra.mxu0 0
      %1916 = vmatprep.mubr.bf16.mxu0 0
      %1917 = vmatmul.mubr.bf16.gmra.mxu0 %v1879
      %v1918 = vpop.f32.mrf.mxu0
      %v1919 = vadd.f32 0.0, %v1918
      %v1920 = vpop.f32.mrf.mxu0
      %v1921 = vpop.f32.mrf.mxu0
      %v1922 = vadd.f32 0.0, %v1921
      %v1923 = vpop.f32.mrf.mxu0
      %1924 = vdwg.mxu0
      %v1926 = vsel %vm1407, %v1386, 0
      %v1929 = vsel %vm1407, %v1402, 0
      %1931 = vmatprep.subr.bf16.mxu0 0
      %1932 = vmatpush1.bf16.xpose.msra.mxu0 0
      %1933 = vmatprep.subr.bf16.mxu0 0
      %1934 = vmatpush1.bf16.xpose.msra.mxu0 0
      %1935 = vmatprep.subr.bf16.mxu0 0
      %1936 = vmatpush1.bf16.xpose.msra.mxu0 0
      %1937 = vmatprep.subr.bf16.mxu0 0
      %1938 = vmatpush1.bf16.xpose.msra.mxu0 0
      %1939 = vmatprep.subr.bf16.mxu0 0
      %1940 = vmatpush1.bf16.xpose.msra.mxu0 0
      %1941 = vmatprep.subr.bf16.mxu0 0
      %1942 = vmatpush1.bf16.xpose.msra.mxu0 0
      %1943 = vmatprep.subr.bf16.mxu0 0
      %1944 = vmatpush1.bf16.xpose.msra.mxu0 0
      %1945 = vmatprep.subr.bf16.mxu0 0
      %1946 = vmatpush1.bf16.xpose.msra.mxu0 %v1929
      %1947 = vmatprep.subr.bf16.mxu0 0
      %1948 = vmatpush2.bf16.xpose.msra.mxu0 0
      %1949 = vmatprep.subr.bf16.mxu0 0
      %1950 = vmatpush2.bf16.xpose.msra.mxu0 0
      %1951 = vmatprep.subr.bf16.mxu0 0
      %1952 = vmatpush2.bf16.xpose.msra.mxu0 0
      %1953 = vmatprep.subr.bf16.mxu0 0
      %1954 = vmatpush2.bf16.xpose.msra.mxu0 0
      %1955 = vmatprep.subr.bf16.mxu0 0
      %1956 = vmatpush2.bf16.xpose.msra.mxu0 0
      %1957 = vmatprep.subr.bf16.mxu0 0
      %1958 = vmatpush2.bf16.xpose.msra.mxu0 0
      %1959 = vmatprep.subr.bf16.mxu0 0
      %1960 = vmatpush2.bf16.xpose.msra.mxu0 0
      %1961 = vmatprep.subr.bf16.mxu0 0
      %1962 = vmatpush2.bf16.xpose.msra.mxu0 0
      %1963 = vmatprep.mubr.bf16.mxu0 0
      %1964 = vmatmul.mubr.bf16.gmra.mxu0 %v1926
      %v1965 = vpop.f32.mrf.mxu0
      %v1966 = vadd.f32 0.0, %v1965
      %v1967 = vpop.f32.mrf.mxu0
      %v1968 = vpop.f32.mrf.mxu0
      %v1969 = vadd.f32 0.0, %v1968
      %v1970 = vpop.f32.mrf.mxu0
      %1971 = vdwg.mxu0
      %v1973 = vsel %vm1407, %v1387, 0
      %v1976 = vsel %vm1407, %v1403, 0
      %1978 = vmatprep.subr.bf16.mxu0 0
      %1979 = vmatpush1.bf16.xpose.msra.mxu0 0
      %1980 = vmatprep.subr.bf16.mxu0 0
      %1981 = vmatpush1.bf16.xpose.msra.mxu0 0
      %1982 = vmatprep.subr.bf16.mxu0 0
      %1983 = vmatpush1.bf16.xpose.msra.mxu0 0
      %1984 = vmatprep.subr.bf16.mxu0 0
      %1985 = vmatpush1.bf16.xpose.msra.mxu0 0
      %1986 = vmatprep.subr.bf16.mxu0 0
      %1987 = vmatpush1.bf16.xpose.msra.mxu0 0
      %1988 = vmatprep.subr.bf16.mxu0 0
      %1989 = vmatpush1.bf16.xpose.msra.mxu0 0
      %1990 = vmatprep.subr.bf16.mxu0 0
      %1991 = vmatpush1.bf16.xpose.msra.mxu0 0
      %1992 = vmatprep.subr.bf16.mxu0 0
      %1993 = vmatpush1.bf16.xpose.msra.mxu0 %v1976
      %1994 = vmatprep.subr.bf16.mxu0 0
      %1995 = vmatpush2.bf16.xpose.msra.mxu0 0
      %1996 = vmatprep.subr.bf16.mxu0 0
      %1997 = vmatpush2.bf16.xpose.msra.mxu0 0
      %1998 = vmatprep.subr.bf16.mxu0 0
      %1999 = vmatpush2.bf16.xpose.msra.mxu0 0
      %2000 = vmatprep.subr.bf16.mxu0 0
      %2001 = vmatpush2.bf16.xpose.msra.mxu0 0
      %2002 = vmatprep.subr.bf16.mxu0 0
      %2003 = vmatpush2.bf16.xpose.msra.mxu0 0
      %2004 = vmatprep.subr.bf16.mxu0 0
      %2005 = vmatpush2.bf16.xpose.msra.mxu0 0
      %2006 = vmatprep.subr.bf16.mxu0 0
      %2007 = vmatpush2.bf16.xpose.msra.mxu0 0
      %2008 = vmatprep.subr.bf16.mxu0 0
      %2009 = vmatpush2.bf16.xpose.msra.mxu0 0
      %2010 = vmatprep.mubr.bf16.mxu0 0
      %2011 = vmatmul.mubr.bf16.gmra.mxu0 %v1973
      %v2012 = vpop.f32.mrf.mxu0
      %v2013 = vadd.f32 0.0, %v2012
      %v2014 = vpop.f32.mrf.mxu0
      %v2015 = vpop.f32.mrf.mxu0
      %v2016 = vadd.f32 0.0, %v2015
      %v2017 = vpop.f32.mrf.mxu0
      %2018 = vdwg.mxu0
      %v2020 = vsel %vm1407, %v1388, 0
      %v2023 = vsel %vm1407, %v1404, 0
      %2025 = vmatprep.subr.bf16.mxu0 0
      %2026 = vmatpush1.bf16.xpose.msra.mxu0 0
      %2027 = vmatprep.subr.bf16.mxu0 0
      %2028 = vmatpush1.bf16.xpose.msra.mxu0 0
      %2029 = vmatprep.subr.bf16.mxu0 0
      %2030 = vmatpush1.bf16.xpose.msra.mxu0 0
      %2031 = vmatprep.subr.bf16.mxu0 0
      %2032 = vmatpush1.bf16.xpose.msra.mxu0 0
      %2033 = vmatprep.subr.bf16.mxu0 0
      %2034 = vmatpush1.bf16.xpose.msra.mxu0 0
      %2035 = vmatprep.subr.bf16.mxu0 0
      %2036 = vmatpush1.bf16.xpose.msra.mxu0 0
      %2037 = vmatprep.subr.bf16.mxu0 0
      %2038 = vmatpush1.bf16.xpose.msra.mxu0 0
      %2039 = vmatprep.subr.bf16.mxu0 0
      %2040 = vmatpush1.bf16.xpose.msra.mxu0 %v2023
      %2041 = vmatprep.subr.bf16.mxu0 0
      %2042 = vmatpush2.bf16.xpose.msra.mxu0 0
      %2043 = vmatprep.subr.bf16.mxu0 0
      %2044 = vmatpush2.bf16.xpose.msra.mxu0 0
      %2045 = vmatprep.subr.bf16.mxu0 0
      %2046 = vmatpush2.bf16.xpose.msra.mxu0 0
      %2047 = vmatprep.subr.bf16.mxu0 0
      %2048 = vmatpush2.bf16.xpose.msra.mxu0 0
      %2049 = vmatprep.subr.bf16.mxu0 0
      %2050 = vmatpush2.bf16.xpose.msra.mxu0 0
      %2051 = vmatprep.subr.bf16.mxu0 0
      %2052 = vmatpush2.bf16.xpose.msra.mxu0 0
      %2053 = vmatprep.subr.bf16.mxu0 0
      %2054 = vmatpush2.bf16.xpose.msra.mxu0 0
      %2055 = vmatprep.subr.bf16.mxu0 0
      %2056 = vmatpush2.bf16.xpose.msra.mxu0 0
      %2057 = vmatprep.mubr.bf16.mxu0 0
      %2058 = vmatmul.mubr.bf16.gmra.mxu0 %v2020
      %v2059 = vpop.f32.mrf.mxu0
      %v2060 = vadd.f32 0.0, %v2059
      %v2061 = vpop.f32.mrf.mxu0
      %v2062 = vpop.f32.mrf.mxu0
      %v2063 = vadd.f32 0.0, %v2062
      %v2064 = vpop.f32.mrf.mxu0
      %2065 = vdwg.mxu0
      %v2067 = vsel %vm1407, %v1389, 0
      %v2070 = vsel %vm1407, %v1405, 0
      %2072 = vmatprep.subr.bf16.mxu0 0
      %2073 = vmatpush1.bf16.xpose.msra.mxu0 0
      %2074 = vmatprep.subr.bf16.mxu0 0
      %2075 = vmatpush1.bf16.xpose.msra.mxu0 0
      %2076 = vmatprep.subr.bf16.mxu0 0
      %2077 = vmatpush1.bf16.xpose.msra.mxu0 0
      %2078 = vmatprep.subr.bf16.mxu0 0
      %2079 = vmatpush1.bf16.xpose.msra.mxu0 0
      %2080 = vmatprep.subr.bf16.mxu0 0
      %2081 = vmatpush1.bf16.xpose.msra.mxu0 0
      %2082 = vmatprep.subr.bf16.mxu0 0
      %2083 = vmatpush1.bf16.xpose.msra.mxu0 0
      %2084 = vmatprep.subr.bf16.mxu0 0
      %2085 = vmatpush1.bf16.xpose.msra.mxu0 0
      %2086 = vmatprep.subr.bf16.mxu0 0
      %2087 = vmatpush1.bf16.xpose.msra.mxu0 %v2070
      %2088 = vmatprep.subr.bf16.mxu0 0
      %2089 = vmatpush2.bf16.xpose.msra.mxu0 0
      %2090 = vmatprep.subr.bf16.mxu0 0
      %2091 = vmatpush2.bf16.xpose.msra.mxu0 0
      %2092 = vmatprep.subr.bf16.mxu0 0
      %2093 = vmatpush2.bf16.xpose.msra.mxu0 0
      %2094 = vmatprep.subr.bf16.mxu0 0
      %2095 = vmatpush2.bf16.xpose.msra.mxu0 0
      %2096 = vmatprep.subr.bf16.mxu0 0
      %2097 = vmatpush2.bf16.xpose.msra.mxu0 0
      %2098 = vmatprep.subr.bf16.mxu0 0
      %2099 = vmatpush2.bf16.xpose.msra.mxu0 0
      %2100 = vmatprep.subr.bf16.mxu0 0
      %2101 = vmatpush2.bf16.xpose.msra.mxu0 0
      %2102 = vmatprep.subr.bf16.mxu0 0
      %2103 = vmatpush2.bf16.xpose.msra.mxu0 0
      %2104 = vmatprep.mubr.bf16.mxu0 0
      %2105 = vmatmul.mubr.bf16.gmra.mxu0 %v2067
      %v2106 = vpop.f32.mrf.mxu0
      %v2107 = vadd.f32 0.0, %v2106
      %v2108 = vpop.f32.mrf.mxu0
      %v2109 = vpop.f32.mrf.mxu0
      %v2110 = vadd.f32 0.0, %v2109
      %v2111 = vpop.f32.mrf.mxu0
      %2112 = vdwg.mxu0
      %v2114 = vsel %vm1407, %v1390, 0
      %v2117 = vsel %vm1407, %v1406, 0
      %2119 = vmatprep.subr.bf16.mxu0 0
      %2120 = vmatpush1.bf16.xpose.msra.mxu0 0
      %2121 = vmatprep.subr.bf16.mxu0 0
      %2122 = vmatpush1.bf16.xpose.msra.mxu0 0
      %2123 = vmatprep.subr.bf16.mxu0 0
      %2124 = vmatpush1.bf16.xpose.msra.mxu0 0
      %2125 = vmatprep.subr.bf16.mxu0 0
      %2126 = vmatpush1.bf16.xpose.msra.mxu0 0
      %2127 = vmatprep.subr.bf16.mxu0 0
      %2128 = vmatpush1.bf16.xpose.msra.mxu0 0
      %2129 = vmatprep.subr.bf16.mxu0 0
      %2130 = vmatpush1.bf16.xpose.msra.mxu0 0
      %2131 = vmatprep.subr.bf16.mxu0 0
      %2132 = vmatpush1.bf16.xpose.msra.mxu0 0
      %2133 = vmatprep.subr.bf16.mxu0 0
      %2134 = vmatpush1.bf16.xpose.msra.mxu0 %v2117
      %2135 = vmatprep.subr.bf16.mxu0 0
      %2136 = vmatpush2.bf16.xpose.msra.mxu0 0
      %2137 = vmatprep.subr.bf16.mxu0 0
      %2138 = vmatpush2.bf16.xpose.msra.mxu0 0
      %2139 = vmatprep.subr.bf16.mxu0 0
      %2140 = vmatpush2.bf16.xpose.msra.mxu0 0
      %2141 = vmatprep.subr.bf16.mxu0 0
      %2142 = vmatpush2.bf16.xpose.msra.mxu0 0
      %2143 = vmatprep.subr.bf16.mxu0 0
      %2144 = vmatpush2.bf16.xpose.msra.mxu0 0
      %2145 = vmatprep.subr.bf16.mxu0 0
      %2146 = vmatpush2.bf16.xpose.msra.mxu0 0
      %2147 = vmatprep.subr.bf16.mxu0 0
      %2148 = vmatpush2.bf16.xpose.msra.mxu0 0
      %2149 = vmatprep.subr.bf16.mxu0 0
      %2150 = vmatpush2.bf16.xpose.msra.mxu0 0
      %2151 = vmatprep.mubr.bf16.mxu0 0
      %2152 = vmatmul.mubr.bf16.gmra.mxu0 %v2114
      %v2153 = vpop.f32.mrf.mxu0
      %v2154 = vadd.f32 0.0, %v2153
      %v2155 = vpop.f32.mrf.mxu0
      %v2156 = vpop.f32.mrf.mxu0
      %v2157 = vadd.f32 0.0, %v2156
      %v2158 = vpop.f32.mrf.mxu0
      %2159 = vdwg.mxu0
      %v2160 = vmul.f32 %v1449, 0.17677669
      %v2161 = vmul.f32 %v1452, 0.17677669
      %v2162 = vmul.f32 %v1496, 0.17677669
      %v2163 = vmul.f32 %v1499, 0.17677669
      %v2164 = vmul.f32 %v1543, 0.17677669
      %v2165 = vmul.f32 %v1546, 0.17677669
      %v2166 = vmul.f32 %v1590, 0.17677669
      %v2167 = vmul.f32 %v1593, 0.17677669
      %v2168 = vmul.f32 %v1637, 0.17677669
      %v2169 = vmul.f32 %v1640, 0.17677669
      %v2170 = vmul.f32 %v1684, 0.17677669
      %v2171 = vmul.f32 %v1687, 0.17677669
      %v2172 = vmul.f32 %v1731, 0.17677669
      %v2173 = vmul.f32 %v1734, 0.17677669
      %v2174 = vmul.f32 %v1778, 0.17677669
      %v2175 = vmul.f32 %v1781, 0.17677669
      %v2176 = vmul.f32 %v1825, 0.17677669
      %v2177 = vmul.f32 %v1828, 0.17677669
      %v2178 = vmul.f32 %v1872, 0.17677669
      %v2179 = vmul.f32 %v1875, 0.17677669
      %v2180 = vmul.f32 %v1919, 0.17677669
      %v2181 = vmul.f32 %v1922, 0.17677669
      %v2182 = vmul.f32 %v1966, 0.17677669
      %v2183 = vmul.f32 %v1969, 0.17677669
      %v2184 = vmul.f32 %v2013, 0.17677669
      %v2185 = vmul.f32 %v2016, 0.17677669
      %v2186 = vmul.f32 %v2060, 0.17677669
      %v2187 = vmul.f32 %v2063, 0.17677669
      %v2188 = vmul.f32 %v2107, 0.17677669
      %v2189 = vmul.f32 %v2110, 0.17677669
      %v2190 = vmul.f32 %v2154, 0.17677669
      %v2191 = vmul.f32 %v2157, 0.17677669
      %v2192 = vadd.f32 %v2160, %v1133
      %v2193 = vadd.f32 %v2161, %v1134
      %v2194 = vadd.f32 %v2162, %v1133
      %v2195 = vadd.f32 %v2163, %v1134
      %v2196 = vadd.f32 %v2164, %v1133
      %v2197 = vadd.f32 %v2165, %v1134
      %v2198 = vadd.f32 %v2166, %v1133
      %v2199 = vadd.f32 %v2167, %v1134
      %v2200 = vadd.f32 %v2168, %v1133
      %v2201 = vadd.f32 %v2169, %v1134
      %v2202 = vadd.f32 %v2170, %v1133
      %v2203 = vadd.f32 %v2171, %v1134
      %v2204 = vadd.f32 %v2172, %v1133
      %v2205 = vadd.f32 %v2173, %v1134
      %v2206 = vadd.f32 %v2174, %v1133
      %v2207 = vadd.f32 %v2175, %v1134
      %v2208 = vadd.f32 %v2176, %v1133
      %v2209 = vadd.f32 %v2177, %v1134
      %v2210 = vadd.f32 %v2178, %v1133
      %v2211 = vadd.f32 %v2179, %v1134
      %v2212 = vadd.f32 %v2180, %v1133
      %v2213 = vadd.f32 %v2181, %v1134
      %v2214 = vadd.f32 %v2182, %v1133
      %v2215 = vadd.f32 %v2183, %v1134
      %v2216 = vadd.f32 %v2184, %v1133
      %v2217 = vadd.f32 %v2185, %v1134
      %v2218 = vadd.f32 %v2186, %v1133
      %v2219 = vadd.f32 %v2187, %v1134
      %v2220 = vadd.f32 %v2188, %v1133
      %v2221 = vadd.f32 %v2189, %v1134
      %v2222 = vadd.f32 %v2190, %v1133
      %v2223 = vadd.f32 %v2191, %v1134
      %vm2224 = vcmask 130048
      %v2225 = vsel %vm2224, %v2192, -inf
      %2226 = vmax.xlane.f32.xlu0 %v2225
      %v2227 = vpop.xlane.xlu0 %2226
      %v2228 = vsel %vm2224, %v2193, -inf
      %2229 = vmax.xlane.f32.xlu0 %v2228
      %v2230 = vpop.xlane.xlu0 %2229
      %v2231 = vsel %vm2224, %v2194, -inf
      %2232 = vmax.xlane.f32.xlu0 %v2231
      %v2233 = vpop.xlane.xlu0 %2232
      %v2234 = vsel %vm2224, %v2195, -inf
      %2235 = vmax.xlane.f32.xlu0 %v2234
      %v2236 = vpop.xlane.xlu0 %2235
      %v2237 = vsel %vm2224, %v2196, -inf
      %2238 = vmax.xlane.f32.xlu0 %v2237
      %v2239 = vpop.xlane.xlu0 %2238
      %v2240 = vsel %vm2224, %v2197, -inf
      %2241 = vmax.xlane.f32.xlu0 %v2240
      %v2242 = vpop.xlane.xlu0 %2241
      %v2243 = vsel %vm2224, %v2198, -inf
      %2244 = vmax.xlane.f32.xlu0 %v2243
      %v2245 = vpop.xlane.xlu0 %2244
      %v2246 = vsel %vm2224, %v2199, -inf
      %2247 = vmax.xlane.f32.xlu0 %v2246
      %v2248 = vpop.xlane.xlu0 %2247
      %v2249 = vsel %vm2224, %v2200, -inf
      %2250 = vmax.xlane.f32.xlu0 %v2249
      %v2251 = vpop.xlane.xlu0 %2250
      %v2252 = vsel %vm2224, %v2201, -inf
      %2253 = vmax.xlane.f32.xlu0 %v2252
      %v2254 = vpop.xlane.xlu0 %2253
      %v2255 = vsel %vm2224, %v2202, -inf
      %2256 = vmax.xlane.f32.xlu0 %v2255
      %v2257 = vpop.xlane.xlu0 %2256
      %v2258 = vsel %vm2224, %v2203, -inf
      %2259 = vmax.xlane.f32.xlu0 %v2258
      %v2260 = vpop.xlane.xlu0 %2259
      %v2261 = vsel %vm2224, %v2204, -inf
      %2262 = vmax.xlane.f32.xlu0 %v2261
      %v2263 = vpop.xlane.xlu0 %2262
      %v2264 = vsel %vm2224, %v2205, -inf
      %2265 = vmax.xlane.f32.xlu0 %v2264
      %v2266 = vpop.xlane.xlu0 %2265
      %v2267 = vsel %vm2224, %v2206, -inf
      %2268 = vmax.xlane.f32.xlu0 %v2267
      %v2269 = vpop.xlane.xlu0 %2268
      %v2270 = vsel %vm2224, %v2207, -inf
      %2271 = vmax.xlane.f32.xlu0 %v2270
      %v2272 = vpop.xlane.xlu0 %2271
      %v2273 = vsel %vm2224, %v2208, -inf
      %2274 = vmax.xlane.f32.xlu0 %v2273
      %v2275 = vpop.xlane.xlu0 %2274
      %v2276 = vsel %vm2224, %v2209, -inf
      %2277 = vmax.xlane.f32.xlu0 %v2276
      %v2278 = vpop.xlane.xlu0 %2277
      %v2279 = vsel %vm2224, %v2210, -inf
      %2280 = vmax.xlane.f32.xlu0 %v2279
      %v2281 = vpop.xlane.xlu0 %2280
      %v2282 = vsel %vm2224, %v2211, -inf
      %2283 = vmax.xlane.f32.xlu0 %v2282
      %v2284 = vpop.xlane.xlu0 %2283
      %v2285 = vsel %vm2224, %v2212, -inf
      %2286 = vmax.xlane.f32.xlu0 %v2285
      %v2287 = vpop.xlane.xlu0 %2286
      %v2288 = vsel %vm2224, %v2213, -inf
      %2289 = vmax.xlane.f32.xlu0 %v2288
      %v2290 = vpop.xlane.xlu0 %2289
      %v2291 = vsel %vm2224, %v2214, -inf
      %2292 = vmax.xlane.f32.xlu0 %v2291
      %v2293 = vpop.xlane.xlu0 %2292
      %v2294 = vsel %vm2224, %v2215, -inf
      %2295 = vmax.xlane.f32.xlu0 %v2294
      %v2296 = vpop.xlane.xlu0 %2295
      %v2297 = vsel %vm2224, %v2216, -inf
      %2298 = vmax.xlane.f32.xlu0 %v2297
      %v2299 = vpop.xlane.xlu0 %2298
      %v2300 = vsel %vm2224, %v2217, -inf
      %2301 = vmax.xlane.f32.xlu0 %v2300
      %v2302 = vpop.xlane.xlu0 %2301
      %v2303 = vsel %vm2224, %v2218, -inf
      %2304 = vmax.xlane.f32.xlu0 %v2303
      %v2305 = vpop.xlane.xlu0 %2304
      %v2306 = vsel %vm2224, %v2219, -inf
      %2307 = vmax.xlane.f32.xlu0 %v2306
      %v2308 = vpop.xlane.xlu0 %2307
      %v2309 = vsel %vm2224, %v2220, -inf
      %2310 = vmax.xlane.f32.xlu0 %v2309
      %v2311 = vpop.xlane.xlu0 %2310
      %v2312 = vsel %vm2224, %v2221, -inf
      %2313 = vmax.xlane.f32.xlu0 %v2312
      %v2314 = vpop.xlane.xlu0 %2313
      %v2315 = vsel %vm2224, %v2222, -inf
      %2316 = vmax.xlane.f32.xlu0 %v2315
      %v2317 = vpop.xlane.xlu0 %2316
      %v2318 = vsel %vm2224, %v2223, -inf
      %2319 = vmax.xlane.f32.xlu0 %v2318
      %v2320 = vpop.xlane.xlu0 %2319
      %v2321 = vsub.f32 %v2192, %v2227
      %v2322 = vsub.f32 %v2193, %v2230
      %v2323 = vsub.f32 %v2194, %v2233
      %v2324 = vsub.f32 %v2195, %v2236
      %v2325 = vsub.f32 %v2196, %v2239
      %v2326 = vsub.f32 %v2197, %v2242
      %v2327 = vsub.f32 %v2198, %v2245
      %v2328 = vsub.f32 %v2199, %v2248
      %v2329 = vsub.f32 %v2200, %v2251
      %v2330 = vsub.f32 %v2201, %v2254
      %v2331 = vsub.f32 %v2202, %v2257
      %v2332 = vsub.f32 %v2203, %v2260
      %v2333 = vsub.f32 %v2204, %v2263
      %v2334 = vsub.f32 %v2205, %v2266
      %v2335 = vsub.f32 %v2206, %v2269
      %v2336 = vsub.f32 %v2207, %v2272
      %v2337 = vsub.f32 %v2208, %v2275
      %v2338 = vsub.f32 %v2209, %v2278
      %v2339 = vsub.f32 %v2210, %v2281
      %v2340 = vsub.f32 %v2211, %v2284
      %v2341 = vsub.f32 %v2212, %v2287
      %v2342 = vsub.f32 %v2213, %v2290
      %v2343 = vsub.f32 %v2214, %v2293
      %v2344 = vsub.f32 %v2215, %v2296
      %v2345 = vsub.f32 %v2216, %v2299
      %v2346 = vsub.f32 %v2217, %v2302
      %v2347 = vsub.f32 %v2218, %v2305
      %v2348 = vsub.f32 %v2219, %v2308
      %v2349 = vsub.f32 %v2220, %v2311
      %v2350 = vsub.f32 %v2221, %v2314
      %v2351 = vsub.f32 %v2222, %v2317
      %v2352 = vsub.f32 %v2223, %v2320
      %v2353 = vmul.f32 %v2321, 1.442695
      %v2354 = vpow.pop %v2353
      %v2355 = vmul.f32 %v2322, 1.442695
      %v2356 = vpow.pop %v2355
      %v2357 = vmul.f32 %v2323, 1.442695
      %v2358 = vpow.pop %v2357
      %v2359 = vmul.f32 %v2324, 1.442695
      %v2360 = vpow.pop %v2359
      %v2361 = vmul.f32 %v2325, 1.442695
      %v2362 = vpow.pop %v2361
      %v2363 = vmul.f32 %v2326, 1.442695
      %v2364 = vpow.pop %v2363
      %v2365 = vmul.f32 %v2327, 1.442695
      %v2366 = vpow.pop %v2365
      %v2367 = vmul.f32 %v2328, 1.442695
      %v2368 = vpow.pop %v2367
      %v2369 = vmul.f32 %v2329, 1.442695
      %v2370 = vpow.pop %v2369
      %v2371 = vmul.f32 %v2330, 1.442695
      %v2372 = vpow.pop %v2371
      %v2373 = vmul.f32 %v2331, 1.442695
      %v2374 = vpow.pop %v2373
      %v2375 = vmul.f32 %v2332, 1.442695
      %v2376 = vpow.pop %v2375
      %v2377 = vmul.f32 %v2333, 1.442695
      %v2378 = vpow.pop %v2377
      %v2379 = vmul.f32 %v2334, 1.442695
      %v2380 = vpow.pop %v2379
      %v2381 = vmul.f32 %v2335, 1.442695
      %v2382 = vpow.pop %v2381
      %v2383 = vmul.f32 %v2336, 1.442695
      %v2384 = vpow.pop %v2383
      %v2385 = vmul.f32 %v2337, 1.442695
      %v2386 = vpow.pop %v2385
      %v2387 = vmul.f32 %v2338, 1.442695
      %v2388 = vpow.pop %v2387
      %v2389 = vmul.f32 %v2339, 1.442695
      %v2390 = vpow.pop %v2389
      %v2391 = vmul.f32 %v2340, 1.442695
      %v2392 = vpow.pop %v2391
      %v2393 = vmul.f32 %v2341, 1.442695
      %v2394 = vpow.pop %v2393
      %v2395 = vmul.f32 %v2342, 1.442695
      %v2396 = vpow.pop %v2395
      %v2397 = vmul.f32 %v2343, 1.442695
      %v2398 = vpow.pop %v2397
      %v2399 = vmul.f32 %v2344, 1.442695
      %v2400 = vpow.pop %v2399
      %v2401 = vmul.f32 %v2345, 1.442695
      %v2402 = vpow.pop %v2401
      %v2403 = vmul.f32 %v2346, 1.442695
      %v2404 = vpow.pop %v2403
      %v2405 = vmul.f32 %v2347, 1.442695
      %v2406 = vpow.pop %v2405
      %v2407 = vmul.f32 %v2348, 1.442695
      %v2408 = vpow.pop %v2407
      %v2409 = vmul.f32 %v2349, 1.442695
      %v2410 = vpow.pop %v2409
      %v2411 = vmul.f32 %v2350, 1.442695
      %v2412 = vpow.pop %v2411
      %v2413 = vmul.f32 %v2351, 1.442695
      %v2414 = vpow.pop %v2413
      %v2415 = vmul.f32 %v2352, 1.442695
      %v2416 = vpow.pop %v2415
      %v2417 = vsel %vm2224, %v2354, 0.0
      %2418 = vadd.xlane.f32.xlu0 %v2417
      %v2419 = vpop.xlane.xlu0 %2418
      %v2420 = vsel %vm2224, %v2356, 0.0
      %2421 = vadd.xlane.f32.xlu0 %v2420
      %v2422 = vpop.xlane.xlu0 %2421
      %v2423 = vsel %vm2224, %v2358, 0.0
      %2424 = vadd.xlane.f32.xlu0 %v2423
      %v2425 = vpop.xlane.xlu0 %2424
      %v2426 = vsel %vm2224, %v2360, 0.0
      %2427 = vadd.xlane.f32.xlu0 %v2426
      %v2428 = vpop.xlane.xlu0 %2427
      %v2429 = vsel %vm2224, %v2362, 0.0
      %2430 = vadd.xlane.f32.xlu0 %v2429
      %v2431 = vpop.xlane.xlu0 %2430
      %v2432 = vsel %vm2224, %v2364, 0.0
      %2433 = vadd.xlane.f32.xlu0 %v2432
      %v2434 = vpop.xlane.xlu0 %2433
      %v2435 = vsel %vm2224, %v2366, 0.0
      %2436 = vadd.xlane.f32.xlu0 %v2435
      %v2437 = vpop.xlane.xlu0 %2436
      %v2438 = vsel %vm2224, %v2368, 0.0
      %2439 = vadd.xlane.f32.xlu0 %v2438
      %v2440 = vpop.xlane.xlu0 %2439
      %v2441 = vsel %vm2224, %v2370, 0.0
      %2442 = vadd.xlane.f32.xlu0 %v2441
      %v2443 = vpop.xlane.xlu0 %2442
      %v2444 = vsel %vm2224, %v2372, 0.0
      %2445 = vadd.xlane.f32.xlu0 %v2444
      %v2446 = vpop.xlane.xlu0 %2445
      %v2447 = vsel %vm2224, %v2374, 0.0
      %2448 = vadd.xlane.f32.xlu0 %v2447
      %v2449 = vpop.xlane.xlu0 %2448
      %v2450 = vsel %vm2224, %v2376, 0.0
      %2451 = vadd.xlane.f32.xlu0 %v2450
      %v2452 = vpop.xlane.xlu0 %2451
      %v2453 = vsel %vm2224, %v2378, 0.0
      %2454 = vadd.xlane.f32.xlu0 %v2453
      %v2455 = vpop.xlane.xlu0 %2454
      %v2456 = vsel %vm2224, %v2380, 0.0
      %2457 = vadd.xlane.f32.xlu0 %v2456
      %v2458 = vpop.xlane.xlu0 %2457
      %v2459 = vsel %vm2224, %v2382, 0.0
      %2460 = vadd.xlane.f32.xlu0 %v2459
      %v2461 = vpop.xlane.xlu0 %2460
      %v2462 = vsel %vm2224, %v2384, 0.0
      %2463 = vadd.xlane.f32.xlu0 %v2462
      %v2464 = vpop.xlane.xlu0 %2463
      %v2465 = vsel %vm2224, %v2386, 0.0
      %2466 = vadd.xlane.f32.xlu0 %v2465
      %v2467 = vpop.xlane.xlu0 %2466
      %v2468 = vsel %vm2224, %v2388, 0.0
      %2469 = vadd.xlane.f32.xlu0 %v2468
      %v2470 = vpop.xlane.xlu0 %2469
      %v2471 = vsel %vm2224, %v2390, 0.0
      %2472 = vadd.xlane.f32.xlu0 %v2471
      %v2473 = vpop.xlane.xlu0 %2472
      %v2474 = vsel %vm2224, %v2392, 0.0
      %2475 = vadd.xlane.f32.xlu0 %v2474
      %v2476 = vpop.xlane.xlu0 %2475
      %v2477 = vsel %vm2224, %v2394, 0.0
      %2478 = vadd.xlane.f32.xlu0 %v2477
      %v2479 = vpop.xlane.xlu0 %2478
      %v2480 = vsel %vm2224, %v2396, 0.0
      %2481 = vadd.xlane.f32.xlu0 %v2480
      %v2482 = vpop.xlane.xlu0 %2481
      %v2483 = vsel %vm2224, %v2398, 0.0
      %2484 = vadd.xlane.f32.xlu0 %v2483
      %v2485 = vpop.xlane.xlu0 %2484
      %v2486 = vsel %vm2224, %v2400, 0.0
      %2487 = vadd.xlane.f32.xlu0 %v2486
      %v2488 = vpop.xlane.xlu0 %2487
      %v2489 = vsel %vm2224, %v2402, 0.0
      %2490 = vadd.xlane.f32.xlu0 %v2489
      %v2491 = vpop.xlane.xlu0 %2490
      %v2492 = vsel %vm2224, %v2404, 0.0
      %2493 = vadd.xlane.f32.xlu0 %v2492
      %v2494 = vpop.xlane.xlu0 %2493
      %v2495 = vsel %vm2224, %v2406, 0.0
      %2496 = vadd.xlane.f32.xlu0 %v2495
      %v2497 = vpop.xlane.xlu0 %2496
      %v2498 = vsel %vm2224, %v2408, 0.0
      %2499 = vadd.xlane.f32.xlu0 %v2498
      %v2500 = vpop.xlane.xlu0 %2499
      %v2501 = vsel %vm2224, %v2410, 0.0
      %2502 = vadd.xlane.f32.xlu0 %v2501
      %v2503 = vpop.xlane.xlu0 %2502
      %v2504 = vsel %vm2224, %v2412, 0.0
      %2505 = vadd.xlane.f32.xlu0 %v2504
      %v2506 = vpop.xlane.xlu0 %2505
      %v2507 = vsel %vm2224, %v2414, 0.0
      %2508 = vadd.xlane.f32.xlu0 %v2507
      %v2509 = vpop.xlane.xlu0 %2508
      %v2510 = vsel %vm2224, %v2416, 0.0
      %2511 = vadd.xlane.f32.xlu0 %v2510
      %v2512 = vpop.xlane.xlu0 %2511
      %v2513 = vrcp.pop %v2419
      %v2514 = vrcp.pop %v2422
      %v2515 = vrcp.pop %v2425
      %v2516 = vrcp.pop %v2428
      %v2517 = vrcp.pop %v2431
      %v2518 = vrcp.pop %v2434
      %v2519 = vrcp.pop %v2437
      %v2520 = vrcp.pop %v2440
      %v2521 = vrcp.pop %v2443
      %v2522 = vrcp.pop %v2446
      %v2523 = vrcp.pop %v2449
      %v2524 = vrcp.pop %v2452
      %v2525 = vrcp.pop %v2455
      %v2526 = vrcp.pop %v2458
      %v2527 = vrcp.pop %v2461
      %v2528 = vrcp.pop %v2464
      %v2529 = vrcp.pop %v2467
      %v2530 = vrcp.pop %v2470
      %v2531 = vrcp.pop %v2473
      %v2532 = vrcp.pop %v2476
      %v2533 = vrcp.pop %v2479
      %v2534 = vrcp.pop %v2482
      %v2535 = vrcp.pop %v2485
      %v2536 = vrcp.pop %v2488
      %v2537 = vrcp.pop %v2491
      %v2538 = vrcp.pop %v2494
      %v2539 = vrcp.pop %v2497
      %v2540 = vrcp.pop %v2500
      %v2541 = vrcp.pop %v2503
      %v2542 = vrcp.pop %v2506
      %v2543 = vrcp.pop %v2509
      %v2544 = vrcp.pop %v2512
      %v2545 = vmul.f32 %v2354, %v2513
      %v2546 = vmul.f32 %v2356, %v2514
      %v2547 = vmul.f32 %v2358, %v2515
      %v2548 = vmul.f32 %v2360, %v2516
      %v2549 = vmul.f32 %v2362, %v2517
      %v2550 = vmul.f32 %v2364, %v2518
      %v2551 = vmul.f32 %v2366, %v2519
      %v2552 = vmul.f32 %v2368, %v2520
      %v2553 = vmul.f32 %v2370, %v2521
      %v2554 = vmul.f32 %v2372, %v2522
      %v2555 = vmul.f32 %v2374, %v2523
      %v2556 = vmul.f32 %v2376, %v2524
      %v2557 = vmul.f32 %v2378, %v2525
      %v2558 = vmul.f32 %v2380, %v2526
      %v2559 = vmul.f32 %v2382, %v2527
      %v2560 = vmul.f32 %v2384, %v2528
      %v2561 = vmul.f32 %v2386, %v2529
      %v2562 = vmul.f32 %v2388, %v2530
      %v2563 = vmul.f32 %v2390, %v2531
      %v2564 = vmul.f32 %v2392, %v2532
      %v2565 = vmul.f32 %v2394, %v2533
      %v2566 = vmul.f32 %v2396, %v2534
      %v2567 = vmul.f32 %v2398, %v2535
      %v2568 = vmul.f32 %v2400, %v2536
      %v2569 = vmul.f32 %v2402, %v2537
      %v2570 = vmul.f32 %v2404, %v2538
      %v2571 = vmul.f32 %v2406, %v2539
      %v2572 = vmul.f32 %v2408, %v2540
      %v2573 = vmul.f32 %v2410, %v2541
      %v2574 = vmul.f32 %v2412, %v2542
      %v2575 = vmul.f32 %v2414, %v2543
      %v2576 = vmul.f32 %v2416, %v2544
      %v2577 = vpack.c.bf16 %v2546, %v2545
      %v2578 = vpack.c.bf16 %v2548, %v2547
      %v2579 = vpack.c.bf16 %v2550, %v2549
      %v2580 = vpack.c.bf16 %v2552, %v2551
      %v2581 = vpack.c.bf16 %v2554, %v2553
      %v2582 = vpack.c.bf16 %v2556, %v2555
      %v2583 = vpack.c.bf16 %v2558, %v2557
      %v2584 = vpack.c.bf16 %v2560, %v2559
      %v2585 = vpack.c.bf16 %v2562, %v2561
      %v2586 = vpack.c.bf16 %v2564, %v2563
      %v2587 = vpack.c.bf16 %v2566, %v2565
      %v2588 = vpack.c.bf16 %v2568, %v2567
      %v2589 = vpack.c.bf16 %v2570, %v2569
      %v2590 = vpack.c.bf16 %v2572, %v2571
      %v2591 = vpack.c.bf16 %v2574, %v2573
      %v2592 = vpack.c.bf16 %v2576, %v2575
      %v2593 = vpack.c.bf16 %v1099, %v1096
      %v2594 = vpack.c.bf16 %v1107, %v1104
      %v2595 = vpack.c.bf16 %v1115, %v1112
      %v2596 = vpack.c.bf16 %v1123, %v1120
      %v2597 = vpack.c.bf16 %v1306, %v1304
      %v2598 = vpack.c.bf16 %v1310, %v1308
      %v2599 = vpack.c.bf16 %v1314, %v1312
      %v2600 = vpack.c.bf16 %v1318, %v1316
      %v2601 = vpack.c.bf16 %v1330, %v1328
      %v2602 = vpack.c.bf16 %v1334, %v1332
      %v2603 = vpack.c.bf16 %v1338, %v1336
      %v2604 = vpack.c.bf16 %v1342, %v1340
      %v2605 = vpack.c.bf16 %v1354, %v1352
      %v2606 = vpack.c.bf16 %v1358, %v1356
      %v2607 = vpack.c.bf16 %v1362, %v1360
      %v2608 = vpack.c.bf16 %v1366, %v1364
      %v2610 = vsel %vm2224, %v2577, 0
      %2612 = vmatprep.subr.bf16.mxu0 0
      %2613 = vmatpush1.bf16.msra.mxu0 0
      %2614 = vmatprep.subr.bf16.mxu0 0
      %2615 = vmatpush1.bf16.msra.mxu0 0
      %2616 = vmatprep.subr.bf16.mxu0 0
      %2617 = vmatpush1.bf16.msra.mxu0 0
      %2618 = vmatprep.subr.bf16.mxu0 0
      %2619 = vmatpush1.bf16.msra.mxu0 0
      %2620 = vmatprep.subr.bf16.mxu0 0
      %2621 = vmatpush1.bf16.msra.mxu0 0
      %2622 = vmatprep.subr.bf16.mxu0 0
      %2623 = vmatpush1.bf16.msra.mxu0 0
      %2624 = vmatprep.subr.bf16.mxu0 0
      %2625 = vmatpush1.bf16.msra.mxu0 0
      %2626 = vmatprep.subr.bf16.mxu0 0
      %2627 = vmatpush1.bf16.msra.mxu0 %v2593
      %2628 = vmatprep.subr.bf16.mxu0 0
      %2629 = vmatpush2.bf16.msra.mxu0 0
      %2630 = vmatprep.subr.bf16.mxu0 0
      %2631 = vmatpush2.bf16.msra.mxu0 0
      %2632 = vmatprep.subr.bf16.mxu0 0
      %2633 = vmatpush2.bf16.msra.mxu0 0
      %2634 = vmatprep.subr.bf16.mxu0 0
      %2635 = vmatpush2.bf16.msra.mxu0 0
      %2636 = vmatprep.subr.bf16.mxu0 0
      %2637 = vmatpush2.bf16.msra.mxu0 0
      %2638 = vmatprep.subr.bf16.mxu0 0
      %2639 = vmatpush2.bf16.msra.mxu0 0
      %2640 = vmatprep.subr.bf16.mxu0 0
      %2641 = vmatpush2.bf16.msra.mxu0 0
      %2642 = vmatprep.subr.bf16.mxu0 0
      %2643 = vmatpush2.bf16.msra.mxu0 0
      %2644 = vmatprep.mubr.bf16.mxu0 0
      %2645 = vmatmul.mubr.bf16.gmra.mxu0 %v2610
      %v2646 = vpop.f32.mrf.mxu0
      %v2647 = vadd.f32 0.0, %v2646
      %v2648 = vpop.f32.mrf.mxu0
      %v2649 = vpop.f32.mrf.mxu0
      %v2650 = vadd.f32 0.0, %v2649
      %v2651 = vpop.f32.mrf.mxu0
      %2652 = vdwg.mxu0
      %v2654 = vsel %vm2224, %v2578, 0
      %2656 = vmatprep.subr.bf16.mxu0 0
      %2657 = vmatpush1.bf16.msra.mxu0 0
      %2658 = vmatprep.subr.bf16.mxu0 0
      %2659 = vmatpush1.bf16.msra.mxu0 0
      %2660 = vmatprep.subr.bf16.mxu0 0
      %2661 = vmatpush1.bf16.msra.mxu0 0
      %2662 = vmatprep.subr.bf16.mxu0 0
      %2663 = vmatpush1.bf16.msra.mxu0 0
      %2664 = vmatprep.subr.bf16.mxu0 0
      %2665 = vmatpush1.bf16.msra.mxu0 0
      %2666 = vmatprep.subr.bf16.mxu0 0
      %2667 = vmatpush1.bf16.msra.mxu0 0
      %2668 = vmatprep.subr.bf16.mxu0 0
      %2669 = vmatpush1.bf16.msra.mxu0 0
      %2670 = vmatprep.subr.bf16.mxu0 0
      %2671 = vmatpush1.bf16.msra.mxu0 %v2594
      %2672 = vmatprep.subr.bf16.mxu0 0
      %2673 = vmatpush2.bf16.msra.mxu0 0
      %2674 = vmatprep.subr.bf16.mxu0 0
      %2675 = vmatpush2.bf16.msra.mxu0 0
      %2676 = vmatprep.subr.bf16.mxu0 0
      %2677 = vmatpush2.bf16.msra.mxu0 0
      %2678 = vmatprep.subr.bf16.mxu0 0
      %2679 = vmatpush2.bf16.msra.mxu0 0
      %2680 = vmatprep.subr.bf16.mxu0 0
      %2681 = vmatpush2.bf16.msra.mxu0 0
      %2682 = vmatprep.subr.bf16.mxu0 0
      %2683 = vmatpush2.bf16.msra.mxu0 0
      %2684 = vmatprep.subr.bf16.mxu0 0
      %2685 = vmatpush2.bf16.msra.mxu0 0
      %2686 = vmatprep.subr.bf16.mxu0 0
      %2687 = vmatpush2.bf16.msra.mxu0 0
      %2688 = vmatprep.mubr.bf16.mxu0 0
      %2689 = vmatmul.mubr.bf16.gmra.mxu0 %v2654
      %v2690 = vpop.f32.mrf.mxu0
      %v2691 = vadd.f32 0.0, %v2690
      %v2692 = vpop.f32.mrf.mxu0
      %v2693 = vpop.f32.mrf.mxu0
      %v2694 = vadd.f32 0.0, %v2693
      %v2695 = vpop.f32.mrf.mxu0
      %2696 = vdwg.mxu0
      %v2698 = vsel %vm2224, %v2579, 0
      %2700 = vmatprep.subr.bf16.mxu0 0
      %2701 = vmatpush1.bf16.msra.mxu0 0
      %2702 = vmatprep.subr.bf16.mxu0 0
      %2703 = vmatpush1.bf16.msra.mxu0 0
      %2704 = vmatprep.subr.bf16.mxu0 0
      %2705 = vmatpush1.bf16.msra.mxu0 0
      %2706 = vmatprep.subr.bf16.mxu0 0
      %2707 = vmatpush1.bf16.msra.mxu0 0
      %2708 = vmatprep.subr.bf16.mxu0 0
      %2709 = vmatpush1.bf16.msra.mxu0 0
      %2710 = vmatprep.subr.bf16.mxu0 0
      %2711 = vmatpush1.bf16.msra.mxu0 0
      %2712 = vmatprep.subr.bf16.mxu0 0
      %2713 = vmatpush1.bf16.msra.mxu0 0
      %2714 = vmatprep.subr.bf16.mxu0 0
      %2715 = vmatpush1.bf16.msra.mxu0 %v2595
      %2716 = vmatprep.subr.bf16.mxu0 0
      %2717 = vmatpush2.bf16.msra.mxu0 0
      %2718 = vmatprep.subr.bf16.mxu0 0
      %2719 = vmatpush2.bf16.msra.mxu0 0
      %2720 = vmatprep.subr.bf16.mxu0 0
      %2721 = vmatpush2.bf16.msra.mxu0 0
      %2722 = vmatprep.subr.bf16.mxu0 0
      %2723 = vmatpush2.bf16.msra.mxu0 0
      %2724 = vmatprep.subr.bf16.mxu0 0
      %2725 = vmatpush2.bf16.msra.mxu0 0
      %2726 = vmatprep.subr.bf16.mxu0 0
      %2727 = vmatpush2.bf16.msra.mxu0 0
      %2728 = vmatprep.subr.bf16.mxu0 0
      %2729 = vmatpush2.bf16.msra.mxu0 0
      %2730 = vmatprep.subr.bf16.mxu0 0
      %2731 = vmatpush2.bf16.msra.mxu0 0
      %2732 = vmatprep.mubr.bf16.mxu0 0
      %2733 = vmatmul.mubr.bf16.gmra.mxu0 %v2698
      %v2734 = vpop.f32.mrf.mxu0
      %v2735 = vadd.f32 0.0, %v2734
      %v2736 = vpop.f32.mrf.mxu0
      %v2737 = vpop.f32.mrf.mxu0
      %v2738 = vadd.f32 0.0, %v2737
      %v2739 = vpop.f32.mrf.mxu0
      %2740 = vdwg.mxu0
      %v2742 = vsel %vm2224, %v2580, 0
      %2744 = vmatprep.subr.bf16.mxu0 0
      %2745 = vmatpush1.bf16.msra.mxu0 0
      %2746 = vmatprep.subr.bf16.mxu0 0
      %2747 = vmatpush1.bf16.msra.mxu0 0
      %2748 = vmatprep.subr.bf16.mxu0 0
      %2749 = vmatpush1.bf16.msra.mxu0 0
      %2750 = vmatprep.subr.bf16.mxu0 0
      %2751 = vmatpush1.bf16.msra.mxu0 0
      %2752 = vmatprep.subr.bf16.mxu0 0
      %2753 = vmatpush1.bf16.msra.mxu0 0
      %2754 = vmatprep.subr.bf16.mxu0 0
      %2755 = vmatpush1.bf16.msra.mxu0 0
      %2756 = vmatprep.subr.bf16.mxu0 0
      %2757 = vmatpush1.bf16.msra.mxu0 0
      %2758 = vmatprep.subr.bf16.mxu0 0
      %2759 = vmatpush1.bf16.msra.mxu0 %v2596
      %2760 = vmatprep.subr.bf16.mxu0 0
      %2761 = vmatpush2.bf16.msra.mxu0 0
      %2762 = vmatprep.subr.bf16.mxu0 0
      %2763 = vmatpush2.bf16.msra.mxu0 0
      %2764 = vmatprep.subr.bf16.mxu0 0
      %2765 = vmatpush2.bf16.msra.mxu0 0
      %2766 = vmatprep.subr.bf16.mxu0 0
      %2767 = vmatpush2.bf16.msra.mxu0 0
      %2768 = vmatprep.subr.bf16.mxu0 0
      %2769 = vmatpush2.bf16.msra.mxu0 0
      %2770 = vmatprep.subr.bf16.mxu0 0
      %2771 = vmatpush2.bf16.msra.mxu0 0
      %2772 = vmatprep.subr.bf16.mxu0 0
      %2773 = vmatpush2.bf16.msra.mxu0 0
      %2774 = vmatprep.subr.bf16.mxu0 0
      %2775 = vmatpush2.bf16.msra.mxu0 0
      %2776 = vmatprep.mubr.bf16.mxu0 0
      %2777 = vmatmul.mubr.bf16.gmra.mxu0 %v2742
      %v2778 = vpop.f32.mrf.mxu0
      %v2779 = vadd.f32 0.0, %v2778
      %v2780 = vpop.f32.mrf.mxu0
      %v2781 = vpop.f32.mrf.mxu0
      %v2782 = vadd.f32 0.0, %v2781
      %v2783 = vpop.f32.mrf.mxu0
      %2784 = vdwg.mxu0
      %v2786 = vsel %vm2224, %v2581, 0
      %2788 = vmatprep.subr.bf16.mxu0 0
      %2789 = vmatpush1.bf16.msra.mxu0 0
      %2790 = vmatprep.subr.bf16.mxu0 0
      %2791 = vmatpush1.bf16.msra.mxu0 0
      %2792 = vmatprep.subr.bf16.mxu0 0
      %2793 = vmatpush1.bf16.msra.mxu0 0
      %2794 = vmatprep.subr.bf16.mxu0 0
      %2795 = vmatpush1.bf16.msra.mxu0 0
      %2796 = vmatprep.subr.bf16.mxu0 0
      %2797 = vmatpush1.bf16.msra.mxu0 0
      %2798 = vmatprep.subr.bf16.mxu0 0
      %2799 = vmatpush1.bf16.msra.mxu0 0
      %2800 = vmatprep.subr.bf16.mxu0 0
      %2801 = vmatpush1.bf16.msra.mxu0 0
      %2802 = vmatprep.subr.bf16.mxu0 0
      %2803 = vmatpush1.bf16.msra.mxu0 %v2597
      %2804 = vmatprep.subr.bf16.mxu0 0
      %2805 = vmatpush2.bf16.msra.mxu0 0
      %2806 = vmatprep.subr.bf16.mxu0 0
      %2807 = vmatpush2.bf16.msra.mxu0 0
      %2808 = vmatprep.subr.bf16.mxu0 0
      %2809 = vmatpush2.bf16.msra.mxu0 0
      %2810 = vmatprep.subr.bf16.mxu0 0
      %2811 = vmatpush2.bf16.msra.mxu0 0
      %2812 = vmatprep.subr.bf16.mxu0 0
      %2813 = vmatpush2.bf16.msra.mxu0 0
      %2814 = vmatprep.subr.bf16.mxu0 0
      %2815 = vmatpush2.bf16.msra.mxu0 0
      %2816 = vmatprep.subr.bf16.mxu0 0
      %2817 = vmatpush2.bf16.msra.mxu0 0
      %2818 = vmatprep.subr.bf16.mxu0 0
      %2819 = vmatpush2.bf16.msra.mxu0 0
      %2820 = vmatprep.mubr.bf16.mxu0 0
      %2821 = vmatmul.mubr.bf16.gmra.mxu0 %v2786
      %v2822 = vpop.f32.mrf.mxu0
      %v2823 = vadd.f32 0.0, %v2822
      %v2824 = vpop.f32.mrf.mxu0
      %v2825 = vpop.f32.mrf.mxu0
      %v2826 = vadd.f32 0.0, %v2825
      %v2827 = vpop.f32.mrf.mxu0
      %2828 = vdwg.mxu0
      %v2830 = vsel %vm2224, %v2582, 0
      %2832 = vmatprep.subr.bf16.mxu0 0
      %2833 = vmatpush1.bf16.msra.mxu0 0
      %2834 = vmatprep.subr.bf16.mxu0 0
      %2835 = vmatpush1.bf16.msra.mxu0 0
      %2836 = vmatprep.subr.bf16.mxu0 0
      %2837 = vmatpush1.bf16.msra.mxu0 0
      %2838 = vmatprep.subr.bf16.mxu0 0
      %2839 = vmatpush1.bf16.msra.mxu0 0
      %2840 = vmatprep.subr.bf16.mxu0 0
      %2841 = vmatpush1.bf16.msra.mxu0 0
      %2842 = vmatprep.subr.bf16.mxu0 0
      %2843 = vmatpush1.bf16.msra.mxu0 0
      %2844 = vmatprep.subr.bf16.mxu0 0
      %2845 = vmatpush1.bf16.msra.mxu0 0
      %2846 = vmatprep.subr.bf16.mxu0 0
      %2847 = vmatpush1.bf16.msra.mxu0 %v2598
      %2848 = vmatprep.subr.bf16.mxu0 0
      %2849 = vmatpush2.bf16.msra.mxu0 0
      %2850 = vmatprep.subr.bf16.mxu0 0
      %2851 = vmatpush2.bf16.msra.mxu0 0
      %2852 = vmatprep.subr.bf16.mxu0 0
      %2853 = vmatpush2.bf16.msra.mxu0 0
      %2854 = vmatprep.subr.bf16.mxu0 0
      %2855 = vmatpush2.bf16.msra.mxu0 0
      %2856 = vmatprep.subr.bf16.mxu0 0
      %2857 = vmatpush2.bf16.msra.mxu0 0
      %2858 = vmatprep.subr.bf16.mxu0 0
      %2859 = vmatpush2.bf16.msra.mxu0 0
      %2860 = vmatprep.subr.bf16.mxu0 0
      %2861 = vmatpush2.bf16.msra.mxu0 0
      %2862 = vmatprep.subr.bf16.mxu0 0
      %2863 = vmatpush2.bf16.msra.mxu0 0
      %2864 = vmatprep.mubr.bf16.mxu0 0
      %2865 = vmatmul.mubr.bf16.gmra.mxu0 %v2830
      %v2866 = vpop.f32.mrf.mxu0
      %v2867 = vadd.f32 0.0, %v2866
      %v2868 = vpop.f32.mrf.mxu0
      %v2869 = vpop.f32.mrf.mxu0
      %v2870 = vadd.f32 0.0, %v2869
      %v2871 = vpop.f32.mrf.mxu0
      %2872 = vdwg.mxu0
      %v2874 = vsel %vm2224, %v2583, 0
      %2876 = vmatprep.subr.bf16.mxu0 0
      %2877 = vmatpush1.bf16.msra.mxu0 0
      %2878 = vmatprep.subr.bf16.mxu0 0
      %2879 = vmatpush1.bf16.msra.mxu0 0
      %2880 = vmatprep.subr.bf16.mxu0 0
      %2881 = vmatpush1.bf16.msra.mxu0 0
      %2882 = vmatprep.subr.bf16.mxu0 0
      %2883 = vmatpush1.bf16.msra.mxu0 0
      %2884 = vmatprep.subr.bf16.mxu0 0
      %2885 = vmatpush1.bf16.msra.mxu0 0
      %2886 = vmatprep.subr.bf16.mxu0 0
      %2887 = vmatpush1.bf16.msra.mxu0 0
      %2888 = vmatprep.subr.bf16.mxu0 0
      %2889 = vmatpush1.bf16.msra.mxu0 0
      %2890 = vmatprep.subr.bf16.mxu0 0
      %2891 = vmatpush1.bf16.msra.mxu0 %v2599
      %2892 = vmatprep.subr.bf16.mxu0 0
      %2893 = vmatpush2.bf16.msra.mxu0 0
      %2894 = vmatprep.subr.bf16.mxu0 0
      %2895 = vmatpush2.bf16.msra.mxu0 0
      %2896 = vmatprep.subr.bf16.mxu0 0
      %2897 = vmatpush2.bf16.msra.mxu0 0
      %2898 = vmatprep.subr.bf16.mxu0 0
      %2899 = vmatpush2.bf16.msra.mxu0 0
      %2900 = vmatprep.subr.bf16.mxu0 0
      %2901 = vmatpush2.bf16.msra.mxu0 0
      %2902 = vmatprep.subr.bf16.mxu0 0
      %2903 = vmatpush2.bf16.msra.mxu0 0
      %2904 = vmatprep.subr.bf16.mxu0 0
      %2905 = vmatpush2.bf16.msra.mxu0 0
      %2906 = vmatprep.subr.bf16.mxu0 0
      %2907 = vmatpush2.bf16.msra.mxu0 0
      %2908 = vmatprep.mubr.bf16.mxu0 0
      %2909 = vmatmul.mubr.bf16.gmra.mxu0 %v2874
      %v2910 = vpop.f32.mrf.mxu0
      %v2911 = vadd.f32 0.0, %v2910
      %v2912 = vpop.f32.mrf.mxu0
      %v2913 = vpop.f32.mrf.mxu0
      %v2914 = vadd.f32 0.0, %v2913
      %v2915 = vpop.f32.mrf.mxu0
      %2916 = vdwg.mxu0
      %v2918 = vsel %vm2224, %v2584, 0
      %2920 = vmatprep.subr.bf16.mxu0 0
      %2921 = vmatpush1.bf16.msra.mxu0 0
      %2922 = vmatprep.subr.bf16.mxu0 0
      %2923 = vmatpush1.bf16.msra.mxu0 0
      %2924 = vmatprep.subr.bf16.mxu0 0
      %2925 = vmatpush1.bf16.msra.mxu0 0
      %2926 = vmatprep.subr.bf16.mxu0 0
      %2927 = vmatpush1.bf16.msra.mxu0 0
      %2928 = vmatprep.subr.bf16.mxu0 0
      %2929 = vmatpush1.bf16.msra.mxu0 0
      %2930 = vmatprep.subr.bf16.mxu0 0
      %2931 = vmatpush1.bf16.msra.mxu0 0
      %2932 = vmatprep.subr.bf16.mxu0 0
      %2933 = vmatpush1.bf16.msra.mxu0 0
      %2934 = vmatprep.subr.bf16.mxu0 0
      %2935 = vmatpush1.bf16.msra.mxu0 %v2600
      %2936 = vmatprep.subr.bf16.mxu0 0
      %2937 = vmatpush2.bf16.msra.mxu0 0
      %2938 = vmatprep.subr.bf16.mxu0 0
      %2939 = vmatpush2.bf16.msra.mxu0 0
      %2940 = vmatprep.subr.bf16.mxu0 0
      %2941 = vmatpush2.bf16.msra.mxu0 0
      %2942 = vmatprep.subr.bf16.mxu0 0
      %2943 = vmatpush2.bf16.msra.mxu0 0
      %2944 = vmatprep.subr.bf16.mxu0 0
      %2945 = vmatpush2.bf16.msra.mxu0 0
      %2946 = vmatprep.subr.bf16.mxu0 0
      %2947 = vmatpush2.bf16.msra.mxu0 0
      %2948 = vmatprep.subr.bf16.mxu0 0
      %2949 = vmatpush2.bf16.msra.mxu0 0
      %2950 = vmatprep.subr.bf16.mxu0 0
      %2951 = vmatpush2.bf16.msra.mxu0 0
      %2952 = vmatprep.mubr.bf16.mxu0 0
      %2953 = vmatmul.mubr.bf16.gmra.mxu0 %v2918
      %v2954 = vpop.f32.mrf.mxu0
      %v2955 = vadd.f32 0.0, %v2954
      %v2956 = vpop.f32.mrf.mxu0
      %v2957 = vpop.f32.mrf.mxu0
      %v2958 = vadd.f32 0.0, %v2957
      %v2959 = vpop.f32.mrf.mxu0
      %2960 = vdwg.mxu0
      %v2962 = vsel %vm2224, %v2585, 0
      %2964 = vmatprep.subr.bf16.mxu0 0
      %2965 = vmatpush1.bf16.msra.mxu0 0
      %2966 = vmatprep.subr.bf16.mxu0 0
      %2967 = vmatpush1.bf16.msra.mxu0 0
      %2968 = vmatprep.subr.bf16.mxu0 0
      %2969 = vmatpush1.bf16.msra.mxu0 0
      %2970 = vmatprep.subr.bf16.mxu0 0
      %2971 = vmatpush1.bf16.msra.mxu0 0
      %2972 = vmatprep.subr.bf16.mxu0 0
      %2973 = vmatpush1.bf16.msra.mxu0 0
      %2974 = vmatprep.subr.bf16.mxu0 0
      %2975 = vmatpush1.bf16.msra.mxu0 0
      %2976 = vmatprep.subr.bf16.mxu0 0
      %2977 = vmatpush1.bf16.msra.mxu0 0
      %2978 = vmatprep.subr.bf16.mxu0 0
      %2979 = vmatpush1.bf16.msra.mxu0 %v2601
      %2980 = vmatprep.subr.bf16.mxu0 0
      %2981 = vmatpush2.bf16.msra.mxu0 0
      %2982 = vmatprep.subr.bf16.mxu0 0
      %2983 = vmatpush2.bf16.msra.mxu0 0
      %2984 = vmatprep.subr.bf16.mxu0 0
      %2985 = vmatpush2.bf16.msra.mxu0 0
      %2986 = vmatprep.subr.bf16.mxu0 0
      %2987 = vmatpush2.bf16.msra.mxu0 0
      %2988 = vmatprep.subr.bf16.mxu0 0
      %2989 = vmatpush2.bf16.msra.mxu0 0
      %2990 = vmatprep.subr.bf16.mxu0 0
      %2991 = vmatpush2.bf16.msra.mxu0 0
      %2992 = vmatprep.subr.bf16.mxu0 0
      %2993 = vmatpush2.bf16.msra.mxu0 0
      %2994 = vmatprep.subr.bf16.mxu0 0
      %2995 = vmatpush2.bf16.msra.mxu0 0
      %2996 = vmatprep.mubr.bf16.mxu0 0
      %2997 = vmatmul.mubr.bf16.gmra.mxu0 %v2962
      %v2998 = vpop.f32.mrf.mxu0
      %v2999 = vadd.f32 0.0, %v2998
      %v3000 = vpop.f32.mrf.mxu0
      %v3001 = vpop.f32.mrf.mxu0
      %v3002 = vadd.f32 0.0, %v3001
      %v3003 = vpop.f32.mrf.mxu0
      %3004 = vdwg.mxu0
      %v3006 = vsel %vm2224, %v2586, 0
      %3008 = vmatprep.subr.bf16.mxu0 0
      %3009 = vmatpush1.bf16.msra.mxu0 0
      %3010 = vmatprep.subr.bf16.mxu0 0
      %3011 = vmatpush1.bf16.msra.mxu0 0
      %3012 = vmatprep.subr.bf16.mxu0 0
      %3013 = vmatpush1.bf16.msra.mxu0 0
      %3014 = vmatprep.subr.bf16.mxu0 0
      %3015 = vmatpush1.bf16.msra.mxu0 0
      %3016 = vmatprep.subr.bf16.mxu0 0
      %3017 = vmatpush1.bf16.msra.mxu0 0
      %3018 = vmatprep.subr.bf16.mxu0 0
      %3019 = vmatpush1.bf16.msra.mxu0 0
      %3020 = vmatprep.subr.bf16.mxu0 0
      %3021 = vmatpush1.bf16.msra.mxu0 0
      %3022 = vmatprep.subr.bf16.mxu0 0
      %3023 = vmatpush1.bf16.msra.mxu0 %v2602
      %3024 = vmatprep.subr.bf16.mxu0 0
      %3025 = vmatpush2.bf16.msra.mxu0 0
      %3026 = vmatprep.subr.bf16.mxu0 0
      %3027 = vmatpush2.bf16.msra.mxu0 0
      %3028 = vmatprep.subr.bf16.mxu0 0
      %3029 = vmatpush2.bf16.msra.mxu0 0
      %3030 = vmatprep.subr.bf16.mxu0 0
      %3031 = vmatpush2.bf16.msra.mxu0 0
      %3032 = vmatprep.subr.bf16.mxu0 0
      %3033 = vmatpush2.bf16.msra.mxu0 0
      %3034 = vmatprep.subr.bf16.mxu0 0
      %3035 = vmatpush2.bf16.msra.mxu0 0
      %3036 = vmatprep.subr.bf16.mxu0 0
      %3037 = vmatpush2.bf16.msra.mxu0 0
      %3038 = vmatprep.subr.bf16.mxu0 0
      %3039 = vmatpush2.bf16.msra.mxu0 0
      %3040 = vmatprep.mubr.bf16.mxu0 0
      %3041 = vmatmul.mubr.bf16.gmra.mxu0 %v3006
      %v3042 = vpop.f32.mrf.mxu0
      %v3043 = vadd.f32 0.0, %v3042
      %v3044 = vpop.f32.mrf.mxu0
      %v3045 = vpop.f32.mrf.mxu0
      %v3046 = vadd.f32 0.0, %v3045
      %v3047 = vpop.f32.mrf.mxu0
      %3048 = vdwg.mxu0
      %v3050 = vsel %vm2224, %v2587, 0
      %3052 = vmatprep.subr.bf16.mxu0 0
      %3053 = vmatpush1.bf16.msra.mxu0 0
      %3054 = vmatprep.subr.bf16.mxu0 0
      %3055 = vmatpush1.bf16.msra.mxu0 0
      %3056 = vmatprep.subr.bf16.mxu0 0
      %3057 = vmatpush1.bf16.msra.mxu0 0
      %3058 = vmatprep.subr.bf16.mxu0 0
      %3059 = vmatpush1.bf16.msra.mxu0 0
      %3060 = vmatprep.subr.bf16.mxu0 0
      %3061 = vmatpush1.bf16.msra.mxu0 0
      %3062 = vmatprep.subr.bf16.mxu0 0
      %3063 = vmatpush1.bf16.msra.mxu0 0
      %3064 = vmatprep.subr.bf16.mxu0 0
      %3065 = vmatpush1.bf16.msra.mxu0 0
      %3066 = vmatprep.subr.bf16.mxu0 0
      %3067 = vmatpush1.bf16.msra.mxu0 %v2603
      %3068 = vmatprep.subr.bf16.mxu0 0
      %3069 = vmatpush2.bf16.msra.mxu0 0
      %3070 = vmatprep.subr.bf16.mxu0 0
      %3071 = vmatpush2.bf16.msra.mxu0 0
      %3072 = vmatprep.subr.bf16.mxu0 0
      %3073 = vmatpush2.bf16.msra.mxu0 0
      %3074 = vmatprep.subr.bf16.mxu0 0
      %3075 = vmatpush2.bf16.msra.mxu0 0
      %3076 = vmatprep.subr.bf16.mxu0 0
      %3077 = vmatpush2.bf16.msra.mxu0 0
      %3078 = vmatprep.subr.bf16.mxu0 0
      %3079 = vmatpush2.bf16.msra.mxu0 0
      %3080 = vmatprep.subr.bf16.mxu0 0
      %3081 = vmatpush2.bf16.msra.mxu0 0
      %3082 = vmatprep.subr.bf16.mxu0 0
      %3083 = vmatpush2.bf16.msra.mxu0 0
      %3084 = vmatprep.mubr.bf16.mxu0 0
      %3085 = vmatmul.mubr.bf16.gmra.mxu0 %v3050
      %v3086 = vpop.f32.mrf.mxu0
      %v3087 = vadd.f32 0.0, %v3086
      %v3088 = vpop.f32.mrf.mxu0
      %v3089 = vpop.f32.mrf.mxu0
      %v3090 = vadd.f32 0.0, %v3089
      %v3091 = vpop.f32.mrf.mxu0
      %3092 = vdwg.mxu0
      %v3094 = vsel %vm2224, %v2588, 0
      %3096 = vmatprep.subr.bf16.mxu0 0
      %3097 = vmatpush1.bf16.msra.mxu0 0
      %3098 = vmatprep.subr.bf16.mxu0 0
      %3099 = vmatpush1.bf16.msra.mxu0 0
      %3100 = vmatprep.subr.bf16.mxu0 0
      %3101 = vmatpush1.bf16.msra.mxu0 0
      %3102 = vmatprep.subr.bf16.mxu0 0
      %3103 = vmatpush1.bf16.msra.mxu0 0
      %3104 = vmatprep.subr.bf16.mxu0 0
      %3105 = vmatpush1.bf16.msra.mxu0 0
      %3106 = vmatprep.subr.bf16.mxu0 0
      %3107 = vmatpush1.bf16.msra.mxu0 0
      %3108 = vmatprep.subr.bf16.mxu0 0
      %3109 = vmatpush1.bf16.msra.mxu0 0
      %3110 = vmatprep.subr.bf16.mxu0 0
      %3111 = vmatpush1.bf16.msra.mxu0 %v2604
      %3112 = vmatprep.subr.bf16.mxu0 0
      %3113 = vmatpush2.bf16.msra.mxu0 0
      %3114 = vmatprep.subr.bf16.mxu0 0
      %3115 = vmatpush2.bf16.msra.mxu0 0
      %3116 = vmatprep.subr.bf16.mxu0 0
      %3117 = vmatpush2.bf16.msra.mxu0 0
      %3118 = vmatprep.subr.bf16.mxu0 0
      %3119 = vmatpush2.bf16.msra.mxu0 0
      %3120 = vmatprep.subr.bf16.mxu0 0
      %3121 = vmatpush2.bf16.msra.mxu0 0
      %3122 = vmatprep.subr.bf16.mxu0 0
      %3123 = vmatpush2.bf16.msra.mxu0 0
      %3124 = vmatprep.subr.bf16.mxu0 0
      %3125 = vmatpush2.bf16.msra.mxu0 0
      %3126 = vmatprep.subr.bf16.mxu0 0
      %3127 = vmatpush2.bf16.msra.mxu0 0
      %3128 = vmatprep.mubr.bf16.mxu0 0
      %3129 = vmatmul.mubr.bf16.gmra.mxu0 %v3094
      %v3130 = vpop.f32.mrf.mxu0
      %v3131 = vadd.f32 0.0, %v3130
      %v3132 = vpop.f32.mrf.mxu0
      %v3133 = vpop.f32.mrf.mxu0
      %v3134 = vadd.f32 0.0, %v3133
      %v3135 = vpop.f32.mrf.mxu0
      %3136 = vdwg.mxu0
      %v3138 = vsel %vm2224, %v2589, 0
      %3140 = vmatprep.subr.bf16.mxu0 0
      %3141 = vmatpush1.bf16.msra.mxu0 0
      %3142 = vmatprep.subr.bf16.mxu0 0
      %3143 = vmatpush1.bf16.msra.mxu0 0
      %3144 = vmatprep.subr.bf16.mxu0 0
      %3145 = vmatpush1.bf16.msra.mxu0 0
      %3146 = vmatprep.subr.bf16.mxu0 0
      %3147 = vmatpush1.bf16.msra.mxu0 0
      %3148 = vmatprep.subr.bf16.mxu0 0
      %3149 = vmatpush1.bf16.msra.mxu0 0
      %3150 = vmatprep.subr.bf16.mxu0 0
      %3151 = vmatpush1.bf16.msra.mxu0 0
      %3152 = vmatprep.subr.bf16.mxu0 0
      %3153 = vmatpush1.bf16.msra.mxu0 0
      %3154 = vmatprep.subr.bf16.mxu0 0
      %3155 = vmatpush1.bf16.msra.mxu0 %v2605
      %3156 = vmatprep.subr.bf16.mxu0 0
      %3157 = vmatpush2.bf16.msra.mxu0 0
      %3158 = vmatprep.subr.bf16.mxu0 0
      %3159 = vmatpush2.bf16.msra.mxu0 0
      %3160 = vmatprep.subr.bf16.mxu0 0
      %3161 = vmatpush2.bf16.msra.mxu0 0
      %3162 = vmatprep.subr.bf16.mxu0 0
      %3163 = vmatpush2.bf16.msra.mxu0 0
      %3164 = vmatprep.subr.bf16.mxu0 0
      %3165 = vmatpush2.bf16.msra.mxu0 0
      %3166 = vmatprep.subr.bf16.mxu0 0
      %3167 = vmatpush2.bf16.msra.mxu0 0
      %3168 = vmatprep.subr.bf16.mxu0 0
      %3169 = vmatpush2.bf16.msra.mxu0 0
      %3170 = vmatprep.subr.bf16.mxu0 0
      %3171 = vmatpush2.bf16.msra.mxu0 0
      %3172 = vmatprep.mubr.bf16.mxu0 0
      %3173 = vmatmul.mubr.bf16.gmra.mxu0 %v3138
      %v3174 = vpop.f32.mrf.mxu0
      %v3175 = vadd.f32 0.0, %v3174
      %v3176 = vpop.f32.mrf.mxu0
      %v3177 = vpop.f32.mrf.mxu0
      %v3178 = vadd.f32 0.0, %v3177
      %v3179 = vpop.f32.mrf.mxu0
      %3180 = vdwg.mxu0
      %v3182 = vsel %vm2224, %v2590, 0
      %3184 = vmatprep.subr.bf16.mxu0 0
      %3185 = vmatpush1.bf16.msra.mxu0 0
      %3186 = vmatprep.subr.bf16.mxu0 0
      %3187 = vmatpush1.bf16.msra.mxu0 0
      %3188 = vmatprep.subr.bf16.mxu0 0
      %3189 = vmatpush1.bf16.msra.mxu0 0
      %3190 = vmatprep.subr.bf16.mxu0 0
      %3191 = vmatpush1.bf16.msra.mxu0 0
      %3192 = vmatprep.subr.bf16.mxu0 0
      %3193 = vmatpush1.bf16.msra.mxu0 0
      %3194 = vmatprep.subr.bf16.mxu0 0
      %3195 = vmatpush1.bf16.msra.mxu0 0
      %3196 = vmatprep.subr.bf16.mxu0 0
      %3197 = vmatpush1.bf16.msra.mxu0 0
      %3198 = vmatprep.subr.bf16.mxu0 0
      %3199 = vmatpush1.bf16.msra.mxu0 %v2606
      %3200 = vmatprep.subr.bf16.mxu0 0
      %3201 = vmatpush2.bf16.msra.mxu0 0
      %3202 = vmatprep.subr.bf16.mxu0 0
      %3203 = vmatpush2.bf16.msra.mxu0 0
      %3204 = vmatprep.subr.bf16.mxu0 0
      %3205 = vmatpush2.bf16.msra.mxu0 0
      %3206 = vmatprep.subr.bf16.mxu0 0
      %3207 = vmatpush2.bf16.msra.mxu0 0
      %3208 = vmatprep.subr.bf16.mxu0 0
      %3209 = vmatpush2.bf16.msra.mxu0 0
      %3210 = vmatprep.subr.bf16.mxu0 0
      %3211 = vmatpush2.bf16.msra.mxu0 0
      %3212 = vmatprep.subr.bf16.mxu0 0
      %3213 = vmatpush2.bf16.msra.mxu0 0
      %3214 = vmatprep.subr.bf16.mxu0 0
      %3215 = vmatpush2.bf16.msra.mxu0 0
      %3216 = vmatprep.mubr.bf16.mxu0 0
      %3217 = vmatmul.mubr.bf16.gmra.mxu0 %v3182
      %v3218 = vpop.f32.mrf.mxu0
      %v3219 = vadd.f32 0.0, %v3218
      %v3220 = vpop.f32.mrf.mxu0
      %v3221 = vpop.f32.mrf.mxu0
      %v3222 = vadd.f32 0.0, %v3221
      %v3223 = vpop.f32.mrf.mxu0
      %3224 = vdwg.mxu0
      %v3226 = vsel %vm2224, %v2591, 0
      %3228 = vmatprep.subr.bf16.mxu0 0
      %3229 = vmatpush1.bf16.msra.mxu0 0
      %3230 = vmatprep.subr.bf16.mxu0 0
      %3231 = vmatpush1.bf16.msra.mxu0 0
      %3232 = vmatprep.subr.bf16.mxu0 0
      %3233 = vmatpush1.bf16.msra.mxu0 0
      %3234 = vmatprep.subr.bf16.mxu0 0
      %3235 = vmatpush1.bf16.msra.mxu0 0
      %3236 = vmatprep.subr.bf16.mxu0 0
      %3237 = vmatpush1.bf16.msra.mxu0 0
      %3238 = vmatprep.subr.bf16.mxu0 0
      %3239 = vmatpush1.bf16.msra.mxu0 0
      %3240 = vmatprep.subr.bf16.mxu0 0
      %3241 = vmatpush1.bf16.msra.mxu0 0
      %3242 = vmatprep.subr.bf16.mxu0 0
      %3243 = vmatpush1.bf16.msra.mxu0 %v2607
      %3244 = vmatprep.subr.bf16.mxu0 0
      %3245 = vmatpush2.bf16.msra.mxu0 0
      %3246 = vmatprep.subr.bf16.mxu0 0
      %3247 = vmatpush2.bf16.msra.mxu0 0
      %3248 = vmatprep.subr.bf16.mxu0 0
      %3249 = vmatpush2.bf16.msra.mxu0 0
      %3250 = vmatprep.subr.bf16.mxu0 0
      %3251 = vmatpush2.bf16.msra.mxu0 0
      %3252 = vmatprep.subr.bf16.mxu0 0
      %3253 = vmatpush2.bf16.msra.mxu0 0
      %3254 = vmatprep.subr.bf16.mxu0 0
      %3255 = vmatpush2.bf16.msra.mxu0 0
      %3256 = vmatprep.subr.bf16.mxu0 0
      %3257 = vmatpush2.bf16.msra.mxu0 0
      %3258 = vmatprep.subr.bf16.mxu0 0
      %3259 = vmatpush2.bf16.msra.mxu0 0
      %3260 = vmatprep.mubr.bf16.mxu0 0
      %3261 = vmatmul.mubr.bf16.gmra.mxu0 %v3226
      %v3262 = vpop.f32.mrf.mxu0
      %v3263 = vadd.f32 0.0, %v3262
      %v3264 = vpop.f32.mrf.mxu0
      %v3265 = vpop.f32.mrf.mxu0
      %v3266 = vadd.f32 0.0, %v3265
      %v3267 = vpop.f32.mrf.mxu0
      %3268 = vdwg.mxu0
      %v3270 = vsel %vm2224, %v2592, 0
      %3272 = vmatprep.subr.bf16.mxu0 0
      %3273 = vmatpush1.bf16.msra.mxu0 0
      %3274 = vmatprep.subr.bf16.mxu0 0
      %3275 = vmatpush1.bf16.msra.mxu0 0
      %3276 = vmatprep.subr.bf16.mxu0 0
      %3277 = vmatpush1.bf16.msra.mxu0 0
      %3278 = vmatprep.subr.bf16.mxu0 0
      %3279 = vmatpush1.bf16.msra.mxu0 0
      %3280 = vmatprep.subr.bf16.mxu0 0
      %3281 = vmatpush1.bf16.msra.mxu0 0
      %3282 = vmatprep.subr.bf16.mxu0 0
      %3283 = vmatpush1.bf16.msra.mxu0 0
      %3284 = vmatprep.subr.bf16.mxu0 0
      %3285 = vmatpush1.bf16.msra.mxu0 0
      %3286 = vmatprep.subr.bf16.mxu0 0
      %3287 = vmatpush1.bf16.msra.mxu0 %v2608
      %3288 = vmatprep.subr.bf16.mxu0 0
      %3289 = vmatpush2.bf16.msra.mxu0 0
      %3290 = vmatprep.subr.bf16.mxu0 0
      %3291 = vmatpush2.bf16.msra.mxu0 0
      %3292 = vmatprep.subr.bf16.mxu0 0
      %3293 = vmatpush2.bf16.msra.mxu0 0
      %3294 = vmatprep.subr.bf16.mxu0 0
      %3295 = vmatpush2.bf16.msra.mxu0 0
      %3296 = vmatprep.subr.bf16.mxu0 0
      %3297 = vmatpush2.bf16.msra.mxu0 0
      %3298 = vmatprep.subr.bf16.mxu0 0
      %3299 = vmatpush2.bf16.msra.mxu0 0
      %3300 = vmatprep.subr.bf16.mxu0 0
      %3301 = vmatpush2.bf16.msra.mxu0 0
      %3302 = vmatprep.subr.bf16.mxu0 0
      %3303 = vmatpush2.bf16.msra.mxu0 0
      %3304 = vmatprep.mubr.bf16.mxu0 0
      %3305 = vmatmul.mubr.bf16.gmra.mxu0 %v3270
      %v3306 = vpop.f32.mrf.mxu0
      %v3307 = vadd.f32 0.0, %v3306
      %v3308 = vpop.f32.mrf.mxu0
      %v3309 = vpop.f32.mrf.mxu0
      %v3310 = vadd.f32 0.0, %v3309
      %v3311 = vpop.f32.mrf.mxu0
      %3312 = vdwg.mxu0
      %3321 = vrot.lane.b32.xlu0 %v2823, 32
      %v3322 = vpop.permute.xlu0 %3321
      %3323 = vrot.lane.b32.xlu0 %v2826, 32
      %v3324 = vpop.permute.xlu0 %3323
      %3325 = vrot.lane.b32.xlu0 %v2867, 32
      %v3326 = vpop.permute.xlu0 %3325
      %3327 = vrot.lane.b32.xlu0 %v2870, 32
      %v3328 = vpop.permute.xlu0 %3327
      %3329 = vrot.lane.b32.xlu0 %v2911, 32
      %v3330 = vpop.permute.xlu0 %3329
      %3331 = vrot.lane.b32.xlu0 %v2914, 32
      %v3332 = vpop.permute.xlu0 %3331
      %3333 = vrot.lane.b32.xlu0 %v2955, 32
      %v3334 = vpop.permute.xlu0 %3333
      %3335 = vrot.lane.b32.xlu0 %v2958, 32
      %v3336 = vpop.permute.xlu0 %3335
      %3353 = vrot.lane.b32.xlu0 %v2999, 64
      %v3354 = vpop.permute.xlu0 %3353
      %3355 = vrot.lane.b32.xlu0 %v3002, 64
      %v3356 = vpop.permute.xlu0 %3355
      %3357 = vrot.lane.b32.xlu0 %v3043, 64
      %v3358 = vpop.permute.xlu0 %3357
      %3359 = vrot.lane.b32.xlu0 %v3046, 64
      %v3360 = vpop.permute.xlu0 %3359
      %3361 = vrot.lane.b32.xlu0 %v3087, 64
      %v3362 = vpop.permute.xlu0 %3361
      %3363 = vrot.lane.b32.xlu0 %v3090, 64
      %v3364 = vpop.permute.xlu0 %3363
      %3365 = vrot.lane.b32.xlu0 %v3131, 64
      %v3366 = vpop.permute.xlu0 %3365
      %3367 = vrot.lane.b32.xlu0 %v3134, 64
      %v3368 = vpop.permute.xlu0 %3367
      %3385 = vrot.lane.b32.xlu0 %v3175, 96
      %v3386 = vpop.permute.xlu0 %3385
      %3387 = vrot.lane.b32.xlu0 %v3178, 96
      %v3388 = vpop.permute.xlu0 %3387
      %3389 = vrot.lane.b32.xlu0 %v3219, 96
      %v3390 = vpop.permute.xlu0 %3389
      %3391 = vrot.lane.b32.xlu0 %v3222, 96
      %v3392 = vpop.permute.xlu0 %3391
      %3393 = vrot.lane.b32.xlu0 %v3263, 96
      %v3394 = vpop.permute.xlu0 %3393
      %3395 = vrot.lane.b32.xlu0 %v3266, 96
      %v3396 = vpop.permute.xlu0 %3395
      %3397 = vrot.lane.b32.xlu0 %v3307, 96
      %v3398 = vpop.permute.xlu0 %3397
      %3399 = vrot.lane.b32.xlu0 %v3310, 96
      %v3400 = vpop.permute.xlu0 %3399
      %v3409 = vsel %vm1407, %v2647, %v3322
      %v3410 = vsel %vm1407, %v2650, %v3324
      %v3411 = vsel %vm1407, %v2691, %v3326
      %v3412 = vsel %vm1407, %v2694, %v3328
      %v3413 = vsel %vm1407, %v2735, %v3330
      %v3414 = vsel %vm1407, %v2738, %v3332
      %v3415 = vsel %vm1407, %v2779, %v3334
      %v3416 = vsel %vm1407, %v2782, %v3336
      %vm3417 = vcmask 523264
      %v3418 = vsel %vm3417, %v3409, %v3354
      %v3419 = vsel %vm3417, %v3410, %v3356
      %v3420 = vsel %vm3417, %v3411, %v3358
      %v3421 = vsel %vm3417, %v3412, %v3360
      %v3422 = vsel %vm3417, %v3413, %v3362
      %v3423 = vsel %vm3417, %v3414, %v3364
      %v3424 = vsel %vm3417, %v3415, %v3366
      %v3425 = vsel %vm3417, %v3416, %v3368
      %vm3426 = vcmask 785408
      %v3427 = vsel %vm3426, %v3418, %v3386
      %v3428 = vsel %vm3426, %v3419, %v3388
      %v3429 = vsel %vm3426, %v3420, %v3390
      %v3430 = vsel %vm3426, %v3421, %v3392
      %v3431 = vsel %vm3426, %v3422, %v3394
      %v3432 = vsel %vm3426, %v3423, %v3396
      %v3433 = vsel %vm3426, %v3424, %v3398
      %v3434 = vsel %vm3426, %v3425, %v3400
      %v3435 = vld [vmem:[%s625] sm:$0xf]
      %v3436 = vld [vmem:[%s625 + $0x4] sm:$0xf]
      %v3437 = vld [vmem:[%s625 + $0x8] sm:$0xf]
      %v3438 = vld [vmem:[%s625 + $0xc] sm:$0xf]
      %v3439 = vld [vmem:[%s625 + $0x10] sm:$0xf]
      %v3440 = vld [vmem:[%s625 + $0x14] sm:$0xf]
      %v3441 = vld [vmem:[%s625 + $0x18] sm:$0xf]
      %v3442 = vld [vmem:[%s625 + $0x1c] sm:$0xf]
      %v3443 = vld [vmem:[%s625 + $0x20] sm:$0xf]
      %v3444 = vld [vmem:[%s625 + $0x24] sm:$0xf]
      %v3445 = vld [vmem:[%s625 + $0x28] sm:$0xf]
      %v3446 = vld [vmem:[%s625 + $0x2c] sm:$0xf]
      %v3447 = vld [vmem:[%s625 + $0x30] sm:$0xf]
      %v3448 = vld [vmem:[%s625 + $0x34] sm:$0xf]
      %v3449 = vld [vmem:[%s625 + $0x38] sm:$0xf]
      %v3450 = vld [vmem:[%s625 + $0x3c] sm:$0xf]
      %v3451 = vpack.c.bf16 %v3428, %v3427
      %v3452 = vpack.c.bf16 %v3430, %v3429
      %v3453 = vpack.c.bf16 %v3432, %v3431
      %v3454 = vpack.c.bf16 %v3434, %v3433
      %v3471 = vunpack.c.l.b16 %v3435
      %v3472 = vunpack.c.l.b16 %v3436
      %v3473 = vunpack.c.l.b16 %v3437
      %v3474 = vunpack.c.l.b16 %v3438
      %v3475 = vunpack.c.l.b16 %v3439
      %v3476 = vunpack.c.l.b16 %v3440
      %v3477 = vunpack.c.l.b16 %v3441
      %v3478 = vunpack.c.l.b16 %v3442
      %v3479 = vunpack.c.l.b16 %v3443
      %v3480 = vunpack.c.l.b16 %v3444
      %v3481 = vunpack.c.l.b16 %v3445
      %v3482 = vunpack.c.l.b16 %v3446
      %v3483 = vunpack.c.l.b16 %v3447
      %v3484 = vunpack.c.l.b16 %v3448
      %v3485 = vunpack.c.l.b16 %v3449
      %v3486 = vunpack.c.l.b16 %v3450
      %v3487 = vpack.c.b16 %v3472, %v3471
      %v3488 = vpack.c.b16 %v3474, %v3473
      %v3489 = vpack.c.b16 %v3476, %v3475
      %v3490 = vpack.c.b16 %v3478, %v3477
      %v3491 = vpack.c.b16 %v3480, %v3479
      %v3492 = vpack.c.b16 %v3482, %v3481
      %v3493 = vpack.c.b16 %v3484, %v3483
      %v3494 = vpack.c.b16 %v3486, %v3485
      %3503 = vmatprep.subr.bf16.mxu0 0
      %3504 = vmatpush1.bf16.msra.mxu0 %v3494
      %3505 = vmatprep.subr.bf16.mxu0 0
      %3506 = vmatpush1.bf16.msra.mxu0 %v3493
      %3507 = vmatprep.subr.bf16.mxu0 0
      %3508 = vmatpush1.bf16.msra.mxu0 %v3492
      %3509 = vmatprep.subr.bf16.mxu0 0
      %3510 = vmatpush1.bf16.msra.mxu0 %v3491
      %3511 = vmatprep.subr.bf16.mxu0 0
      %3512 = vmatpush1.bf16.msra.mxu0 %v3490
      %3513 = vmatprep.subr.bf16.mxu0 0
      %3514 = vmatpush1.bf16.msra.mxu0 %v3489
      %3515 = vmatprep.subr.bf16.mxu0 0
      %3516 = vmatpush1.bf16.msra.mxu0 %v3488
      %3517 = vmatprep.subr.bf16.mxu0 0
      %3518 = vmatpush1.bf16.msra.mxu0 %v3487
      %3519 = vmatprep.subr.bf16.mxu0 0
      %3520 = vmatpush2.bf16.msra.mxu0 0
      %3521 = vmatprep.subr.bf16.mxu0 0
      %3522 = vmatpush2.bf16.msra.mxu0 0
      %3523 = vmatprep.subr.bf16.mxu0 0
      %3524 = vmatpush2.bf16.msra.mxu0 0
      %3525 = vmatprep.subr.bf16.mxu0 0
      %3526 = vmatpush2.bf16.msra.mxu0 0
      %3527 = vmatprep.subr.bf16.mxu0 0
      %3528 = vmatpush2.bf16.msra.mxu0 0
      %3529 = vmatprep.subr.bf16.mxu0 0
      %3530 = vmatpush2.bf16.msra.mxu0 0
      %3531 = vmatprep.subr.bf16.mxu0 0
      %3532 = vmatpush2.bf16.msra.mxu0 0
      %3533 = vmatprep.subr.bf16.mxu0 0
      %3534 = vmatpush2.bf16.msra.mxu0 0
      %3535 = vmatprep.mubr.bf16.mxu0 0
      %3536 = vmatmul.mubr.bf16.gmra.mxu0 %v3451
      %v3537 = vpop.f32.mrf.mxu0
      %v3538 = vadd.f32 0.0, %v3537
      %v3539 = vpop.f32.mrf.mxu0
      %v3540 = vpop.f32.mrf.mxu0
      %v3541 = vadd.f32 0.0, %v3540
      %v3542 = vpop.f32.mrf.mxu0
      %3543 = vmatprep.mubr.bf16.mxu0 0
      %3544 = vmatmul.mubr.bf16.gmra.mxu0 %v3452
      %v3545 = vpop.f32.mrf.mxu0
      %v3546 = vadd.f32 0.0, %v3545
      %v3547 = vpop.f32.mrf.mxu0
      %v3548 = vpop.f32.mrf.mxu0
      %v3549 = vadd.f32 0.0, %v3548
      %v3550 = vpop.f32.mrf.mxu0
      %3551 = vmatprep.mubr.bf16.mxu0 0
      %3552 = vmatmul.mubr.bf16.gmra.mxu0 %v3453
      %v3553 = vpop.f32.mrf.mxu0
      %v3554 = vadd.f32 0.0, %v3553
      %v3555 = vpop.f32.mrf.mxu0
      %v3556 = vpop.f32.mrf.mxu0
      %v3557 = vadd.f32 0.0, %v3556
      %v3558 = vpop.f32.mrf.mxu0
      %3559 = vmatprep.mubr.bf16.mxu0 0
      %3560 = vmatmul.mubr.bf16.gmra.mxu0 %v3454
      %v3561 = vpop.f32.mrf.mxu0
      %v3562 = vadd.f32 0.0, %v3561
      %v3563 = vpop.f32.mrf.mxu0
      %v3564 = vpop.f32.mrf.mxu0
      %v3565 = vadd.f32 0.0, %v3564
      %v3566 = vpop.f32.mrf.mxu0
      %3567 = vdwg.mxu0
      %v3568 = vadd.f32 %v680, %v3538
      %v3569 = vadd.f32 %v681, %v3541
      %v3570 = vadd.f32 %v682, %v3546
      %v3571 = vadd.f32 %v683, %v3549
      %v3572 = vadd.f32 %v684, %v3554
      %v3573 = vadd.f32 %v685, %v3557
      %v3574 = vadd.f32 %v686, %v3562
      %v3575 = vadd.f32 %v687, %v3565
      %v3576 = vld [vmem:[%s628] sm:$0x1]
      %v3578 = vlaneseq
      %v3579 = vshrl.u32 %v3578, 7
      %v3580 = vsub.s32 0, %v3579
      %v3581 = vrot.slane %v3576, %v3580
      %v3583 = vadd.f32 %v3568, %v3581
      %v3584 = vadd.f32 %v3569, %v3581
      %v3585 = vadd.f32 %v3570, %v3581
      %v3586 = vadd.f32 %v3571, %v3581
      %v3587 = vadd.f32 %v3572, %v3581
      %v3588 = vadd.f32 %v3573, %v3581
      %v3589 = vadd.f32 %v3574, %v3581
      %v3590 = vadd.f32 %v3575, %v3581
      %v3591 = vld [vmem:[%s631] sm:$0x1]
      %v3592 = vld [vmem:[%s634] sm:$0x1]
      %3593 = vadd.xlane.f32.xlu0 %v3583
      %v3594 = vpop.xlane.xlu0 %3593
      %3595 = vadd.xlane.f32.xlu0 %v3584
      %v3596 = vpop.xlane.xlu0 %3595
      %3597 = vadd.xlane.f32.xlu0 %v3585
      %v3598 = vpop.xlane.xlu0 %3597
      %3599 = vadd.xlane.f32.xlu0 %v3586
      %v3600 = vpop.xlane.xlu0 %3599
      %3601 = vadd.xlane.f32.xlu0 %v3587
      %v3602 = vpop.xlane.xlu0 %3601
      %3603 = vadd.xlane.f32.xlu0 %v3588
      %v3604 = vpop.xlane.xlu0 %3603
      %3605 = vadd.xlane.f32.xlu0 %v3589
      %v3606 = vpop.xlane.xlu0 %3605
      %3607 = vadd.xlane.f32.xlu0 %v3590
      %v3608 = vpop.xlane.xlu0 %3607
      %v3609 = vmul.f32 %v3594, %v706
      %v3610 = vmul.f32 %v3596, %v706
      %v3611 = vmul.f32 %v3598, %v706
      %v3612 = vmul.f32 %v3600, %v706
      %v3613 = vmul.f32 %v3602, %v706
      %v3614 = vmul.f32 %v3604, %v706
      %v3615 = vmul.f32 %v3606, %v706
      %v3616 = vmul.f32 %v3608, %v706
      %v3617 = vsub.f32 %v3583, %v3609
      %v3618 = vsub.f32 %v3584, %v3610
      %v3619 = vsub.f32 %v3585, %v3611
      %v3620 = vsub.f32 %v3586, %v3612
      %v3621 = vsub.f32 %v3587, %v3613
      %v3622 = vsub.f32 %v3588, %v3614
      %v3623 = vsub.f32 %v3589, %v3615
      %v3624 = vsub.f32 %v3590, %v3616
      %v3625 = vmul.f32 %v3617, %v3617
      %v3626 = vmul.f32 %v3618, %v3618
      %v3627 = vmul.f32 %v3619, %v3619
      %v3628 = vmul.f32 %v3620, %v3620
      %v3629 = vmul.f32 %v3621, %v3621
      %v3630 = vmul.f32 %v3622, %v3622
      %v3631 = vmul.f32 %v3623, %v3623
      %v3632 = vmul.f32 %v3624, %v3624
      %3633 = vadd.xlane.f32.xlu0 %v3625
      %v3634 = vpop.xlane.xlu0 %3633
      %3635 = vadd.xlane.f32.xlu0 %v3626
      %v3636 = vpop.xlane.xlu0 %3635
      %3637 = vadd.xlane.f32.xlu0 %v3627
      %v3638 = vpop.xlane.xlu0 %3637
      %3639 = vadd.xlane.f32.xlu0 %v3628
      %v3640 = vpop.xlane.xlu0 %3639
      %3641 = vadd.xlane.f32.xlu0 %v3629
      %v3642 = vpop.xlane.xlu0 %3641
      %3643 = vadd.xlane.f32.xlu0 %v3630
      %v3644 = vpop.xlane.xlu0 %3643
      %3645 = vadd.xlane.f32.xlu0 %v3631
      %v3646 = vpop.xlane.xlu0 %3645
      %3647 = vadd.xlane.f32.xlu0 %v3632
      %v3648 = vpop.xlane.xlu0 %3647
      %v3649 = vmul.f32 %v3634, %v706
      %v3650 = vmul.f32 %v3636, %v706
      %v3651 = vmul.f32 %v3638, %v706
      %v3652 = vmul.f32 %v3640, %v706
      %v3653 = vmul.f32 %v3642, %v706
      %v3654 = vmul.f32 %v3644, %v706
      %v3655 = vmul.f32 %v3646, %v706
      %v3656 = vmul.f32 %v3648, %v706
      %v3657 = vadd.f32 %v3649, 1e-05
      %v3658 = vadd.f32 %v3650, 1e-05
      %v3659 = vadd.f32 %v3651, 1e-05
      %v3660 = vadd.f32 %v3652, 1e-05
      %v3661 = vadd.f32 %v3653, 1e-05
      %v3662 = vadd.f32 %v3654, 1e-05
      %v3663 = vadd.f32 %v3655, 1e-05
      %v3664 = vadd.f32 %v3656, 1e-05
      %v3665 = vrsqrt.pop %v3657
      %v3666 = vrsqrt.pop %v3658
      %v3667 = vrsqrt.pop %v3659
      %v3668 = vrsqrt.pop %v3660
      %v3669 = vrsqrt.pop %v3661
      %v3670 = vrsqrt.pop %v3662
      %v3671 = vrsqrt.pop %v3663
      %v3672 = vrsqrt.pop %v3664
      %v3673 = vmul.f32 %v3617, %v3665
      %v3674 = vmul.f32 %v3618, %v3666
      %v3675 = vmul.f32 %v3619, %v3667
      %v3676 = vmul.f32 %v3620, %v3668
      %v3677 = vmul.f32 %v3621, %v3669
      %v3678 = vmul.f32 %v3622, %v3670
      %v3679 = vmul.f32 %v3623, %v3671
      %v3680 = vmul.f32 %v3624, %v3672
      %v3682 = vlaneseq
      %v3683 = vshrl.u32 %v3682, 7
      %v3684 = vsub.s32 0, %v3683
      %v3685 = vrot.slane %v3591, %v3684
      %v3687 = vmul.f32 %v3673, %v3685
      %v3688 = vmul.f32 %v3674, %v3685
      %v3689 = vmul.f32 %v3675, %v3685
      %v3690 = vmul.f32 %v3676, %v3685
      %v3691 = vmul.f32 %v3677, %v3685
      %v3692 = vmul.f32 %v3678, %v3685
      %v3693 = vmul.f32 %v3679, %v3685
      %v3694 = vmul.f32 %v3680, %v3685
      %v3696 = vlaneseq
      %v3697 = vshrl.u32 %v3696, 7
      %v3698 = vsub.s32 0, %v3697
      %v3699 = vrot.slane %v3592, %v3698
      %v3701 = vadd.f32 %v3687, %v3699
      %v3702 = vadd.f32 %v3688, %v3699
      %v3703 = vadd.f32 %v3689, %v3699
      %v3704 = vadd.f32 %v3690, %v3699
      %v3705 = vadd.f32 %v3691, %v3699
      %v3706 = vadd.f32 %v3692, %v3699
      %v3707 = vadd.f32 %v3693, %v3699
      %v3708 = vadd.f32 %v3694, %v3699
      %v3709 = vld [vmem:[%s639] sm:$0xff]
      %v3710 = vld [vmem:[%s639 + $0x8] sm:$0xff]
      %v3711 = vld [vmem:[%s639 + $0x10] sm:$0xff]
      %v3712 = vld [vmem:[%s639 + $0x18] sm:$0xff]
      %v3713 = vld [vmem:[%s639 + $0x20] sm:$0xff]
      %v3714 = vld [vmem:[%s639 + $0x28] sm:$0xff]
      %v3715 = vld [vmem:[%s639 + $0x30] sm:$0xff]
      %v3716 = vld [vmem:[%s639 + $0x38] sm:$0xff]
      %v3717 = vld [vmem:[%s639 + $0x40] sm:$0xff]
      %v3718 = vld [vmem:[%s639 + $0x48] sm:$0xff]
      %v3719 = vld [vmem:[%s639 + $0x50] sm:$0xff]
      %v3720 = vld [vmem:[%s639 + $0x58] sm:$0xff]
      %v3721 = vld [vmem:[%s639 + $0x60] sm:$0xff]
      %v3722 = vld [vmem:[%s639 + $0x68] sm:$0xff]
      %v3723 = vld [vmem:[%s639 + $0x70] sm:$0xff]
      %v3724 = vld [vmem:[%s639 + $0x78] sm:$0xff]
      %v3725 = vld [vmem:[%s639 + $0x80] sm:$0xff]
      %v3726 = vld [vmem:[%s639 + $0x88] sm:$0xff]
      %v3727 = vld [vmem:[%s639 + $0x90] sm:$0xff]
      %v3728 = vld [vmem:[%s639 + $0x98] sm:$0xff]
      %v3729 = vld [vmem:[%s639 + $0xa0] sm:$0xff]
      %v3730 = vld [vmem:[%s639 + $0xa8] sm:$0xff]
      %v3731 = vld [vmem:[%s639 + $0xb0] sm:$0xff]
      %v3732 = vld [vmem:[%s639 + $0xb8] sm:$0xff]
      %v3733 = vld [vmem:[%s639 + $0xc0] sm:$0xff]
      %v3734 = vld [vmem:[%s639 + $0xc8] sm:$0xff]
      %v3735 = vld [vmem:[%s639 + $0xd0] sm:$0xff]
      %v3736 = vld [vmem:[%s639 + $0xd8] sm:$0xff]
      %v3737 = vld [vmem:[%s639 + $0xe0] sm:$0xff]
      %v3738 = vld [vmem:[%s639 + $0xe8] sm:$0xff]
      %v3739 = vld [vmem:[%s639 + $0xf0] sm:$0xff]
      %v3740 = vld [vmem:[%s639 + $0xf8] sm:$0xff]
      %v3741 = vpack.c.bf16 %v3702, %v3701
      %v3742 = vpack.c.bf16 %v3704, %v3703
      %v3743 = vpack.c.bf16 %v3706, %v3705
      %v3744 = vpack.c.bf16 %v3708, %v3707
      %v3745 = vld [vmem:[%s643] sm:$0xf]
      %v3747 = vlaneseq
      %v3748 = vshrl.u32 %v3747, 7
      %v3749 = vsub.s32 0, %v3748
      %v3750 = vrot.slane %v3745, %v3749
      %v3751 = vlaneseq
      %v3752 = vshrl.u32 %v3751, 7
      %v3753 = vsub.s32 1, %v3752
      %v3754 = vrot.slane %v3745, %v3753
      %v3755 = vlaneseq
      %v3756 = vshrl.u32 %v3755, 7
      %v3757 = vsub.s32 2, %v3756
      %v3758 = vrot.slane %v3745, %v3757
      %v3759 = vlaneseq
      %v3760 = vshrl.u32 %v3759, 7
      %v3761 = vsub.s32 3, %v3760
      %v3762 = vrot.slane %v3745, %v3761
      %v3799 = vunpack.c.l.b16 %v3709
      %v3800 = vunpack.c.h.b16 %v3709
      %v3801 = vunpack.c.l.b16 %v3710
      %v3802 = vunpack.c.h.b16 %v3710
      %v3803 = vunpack.c.l.b16 %v3711
      %v3804 = vunpack.c.h.b16 %v3711
      %v3805 = vunpack.c.l.b16 %v3712
      %v3806 = vunpack.c.h.b16 %v3712
      %v3807 = vunpack.c.l.b16 %v3713
      %v3808 = vunpack.c.h.b16 %v3713
      %v3809 = vunpack.c.l.b16 %v3714
      %v3810 = vunpack.c.h.b16 %v3714
      %v3811 = vunpack.c.l.b16 %v3715
      %v3812 = vunpack.c.h.b16 %v3715
      %v3813 = vunpack.c.l.b16 %v3716
      %v3814 = vunpack.c.h.b16 %v3716
      %v3815 = vunpack.c.l.b16 %v3717
      %v3816 = vunpack.c.h.b16 %v3717
      %v3817 = vunpack.c.l.b16 %v3718
      %v3818 = vunpack.c.h.b16 %v3718
      %v3819 = vunpack.c.l.b16 %v3719
      %v3820 = vunpack.c.h.b16 %v3719
      %v3821 = vunpack.c.l.b16 %v3720
      %v3822 = vunpack.c.h.b16 %v3720
      %v3823 = vunpack.c.l.b16 %v3721
      %v3824 = vunpack.c.h.b16 %v3721
      %v3825 = vunpack.c.l.b16 %v3722
      %v3826 = vunpack.c.h.b16 %v3722
      %v3827 = vunpack.c.l.b16 %v3723
      %v3828 = vunpack.c.h.b16 %v3723
      %v3829 = vunpack.c.l.b16 %v3724
      %v3830 = vunpack.c.h.b16 %v3724
      %v3831 = vunpack.c.l.b16 %v3725
      %v3832 = vunpack.c.h.b16 %v3725
      %v3833 = vunpack.c.l.b16 %v3726
      %v3834 = vunpack.c.h.b16 %v3726
      %v3835 = vunpack.c.l.b16 %v3727
      %v3836 = vunpack.c.h.b16 %v3727
      %v3837 = vunpack.c.l.b16 %v3728
      %v3838 = vunpack.c.h.b16 %v3728
      %v3839 = vunpack.c.l.b16 %v3729
      %v3840 = vunpack.c.h.b16 %v3729
      %v3841 = vunpack.c.l.b16 %v3730
      %v3842 = vunpack.c.h.b16 %v3730
      %v3843 = vunpack.c.l.b16 %v3731
      %v3844 = vunpack.c.h.b16 %v3731
      %v3845 = vunpack.c.l.b16 %v3732
      %v3846 = vunpack.c.h.b16 %v3732
      %v3847 = vunpack.c.l.b16 %v3733
      %v3848 = vunpack.c.h.b16 %v3733
      %v3849 = vunpack.c.l.b16 %v3734
      %v3850 = vunpack.c.h.b16 %v3734
      %v3851 = vunpack.c.l.b16 %v3735
      %v3852 = vunpack.c.h.b16 %v3735
      %v3853 = vunpack.c.l.b16 %v3736
      %v3854 = vunpack.c.h.b16 %v3736
      %v3855 = vunpack.c.l.b16 %v3737
      %v3856 = vunpack.c.h.b16 %v3737
      %v3857 = vunpack.c.l.b16 %v3738
      %v3858 = vunpack.c.h.b16 %v3738
      %v3859 = vunpack.c.l.b16 %v3739
      %v3860 = vunpack.c.h.b16 %v3739
      %v3861 = vunpack.c.l.b16 %v3740
      %v3862 = vunpack.c.h.b16 %v3740
      %v3863 = vpack.c.b16 %v3803, %v3799
      %v3864 = vpack.c.b16 %v3804, %v3800
      %v3865 = vpack.c.b16 %v3805, %v3801
      %v3866 = vpack.c.b16 %v3806, %v3802
      %v3867 = vpack.c.b16 %v3811, %v3807
      %v3868 = vpack.c.b16 %v3812, %v3808
      %v3869 = vpack.c.b16 %v3813, %v3809
      %v3870 = vpack.c.b16 %v3814, %v3810
      %v3871 = vpack.c.b16 %v3819, %v3815
      %v3872 = vpack.c.b16 %v3820, %v3816
      %v3873 = vpack.c.b16 %v3821, %v3817
      %v3874 = vpack.c.b16 %v3822, %v3818
      %v3875 = vpack.c.b16 %v3827, %v3823
      %v3876 = vpack.c.b16 %v3828, %v3824
      %v3877 = vpack.c.b16 %v3829, %v3825
      %v3878 = vpack.c.b16 %v3830, %v3826
      %v3879 = vpack.c.b16 %v3835, %v3831
      %v3880 = vpack.c.b16 %v3836, %v3832
      %v3881 = vpack.c.b16 %v3837, %v3833
      %v3882 = vpack.c.b16 %v3838, %v3834
      %v3883 = vpack.c.b16 %v3843, %v3839
      %v3884 = vpack.c.b16 %v3844, %v3840
      %v3885 = vpack.c.b16 %v3845, %v3841
      %v3886 = vpack.c.b16 %v3846, %v3842
      %v3887 = vpack.c.b16 %v3851, %v3847
      %v3888 = vpack.c.b16 %v3852, %v3848
      %v3889 = vpack.c.b16 %v3853, %v3849
      %v3890 = vpack.c.b16 %v3854, %v3850
      %v3891 = vpack.c.b16 %v3859, %v3855
      %v3892 = vpack.c.b16 %v3860, %v3856
      %v3893 = vpack.c.b16 %v3861, %v3857
      %v3894 = vpack.c.b16 %v3862, %v3858
      %3927 = vmatprep.subr.bf16.mxu0 %v3892
      %3928 = vmatpush1.bf16.msra.mxu0 %v3891
      %3929 = vmatprep.subr.bf16.mxu0 %v3888
      %3930 = vmatpush1.bf16.msra.mxu0 %v3887
      %3931 = vmatprep.subr.bf16.mxu0 %v3884
      %3932 = vmatpush1.bf16.msra.mxu0 %v3883
      %3933 = vmatprep.subr.bf16.mxu0 %v3880
      %3934 = vmatpush1.bf16.msra.mxu0 %v3879
      %3935 = vmatprep.subr.bf16.mxu0 %v3876
      %3936 = vmatpush1.bf16.msra.mxu0 %v3875
      %3937 = vmatprep.subr.bf16.mxu0 %v3872
      %3938 = vmatpush1.bf16.msra.mxu0 %v3871
      %3939 = vmatprep.subr.bf16.mxu0 %v3868
      %3940 = vmatpush1.bf16.msra.mxu0 %v3867
      %3941 = vmatprep.subr.bf16.mxu0 %v3864
      %3942 = vmatpush1.bf16.msra.mxu0 %v3863
      %3943 = vmatprep.subr.bf16.mxu0 0
      %3944 = vmatpush2.bf16.msra.mxu0 0
      %3945 = vmatprep.subr.bf16.mxu0 0
      %3946 = vmatpush2.bf16.msra.mxu0 0
      %3947 = vmatprep.subr.bf16.mxu0 0
      %3948 = vmatpush2.bf16.msra.mxu0 0
      %3949 = vmatprep.subr.bf16.mxu0 0
      %3950 = vmatpush2.bf16.msra.mxu0 0
      %3951 = vmatprep.subr.bf16.mxu0 0
      %3952 = vmatpush2.bf16.msra.mxu0 0
      %3953 = vmatprep.subr.bf16.mxu0 0
      %3954 = vmatpush2.bf16.msra.mxu0 0
      %3955 = vmatprep.subr.bf16.mxu0 0
      %3956 = vmatpush2.bf16.msra.mxu0 0
      %3957 = vmatprep.subr.bf16.mxu0 0
      %3958 = vmatpush2.bf16.msra.mxu0 0
      %3959 = vmatprep.mubr.bf16.mxu0 0
      %3960 = vmatmul.mubr.bf16.gmra.mxu0 %v3741
      %v3961 = vpop.f32.mrf.mxu0
      %v3962 = vadd.f32 %v3750, %v3961
      %v3963 = vpop.f32.mrf.mxu0
      %v3964 = vadd.f32 %v3754, %v3963
      %v3965 = vpop.f32.mrf.mxu0
      %v3966 = vadd.f32 %v3750, %v3965
      %v3967 = vpop.f32.mrf.mxu0
      %v3968 = vadd.f32 %v3754, %v3967
      %3969 = vmatprep.mubr.bf16.mxu0 0
      %3970 = vmatmul.mubr.bf16.gmra.mxu0 %v3742
      %v3971 = vpop.f32.mrf.mxu0
      %v3972 = vadd.f32 %v3750, %v3971
      %v3973 = vpop.f32.mrf.mxu0
      %v3974 = vadd.f32 %v3754, %v3973
      %v3975 = vpop.f32.mrf.mxu0
      %v3976 = vadd.f32 %v3750, %v3975
      %v3977 = vpop.f32.mrf.mxu0
      %v3978 = vadd.f32 %v3754, %v3977
      %3979 = vmatprep.mubr.bf16.mxu0 0
      %3980 = vmatmul.mubr.bf16.gmra.mxu0 %v3743
      %v3981 = vpop.f32.mrf.mxu0
      %v3982 = vadd.f32 %v3750, %v3981
      %v3983 = vpop.f32.mrf.mxu0
      %v3984 = vadd.f32 %v3754, %v3983
      %v3985 = vpop.f32.mrf.mxu0
      %v3986 = vadd.f32 %v3750, %v3985
      %v3987 = vpop.f32.mrf.mxu0
      %v3988 = vadd.f32 %v3754, %v3987
      %3989 = vmatprep.mubr.bf16.mxu0 0
      %3990 = vmatmul.mubr.bf16.gmra.mxu0 %v3744
      %v3991 = vpop.f32.mrf.mxu0
      %v3992 = vadd.f32 %v3750, %v3991
      %v3993 = vpop.f32.mrf.mxu0
      %v3994 = vadd.f32 %v3754, %v3993
      %v3995 = vpop.f32.mrf.mxu0
      %v3996 = vadd.f32 %v3750, %v3995
      %v3997 = vpop.f32.mrf.mxu0
      %v3998 = vadd.f32 %v3754, %v3997
      %3999 = vdwg.mxu0
      %4000 = vmatprep.subr.bf16.mxu0 %v3894
      %4001 = vmatpush1.bf16.msra.mxu0 %v3893
      %4002 = vmatprep.subr.bf16.mxu0 %v3890
      %4003 = vmatpush1.bf16.msra.mxu0 %v3889
      %4004 = vmatprep.subr.bf16.mxu0 %v3886
      %4005 = vmatpush1.bf16.msra.mxu0 %v3885
      %4006 = vmatprep.subr.bf16.mxu0 %v3882
      %4007 = vmatpush1.bf16.msra.mxu0 %v3881
      %4008 = vmatprep.subr.bf16.mxu0 %v3878
      %4009 = vmatpush1.bf16.msra.mxu0 %v3877
      %4010 = vmatprep.subr.bf16.mxu0 %v3874
      %4011 = vmatpush1.bf16.msra.mxu0 %v3873
      %4012 = vmatprep.subr.bf16.mxu0 %v3870
      %4013 = vmatpush1.bf16.msra.mxu0 %v3869
      %4014 = vmatprep.subr.bf16.mxu0 %v3866
      %4015 = vmatpush1.bf16.msra.mxu0 %v3865
      %4016 = vmatprep.subr.bf16.mxu0 0
      %4017 = vmatpush2.bf16.msra.mxu0 0
      %4018 = vmatprep.subr.bf16.mxu0 0
      %4019 = vmatpush2.bf16.msra.mxu0 0
      %4020 = vmatprep.subr.bf16.mxu0 0
      %4021 = vmatpush2.bf16.msra.mxu0 0
      %4022 = vmatprep.subr.bf16.mxu0 0
      %4023 = vmatpush2.bf16.msra.mxu0 0
      %4024 = vmatprep.subr.bf16.mxu0 0
      %4025 = vmatpush2.bf16.msra.mxu0 0
      %4026 = vmatprep.subr.bf16.mxu0 0
      %4027 = vmatpush2.bf16.msra.mxu0 0
      %4028 = vmatprep.subr.bf16.mxu0 0
      %4029 = vmatpush2.bf16.msra.mxu0 0
      %4030 = vmatprep.subr.bf16.mxu0 0
      %4031 = vmatpush2.bf16.msra.mxu0 0
      %4032 = vmatprep.mubr.bf16.mxu0 0
      %4033 = vmatmul.mubr.bf16.gmra.mxu0 %v3741
      %v4034 = vpop.f32.mrf.mxu0
      %v4035 = vadd.f32 %v3758, %v4034
      %v4036 = vpop.f32.mrf.mxu0
      %v4037 = vadd.f32 %v3762, %v4036
      %v4038 = vpop.f32.mrf.mxu0
      %v4039 = vadd.f32 %v3758, %v4038
      %v4040 = vpop.f32.mrf.mxu0
      %v4041 = vadd.f32 %v3762, %v4040
      %4042 = vmatprep.mubr.bf16.mxu0 0
      %4043 = vmatmul.mubr.bf16.gmra.mxu0 %v3742
      %v4044 = vpop.f32.mrf.mxu0
      %v4045 = vadd.f32 %v3758, %v4044
      %v4046 = vpop.f32.mrf.mxu0
      %v4047 = vadd.f32 %v3762, %v4046
      %v4048 = vpop.f32.mrf.mxu0
      %v4049 = vadd.f32 %v3758, %v4048
      %v4050 = vpop.f32.mrf.mxu0
      %v4051 = vadd.f32 %v3762, %v4050
      %4052 = vmatprep.mubr.bf16.mxu0 0
      %4053 = vmatmul.mubr.bf16.gmra.mxu0 %v3743
      %v4054 = vpop.f32.mrf.mxu0
      %v4055 = vadd.f32 %v3758, %v4054
      %v4056 = vpop.f32.mrf.mxu0
      %v4057 = vadd.f32 %v3762, %v4056
      %v4058 = vpop.f32.mrf.mxu0
      %v4059 = vadd.f32 %v3758, %v4058
      %v4060 = vpop.f32.mrf.mxu0
      %v4061 = vadd.f32 %v3762, %v4060
      %4062 = vmatprep.mubr.bf16.mxu0 0
      %4063 = vmatmul.mubr.bf16.gmra.mxu0 %v3744
      %v4064 = vpop.f32.mrf.mxu0
      %v4065 = vadd.f32 %v3758, %v4064
      %v4066 = vpop.f32.mrf.mxu0
      %v4067 = vadd.f32 %v3762, %v4066
      %v4068 = vpop.f32.mrf.mxu0
      %v4069 = vadd.f32 %v3758, %v4068
      %v4070 = vpop.f32.mrf.mxu0
      %v4071 = vadd.f32 %v3762, %v4070
      %4072 = vdwg.mxu0
      %v4073 = vmul.f32 %v3962, 0.5
      %v4074 = vmul.f32 %v3964, 0.5
      %v4075 = vmul.f32 %v4035, 0.5
      %v4076 = vmul.f32 %v4037, 0.5
      %v4077 = vmul.f32 %v3966, 0.5
      %v4078 = vmul.f32 %v3968, 0.5
      %v4079 = vmul.f32 %v4039, 0.5
      %v4080 = vmul.f32 %v4041, 0.5
      %v4081 = vmul.f32 %v3972, 0.5
      %v4082 = vmul.f32 %v3974, 0.5
      %v4083 = vmul.f32 %v4045, 0.5
      %v4084 = vmul.f32 %v4047, 0.5
      %v4085 = vmul.f32 %v3976, 0.5
      %v4086 = vmul.f32 %v3978, 0.5
      %v4087 = vmul.f32 %v4049, 0.5
      %v4088 = vmul.f32 %v4051, 0.5
      %v4089 = vmul.f32 %v3982, 0.5
      %v4090 = vmul.f32 %v3984, 0.5
      %v4091 = vmul.f32 %v4055, 0.5
      %v4092 = vmul.f32 %v4057, 0.5
      %v4093 = vmul.f32 %v3986, 0.5
      %v4094 = vmul.f32 %v3988, 0.5
      %v4095 = vmul.f32 %v4059, 0.5
      %v4096 = vmul.f32 %v4061, 0.5
      %v4097 = vmul.f32 %v3992, 0.5
      %v4098 = vmul.f32 %v3994, 0.5
      %v4099 = vmul.f32 %v4065, 0.5
      %v4100 = vmul.f32 %v4067, 0.5
      %v4101 = vmul.f32 %v3996, 0.5
      %v4102 = vmul.f32 %v3998, 0.5
      %v4103 = vmul.f32 %v4069, 0.5
      %v4104 = vmul.f32 %v4071, 0.5
      %v4105 = vmul.f32 %v3962, 0.044715
      %v4106 = vmul.f32 %v3964, 0.044715
      %v4107 = vmul.f32 %v4035, 0.044715
      %v4108 = vmul.f32 %v4037, 0.044715
      %v4109 = vmul.f32 %v3966, 0.044715
      %v4110 = vmul.f32 %v3968, 0.044715
      %v4111 = vmul.f32 %v4039, 0.044715
      %v4112 = vmul.f32 %v4041, 0.044715
      %v4113 = vmul.f32 %v3972, 0.044715
      %v4114 = vmul.f32 %v3974, 0.044715
      %v4115 = vmul.f32 %v4045, 0.044715
      %v4116 = vmul.f32 %v4047, 0.044715
      %v4117 = vmul.f32 %v3976, 0.044715
      %v4118 = vmul.f32 %v3978, 0.044715
      %v4119 = vmul.f32 %v4049, 0.044715
      %v4120 = vmul.f32 %v4051, 0.044715
      %v4121 = vmul.f32 %v3982, 0.044715
      %v4122 = vmul.f32 %v3984, 0.044715
      %v4123 = vmul.f32 %v4055, 0.044715
      %v4124 = vmul.f32 %v4057, 0.044715
      %v4125 = vmul.f32 %v3986, 0.044715
      %v4126 = vmul.f32 %v3988, 0.044715
      %v4127 = vmul.f32 %v4059, 0.044715
      %v4128 = vmul.f32 %v4061, 0.044715
      %v4129 = vmul.f32 %v3992, 0.044715
      %v4130 = vmul.f32 %v3994, 0.044715
      %v4131 = vmul.f32 %v4065, 0.044715
      %v4132 = vmul.f32 %v4067, 0.044715
      %v4133 = vmul.f32 %v3996, 0.044715
      %v4134 = vmul.f32 %v3998, 0.044715
      %v4135 = vmul.f32 %v4069, 0.044715
      %v4136 = vmul.f32 %v4071, 0.044715
      %v4137 = vmul.f32 %v4105, %v3962
      %v4138 = vmul.f32 %v4106, %v3964
      %v4139 = vmul.f32 %v4107, %v4035
      %v4140 = vmul.f32 %v4108, %v4037
      %v4141 = vmul.f32 %v4109, %v3966
      %v4142 = vmul.f32 %v4110, %v3968
      %v4143 = vmul.f32 %v4111, %v4039
      %v4144 = vmul.f32 %v4112, %v4041
      %v4145 = vmul.f32 %v4113, %v3972
      %v4146 = vmul.f32 %v4114, %v3974
      %v4147 = vmul.f32 %v4115, %v4045
      %v4148 = vmul.f32 %v4116, %v4047
      %v4149 = vmul.f32 %v4117, %v3976
      %v4150 = vmul.f32 %v4118, %v3978
      %v4151 = vmul.f32 %v4119, %v4049
      %v4152 = vmul.f32 %v4120, %v4051
      %v4153 = vmul.f32 %v4121, %v3982
      %v4154 = vmul.f32 %v4122, %v3984
      %v4155 = vmul.f32 %v4123, %v4055
      %v4156 = vmul.f32 %v4124, %v4057
      %v4157 = vmul.f32 %v4125, %v3986
      %v4158 = vmul.f32 %v4126, %v3988
      %v4159 = vmul.f32 %v4127, %v4059
      %v4160 = vmul.f32 %v4128, %v4061
      %v4161 = vmul.f32 %v4129, %v3992
      %v4162 = vmul.f32 %v4130, %v3994
      %v4163 = vmul.f32 %v4131, %v4065
      %v4164 = vmul.f32 %v4132, %v4067
      %v4165 = vmul.f32 %v4133, %v3996
      %v4166 = vmul.f32 %v4134, %v3998
      %v4167 = vmul.f32 %v4135, %v4069
      %v4168 = vmul.f32 %v4136, %v4071
      %v4169 = vmul.f32 %v4137, %v3962
      %v4170 = vmul.f32 %v4138, %v3964
      %v4171 = vmul.f32 %v4139, %v4035
      %v4172 = vmul.f32 %v4140, %v4037
      %v4173 = vmul.f32 %v4141, %v3966
      %v4174 = vmul.f32 %v4142, %v3968
      %v4175 = vmul.f32 %v4143, %v4039
      %v4176 = vmul.f32 %v4144, %v4041
      %v4177 = vmul.f32 %v4145, %v3972
      %v4178 = vmul.f32 %v4146, %v3974
      %v4179 = vmul.f32 %v4147, %v4045
      %v4180 = vmul.f32 %v4148, %v4047
      %v4181 = vmul.f32 %v4149, %v3976
      %v4182 = vmul.f32 %v4150, %v3978
      %v4183 = vmul.f32 %v4151, %v4049
      %v4184 = vmul.f32 %v4152, %v4051
      %v4185 = vmul.f32 %v4153, %v3982
      %v4186 = vmul.f32 %v4154, %v3984
      %v4187 = vmul.f32 %v4155, %v4055
      %v4188 = vmul.f32 %v4156, %v4057
      %v4189 = vmul.f32 %v4157, %v3986
      %v4190 = vmul.f32 %v4158, %v3988
      %v4191 = vmul.f32 %v4159, %v4059
      %v4192 = vmul.f32 %v4160, %v4061
      %v4193 = vmul.f32 %v4161, %v3992
      %v4194 = vmul.f32 %v4162, %v3994
      %v4195 = vmul.f32 %v4163, %v4065
      %v4196 = vmul.f32 %v4164, %v4067
      %v4197 = vmul.f32 %v4165, %v3996
      %v4198 = vmul.f32 %v4166, %v3998
      %v4199 = vmul.f32 %v4167, %v4069
      %v4200 = vmul.f32 %v4168, %v4071
      %v4201 = vadd.f32 %v3962, %v4169
      %v4202 = vadd.f32 %v3964, %v4170
      %v4203 = vadd.f32 %v4035, %v4171
      %v4204 = vadd.f32 %v4037, %v4172
      %v4205 = vadd.f32 %v3966, %v4173
      %v4206 = vadd.f32 %v3968, %v4174
      %v4207 = vadd.f32 %v4039, %v4175
      %v4208 = vadd.f32 %v4041, %v4176
      %v4209 = vadd.f32 %v3972, %v4177
      %v4210 = vadd.f32 %v3974, %v4178
      %v4211 = vadd.f32 %v4045, %v4179
      %v4212 = vadd.f32 %v4047, %v4180
      %v4213 = vadd.f32 %v3976, %v4181
      %v4214 = vadd.f32 %v3978, %v4182
      %v4215 = vadd.f32 %v4049, %v4183
      %v4216 = vadd.f32 %v4051, %v4184
      %v4217 = vadd.f32 %v3982, %v4185
      %v4218 = vadd.f32 %v3984, %v4186
      %v4219 = vadd.f32 %v4055, %v4187
      %v4220 = vadd.f32 %v4057, %v4188
      %v4221 = vadd.f32 %v3986, %v4189
      %v4222 = vadd.f32 %v3988, %v4190
      %v4223 = vadd.f32 %v4059, %v4191
      %v4224 = vadd.f32 %v4061, %v4192
      %v4225 = vadd.f32 %v3992, %v4193
      %v4226 = vadd.f32 %v3994, %v4194
      %v4227 = vadd.f32 %v4065, %v4195
      %v4228 = vadd.f32 %v4067, %v4196
      %v4229 = vadd.f32 %v3996, %v4197
      %v4230 = vadd.f32 %v3998, %v4198
      %v4231 = vadd.f32 %v4069, %v4199
      %v4232 = vadd.f32 %v4071, %v4200
      %v4233 = vmul.f32 %v4201, 0.7978846
      %v4234 = vmul.f32 %v4202, 0.7978846
      %v4235 = vmul.f32 %v4203, 0.7978846
      %v4236 = vmul.f32 %v4204, 0.7978846
      %v4237 = vmul.f32 %v4205, 0.7978846
      %v4238 = vmul.f32 %v4206, 0.7978846
      %v4239 = vmul.f32 %v4207, 0.7978846
      %v4240 = vmul.f32 %v4208, 0.7978846
      %v4241 = vmul.f32 %v4209, 0.7978846
      %v4242 = vmul.f32 %v4210, 0.7978846
      %v4243 = vmul.f32 %v4211, 0.7978846
      %v4244 = vmul.f32 %v4212, 0.7978846
      %v4245 = vmul.f32 %v4213, 0.7978846
      %v4246 = vmul.f32 %v4214, 0.7978846
      %v4247 = vmul.f32 %v4215, 0.7978846
      %v4248 = vmul.f32 %v4216, 0.7978846
      %v4249 = vmul.f32 %v4217, 0.7978846
      %v4250 = vmul.f32 %v4218, 0.7978846
      %v4251 = vmul.f32 %v4219, 0.7978846
      %v4252 = vmul.f32 %v4220, 0.7978846
      %v4253 = vmul.f32 %v4221, 0.7978846
      %v4254 = vmul.f32 %v4222, 0.7978846
      %v4255 = vmul.f32 %v4223, 0.7978846
      %v4256 = vmul.f32 %v4224, 0.7978846
      %v4257 = vmul.f32 %v4225, 0.7978846
      %v4258 = vmul.f32 %v4226, 0.7978846
      %v4259 = vmul.f32 %v4227, 0.7978846
      %v4260 = vmul.f32 %v4228, 0.7978846
      %v4261 = vmul.f32 %v4229, 0.7978846
      %v4262 = vmul.f32 %v4230, 0.7978846
      %v4263 = vmul.f32 %v4231, 0.7978846
      %v4264 = vmul.f32 %v4232, 0.7978846
      %v4265 = vtanh.pop %v4233
      %v4266 = vtanh.pop %v4234
      %v4267 = vtanh.pop %v4235
      %v4268 = vtanh.pop %v4236
      %v4269 = vtanh.pop %v4237
      %v4270 = vtanh.pop %v4238
      %v4271 = vtanh.pop %v4239
      %v4272 = vtanh.pop %v4240
      %v4273 = vtanh.pop %v4241
      %v4274 = vtanh.pop %v4242
      %v4275 = vtanh.pop %v4243
      %v4276 = vtanh.pop %v4244
      %v4277 = vtanh.pop %v4245
      %v4278 = vtanh.pop %v4246
      %v4279 = vtanh.pop %v4247
      %v4280 = vtanh.pop %v4248
      %v4281 = vtanh.pop %v4249
      %v4282 = vtanh.pop %v4250
      %v4283 = vtanh.pop %v4251
      %v4284 = vtanh.pop %v4252
      %v4285 = vtanh.pop %v4253
      %v4286 = vtanh.pop %v4254
      %v4287 = vtanh.pop %v4255
      %v4288 = vtanh.pop %v4256
      %v4289 = vtanh.pop %v4257
      %v4290 = vtanh.pop %v4258
      %v4291 = vtanh.pop %v4259
      %v4292 = vtanh.pop %v4260
      %v4293 = vtanh.pop %v4261
      %v4294 = vtanh.pop %v4262
      %v4295 = vtanh.pop %v4263
      %v4296 = vtanh.pop %v4264
      %v4297 = vadd.f32 %v4265, 1.0
      %v4298 = vadd.f32 %v4266, 1.0
      %v4299 = vadd.f32 %v4267, 1.0
      %v4300 = vadd.f32 %v4268, 1.0
      %v4301 = vadd.f32 %v4269, 1.0
      %v4302 = vadd.f32 %v4270, 1.0
      %v4303 = vadd.f32 %v4271, 1.0
      %v4304 = vadd.f32 %v4272, 1.0
      %v4305 = vadd.f32 %v4273, 1.0
      %v4306 = vadd.f32 %v4274, 1.0
      %v4307 = vadd.f32 %v4275, 1.0
      %v4308 = vadd.f32 %v4276, 1.0
      %v4309 = vadd.f32 %v4277, 1.0
      %v4310 = vadd.f32 %v4278, 1.0
      %v4311 = vadd.f32 %v4279, 1.0
      %v4312 = vadd.f32 %v4280, 1.0
      %v4313 = vadd.f32 %v4281, 1.0
      %v4314 = vadd.f32 %v4282, 1.0
      %v4315 = vadd.f32 %v4283, 1.0
      %v4316 = vadd.f32 %v4284, 1.0
      %v4317 = vadd.f32 %v4285, 1.0
      %v4318 = vadd.f32 %v4286, 1.0
      %v4319 = vadd.f32 %v4287, 1.0
      %v4320 = vadd.f32 %v4288, 1.0
      %v4321 = vadd.f32 %v4289, 1.0
      %v4322 = vadd.f32 %v4290, 1.0
      %v4323 = vadd.f32 %v4291, 1.0
      %v4324 = vadd.f32 %v4292, 1.0
      %v4325 = vadd.f32 %v4293, 1.0
      %v4326 = vadd.f32 %v4294, 1.0
      %v4327 = vadd.f32 %v4295, 1.0
      %v4328 = vadd.f32 %v4296, 1.0
      %v4329 = vmul.f32 %v4073, %v4297
      %v4330 = vmul.f32 %v4074, %v4298
      %v4331 = vmul.f32 %v4075, %v4299
      %v4332 = vmul.f32 %v4076, %v4300
      %v4333 = vmul.f32 %v4077, %v4301
      %v4334 = vmul.f32 %v4078, %v4302
      %v4335 = vmul.f32 %v4079, %v4303
      %v4336 = vmul.f32 %v4080, %v4304
      %v4337 = vmul.f32 %v4081, %v4305
      %v4338 = vmul.f32 %v4082, %v4306
      %v4339 = vmul.f32 %v4083, %v4307
      %v4340 = vmul.f32 %v4084, %v4308
      %v4341 = vmul.f32 %v4085, %v4309
      %v4342 = vmul.f32 %v4086, %v4310
      %v4343 = vmul.f32 %v4087, %v4311
      %v4344 = vmul.f32 %v4088, %v4312
      %v4345 = vmul.f32 %v4089, %v4313
      %v4346 = vmul.f32 %v4090, %v4314
      %v4347 = vmul.f32 %v4091, %v4315
      %v4348 = vmul.f32 %v4092, %v4316
      %v4349 = vmul.f32 %v4093, %v4317
      %v4350 = vmul.f32 %v4094, %v4318
      %v4351 = vmul.f32 %v4095, %v4319
      %v4352 = vmul.f32 %v4096, %v4320
      %v4353 = vmul.f32 %v4097, %v4321
      %v4354 = vmul.f32 %v4098, %v4322
      %v4355 = vmul.f32 %v4099, %v4323
      %v4356 = vmul.f32 %v4100, %v4324
      %v4357 = vmul.f32 %v4101, %v4325
      %v4358 = vmul.f32 %v4102, %v4326
      %v4359 = vmul.f32 %v4103, %v4327
      %v4360 = vmul.f32 %v4104, %v4328
      %v4361 = vld [vmem:[%s648] sm:$0xf]
      %v4362 = vld [vmem:[%s648 + $0x4] sm:$0xf]
      %v4363 = vld [vmem:[%s648 + $0x8] sm:$0xf]
      %v4364 = vld [vmem:[%s648 + $0xc] sm:$0xf]
      %v4365 = vld [vmem:[%s648 + $0x10] sm:$0xf]
      %v4366 = vld [vmem:[%s648 + $0x14] sm:$0xf]
      %v4367 = vld [vmem:[%s648 + $0x18] sm:$0xf]
      %v4368 = vld [vmem:[%s648 + $0x1c] sm:$0xf]
      %v4369 = vld [vmem:[%s648 + $0x20] sm:$0xf]
      %v4370 = vld [vmem:[%s648 + $0x24] sm:$0xf]
      %v4371 = vld [vmem:[%s648 + $0x28] sm:$0xf]
      %v4372 = vld [vmem:[%s648 + $0x2c] sm:$0xf]
      %v4373 = vld [vmem:[%s648 + $0x30] sm:$0xf]
      %v4374 = vld [vmem:[%s648 + $0x34] sm:$0xf]
      %v4375 = vld [vmem:[%s648 + $0x38] sm:$0xf]
      %v4376 = vld [vmem:[%s648 + $0x3c] sm:$0xf]
      %v4377 = vld [vmem:[%s648 + $0x40] sm:$0xf]
      %v4378 = vld [vmem:[%s648 + $0x44] sm:$0xf]
      %v4379 = vld [vmem:[%s648 + $0x48] sm:$0xf]
      %v4380 = vld [vmem:[%s648 + $0x4c] sm:$0xf]
      %v4381 = vld [vmem:[%s648 + $0x50] sm:$0xf]
      %v4382 = vld [vmem:[%s648 + $0x54] sm:$0xf]
      %v4383 = vld [vmem:[%s648 + $0x58] sm:$0xf]
      %v4384 = vld [vmem:[%s648 + $0x5c] sm:$0xf]
      %v4385 = vld [vmem:[%s648 + $0x60] sm:$0xf]
      %v4386 = vld [vmem:[%s648 + $0x64] sm:$0xf]
      %v4387 = vld [vmem:[%s648 + $0x68] sm:$0xf]
      %v4388 = vld [vmem:[%s648 + $0x6c] sm:$0xf]
      %v4389 = vld [vmem:[%s648 + $0x70] sm:$0xf]
      %v4390 = vld [vmem:[%s648 + $0x74] sm:$0xf]
      %v4391 = vld [vmem:[%s648 + $0x78] sm:$0xf]
      %v4392 = vld [vmem:[%s648 + $0x7c] sm:$0xf]
      %v4393 = vld [vmem:[%s648 + $0x80] sm:$0xf]
      %v4394 = vld [vmem:[%s648 + $0x84] sm:$0xf]
      %v4395 = vld [vmem:[%s648 + $0x88] sm:$0xf]
      %v4396 = vld [vmem:[%s648 + $0x8c] sm:$0xf]
      %v4397 = vld [vmem:[%s648 + $0x90] sm:$0xf]
      %v4398 = vld [vmem:[%s648 + $0x94] sm:$0xf]
      %v4399 = vld [vmem:[%s648 + $0x98] sm:$0xf]
      %v4400 = vld [vmem:[%s648 + $0x9c] sm:$0xf]
      %v4401 = vld [vmem:[%s648 + $0xa0] sm:$0xf]
      %v4402 = vld [vmem:[%s648 + $0xa4] sm:$0xf]
      %v4403 = vld [vmem:[%s648 + $0xa8] sm:$0xf]
      %v4404 = vld [vmem:[%s648 + $0xac] sm:$0xf]
      %v4405 = vld [vmem:[%s648 + $0xb0] sm:$0xf]
      %v4406 = vld [vmem:[%s648 + $0xb4] sm:$0xf]
      %v4407 = vld [vmem:[%s648 + $0xb8] sm:$0xf]
      %v4408 = vld [vmem:[%s648 + $0xbc] sm:$0xf]
      %v4409 = vld [vmem:[%s648 + $0xc0] sm:$0xf]
      %v4410 = vld [vmem:[%s648 + $0xc4] sm:$0xf]
      %v4411 = vld [vmem:[%s648 + $0xc8] sm:$0xf]
      %v4412 = vld [vmem:[%s648 + $0xcc] sm:$0xf]
      %v4413 = vld [vmem:[%s648 + $0xd0] sm:$0xf]
      %v4414 = vld [vmem:[%s648 + $0xd4] sm:$0xf]
      %v4415 = vld [vmem:[%s648 + $0xd8] sm:$0xf]
      %v4416 = vld [vmem:[%s648 + $0xdc] sm:$0xf]
      %v4417 = vld [vmem:[%s648 + $0xe0] sm:$0xf]
      %v4418 = vld [vmem:[%s648 + $0xe4] sm:$0xf]
      %v4419 = vld [vmem:[%s648 + $0xe8] sm:$0xf]
      %v4420 = vld [vmem:[%s648 + $0xec] sm:$0xf]
      %v4421 = vld [vmem:[%s648 + $0xf0] sm:$0xf]
      %v4422 = vld [vmem:[%s648 + $0xf4] sm:$0xf]
      %v4423 = vld [vmem:[%s648 + $0xf8] sm:$0xf]
      %v4424 = vld [vmem:[%s648 + $0xfc] sm:$0xf]
      %v4425 = vpack.c.bf16 %v4333, %v4329
      %v4426 = vpack.c.bf16 %v4334, %v4330
      %v4427 = vpack.c.bf16 %v4335, %v4331
      %v4428 = vpack.c.bf16 %v4336, %v4332
      %v4429 = vpack.c.bf16 %v4341, %v4337
      %v4430 = vpack.c.bf16 %v4342, %v4338
      %v4431 = vpack.c.bf16 %v4343, %v4339
      %v4432 = vpack.c.bf16 %v4344, %v4340
      %v4433 = vpack.c.bf16 %v4349, %v4345
      %v4434 = vpack.c.bf16 %v4350, %v4346
      %v4435 = vpack.c.bf16 %v4351, %v4347
      %v4436 = vpack.c.bf16 %v4352, %v4348
      %v4437 = vpack.c.bf16 %v4357, %v4353
      %v4438 = vpack.c.bf16 %v4358, %v4354
      %v4439 = vpack.c.bf16 %v4359, %v4355
      %v4440 = vpack.c.bf16 %v4360, %v4356
      %v4505 = vunpack.c.l.b16 %v4361
      %v4506 = vunpack.c.l.b16 %v4362
      %v4507 = vunpack.c.l.b16 %v4363
      %v4508 = vunpack.c.l.b16 %v4364
      %v4509 = vunpack.c.l.b16 %v4365
      %v4510 = vunpack.c.l.b16 %v4366
      %v4511 = vunpack.c.l.b16 %v4367
      %v4512 = vunpack.c.l.b16 %v4368
      %v4513 = vunpack.c.l.b16 %v4369
      %v4514 = vunpack.c.l.b16 %v4370
      %v4515 = vunpack.c.l.b16 %v4371
      %v4516 = vunpack.c.l.b16 %v4372
      %v4517 = vunpack.c.l.b16 %v4373
      %v4518 = vunpack.c.l.b16 %v4374
      %v4519 = vunpack.c.l.b16 %v4375
      %v4520 = vunpack.c.l.b16 %v4376
      %v4521 = vunpack.c.l.b16 %v4377
      %v4522 = vunpack.c.l.b16 %v4378
      %v4523 = vunpack.c.l.b16 %v4379
      %v4524 = vunpack.c.l.b16 %v4380
      %v4525 = vunpack.c.l.b16 %v4381
      %v4526 = vunpack.c.l.b16 %v4382
      %v4527 = vunpack.c.l.b16 %v4383
      %v4528 = vunpack.c.l.b16 %v4384
      %v4529 = vunpack.c.l.b16 %v4385
      %v4530 = vunpack.c.l.b16 %v4386
      %v4531 = vunpack.c.l.b16 %v4387
      %v4532 = vunpack.c.l.b16 %v4388
      %v4533 = vunpack.c.l.b16 %v4389
      %v4534 = vunpack.c.l.b16 %v4390
      %v4535 = vunpack.c.l.b16 %v4391
      %v4536 = vunpack.c.l.b16 %v4392
      %v4537 = vunpack.c.l.b16 %v4393
      %v4538 = vunpack.c.l.b16 %v4394
      %v4539 = vunpack.c.l.b16 %v4395
      %v4540 = vunpack.c.l.b16 %v4396
      %v4541 = vunpack.c.l.b16 %v4397
      %v4542 = vunpack.c.l.b16 %v4398
      %v4543 = vunpack.c.l.b16 %v4399
      %v4544 = vunpack.c.l.b16 %v4400
      %v4545 = vunpack.c.l.b16 %v4401
      %v4546 = vunpack.c.l.b16 %v4402
      %v4547 = vunpack.c.l.b16 %v4403
      %v4548 = vunpack.c.l.b16 %v4404
      %v4549 = vunpack.c.l.b16 %v4405
      %v4550 = vunpack.c.l.b16 %v4406
      %v4551 = vunpack.c.l.b16 %v4407
      %v4552 = vunpack.c.l.b16 %v4408
      %v4553 = vunpack.c.l.b16 %v4409
      %v4554 = vunpack.c.l.b16 %v4410
      %v4555 = vunpack.c.l.b16 %v4411
      %v4556 = vunpack.c.l.b16 %v4412
      %v4557 = vunpack.c.l.b16 %v4413
      %v4558 = vunpack.c.l.b16 %v4414
      %v4559 = vunpack.c.l.b16 %v4415
      %v4560 = vunpack.c.l.b16 %v4416
      %v4561 = vunpack.c.l.b16 %v4417
      %v4562 = vunpack.c.l.b16 %v4418
      %v4563 = vunpack.c.l.b16 %v4419
      %v4564 = vunpack.c.l.b16 %v4420
      %v4565 = vunpack.c.l.b16 %v4421
      %v4566 = vunpack.c.l.b16 %v4422
      %v4567 = vunpack.c.l.b16 %v4423
      %v4568 = vunpack.c.l.b16 %v4424
      %v4569 = vpack.c.b16 %v4506, %v4505
      %v4570 = vpack.c.b16 %v4508, %v4507
      %v4571 = vpack.c.b16 %v4510, %v4509
      %v4572 = vpack.c.b16 %v4512, %v4511
      %v4573 = vpack.c.b16 %v4514, %v4513
      %v4574 = vpack.c.b16 %v4516, %v4515
      %v4575 = vpack.c.b16 %v4518, %v4517
      %v4576 = vpack.c.b16 %v4520, %v4519
      %v4577 = vpack.c.b16 %v4522, %v4521
      %v4578 = vpack.c.b16 %v4524, %v4523
      %v4579 = vpack.c.b16 %v4526, %v4525
      %v4580 = vpack.c.b16 %v4528, %v4527
      %v4581 = vpack.c.b16 %v4530, %v4529
      %v4582 = vpack.c.b16 %v4532, %v4531
      %v4583 = vpack.c.b16 %v4534, %v4533
      %v4584 = vpack.c.b16 %v4536, %v4535
      %v4585 = vpack.c.b16 %v4538, %v4537
      %v4586 = vpack.c.b16 %v4540, %v4539
      %v4587 = vpack.c.b16 %v4542, %v4541
      %v4588 = vpack.c.b16 %v4544, %v4543
      %v4589 = vpack.c.b16 %v4546, %v4545
      %v4590 = vpack.c.b16 %v4548, %v4547
      %v4591 = vpack.c.b16 %v4550, %v4549
      %v4592 = vpack.c.b16 %v4552, %v4551
      %v4593 = vpack.c.b16 %v4554, %v4553
      %v4594 = vpack.c.b16 %v4556, %v4555
      %v4595 = vpack.c.b16 %v4558, %v4557
      %v4596 = vpack.c.b16 %v4560, %v4559
      %v4597 = vpack.c.b16 %v4562, %v4561
      %v4598 = vpack.c.b16 %v4564, %v4563
      %v4599 = vpack.c.b16 %v4566, %v4565
      %v4600 = vpack.c.b16 %v4568, %v4567
      %4633 = vmatprep.subr.bf16.mxu0 0
      %4634 = vmatpush1.bf16.msra.mxu0 %v4576
      %4635 = vmatprep.subr.bf16.mxu0 0
      %4636 = vmatpush1.bf16.msra.mxu0 %v4575
      %4637 = vmatprep.subr.bf16.mxu0 0
      %4638 = vmatpush1.bf16.msra.mxu0 %v4574
      %4639 = vmatprep.subr.bf16.mxu0 0
      %4640 = vmatpush1.bf16.msra.mxu0 %v4573
      %4641 = vmatprep.subr.bf16.mxu0 0
      %4642 = vmatpush1.bf16.msra.mxu0 %v4572
      %4643 = vmatprep.subr.bf16.mxu0 0
      %4644 = vmatpush1.bf16.msra.mxu0 %v4571
      %4645 = vmatprep.subr.bf16.mxu0 0
      %4646 = vmatpush1.bf16.msra.mxu0 %v4570
      %4647 = vmatprep.subr.bf16.mxu0 0
      %4648 = vmatpush1.bf16.msra.mxu0 %v4569
      %4649 = vmatprep.subr.bf16.mxu0 0
      %4650 = vmatpush2.bf16.msra.mxu0 %v4584
      %4651 = vmatprep.subr.bf16.mxu0 0
      %4652 = vmatpush2.bf16.msra.mxu0 %v4583
      %4653 = vmatprep.subr.bf16.mxu0 0
      %4654 = vmatpush2.bf16.msra.mxu0 %v4582
      %4655 = vmatprep.subr.bf16.mxu0 0
      %4656 = vmatpush2.bf16.msra.mxu0 %v4581
      %4657 = vmatprep.subr.bf16.mxu0 0
      %4658 = vmatpush2.bf16.msra.mxu0 %v4580
      %4659 = vmatprep.subr.bf16.mxu0 0
      %4660 = vmatpush2.bf16.msra.mxu0 %v4579
      %4661 = vmatprep.subr.bf16.mxu0 0
      %4662 = vmatpush2.bf16.msra.mxu0 %v4578
      %4663 = vmatprep.subr.bf16.mxu0 0
      %4664 = vmatpush2.bf16.msra.mxu0 %v4577
      %4665 = vmatprep.mubr.bf16.mxu0 %v4426
      %4666 = vmatmul.mubr.bf16.gmra.mxu0 %v4425
      %v4667 = vpop.f32.mrf.mxu0
      %v4668 = vadd.f32 0.0, %v4667
      %v4669 = vpop.f32.mrf.mxu0
      %v4670 = vpop.f32.mrf.mxu0
      %v4671 = vadd.f32 0.0, %v4670
      %v4672 = vpop.f32.mrf.mxu0
      %4673 = vmatprep.mubr.bf16.mxu0 %v4430
      %4674 = vmatmul.mubr.bf16.gmra.mxu0 %v4429
      %v4675 = vpop.f32.mrf.mxu0
      %v4676 = vadd.f32 0.0, %v4675
      %v4677 = vpop.f32.mrf.mxu0
      %v4678 = vpop.f32.mrf.mxu0
      %v4679 = vadd.f32 0.0, %v4678
      %v4680 = vpop.f32.mrf.mxu0
      %4681 = vmatprep.mubr.bf16.mxu0 %v4434
      %4682 = vmatmul.mubr.bf16.gmra.mxu0 %v4433
      %v4683 = vpop.f32.mrf.mxu0
      %v4684 = vadd.f32 0.0, %v4683
      %v4685 = vpop.f32.mrf.mxu0
      %v4686 = vpop.f32.mrf.mxu0
      %v4687 = vadd.f32 0.0, %v4686
      %v4688 = vpop.f32.mrf.mxu0
      %4689 = vmatprep.mubr.bf16.mxu0 %v4438
      %4690 = vmatmul.mubr.bf16.gmra.mxu0 %v4437
      %v4691 = vpop.f32.mrf.mxu0
      %v4692 = vadd.f32 0.0, %v4691
      %v4693 = vpop.f32.mrf.mxu0
      %v4694 = vpop.f32.mrf.mxu0
      %v4695 = vadd.f32 0.0, %v4694
      %v4696 = vpop.f32.mrf.mxu0
      %4697 = vdwg.mxu0
      %4698 = vmatprep.subr.bf16.mxu0 0
      %4699 = vmatpush1.bf16.msra.mxu0 %v4592
      %4700 = vmatprep.subr.bf16.mxu0 0
      %4701 = vmatpush1.bf16.msra.mxu0 %v4591
      %4702 = vmatprep.subr.bf16.mxu0 0
      %4703 = vmatpush1.bf16.msra.mxu0 %v4590
      %4704 = vmatprep.subr.bf16.mxu0 0
      %4705 = vmatpush1.bf16.msra.mxu0 %v4589
      %4706 = vmatprep.subr.bf16.mxu0 0
      %4707 = vmatpush1.bf16.msra.mxu0 %v4588
      %4708 = vmatprep.subr.bf16.mxu0 0
      %4709 = vmatpush1.bf16.msra.mxu0 %v4587
      %4710 = vmatprep.subr.bf16.mxu0 0
      %4711 = vmatpush1.bf16.msra.mxu0 %v4586
      %4712 = vmatprep.subr.bf16.mxu0 0
      %4713 = vmatpush1.bf16.msra.mxu0 %v4585
      %4714 = vmatprep.subr.bf16.mxu0 0
      %4715 = vmatpush2.bf16.msra.mxu0 %v4600
      %4716 = vmatprep.subr.bf16.mxu0 0
      %4717 = vmatpush2.bf16.msra.mxu0 %v4599
      %4718 = vmatprep.subr.bf16.mxu0 0
      %4719 = vmatpush2.bf16.msra.mxu0 %v4598
      %4720 = vmatprep.subr.bf16.mxu0 0
      %4721 = vmatpush2.bf16.msra.mxu0 %v4597
      %4722 = vmatprep.subr.bf16.mxu0 0
      %4723 = vmatpush2.bf16.msra.mxu0 %v4596
      %4724 = vmatprep.subr.bf16.mxu0 0
      %4725 = vmatpush2.bf16.msra.mxu0 %v4595
      %4726 = vmatprep.subr.bf16.mxu0 0
      %4727 = vmatpush2.bf16.msra.mxu0 %v4594
      %4728 = vmatprep.subr.bf16.mxu0 0
      %4729 = vmatpush2.bf16.msra.mxu0 %v4593
      %4730 = vmatprep.mubr.bf16.mxu0 %v4428
      %4731 = vmatmul.mubr.bf16.gmra.mxu0 %v4427
      %v4732 = vpop.f32.mrf.mxu0
      %v4733 = vadd.f32 %v4668, %v4732
      %v4734 = vpop.f32.mrf.mxu0
      %v4735 = vpop.f32.mrf.mxu0
      %v4736 = vadd.f32 %v4671, %v4735
      %v4737 = vpop.f32.mrf.mxu0
      %4738 = vmatprep.mubr.bf16.mxu0 %v4432
      %4739 = vmatmul.mubr.bf16.gmra.mxu0 %v4431
      %v4740 = vpop.f32.mrf.mxu0
      %v4741 = vadd.f32 %v4676, %v4740
      %v4742 = vpop.f32.mrf.mxu0
      %v4743 = vpop.f32.mrf.mxu0
      %v4744 = vadd.f32 %v4679, %v4743
      %v4745 = vpop.f32.mrf.mxu0
      %4746 = vmatprep.mubr.bf16.mxu0 %v4436
      %4747 = vmatmul.mubr.bf16.gmra.mxu0 %v4435
      %v4748 = vpop.f32.mrf.mxu0
      %v4749 = vadd.f32 %v4684, %v4748
      %v4750 = vpop.f32.mrf.mxu0
      %v4751 = vpop.f32.mrf.mxu0
      %v4752 = vadd.f32 %v4687, %v4751
      %v4753 = vpop.f32.mrf.mxu0
      %4754 = vmatprep.mubr.bf16.mxu0 %v4440
      %4755 = vmatmul.mubr.bf16.gmra.mxu0 %v4439
      %v4756 = vpop.f32.mrf.mxu0
      %v4757 = vadd.f32 %v4692, %v4756
      %v4758 = vpop.f32.mrf.mxu0
      %v4759 = vpop.f32.mrf.mxu0
      %v4760 = vadd.f32 %v4695, %v4759
      %v4761 = vpop.f32.mrf.mxu0
      %4762 = vdwg.mxu0
      %v4763 = vadd.f32 %v3583, %v4733
      %v4764 = vadd.f32 %v3584, %v4736
      %v4765 = vadd.f32 %v3585, %v4741
      %v4766 = vadd.f32 %v3586, %v4744
      %v4767 = vadd.f32 %v3587, %v4749
      %v4768 = vadd.f32 %v3588, %v4752
      %v4769 = vadd.f32 %v3589, %v4757
      %v4770 = vadd.f32 %v3590, %v4760
      %v4771 = vld [vmem:[%s651] sm:$0x1]
      %v4773 = vlaneseq
      %v4774 = vshrl.u32 %v4773, 7
      %v4775 = vsub.s32 0, %v4774
      %v4776 = vrot.slane %v4771, %v4775
      %v4778 = vadd.f32 %v4763, %v4776
      %v4779 = vadd.f32 %v4764, %v4776
      %v4780 = vadd.f32 %v4765, %v4776
      %v4781 = vadd.f32 %v4766, %v4776
      %v4782 = vadd.f32 %v4767, %v4776
      %v4783 = vadd.f32 %v4768, %v4776
      %v4784 = vadd.f32 %v4769, %v4776
      %v4785 = vadd.f32 %v4770, %v4776
      %4786 = vst [vmem:[#allocation2] sm:$0xff] %v4778
      %4787 = vst [vmem:[#allocation2 + $0x8] sm:$0xff] %v4779
      %4788 = vst [vmem:[#allocation2 + $0x10] sm:$0xff] %v4780
      %4789 = vst [vmem:[#allocation2 + $0x18] sm:$0xff] %v4781
      %4790 = vst [vmem:[#allocation2 + $0x20] sm:$0xff] %v4782
      %4791 = vst [vmem:[#allocation2 + $0x28] sm:$0xff] %v4783
      %4792 = vst [vmem:[#allocation2 + $0x30] sm:$0xff] %v4784
      %4793 = vst [vmem:[#allocation2 + $0x38] sm:$0xff] %v4785
      %p4794 = scmp.eq.s32.totalorder %s29, 1
      // Predicated region
      $region77: #{transformer_policy_forward.4} parent=71 // pred_check
        %p4795 = pneg %p4794
      $region78: #{transformer_policy_forward.4} parent=71 // pred_check_branch
        %4797 = sbr.rel (%p4795) target = $region80
      $region79: #{transformer_policy_forward.4} parent=71 // pred_region
        %v4798 = vld [vmem:[#allocation2] sm:$0xff]
        %v4799 = vld [vmem:[#allocation2 + $0x8] sm:$0xff]
        %v4800 = vld [vmem:[#allocation2 + $0x10] sm:$0xff]
        %v4801 = vld [vmem:[#allocation2 + $0x18] sm:$0xff]
        %v4802 = vld [vmem:[#allocation2 + $0x20] sm:$0xff]
        %v4803 = vld [vmem:[#allocation2 + $0x28] sm:$0xff]
        %v4804 = vld [vmem:[#allocation2 + $0x30] sm:$0xff]
        %v4805 = vld [vmem:[#allocation2 + $0x38] sm:$0xff]
        %4806 = vst [vmem:[%s657] sm:$0xff] %v4798
        %4807 = vst [vmem:[%s657 + $0x8] sm:$0xff] %v4799
        %4808 = vst [vmem:[%s657 + $0x10] sm:$0xff] %v4800
        %4809 = vst [vmem:[%s657 + $0x18] sm:$0xff] %v4801
        %4810 = vst [vmem:[%s657 + $0x20] sm:$0xff] %v4802
        %4811 = vst [vmem:[%s657 + $0x28] sm:$0xff] %v4803
        %4812 = vst [vmem:[%s657 + $0x30] sm:$0xff] %v4804
        %4813 = vst [vmem:[%s657 + $0x38] sm:$0xff] %v4805
      $region80: #{transformer_policy_forward.4} parent=71 // pred_fallthru
        _
      %s4814 = smul.u32 4, %s28
      %p4815 = scmp.lt.s32.totalorder %s4814, 7
      %s4816 = scalar_select %p4815, %s4814, 7
      %s4817 = smul.addr %s4816, 2
      %s4818 = smul.addr %s4817, 8
      %s4819 = scalar_lea.vmem %s13, %s4818
      // Predicated region
      $region81: #{transformer_policy_forward.4} parent=71 // pred_check
        %p4820 = pneg %p392
      $region82: #{transformer_policy_forward.4} parent=71 // pred_check_branch
        %4822 = sbr.rel (%p4820) target = $region84
      $region83: #{transformer_policy_forward.4} parent=71 // pred_region
        %s4823 = smul.u32 4, %s28
      $region84: #{transformer_policy_forward.4} parent=71 // pred_fallthru
        _
    $region72: #{transformer_policy_forward.4} parent=5 // pred_fallthru
      _
    %p4824 = scmp.le.s32.totalorder 2, %s19
    // Predicated region
    $region85: #{transformer_policy_forward.4} parent=5 // pred_check
      %p4825 = pneg %p4824
    $region86: #{transformer_policy_forward.4} parent=5 // pred_check_branch
      %4827 = sbr.rel (%p4825) target = $region88
    $region87: #{transformer_policy_forward.4} parent=5 // pred_region
      %s4828 = ssub.s32 %s19, 2
      // Predicated region
      $region89: #{transformer_policy_forward.4} parent=87 // pred_check
        %p4829 = pneg %p398
      $region90: #{transformer_policy_forward.4} parent=87 // pred_check_branch
        %4831 = sbr.rel (%p4829) target = $region92
      $region91: #{transformer_policy_forward.4} parent=87 // pred_region
        %s4832 = smul.u32 4, %s30
        %p4833 = scmp.lt.s32.totalorder %s4832, 7
        %s4834 = scalar_select %p4833, %s4832, 7
        %s4835 = smul.addr %s4834, 2
        %s4836 = smul.addr %s4835, 8
        %s4837 = scalar_lea.vmem %s13, %s4836
      $region92: #{transformer_policy_forward.4} parent=87 // pred_fallthru
        _
    $region88: #{transformer_policy_forward.4} parent=5 // pred_fallthru
      _
  $region6: #{transformer_policy_forward.4} parent=0 // loop_footer
    %s23 = sadd.s32 1, %s19
  $region7: #{transformer_policy_forward.4} parent=0 // loop_footer_branch
    %18 = sbr.rel target = $region3
  $region8: #{transformer_policy_forward.4} parent=0 // loop_exit
    _

</llo_original>
